<compile_context>
chip_gen: v5e
topology: v5e:2x2
jax: 0.10.0
libtpu: 0.0.40
codegen_flags: <defaults>
</compile_context>

<pallas_src>
import math

import jax
import jax.numpy as jnp
from jax.experimental import pallas as pl
from jax.experimental.pallas import tpu as pltpu

VMEM_SPEC = pl.BlockSpec(memory_space=pltpu.MemorySpace.VMEM)
PACK_WIDTH = 32


# --------------------------------------------------------------------------
# Parameter packing: every weight/bias/BN param lives in one [rows, 32] f32
# matrix; each entry is 8-row aligned so the kernel recovers it with a static,
# sublane-aligned 2-D ref slice.
# --------------------------------------------------------------------------
class _Packer:
    def __init__(self, width=PACK_WIDTH):
        self.width = width
        self.blocks = []
        self.index = {}          # name -> (row_offset, rows, cols)
        self.offset = 0

    def add(self, name, arr):
        arr = jnp.asarray(arr, jnp.float32)
        if arr.ndim == 1:
            arr = arr.reshape(1, -1)
        r, c = arr.shape
        assert c <= self.width, (name, arr.shape)
        rp = ((r + 7) // 8) * 8
        block = jnp.zeros((rp, self.width), jnp.float32).at[:r, :c].set(arr)
        self.blocks.append(block)
        self.index[name] = (self.offset, r, c)
        self.offset += rp

    def pack(self):
        return jnp.concatenate(self.blocks, axis=0)


# --------------------------------------------------------------------------
# Deterministic parameter construction (mirrors the torch module's __init__)
# + dense graph construction (DGL GraphConv norm='both' adjacency).
# --------------------------------------------------------------------------
def build_model(f1, f2, f3, n_nodes, T, seed=0):
    key = jax.random.PRNGKey(seed)

    def nxt():
        nonlocal key
        key, sub = jax.random.split(key)
        return sub

    packer = _Packer()

    def pad2(a, rows, cols):
        return jnp.zeros((rows, cols), jnp.float32).at[:a.shape[0], :a.shape[1]].set(a)

    def add_linear(name, fin, fout, pad):
        w = (1.0 / math.sqrt(fin)) * jax.random.normal(nxt(), (fin, fout), jnp.float32)
        b = 0.1 * jax.random.normal(nxt(), (1, fout), jnp.float32)
        if pad:
            w, b = pad2(w, PACK_WIDTH, PACK_WIDTH), pad2(b, 1, PACK_WIDTH)
        packer.add(name + "_w", w)
        packer.add(name + "_b", b)

    def add_bn(name, fout, pad):
        g = jnp.ones((1, fout), jnp.float32)
        be = jnp.zeros((1, fout), jnp.float32)
        if pad:
            g, be = pad2(g, 1, PACK_WIDTH), pad2(be, 1, PACK_WIDTH)
        packer.add(name + "_g", g)
        packer.add(name + "_be", be)

    cfg = {}

    # spatial embedding FC: f1 -> 20 (relu) -> 15
    cfg["se_dims"] = [f1, 20, 15]
    for i in range(len(cfg["se_dims"]) - 1):
        add_linear(f"se{i}", cfg["se_dims"][i], cfg["se_dims"][i + 1], pad=True)

    # spatial StackedSBlocks: GCN(15,[15,15,15],15) x2, GCN(15,[14,13,12,11],10)
    cfg["sg_dims"] = [
        [15, 15, 15, 15, 15],
        [15, 15, 15, 15, 15],
        [15, 14, 13, 12, 11, 10],
    ]
    for b, dims in enumerate(cfg["sg_dims"]):
        for l in range(len(dims) - 1):
            add_linear(f"sg{b}_{l}", dims[l], dims[l + 1], pad=True)
            add_bn(f"sg{b}_{l}", dims[l + 1], pad=True)

    # temporal StackedSTBlocks: STBlock(f2,4), STBlock(5,5), STBlock(10,10)
    cfg["tb"] = [(f2, 4), (5, 5), (10, 10)]
    seg_widths = [f2]
    for b, (fi, fo) in enumerate(cfg["tb"]):
        dims = [fi, (3 * fi + fo) // 4, fo, fo]     # GCN(fi, [(3fi+fo)//4, fo], fo)
        cfg[f"tb{b}_dims"] = dims
        assert sum(seg_widths) == fi
        # layer 0 weight: rows split per accumulated concat segment
        w0 = (1.0 / math.sqrt(fi)) * jax.random.normal(nxt(), (fi, dims[1]), jnp.float32)
        r0 = 0
        for j, wseg in enumerate(seg_widths):
            packer.add(f"tb{b}_g0_w_s{j}", w0[r0:r0 + wseg, :])
            r0 += wseg
        packer.add(f"tb{b}_g0_b",
                   0.1 * jax.random.normal(nxt(), (1, dims[1]), jnp.float32))
        add_bn(f"tb{b}_g0", dims[1], pad=False)
        for l in range(1, len(dims) - 1):
            add_linear(f"tb{b}_g{l}", dims[l], dims[l + 1], pad=False)
            add_bn(f"tb{b}_g{l}", dims[l + 1], pad=False)
        # Conv1d(fo, fo, 3, padding=1): three taps packed side-by-side [fo, 3*fo]
        wc = (1.0 / math.sqrt(3 * fo)) * jax.random.normal(nxt(), (fo, 3 * fo), jnp.float32)
        cb = 0.1 * jax.random.normal(nxt(), (1, fo), jnp.float32)
        packer.add(f"tb{b}_cw", wc)
        packer.add(f"tb{b}_cb", cb)
        seg_widths.append(fo)

    # external FC: f3 -> (3*f3+10)//4 (relu) -> 10 (relu) -> 10
    cfg["ex_dims"] = [f3, (3 * f3 + 10) // 4, 10, 10]
    for i in range(len(cfg["ex_dims"]) - 1):
        add_linear(f"ex{i}", cfg["ex_dims"][i], cfg["ex_dims"][i + 1], pad=True)

    # output Linear(10 + 20 + 10, 1): stored as per-branch / per-segment rows so
    # the head is a VPU multiply + lane reduce (no M=1 MXU dots).
    t_width = sum(seg_widths)
    cfg["t_width"] = t_width
    tot = 10 + t_width + 10
    w_out = (1.0 / math.sqrt(tot)) * jax.random.normal(nxt(), (tot,), jnp.float32)
    b_out = 0.1 * jax.random.normal(nxt(), (1, 1), jnp.float32)
    packer.add("out_ws", pad2(w_out[0:10].reshape(1, 10), 1, PACK_WIDTH))
    off = 10
    for j, wseg in enumerate(seg_widths):
        packer.add(f"out_wt_s{j}", w_out[off:off + wseg].reshape(1, wseg))
        off += wseg
    packer.add("out_we", pad2(w_out[off:off + 10].reshape(1, 10), 1, PACK_WIDTH))
    packer.add("out_b", b_out)

    # ring graph: A_hat = D^-1/2 (I + ring) D^-1/2   (GraphConv norm='both')
    idx = jnp.arange(n_nodes)
    ring = ((idx[:, None] == (idx[None, :] + 1) % n_nodes)
            | (idx[None, :] == (idx[:, None] + 1) % n_nodes)).astype(jnp.float32)
    a = jnp.clip(jnp.eye(n_nodes, dtype=jnp.float32) + ring, 0.0, 1.0)
    dinv = 1.0 / jnp.sqrt(jnp.sum(a, axis=1))
    a_hat = a * dinv[:, None] * dinv[None, :]
    # kron(I_T, A_hat): block-diagonal aggregation matrix for the time-major
    # [T*N, C] layout -> ONE dense [T*N, T*N]@[T*N, C] matmul per GCN layer.
    kron = jnp.kron(jnp.eye(T, dtype=jnp.float32), a_hat)

    return dict(cfg=cfg, index=packer.index, pack=packer.pack(),
                kron=kron, n_nodes=n_nodes, T=T)


# --------------------------------------------------------------------------
# The single fused forward kernel.
# --------------------------------------------------------------------------
def _make_kernel(cfg, index, n_nodes, T, f2):
    N = n_nodes
    TN = T * N

    def kernel(kron_ref, feat_ref, pack_ref, out_ref):
        def getp(name):
            off, r, c = index[name]
            return pack_ref[off:off + r, :c]

        # Constants: read once, reused across every (unrolled) layer.
        kron = kron_ref[...]                         # [TN, TN] = kron(I_T, A_hat)
        a_hat = kron_ref[0:N, 0:N]                   # top-left block == A_hat

        def bn_relu(y, name):
            # Single-pass training-mode batch stats: var = E[x^2] - mean^2.
            inv_n = 1.0 / y.shape[0]
            mean = jnp.sum(y, axis=0, keepdims=True) * inv_n
            var = jnp.sum(y * y, axis=0, keepdims=True) * inv_n - mean * mean
            yh = (y - mean) * jax.lax.rsqrt(var + 1e-5)
            return jnp.maximum(yh * getp(name + "_g") + getp(name + "_be"), 0.0)

        def dense(x, name, relu):
            y = (jnp.dot(x, getp(name + "_w"), preferred_element_type=jnp.float32)
                 + getp(name + "_b"))
            return jnp.maximum(y, 0.0) if relu else y

        # ---------------- spatial branch ([N, 32], zero-padded channels) --------
        h = feat_ref[TN:TN + N, :]                   # [N, 32]
        n_se = len(cfg["se_dims"]) - 1
        for i in range(n_se):
            h = dense(h, f"se{i}", relu=(i < n_se - 1))

        def spatial_gcn(h, b):
            for l in range(len(cfg["sg_dims"][b]) - 1):
                agg = jnp.dot(a_hat, h, preferred_element_type=jnp.float32)
                y = (jnp.dot(agg, getp(f"sg{b}_{l}_w"),
                             preferred_element_type=jnp.float32)
                     + getp(f"sg{b}_{l}_b"))
                h = bn_relu(y, f"sg{b}_{l}")
            return h

        n_sb = len(cfg["sg_dims"])
        for b in range(n_sb - 1):                    # StackedSBlocks residuals
            h = h + spatial_gcn(h, b)
        s_out = spatial_gcn(h, n_sb - 1)             # [N, 32] (real cols 0..9)

        # ---------------- external branch ----------------
        e = feat_ref[TN + N:TN + N + 1, :]           # [1, 32]
        n_ex = len(cfg["ex_dims"]) - 1
        for i in range(n_ex):
            e = dense(e, f"ex{i}", relu=(i < n_ex - 1))   # real cols 0..9

        # ---------------- temporal branch (time-major [T*N, C]) ----------------
        # StackedSTBlocks' growing torch.cat((h, out), dim=1) is carried as a
        # list of exact-width segments; the first GCN layer of each block applies
        # its row-split weight per segment and sums (matmul distributes over the
        # channel concat), so no lane concat / masked column store is needed.
        segs = [feat_ref[0:TN, 0:f2]]                # [[TN, f2]]
        for b, (fi, fo) in enumerate(cfg["tb"]):
            dims = cfg[f"tb{b}_dims"]
            # layer 0: per-segment channel mix, sum, then ONE kron aggregation.
            pre = jnp.dot(segs[0], getp(f"tb{b}_g0_w_s0"),
                          preferred_element_type=jnp.float32)
            for j in range(1, len(segs)):
                pre = pre + jnp.dot(segs[j], getp(f"tb{b}_g0_w_s{j}"),
                                    preferred_element_type=jnp.float32)
            y = (jnp.dot(kron, pre, preferred_element_type=jnp.float32)
                 + getp(f"tb{b}_g0_b"))
            x = bn_relu(y, f"tb{b}_g0")
            # layers 1..: aggregate (one dense kron matmul) then mix.
            for l in range(1, len(dims) - 1):
                agg = jnp.dot(kron, x, preferred_element_type=jnp.float32)
                y = (jnp.dot(agg, getp(f"tb{b}_g{l}_w"),
                             preferred_element_type=jnp.float32)
                     + getp(f"tb{b}_g{l}_b"))
                x = bn_relu(y, f"tb{b}_g{l}")
            # Conv1d(fo, fo, 3, padding=1) along time: one packed-tap matmul,
            # then tile-aligned (+/- N=8 row = one time step) shifts.
            y = jnp.dot(x, getp(f"tb{b}_cw"), preferred_element_type=jnp.float32)
            y0 = y[:, 0:fo]
            y1 = y[:, fo:2 * fo]
            y2 = y[:, 2 * fo:3 * fo]
            zpad = jnp.zeros((N, fo), jnp.float32)
            prev = jnp.concatenate([zpad, y0[:TN - N, :]], axis=0)   # W0 . x[t-1]
            nxt = jnp.concatenate([y2[N:, :], zpad], axis=0)         # W2 . x[t+1]
            conv = y1 + prev + nxt + getp(f"tb{b}_cb")
            segs.append(conv)                        # torch.cat((h, out), dim=1)

        # ---------------- output head ----------------
        # AvgPool1d(T) over node 0 == masked mean of every N-th row (broadcast
        # multiply + sublane reduce); Linear(40, 1) == VPU multiply + lane
        # reduce per branch/segment.  ReLU before the linear, as in the module.
        node0 = (jax.lax.broadcasted_iota(jnp.int32, (TN, 1), 0) % N == 0
                 ).astype(jnp.float32)               # [TN, 1]

        def lane_dot(v, wrow):                       # [1,k] x [1,k] -> [1,1]
            return jnp.sum(v * wrow, axis=1, keepdims=True)

        def pool0(v):                                # [TN,k] -> [1,k]
            return jnp.sum(v * node0, axis=0, keepdims=True) * (1.0 / T)

        acc = lane_dot(jnp.maximum(s_out[0:1, :], 0.0), getp("out_ws"))
        acc = acc + lane_dot(jnp.maximum(e[0:1, :], 0.0), getp("out_we"))
        for j, seg in enumerate(segs):
            acc = acc + lane_dot(jnp.maximum(pool0(seg), 0.0), getp(f"out_wt_s{j}"))
        out_ref[...] = jax.nn.sigmoid(acc + getp("out_b"))

    return kernel


# --------------------------------------------------------------------------
# Forward wrapper.
# --------------------------------------------------------------------------
def dstgcn_forward(model, spatial_features, temporal_features, external_features):
    N, T = model["n_nodes"], model["T"]
    cfg = model["cfg"]
    f2 = cfg["tb"][0][0]
    TN = T * N
    # torch NCT [node, channel, time] -> time-major channels-last [T*N, f2]
    tflat = jnp.transpose(temporal_features, (2, 0, 1)).reshape(TN, f2)
    # Fold the three runtime feature tensors into one lane-padded buffer
    # (rows 0..TN-1: temporal, TN..TN+N-1: spatial, TN+N: external sample 0).
    feats = jnp.zeros((TN + N + 8, PACK_WIDTH), jnp.float32)
    feats = feats.at[0:TN, 0:f2].set(tflat.astype(jnp.float32))
    feats = feats.at[TN:TN + N, 0:spatial_features.shape[1]].set(
        spatial_features.astype(jnp.float32))
    feats = feats.at[TN + N:TN + N + 1, 0:external_features.shape[1]].set(
        external_features[0:1].astype(jnp.float32))

    kernel = _make_kernel(cfg, model["index"], N, T, f2)
    out = pl.pallas_call(
        kernel,
        out_shape=jax.ShapeDtypeStruct((1, 1), jnp.float32),
        in_specs=[VMEM_SPEC] * 3,
        out_specs=VMEM_SPEC,
    )(model["kron"], feats, model["pack"])
    return out.reshape((1,))


# --------------------------------------------------------------------------

if __name__ == "__main__":
    N, T = 8, 24             # node_num, time steps (AvgPool1d(24) window)
    F1, F2, F3 = 22, 1, 8    # spatial / dynamic / external feature dims
    B = 1                    # TODO(synk): the reference torch.cat mixes 1-D node features
                             # with 2-D e_out, so it is only well-formed for batch_size == 1;
                             # we take graph 0 / e_out[0].

    model = build_model(F1, F2, F3, N, T, seed=0)

    key = jax.random.PRNGKey(0)
    k1, k2, k3 = jax.random.split(key, 3)
    spatial_features = jax.random.normal(k1, (N, F1), jnp.float32)
    temporal_features = jax.random.normal(k2, (N, F2, T), jnp.float32)   # torch NCT layout
    external_features = jax.random.normal(k3, (B, F3), jnp.float32)

    fwd = jax.jit(lambda s, t, e: dstgcn_forward(model, s, t, e))
    out = jax.block_until_ready(fwd(spatial_features, temporal_features, external_features))
    assert out.shape == (1,)
    assert bool(jnp.all(jnp.isfinite(out)))
    print("KERNEL_OK")
</pallas_src>

<mosaic_0001>
module attributes {stable_mosaic.version = 11 : i64} {
  func.func @kernel(%arg0: memref<192x192xf32, #tpu.memory_space<vmem>>, %arg1: memref<208x32xf32, #tpu.memory_space<vmem>>, %arg2: memref<1368x32xf32, #tpu.memory_space<vmem>>, %arg3: memref<1x1xf32, #tpu.memory_space<vmem>>) attributes {dimension_semantics = [], scalar_prefetch = 0 : i64, scratch_operands = 0 : i64, tpu.core_type = #tpu.core_type<tc>} {
    %c0 = arith.constant 0 : index
    %c0_0 = arith.constant 0 : index
    %0 = vector.load %arg0[%c0, %c0_0] : memref<192x192xf32, #tpu.memory_space<vmem>>, vector<192x192xf32>
    %c0_1 = arith.constant 0 : index
    %c0_2 = arith.constant 0 : index
    %1 = vector.load %arg0[%c0_1, %c0_2] : memref<192x192xf32, #tpu.memory_space<vmem>>, vector<8x8xf32>
    %c192 = arith.constant 192 : index
    %c0_3 = arith.constant 0 : index
    %2 = vector.load %arg1[%c192, %c0_3] : memref<208x32xf32, #tpu.memory_space<vmem>>, vector<8x32xf32>
    %c0_4 = arith.constant 0 : index
    %c0_5 = arith.constant 0 : index
    %3 = vector.load %arg2[%c0_4, %c0_5] : memref<1368x32xf32, #tpu.memory_space<vmem>>, vector<32x32xf32>
    %cst = arith.constant dense<0.000000e+00> : vector<8x32xf32>
    %4 = tpu.matmul %2, %3, %cst {dimension_numbers = #tpu.dot_dimension_numbers<[1], [0], [0], [1], [0, 0, 1, 1], [], []>} : vector<8x32xf32>, vector<32x32xf32>, vector<8x32xf32> -> vector<8x32xf32>
    %c32 = arith.constant 32 : index
    %c0_6 = arith.constant 0 : index
    %5 = vector.load %arg2[%c32, %c0_6] : memref<1368x32xf32, #tpu.memory_space<vmem>>, vector<1x32xf32>
    %6 = vector.broadcast %5 : vector<1x32xf32> to vector<8x32xf32>
    %7 = arith.addf %4, %6 : vector<8x32xf32>
    %cst_7 = arith.constant 0.000000e+00 : f32
    %8 = vector.broadcast %cst_7 : f32 to vector<8x32xf32>
    %9 = arith.maximumf %7, %8 : vector<8x32xf32>
    %c40 = arith.constant 40 : index
    %c0_8 = arith.constant 0 : index
    %10 = vector.load %arg2[%c40, %c0_8] : memref<1368x32xf32, #tpu.memory_space<vmem>>, vector<32x32xf32>
    %cst_9 = arith.constant dense<0.000000e+00> : vector<8x32xf32>
    %11 = tpu.matmul %9, %10, %cst_9 {dimension_numbers = #tpu.dot_dimension_numbers<[1], [0], [0], [1], [0, 0, 1, 1], [], []>} : vector<8x32xf32>, vector<32x32xf32>, vector<8x32xf32> -> vector<8x32xf32>
    %c72 = arith.constant 72 : index
    %c0_10 = arith.constant 0 : index
    %12 = vector.load %arg2[%c72, %c0_10] : memref<1368x32xf32, #tpu.memory_space<vmem>>, vector<1x32xf32>
    %13 = vector.broadcast %12 : vector<1x32xf32> to vector<8x32xf32>
    %14 = arith.addf %11, %13 : vector<8x32xf32>
    %cst_11 = arith.constant dense<0.000000e+00> : vector<8x32xf32>
    %15 = tpu.matmul %1, %14, %cst_11 {dimension_numbers = #tpu.dot_dimension_numbers<[1], [0], [0], [1], [0, 0, 1, 1], [], []>} : vector<8x8xf32>, vector<8x32xf32>, vector<8x32xf32> -> vector<8x32xf32>
    %c80 = arith.constant 80 : index
    %c0_12 = arith.constant 0 : index
    %16 = vector.load %arg2[%c80, %c0_12] : memref<1368x32xf32, #tpu.memory_space<vmem>>, vector<32x32xf32>
    %cst_13 = arith.constant dense<0.000000e+00> : vector<8x32xf32>
    %17 = tpu.matmul %15, %16, %cst_13 {dimension_numbers = #tpu.dot_dimension_numbers<[1], [0], [0], [1], [0, 0, 1, 1], [], []>} : vector<8x32xf32>, vector<32x32xf32>, vector<8x32xf32> -> vector<8x32xf32>
    %c112 = arith.constant 112 : index
    %c0_14 = arith.constant 0 : index
    %18 = vector.load %arg2[%c112, %c0_14] : memref<1368x32xf32, #tpu.memory_space<vmem>>, vector<1x32xf32>
    %19 = vector.broadcast %18 : vector<1x32xf32> to vector<8x32xf32>
    %20 = arith.addf %17, %19 : vector<8x32xf32>
    %cst_15 = arith.constant dense<0.000000e+00> : vector<32xf32>
    %21 = vector.multi_reduction <add>, %20, %cst_15 [0] : vector<8x32xf32> to vector<32xf32>
    %22 = vector.shape_cast %21 : vector<32xf32> to vector<1x32xf32>
    %cst_16 = arith.constant 1.250000e-01 : f32
    %23 = vector.broadcast %cst_16 : f32 to vector<1x32xf32>
    %24 = arith.mulf %22, %23 : vector<1x32xf32>
    %25 = arith.mulf %20, %20 : vector<8x32xf32>
    %cst_17 = arith.constant dense<0.000000e+00> : vector<32xf32>
    %26 = vector.multi_reduction <add>, %25, %cst_17 [0] : vector<8x32xf32> to vector<32xf32>
    %27 = vector.shape_cast %26 : vector<32xf32> to vector<1x32xf32>
    %cst_18 = arith.constant 1.250000e-01 : f32
    %28 = vector.broadcast %cst_18 : f32 to vector<1x32xf32>
    %29 = arith.mulf %27, %28 : vector<1x32xf32>
    %30 = arith.mulf %24, %24 : vector<1x32xf32>
    %31 = arith.subf %29, %30 : vector<1x32xf32>
    %32 = vector.broadcast %24 : vector<1x32xf32> to vector<8x32xf32>
    %33 = arith.subf %20, %32 : vector<8x32xf32>
    %cst_19 = arith.constant 9.99999974E-6 : f32
    %34 = vector.broadcast %cst_19 : f32 to vector<1x32xf32>
    %35 = arith.addf %31, %34 : vector<1x32xf32>
    %36 = math.rsqrt %35 : vector<1x32xf32>
    %37 = vector.broadcast %36 : vector<1x32xf32> to vector<8x32xf32>
    %38 = arith.mulf %33, %37 : vector<8x32xf32>
    %c120 = arith.constant 120 : index
    %c0_20 = arith.constant 0 : index
    %39 = vector.load %arg2[%c120, %c0_20] : memref<1368x32xf32, #tpu.memory_space<vmem>>, vector<1x32xf32>
    %40 = vector.broadcast %39 : vector<1x32xf32> to vector<8x32xf32>
    %41 = arith.mulf %38, %40 : vector<8x32xf32>
    %c128 = arith.constant 128 : index
    %c0_21 = arith.constant 0 : index
    %42 = vector.load %arg2[%c128, %c0_21] : memref<1368x32xf32, #tpu.memory_space<vmem>>, vector<1x32xf32>
    %43 = vector.broadcast %42 : vector<1x32xf32> to vector<8x32xf32>
    %44 = arith.addf %41, %43 : vector<8x32xf32>
    %cst_22 = arith.constant 0.000000e+00 : f32
    %45 = vector.broadcast %cst_22 : f32 to vector<8x32xf32>
    %46 = arith.maximumf %44, %45 : vector<8x32xf32>
    %cst_23 = arith.constant dense<0.000000e+00> : vector<8x32xf32>
    %47 = tpu.matmul %1, %46, %cst_23 {dimension_numbers = #tpu.dot_dimension_numbers<[1], [0], [0], [1], [0, 0, 1, 1], [], []>} : vector<8x8xf32>, vector<8x32xf32>, vector<8x32xf32> -> vector<8x32xf32>
    %c136 = arith.constant 136 : index
    %c0_24 = arith.constant 0 : index
    %48 = vector.load %arg2[%c136, %c0_24] : memref<1368x32xf32, #tpu.memory_space<vmem>>, vector<32x32xf32>
    %cst_25 = arith.constant dense<0.000000e+00> : vector<8x32xf32>
    %49 = tpu.matmul %47, %48, %cst_25 {dimension_numbers = #tpu.dot_dimension_numbers<[1], [0], [0], [1], [0, 0, 1, 1], [], []>} : vector<8x32xf32>, vector<32x32xf32>, vector<8x32xf32> -> vector<8x32xf32>
    %c168 = arith.constant 168 : index
    %c0_26 = arith.constant 0 : index
    %50 = vector.load %arg2[%c168, %c0_26] : memref<1368x32xf32, #tpu.memory_space<vmem>>, vector<1x32xf32>
    %51 = vector.broadcast %50 : vector<1x32xf32> to vector<8x32xf32>
    %52 = arith.addf %49, %51 : vector<8x32xf32>
    %cst_27 = arith.constant dense<0.000000e+00> : vector<32xf32>
    %53 = vector.multi_reduction <add>, %52, %cst_27 [0] : vector<8x32xf32> to vector<32xf32>
    %54 = vector.shape_cast %53 : vector<32xf32> to vector<1x32xf32>
    %cst_28 = arith.constant 1.250000e-01 : f32
    %55 = vector.broadcast %cst_28 : f32 to vector<1x32xf32>
    %56 = arith.mulf %54, %55 : vector<1x32xf32>
    %57 = arith.mulf %52, %52 : vector<8x32xf32>
    %cst_29 = arith.constant dense<0.000000e+00> : vector<32xf32>
    %58 = vector.multi_reduction <add>, %57, %cst_29 [0] : vector<8x32xf32> to vector<32xf32>
    %59 = vector.shape_cast %58 : vector<32xf32> to vector<1x32xf32>
    %cst_30 = arith.constant 1.250000e-01 : f32
    %60 = vector.broadcast %cst_30 : f32 to vector<1x32xf32>
    %61 = arith.mulf %59, %60 : vector<1x32xf32>
    %62 = arith.mulf %56, %56 : vector<1x32xf32>
    %63 = arith.subf %61, %62 : vector<1x32xf32>
    %64 = vector.broadcast %56 : vector<1x32xf32> to vector<8x32xf32>
    %65 = arith.subf %52, %64 : vector<8x32xf32>
    %cst_31 = arith.constant 9.99999974E-6 : f32
    %66 = vector.broadcast %cst_31 : f32 to vector<1x32xf32>
    %67 = arith.addf %63, %66 : vector<1x32xf32>
    %68 = math.rsqrt %67 : vector<1x32xf32>
    %69 = vector.broadcast %68 : vector<1x32xf32> to vector<8x32xf32>
    %70 = arith.mulf %65, %69 : vector<8x32xf32>
    %c176 = arith.constant 176 : index
    %c0_32 = arith.constant 0 : index
    %71 = vector.load %arg2[%c176, %c0_32] : memref<1368x32xf32, #tpu.memory_space<vmem>>, vector<1x32xf32>
    %72 = vector.broadcast %71 : vector<1x32xf32> to vector<8x32xf32>
    %73 = arith.mulf %70, %72 : vector<8x32xf32>
    %c184 = arith.constant 184 : index
    %c0_33 = arith.constant 0 : index
    %74 = vector.load %arg2[%c184, %c0_33] : memref<1368x32xf32, #tpu.memory_space<vmem>>, vector<1x32xf32>
    %75 = vector.broadcast %74 : vector<1x32xf32> to vector<8x32xf32>
    %76 = arith.addf %73, %75 : vector<8x32xf32>
    %cst_34 = arith.constant 0.000000e+00 : f32
    %77 = vector.broadcast %cst_34 : f32 to vector<8x32xf32>
    %78 = arith.maximumf %76, %77 : vector<8x32xf32>
    %cst_35 = arith.constant dense<0.000000e+00> : vector<8x32xf32>
    %79 = tpu.matmul %1, %78, %cst_35 {dimension_numbers = #tpu.dot_dimension_numbers<[1], [0], [0], [1], [0, 0, 1, 1], [], []>} : vector<8x8xf32>, vector<8x32xf32>, vector<8x32xf32> -> vector<8x32xf32>
    %c192_36 = arith.constant 192 : index
    %c0_37 = arith.constant 0 : index
    %80 = vector.load %arg2[%c192_36, %c0_37] : memref<1368x32xf32, #tpu.memory_space<vmem>>, vector<32x32xf32>
    %cst_38 = arith.constant dense<0.000000e+00> : vector<8x32xf32>
    %81 = tpu.matmul %79, %80, %cst_38 {dimension_numbers = #tpu.dot_dimension_numbers<[1], [0], [0], [1], [0, 0, 1, 1], [], []>} : vector<8x32xf32>, vector<32x32xf32>, vector<8x32xf32> -> vector<8x32xf32>
    %c224 = arith.constant 224 : index
    %c0_39 = arith.constant 0 : index
    %82 = vector.load %arg2[%c224, %c0_39] : memref<1368x32xf32, #tpu.memory_space<vmem>>, vector<1x32xf32>
    %83 = vector.broadcast %82 : vector<1x32xf32> to vector<8x32xf32>
    %84 = arith.addf %81, %83 : vector<8x32xf32>
    %cst_40 = arith.constant dense<0.000000e+00> : vector<32xf32>
    %85 = vector.multi_reduction <add>, %84, %cst_40 [0] : vector<8x32xf32> to vector<32xf32>
    %86 = vector.shape_cast %85 : vector<32xf32> to vector<1x32xf32>
    %cst_41 = arith.constant 1.250000e-01 : f32
    %87 = vector.broadcast %cst_41 : f32 to vector<1x32xf32>
    %88 = arith.mulf %86, %87 : vector<1x32xf32>
    %89 = arith.mulf %84, %84 : vector<8x32xf32>
    %cst_42 = arith.constant dense<0.000000e+00> : vector<32xf32>
    %90 = vector.multi_reduction <add>, %89, %cst_42 [0] : vector<8x32xf32> to vector<32xf32>
    %91 = vector.shape_cast %90 : vector<32xf32> to vector<1x32xf32>
    %cst_43 = arith.constant 1.250000e-01 : f32
    %92 = vector.broadcast %cst_43 : f32 to vector<1x32xf32>
    %93 = arith.mulf %91, %92 : vector<1x32xf32>
    %94 = arith.mulf %88, %88 : vector<1x32xf32>
    %95 = arith.subf %93, %94 : vector<1x32xf32>
    %96 = vector.broadcast %88 : vector<1x32xf32> to vector<8x32xf32>
    %97 = arith.subf %84, %96 : vector<8x32xf32>
    %cst_44 = arith.constant 9.99999974E-6 : f32
    %98 = vector.broadcast %cst_44 : f32 to vector<1x32xf32>
    %99 = arith.addf %95, %98 : vector<1x32xf32>
    %100 = math.rsqrt %99 : vector<1x32xf32>
    %101 = vector.broadcast %100 : vector<1x32xf32> to vector<8x32xf32>
    %102 = arith.mulf %97, %101 : vector<8x32xf32>
    %c232 = arith.constant 232 : index
    %c0_45 = arith.constant 0 : index
    %103 = vector.load %arg2[%c232, %c0_45] : memref<1368x32xf32, #tpu.memory_space<vmem>>, vector<1x32xf32>
    %104 = vector.broadcast %103 : vector<1x32xf32> to vector<8x32xf32>
    %105 = arith.mulf %102, %104 : vector<8x32xf32>
    %c240 = arith.constant 240 : index
    %c0_46 = arith.constant 0 : index
    %106 = vector.load %arg2[%c240, %c0_46] : memref<1368x32xf32, #tpu.memory_space<vmem>>, vector<1x32xf32>
    %107 = vector.broadcast %106 : vector<1x32xf32> to vector<8x32xf32>
    %108 = arith.addf %105, %107 : vector<8x32xf32>
    %cst_47 = arith.constant 0.000000e+00 : f32
    %109 = vector.broadcast %cst_47 : f32 to vector<8x32xf32>
    %110 = arith.maximumf %108, %109 : vector<8x32xf32>
    %cst_48 = arith.constant dense<0.000000e+00> : vector<8x32xf32>
    %111 = tpu.matmul %1, %110, %cst_48 {dimension_numbers = #tpu.dot_dimension_numbers<[1], [0], [0], [1], [0, 0, 1, 1], [], []>} : vector<8x8xf32>, vector<8x32xf32>, vector<8x32xf32> -> vector<8x32xf32>
    %c248 = arith.constant 248 : index
    %c0_49 = arith.constant 0 : index
    %112 = vector.load %arg2[%c248, %c0_49] : memref<1368x32xf32, #tpu.memory_space<vmem>>, vector<32x32xf32>
    %cst_50 = arith.constant dense<0.000000e+00> : vector<8x32xf32>
    %113 = tpu.matmul %111, %112, %cst_50 {dimension_numbers = #tpu.dot_dimension_numbers<[1], [0], [0], [1], [0, 0, 1, 1], [], []>} : vector<8x32xf32>, vector<32x32xf32>, vector<8x32xf32> -> vector<8x32xf32>
    %c280 = arith.constant 280 : index
    %c0_51 = arith.constant 0 : index
    %114 = vector.load %arg2[%c280, %c0_51] : memref<1368x32xf32, #tpu.memory_space<vmem>>, vector<1x32xf32>
    %115 = vector.broadcast %114 : vector<1x32xf32> to vector<8x32xf32>
    %116 = arith.addf %113, %115 : vector<8x32xf32>
    %cst_52 = arith.constant dense<0.000000e+00> : vector<32xf32>
    %117 = vector.multi_reduction <add>, %116, %cst_52 [0] : vector<8x32xf32> to vector<32xf32>
    %118 = vector.shape_cast %117 : vector<32xf32> to vector<1x32xf32>
    %cst_53 = arith.constant 1.250000e-01 : f32
    %119 = vector.broadcast %cst_53 : f32 to vector<1x32xf32>
    %120 = arith.mulf %118, %119 : vector<1x32xf32>
    %121 = arith.mulf %116, %116 : vector<8x32xf32>
    %cst_54 = arith.constant dense<0.000000e+00> : vector<32xf32>
    %122 = vector.multi_reduction <add>, %121, %cst_54 [0] : vector<8x32xf32> to vector<32xf32>
    %123 = vector.shape_cast %122 : vector<32xf32> to vector<1x32xf32>
    %cst_55 = arith.constant 1.250000e-01 : f32
    %124 = vector.broadcast %cst_55 : f32 to vector<1x32xf32>
    %125 = arith.mulf %123, %124 : vector<1x32xf32>
    %126 = arith.mulf %120, %120 : vector<1x32xf32>
    %127 = arith.subf %125, %126 : vector<1x32xf32>
    %128 = vector.broadcast %120 : vector<1x32xf32> to vector<8x32xf32>
    %129 = arith.subf %116, %128 : vector<8x32xf32>
    %cst_56 = arith.constant 9.99999974E-6 : f32
    %130 = vector.broadcast %cst_56 : f32 to vector<1x32xf32>
    %131 = arith.addf %127, %130 : vector<1x32xf32>
    %132 = math.rsqrt %131 : vector<1x32xf32>
    %133 = vector.broadcast %132 : vector<1x32xf32> to vector<8x32xf32>
    %134 = arith.mulf %129, %133 : vector<8x32xf32>
    %c288 = arith.constant 288 : index
    %c0_57 = arith.constant 0 : index
    %135 = vector.load %arg2[%c288, %c0_57] : memref<1368x32xf32, #tpu.memory_space<vmem>>, vector<1x32xf32>
    %136 = vector.broadcast %135 : vector<1x32xf32> to vector<8x32xf32>
    %137 = arith.mulf %134, %136 : vector<8x32xf32>
    %c296 = arith.constant 296 : index
    %c0_58 = arith.constant 0 : index
    %138 = vector.load %arg2[%c296, %c0_58] : memref<1368x32xf32, #tpu.memory_space<vmem>>, vector<1x32xf32>
    %139 = vector.broadcast %138 : vector<1x32xf32> to vector<8x32xf32>
    %140 = arith.addf %137, %139 : vector<8x32xf32>
    %cst_59 = arith.constant 0.000000e+00 : f32
    %141 = vector.broadcast %cst_59 : f32 to vector<8x32xf32>
    %142 = arith.maximumf %140, %141 : vector<8x32xf32>
    %143 = arith.addf %14, %142 : vector<8x32xf32>
    %cst_60 = arith.constant dense<0.000000e+00> : vector<8x32xf32>
    %144 = tpu.matmul %1, %143, %cst_60 {dimension_numbers = #tpu.dot_dimension_numbers<[1], [0], [0], [1], [0, 0, 1, 1], [], []>} : vector<8x8xf32>, vector<8x32xf32>, vector<8x32xf32> -> vector<8x32xf32>
    %c304 = arith.constant 304 : index
    %c0_61 = arith.constant 0 : index
    %145 = vector.load %arg2[%c304, %c0_61] : memref<1368x32xf32, #tpu.memory_space<vmem>>, vector<32x32xf32>
    %cst_62 = arith.constant dense<0.000000e+00> : vector<8x32xf32>
    %146 = tpu.matmul %144, %145, %cst_62 {dimension_numbers = #tpu.dot_dimension_numbers<[1], [0], [0], [1], [0, 0, 1, 1], [], []>} : vector<8x32xf32>, vector<32x32xf32>, vector<8x32xf32> -> vector<8x32xf32>
    %c336 = arith.constant 336 : index
    %c0_63 = arith.constant 0 : index
    %147 = vector.load %arg2[%c336, %c0_63] : memref<1368x32xf32, #tpu.memory_space<vmem>>, vector<1x32xf32>
    %148 = vector.broadcast %147 : vector<1x32xf32> to vector<8x32xf32>
    %149 = arith.addf %146, %148 : vector<8x32xf32>
    %cst_64 = arith.constant dense<0.000000e+00> : vector<32xf32>
    %150 = vector.multi_reduction <add>, %149, %cst_64 [0] : vector<8x32xf32> to vector<32xf32>
    %151 = vector.shape_cast %150 : vector<32xf32> to vector<1x32xf32>
    %cst_65 = arith.constant 1.250000e-01 : f32
    %152 = vector.broadcast %cst_65 : f32 to vector<1x32xf32>
    %153 = arith.mulf %151, %152 : vector<1x32xf32>
    %154 = arith.mulf %149, %149 : vector<8x32xf32>
    %cst_66 = arith.constant dense<0.000000e+00> : vector<32xf32>
    %155 = vector.multi_reduction <add>, %154, %cst_66 [0] : vector<8x32xf32> to vector<32xf32>
    %156 = vector.shape_cast %155 : vector<32xf32> to vector<1x32xf32>
    %cst_67 = arith.constant 1.250000e-01 : f32
    %157 = vector.broadcast %cst_67 : f32 to vector<1x32xf32>
    %158 = arith.mulf %156, %157 : vector<1x32xf32>
    %159 = arith.mulf %153, %153 : vector<1x32xf32>
    %160 = arith.subf %158, %159 : vector<1x32xf32>
    %161 = vector.broadcast %153 : vector<1x32xf32> to vector<8x32xf32>
    %162 = arith.subf %149, %161 : vector<8x32xf32>
    %cst_68 = arith.constant 9.99999974E-6 : f32
    %163 = vector.broadcast %cst_68 : f32 to vector<1x32xf32>
    %164 = arith.addf %160, %163 : vector<1x32xf32>
    %165 = math.rsqrt %164 : vector<1x32xf32>
    %166 = vector.broadcast %165 : vector<1x32xf32> to vector<8x32xf32>
    %167 = arith.mulf %162, %166 : vector<8x32xf32>
    %c344 = arith.constant 344 : index
    %c0_69 = arith.constant 0 : index
    %168 = vector.load %arg2[%c344, %c0_69] : memref<1368x32xf32, #tpu.memory_space<vmem>>, vector<1x32xf32>
    %169 = vector.broadcast %168 : vector<1x32xf32> to vector<8x32xf32>
    %170 = arith.mulf %167, %169 : vector<8x32xf32>
    %c352 = arith.constant 352 : index
    %c0_70 = arith.constant 0 : index
    %171 = vector.load %arg2[%c352, %c0_70] : memref<1368x32xf32, #tpu.memory_space<vmem>>, vector<1x32xf32>
    %172 = vector.broadcast %171 : vector<1x32xf32> to vector<8x32xf32>
    %173 = arith.addf %170, %172 : vector<8x32xf32>
    %cst_71 = arith.constant 0.000000e+00 : f32
    %174 = vector.broadcast %cst_71 : f32 to vector<8x32xf32>
    %175 = arith.maximumf %173, %174 : vector<8x32xf32>
    %cst_72 = arith.constant dense<0.000000e+00> : vector<8x32xf32>
    %176 = tpu.matmul %1, %175, %cst_72 {dimension_numbers = #tpu.dot_dimension_numbers<[1], [0], [0], [1], [0, 0, 1, 1], [], []>} : vector<8x8xf32>, vector<8x32xf32>, vector<8x32xf32> -> vector<8x32xf32>
    %c360 = arith.constant 360 : index
    %c0_73 = arith.constant 0 : index
    %177 = vector.load %arg2[%c360, %c0_73] : memref<1368x32xf32, #tpu.memory_space<vmem>>, vector<32x32xf32>
    %cst_74 = arith.constant dense<0.000000e+00> : vector<8x32xf32>
    %178 = tpu.matmul %176, %177, %cst_74 {dimension_numbers = #tpu.dot_dimension_numbers<[1], [0], [0], [1], [0, 0, 1, 1], [], []>} : vector<8x32xf32>, vector<32x32xf32>, vector<8x32xf32> -> vector<8x32xf32>
    %c392 = arith.constant 392 : index
    %c0_75 = arith.constant 0 : index
    %179 = vector.load %arg2[%c392, %c0_75] : memref<1368x32xf32, #tpu.memory_space<vmem>>, vector<1x32xf32>
    %180 = vector.broadcast %179 : vector<1x32xf32> to vector<8x32xf32>
    %181 = arith.addf %178, %180 : vector<8x32xf32>
    %cst_76 = arith.constant dense<0.000000e+00> : vector<32xf32>
    %182 = vector.multi_reduction <add>, %181, %cst_76 [0] : vector<8x32xf32> to vector<32xf32>
    %183 = vector.shape_cast %182 : vector<32xf32> to vector<1x32xf32>
    %cst_77 = arith.constant 1.250000e-01 : f32
    %184 = vector.broadcast %cst_77 : f32 to vector<1x32xf32>
    %185 = arith.mulf %183, %184 : vector<1x32xf32>
    %186 = arith.mulf %181, %181 : vector<8x32xf32>
    %cst_78 = arith.constant dense<0.000000e+00> : vector<32xf32>
    %187 = vector.multi_reduction <add>, %186, %cst_78 [0] : vector<8x32xf32> to vector<32xf32>
    %188 = vector.shape_cast %187 : vector<32xf32> to vector<1x32xf32>
    %cst_79 = arith.constant 1.250000e-01 : f32
    %189 = vector.broadcast %cst_79 : f32 to vector<1x32xf32>
    %190 = arith.mulf %188, %189 : vector<1x32xf32>
    %191 = arith.mulf %185, %185 : vector<1x32xf32>
    %192 = arith.subf %190, %191 : vector<1x32xf32>
    %193 = vector.broadcast %185 : vector<1x32xf32> to vector<8x32xf32>
    %194 = arith.subf %181, %193 : vector<8x32xf32>
    %cst_80 = arith.constant 9.99999974E-6 : f32
    %195 = vector.broadcast %cst_80 : f32 to vector<1x32xf32>
    %196 = arith.addf %192, %195 : vector<1x32xf32>
    %197 = math.rsqrt %196 : vector<1x32xf32>
    %198 = vector.broadcast %197 : vector<1x32xf32> to vector<8x32xf32>
    %199 = arith.mulf %194, %198 : vector<8x32xf32>
    %c400 = arith.constant 400 : index
    %c0_81 = arith.constant 0 : index
    %200 = vector.load %arg2[%c400, %c0_81] : memref<1368x32xf32, #tpu.memory_space<vmem>>, vector<1x32xf32>
    %201 = vector.broadcast %200 : vector<1x32xf32> to vector<8x32xf32>
    %202 = arith.mulf %199, %201 : vector<8x32xf32>
    %c408 = arith.constant 408 : index
    %c0_82 = arith.constant 0 : index
    %203 = vector.load %arg2[%c408, %c0_82] : memref<1368x32xf32, #tpu.memory_space<vmem>>, vector<1x32xf32>
    %204 = vector.broadcast %203 : vector<1x32xf32> to vector<8x32xf32>
    %205 = arith.addf %202, %204 : vector<8x32xf32>
    %cst_83 = arith.constant 0.000000e+00 : f32
    %206 = vector.broadcast %cst_83 : f32 to vector<8x32xf32>
    %207 = arith.maximumf %205, %206 : vector<8x32xf32>
    %cst_84 = arith.constant dense<0.000000e+00> : vector<8x32xf32>
    %208 = tpu.matmul %1, %207, %cst_84 {dimension_numbers = #tpu.dot_dimension_numbers<[1], [0], [0], [1], [0, 0, 1, 1], [], []>} : vector<8x8xf32>, vector<8x32xf32>, vector<8x32xf32> -> vector<8x32xf32>
    %c416 = arith.constant 416 : index
    %c0_85 = arith.constant 0 : index
    %209 = vector.load %arg2[%c416, %c0_85] : memref<1368x32xf32, #tpu.memory_space<vmem>>, vector<32x32xf32>
    %cst_86 = arith.constant dense<0.000000e+00> : vector<8x32xf32>
    %210 = tpu.matmul %208, %209, %cst_86 {dimension_numbers = #tpu.dot_dimension_numbers<[1], [0], [0], [1], [0, 0, 1, 1], [], []>} : vector<8x32xf32>, vector<32x32xf32>, vector<8x32xf32> -> vector<8x32xf32>
    %c448 = arith.constant 448 : index
    %c0_87 = arith.constant 0 : index
    %211 = vector.load %arg2[%c448, %c0_87] : memref<1368x32xf32, #tpu.memory_space<vmem>>, vector<1x32xf32>
    %212 = vector.broadcast %211 : vector<1x32xf32> to vector<8x32xf32>
    %213 = arith.addf %210, %212 : vector<8x32xf32>
    %cst_88 = arith.constant dense<0.000000e+00> : vector<32xf32>
    %214 = vector.multi_reduction <add>, %213, %cst_88 [0] : vector<8x32xf32> to vector<32xf32>
    %215 = vector.shape_cast %214 : vector<32xf32> to vector<1x32xf32>
    %cst_89 = arith.constant 1.250000e-01 : f32
    %216 = vector.broadcast %cst_89 : f32 to vector<1x32xf32>
    %217 = arith.mulf %215, %216 : vector<1x32xf32>
    %218 = arith.mulf %213, %213 : vector<8x32xf32>
    %cst_90 = arith.constant dense<0.000000e+00> : vector<32xf32>
    %219 = vector.multi_reduction <add>, %218, %cst_90 [0] : vector<8x32xf32> to vector<32xf32>
    %220 = vector.shape_cast %219 : vector<32xf32> to vector<1x32xf32>
    %cst_91 = arith.constant 1.250000e-01 : f32
    %221 = vector.broadcast %cst_91 : f32 to vector<1x32xf32>
    %222 = arith.mulf %220, %221 : vector<1x32xf32>
    %223 = arith.mulf %217, %217 : vector<1x32xf32>
    %224 = arith.subf %222, %223 : vector<1x32xf32>
    %225 = vector.broadcast %217 : vector<1x32xf32> to vector<8x32xf32>
    %226 = arith.subf %213, %225 : vector<8x32xf32>
    %cst_92 = arith.constant 9.99999974E-6 : f32
    %227 = vector.broadcast %cst_92 : f32 to vector<1x32xf32>
    %228 = arith.addf %224, %227 : vector<1x32xf32>
    %229 = math.rsqrt %228 : vector<1x32xf32>
    %230 = vector.broadcast %229 : vector<1x32xf32> to vector<8x32xf32>
    %231 = arith.mulf %226, %230 : vector<8x32xf32>
    %c456 = arith.constant 456 : index
    %c0_93 = arith.constant 0 : index
    %232 = vector.load %arg2[%c456, %c0_93] : memref<1368x32xf32, #tpu.memory_space<vmem>>, vector<1x32xf32>
    %233 = vector.broadcast %232 : vector<1x32xf32> to vector<8x32xf32>
    %234 = arith.mulf %231, %233 : vector<8x32xf32>
    %c464 = arith.constant 464 : index
    %c0_94 = arith.constant 0 : index
    %235 = vector.load %arg2[%c464, %c0_94] : memref<1368x32xf32, #tpu.memory_space<vmem>>, vector<1x32xf32>
    %236 = vector.broadcast %235 : vector<1x32xf32> to vector<8x32xf32>
    %237 = arith.addf %234, %236 : vector<8x32xf32>
    %cst_95 = arith.constant 0.000000e+00 : f32
    %238 = vector.broadcast %cst_95 : f32 to vector<8x32xf32>
    %239 = arith.maximumf %237, %238 : vector<8x32xf32>
    %cst_96 = arith.constant dense<0.000000e+00> : vector<8x32xf32>
    %240 = tpu.matmul %1, %239, %cst_96 {dimension_numbers = #tpu.dot_dimension_numbers<[1], [0], [0], [1], [0, 0, 1, 1], [], []>} : vector<8x8xf32>, vector<8x32xf32>, vector<8x32xf32> -> vector<8x32xf32>
    %c472 = arith.constant 472 : index
    %c0_97 = arith.constant 0 : index
    %241 = vector.load %arg2[%c472, %c0_97] : memref<1368x32xf32, #tpu.memory_space<vmem>>, vector<32x32xf32>
    %cst_98 = arith.constant dense<0.000000e+00> : vector<8x32xf32>
    %242 = tpu.matmul %240, %241, %cst_98 {dimension_numbers = #tpu.dot_dimension_numbers<[1], [0], [0], [1], [0, 0, 1, 1], [], []>} : vector<8x32xf32>, vector<32x32xf32>, vector<8x32xf32> -> vector<8x32xf32>
    %c504 = arith.constant 504 : index
    %c0_99 = arith.constant 0 : index
    %243 = vector.load %arg2[%c504, %c0_99] : memref<1368x32xf32, #tpu.memory_space<vmem>>, vector<1x32xf32>
    %244 = vector.broadcast %243 : vector<1x32xf32> to vector<8x32xf32>
    %245 = arith.addf %242, %244 : vector<8x32xf32>
    %cst_100 = arith.constant dense<0.000000e+00> : vector<32xf32>
    %246 = vector.multi_reduction <add>, %245, %cst_100 [0] : vector<8x32xf32> to vector<32xf32>
    %247 = vector.shape_cast %246 : vector<32xf32> to vector<1x32xf32>
    %cst_101 = arith.constant 1.250000e-01 : f32
    %248 = vector.broadcast %cst_101 : f32 to vector<1x32xf32>
    %249 = arith.mulf %247, %248 : vector<1x32xf32>
    %250 = arith.mulf %245, %245 : vector<8x32xf32>
    %cst_102 = arith.constant dense<0.000000e+00> : vector<32xf32>
    %251 = vector.multi_reduction <add>, %250, %cst_102 [0] : vector<8x32xf32> to vector<32xf32>
    %252 = vector.shape_cast %251 : vector<32xf32> to vector<1x32xf32>
    %cst_103 = arith.constant 1.250000e-01 : f32
    %253 = vector.broadcast %cst_103 : f32 to vector<1x32xf32>
    %254 = arith.mulf %252, %253 : vector<1x32xf32>
    %255 = arith.mulf %249, %249 : vector<1x32xf32>
    %256 = arith.subf %254, %255 : vector<1x32xf32>
    %257 = vector.broadcast %249 : vector<1x32xf32> to vector<8x32xf32>
    %258 = arith.subf %245, %257 : vector<8x32xf32>
    %cst_104 = arith.constant 9.99999974E-6 : f32
    %259 = vector.broadcast %cst_104 : f32 to vector<1x32xf32>
    %260 = arith.addf %256, %259 : vector<1x32xf32>
    %261 = math.rsqrt %260 : vector<1x32xf32>
    %262 = vector.broadcast %261 : vector<1x32xf32> to vector<8x32xf32>
    %263 = arith.mulf %258, %262 : vector<8x32xf32>
    %c512 = arith.constant 512 : index
    %c0_105 = arith.constant 0 : index
    %264 = vector.load %arg2[%c512, %c0_105] : memref<1368x32xf32, #tpu.memory_space<vmem>>, vector<1x32xf32>
    %265 = vector.broadcast %264 : vector<1x32xf32> to vector<8x32xf32>
    %266 = arith.mulf %263, %265 : vector<8x32xf32>
    %c520 = arith.constant 520 : index
    %c0_106 = arith.constant 0 : index
    %267 = vector.load %arg2[%c520, %c0_106] : memref<1368x32xf32, #tpu.memory_space<vmem>>, vector<1x32xf32>
    %268 = vector.broadcast %267 : vector<1x32xf32> to vector<8x32xf32>
    %269 = arith.addf %266, %268 : vector<8x32xf32>
    %cst_107 = arith.constant 0.000000e+00 : f32
    %270 = vector.broadcast %cst_107 : f32 to vector<8x32xf32>
    %271 = arith.maximumf %269, %270 : vector<8x32xf32>
    %272 = arith.addf %143, %271 : vector<8x32xf32>
    %cst_108 = arith.constant dense<0.000000e+00> : vector<8x32xf32>
    %273 = tpu.matmul %1, %272, %cst_108 {dimension_numbers = #tpu.dot_dimension_numbers<[1], [0], [0], [1], [0, 0, 1, 1], [], []>} : vector<8x8xf32>, vector<8x32xf32>, vector<8x32xf32> -> vector<8x32xf32>
    %c528 = arith.constant 528 : index
    %c0_109 = arith.constant 0 : index
    %274 = vector.load %arg2[%c528, %c0_109] : memref<1368x32xf32, #tpu.memory_space<vmem>>, vector<32x32xf32>
    %cst_110 = arith.constant dense<0.000000e+00> : vector<8x32xf32>
    %275 = tpu.matmul %273, %274, %cst_110 {dimension_numbers = #tpu.dot_dimension_numbers<[1], [0], [0], [1], [0, 0, 1, 1], [], []>} : vector<8x32xf32>, vector<32x32xf32>, vector<8x32xf32> -> vector<8x32xf32>
    %c560 = arith.constant 560 : index
    %c0_111 = arith.constant 0 : index
    %276 = vector.load %arg2[%c560, %c0_111] : memref<1368x32xf32, #tpu.memory_space<vmem>>, vector<1x32xf32>
    %277 = vector.broadcast %276 : vector<1x32xf32> to vector<8x32xf32>
    %278 = arith.addf %275, %277 : vector<8x32xf32>
    %cst_112 = arith.constant dense<0.000000e+00> : vector<32xf32>
    %279 = vector.multi_reduction <add>, %278, %cst_112 [0] : vector<8x32xf32> to vector<32xf32>
    %280 = vector.shape_cast %279 : vector<32xf32> to vector<1x32xf32>
    %cst_113 = arith.constant 1.250000e-01 : f32
    %281 = vector.broadcast %cst_113 : f32 to vector<1x32xf32>
    %282 = arith.mulf %280, %281 : vector<1x32xf32>
    %283 = arith.mulf %278, %278 : vector<8x32xf32>
    %cst_114 = arith.constant dense<0.000000e+00> : vector<32xf32>
    %284 = vector.multi_reduction <add>, %283, %cst_114 [0] : vector<8x32xf32> to vector<32xf32>
    %285 = vector.shape_cast %284 : vector<32xf32> to vector<1x32xf32>
    %cst_115 = arith.constant 1.250000e-01 : f32
    %286 = vector.broadcast %cst_115 : f32 to vector<1x32xf32>
    %287 = arith.mulf %285, %286 : vector<1x32xf32>
    %288 = arith.mulf %282, %282 : vector<1x32xf32>
    %289 = arith.subf %287, %288 : vector<1x32xf32>
    %290 = vector.broadcast %282 : vector<1x32xf32> to vector<8x32xf32>
    %291 = arith.subf %278, %290 : vector<8x32xf32>
    %cst_116 = arith.constant 9.99999974E-6 : f32
    %292 = vector.broadcast %cst_116 : f32 to vector<1x32xf32>
    %293 = arith.addf %289, %292 : vector<1x32xf32>
    %294 = math.rsqrt %293 : vector<1x32xf32>
    %295 = vector.broadcast %294 : vector<1x32xf32> to vector<8x32xf32>
    %296 = arith.mulf %291, %295 : vector<8x32xf32>
    %c568 = arith.constant 568 : index
    %c0_117 = arith.constant 0 : index
    %297 = vector.load %arg2[%c568, %c0_117] : memref<1368x32xf32, #tpu.memory_space<vmem>>, vector<1x32xf32>
    %298 = vector.broadcast %297 : vector<1x32xf32> to vector<8x32xf32>
    %299 = arith.mulf %296, %298 : vector<8x32xf32>
    %c576 = arith.constant 576 : index
    %c0_118 = arith.constant 0 : index
    %300 = vector.load %arg2[%c576, %c0_118] : memref<1368x32xf32, #tpu.memory_space<vmem>>, vector<1x32xf32>
    %301 = vector.broadcast %300 : vector<1x32xf32> to vector<8x32xf32>
    %302 = arith.addf %299, %301 : vector<8x32xf32>
    %cst_119 = arith.constant 0.000000e+00 : f32
    %303 = vector.broadcast %cst_119 : f32 to vector<8x32xf32>
    %304 = arith.maximumf %302, %303 : vector<8x32xf32>
    %cst_120 = arith.constant dense<0.000000e+00> : vector<8x32xf32>
    %305 = tpu.matmul %1, %304, %cst_120 {dimension_numbers = #tpu.dot_dimension_numbers<[1], [0], [0], [1], [0, 0, 1, 1], [], []>} : vector<8x8xf32>, vector<8x32xf32>, vector<8x32xf32> -> vector<8x32xf32>
    %c584 = arith.constant 584 : index
    %c0_121 = arith.constant 0 : index
    %306 = vector.load %arg2[%c584, %c0_121] : memref<1368x32xf32, #tpu.memory_space<vmem>>, vector<32x32xf32>
    %cst_122 = arith.constant dense<0.000000e+00> : vector<8x32xf32>
    %307 = tpu.matmul %305, %306, %cst_122 {dimension_numbers = #tpu.dot_dimension_numbers<[1], [0], [0], [1], [0, 0, 1, 1], [], []>} : vector<8x32xf32>, vector<32x32xf32>, vector<8x32xf32> -> vector<8x32xf32>
    %c616 = arith.constant 616 : index
    %c0_123 = arith.constant 0 : index
    %308 = vector.load %arg2[%c616, %c0_123] : memref<1368x32xf32, #tpu.memory_space<vmem>>, vector<1x32xf32>
    %309 = vector.broadcast %308 : vector<1x32xf32> to vector<8x32xf32>
    %310 = arith.addf %307, %309 : vector<8x32xf32>
    %cst_124 = arith.constant dense<0.000000e+00> : vector<32xf32>
    %311 = vector.multi_reduction <add>, %310, %cst_124 [0] : vector<8x32xf32> to vector<32xf32>
    %312 = vector.shape_cast %311 : vector<32xf32> to vector<1x32xf32>
    %cst_125 = arith.constant 1.250000e-01 : f32
    %313 = vector.broadcast %cst_125 : f32 to vector<1x32xf32>
    %314 = arith.mulf %312, %313 : vector<1x32xf32>
    %315 = arith.mulf %310, %310 : vector<8x32xf32>
    %cst_126 = arith.constant dense<0.000000e+00> : vector<32xf32>
    %316 = vector.multi_reduction <add>, %315, %cst_126 [0] : vector<8x32xf32> to vector<32xf32>
    %317 = vector.shape_cast %316 : vector<32xf32> to vector<1x32xf32>
    %cst_127 = arith.constant 1.250000e-01 : f32
    %318 = vector.broadcast %cst_127 : f32 to vector<1x32xf32>
    %319 = arith.mulf %317, %318 : vector<1x32xf32>
    %320 = arith.mulf %314, %314 : vector<1x32xf32>
    %321 = arith.subf %319, %320 : vector<1x32xf32>
    %322 = vector.broadcast %314 : vector<1x32xf32> to vector<8x32xf32>
    %323 = arith.subf %310, %322 : vector<8x32xf32>
    %cst_128 = arith.constant 9.99999974E-6 : f32
    %324 = vector.broadcast %cst_128 : f32 to vector<1x32xf32>
    %325 = arith.addf %321, %324 : vector<1x32xf32>
    %326 = math.rsqrt %325 : vector<1x32xf32>
    %327 = vector.broadcast %326 : vector<1x32xf32> to vector<8x32xf32>
    %328 = arith.mulf %323, %327 : vector<8x32xf32>
    %c624 = arith.constant 624 : index
    %c0_129 = arith.constant 0 : index
    %329 = vector.load %arg2[%c624, %c0_129] : memref<1368x32xf32, #tpu.memory_space<vmem>>, vector<1x32xf32>
    %330 = vector.broadcast %329 : vector<1x32xf32> to vector<8x32xf32>
    %331 = arith.mulf %328, %330 : vector<8x32xf32>
    %c632 = arith.constant 632 : index
    %c0_130 = arith.constant 0 : index
    %332 = vector.load %arg2[%c632, %c0_130] : memref<1368x32xf32, #tpu.memory_space<vmem>>, vector<1x32xf32>
    %333 = vector.broadcast %332 : vector<1x32xf32> to vector<8x32xf32>
    %334 = arith.addf %331, %333 : vector<8x32xf32>
    %cst_131 = arith.constant 0.000000e+00 : f32
    %335 = vector.broadcast %cst_131 : f32 to vector<8x32xf32>
    %336 = arith.maximumf %334, %335 : vector<8x32xf32>
    %cst_132 = arith.constant dense<0.000000e+00> : vector<8x32xf32>
    %337 = tpu.matmul %1, %336, %cst_132 {dimension_numbers = #tpu.dot_dimension_numbers<[1], [0], [0], [1], [0, 0, 1, 1], [], []>} : vector<8x8xf32>, vector<8x32xf32>, vector<8x32xf32> -> vector<8x32xf32>
    %c640 = arith.constant 640 : index
    %c0_133 = arith.constant 0 : index
    %338 = vector.load %arg2[%c640, %c0_133] : memref<1368x32xf32, #tpu.memory_space<vmem>>, vector<32x32xf32>
    %cst_134 = arith.constant dense<0.000000e+00> : vector<8x32xf32>
    %339 = tpu.matmul %337, %338, %cst_134 {dimension_numbers = #tpu.dot_dimension_numbers<[1], [0], [0], [1], [0, 0, 1, 1], [], []>} : vector<8x32xf32>, vector<32x32xf32>, vector<8x32xf32> -> vector<8x32xf32>
    %c672 = arith.constant 672 : index
    %c0_135 = arith.constant 0 : index
    %340 = vector.load %arg2[%c672, %c0_135] : memref<1368x32xf32, #tpu.memory_space<vmem>>, vector<1x32xf32>
    %341 = vector.broadcast %340 : vector<1x32xf32> to vector<8x32xf32>
    %342 = arith.addf %339, %341 : vector<8x32xf32>
    %cst_136 = arith.constant dense<0.000000e+00> : vector<32xf32>
    %343 = vector.multi_reduction <add>, %342, %cst_136 [0] : vector<8x32xf32> to vector<32xf32>
    %344 = vector.shape_cast %343 : vector<32xf32> to vector<1x32xf32>
    %cst_137 = arith.constant 1.250000e-01 : f32
    %345 = vector.broadcast %cst_137 : f32 to vector<1x32xf32>
    %346 = arith.mulf %344, %345 : vector<1x32xf32>
    %347 = arith.mulf %342, %342 : vector<8x32xf32>
    %cst_138 = arith.constant dense<0.000000e+00> : vector<32xf32>
    %348 = vector.multi_reduction <add>, %347, %cst_138 [0] : vector<8x32xf32> to vector<32xf32>
    %349 = vector.shape_cast %348 : vector<32xf32> to vector<1x32xf32>
    %cst_139 = arith.constant 1.250000e-01 : f32
    %350 = vector.broadcast %cst_139 : f32 to vector<1x32xf32>
    %351 = arith.mulf %349, %350 : vector<1x32xf32>
    %352 = arith.mulf %346, %346 : vector<1x32xf32>
    %353 = arith.subf %351, %352 : vector<1x32xf32>
    %354 = vector.broadcast %346 : vector<1x32xf32> to vector<8x32xf32>
    %355 = arith.subf %342, %354 : vector<8x32xf32>
    %cst_140 = arith.constant 9.99999974E-6 : f32
    %356 = vector.broadcast %cst_140 : f32 to vector<1x32xf32>
    %357 = arith.addf %353, %356 : vector<1x32xf32>
    %358 = math.rsqrt %357 : vector<1x32xf32>
    %359 = vector.broadcast %358 : vector<1x32xf32> to vector<8x32xf32>
    %360 = arith.mulf %355, %359 : vector<8x32xf32>
    %c680 = arith.constant 680 : index
    %c0_141 = arith.constant 0 : index
    %361 = vector.load %arg2[%c680, %c0_141] : memref<1368x32xf32, #tpu.memory_space<vmem>>, vector<1x32xf32>
    %362 = vector.broadcast %361 : vector<1x32xf32> to vector<8x32xf32>
    %363 = arith.mulf %360, %362 : vector<8x32xf32>
    %c688 = arith.constant 688 : index
    %c0_142 = arith.constant 0 : index
    %364 = vector.load %arg2[%c688, %c0_142] : memref<1368x32xf32, #tpu.memory_space<vmem>>, vector<1x32xf32>
    %365 = vector.broadcast %364 : vector<1x32xf32> to vector<8x32xf32>
    %366 = arith.addf %363, %365 : vector<8x32xf32>
    %cst_143 = arith.constant 0.000000e+00 : f32
    %367 = vector.broadcast %cst_143 : f32 to vector<8x32xf32>
    %368 = arith.maximumf %366, %367 : vector<8x32xf32>
    %cst_144 = arith.constant dense<0.000000e+00> : vector<8x32xf32>
    %369 = tpu.matmul %1, %368, %cst_144 {dimension_numbers = #tpu.dot_dimension_numbers<[1], [0], [0], [1], [0, 0, 1, 1], [], []>} : vector<8x8xf32>, vector<8x32xf32>, vector<8x32xf32> -> vector<8x32xf32>
    %c696 = arith.constant 696 : index
    %c0_145 = arith.constant 0 : index
    %370 = vector.load %arg2[%c696, %c0_145] : memref<1368x32xf32, #tpu.memory_space<vmem>>, vector<32x32xf32>
    %cst_146 = arith.constant dense<0.000000e+00> : vector<8x32xf32>
    %371 = tpu.matmul %369, %370, %cst_146 {dimension_numbers = #tpu.dot_dimension_numbers<[1], [0], [0], [1], [0, 0, 1, 1], [], []>} : vector<8x32xf32>, vector<32x32xf32>, vector<8x32xf32> -> vector<8x32xf32>
    %c728 = arith.constant 728 : index
    %c0_147 = arith.constant 0 : index
    %372 = vector.load %arg2[%c728, %c0_147] : memref<1368x32xf32, #tpu.memory_space<vmem>>, vector<1x32xf32>
    %373 = vector.broadcast %372 : vector<1x32xf32> to vector<8x32xf32>
    %374 = arith.addf %371, %373 : vector<8x32xf32>
    %cst_148 = arith.constant dense<0.000000e+00> : vector<32xf32>
    %375 = vector.multi_reduction <add>, %374, %cst_148 [0] : vector<8x32xf32> to vector<32xf32>
    %376 = vector.shape_cast %375 : vector<32xf32> to vector<1x32xf32>
    %cst_149 = arith.constant 1.250000e-01 : f32
    %377 = vector.broadcast %cst_149 : f32 to vector<1x32xf32>
    %378 = arith.mulf %376, %377 : vector<1x32xf32>
    %379 = arith.mulf %374, %374 : vector<8x32xf32>
    %cst_150 = arith.constant dense<0.000000e+00> : vector<32xf32>
    %380 = vector.multi_reduction <add>, %379, %cst_150 [0] : vector<8x32xf32> to vector<32xf32>
    %381 = vector.shape_cast %380 : vector<32xf32> to vector<1x32xf32>
    %cst_151 = arith.constant 1.250000e-01 : f32
    %382 = vector.broadcast %cst_151 : f32 to vector<1x32xf32>
    %383 = arith.mulf %381, %382 : vector<1x32xf32>
    %384 = arith.mulf %378, %378 : vector<1x32xf32>
    %385 = arith.subf %383, %384 : vector<1x32xf32>
    %386 = vector.broadcast %378 : vector<1x32xf32> to vector<8x32xf32>
    %387 = arith.subf %374, %386 : vector<8x32xf32>
    %cst_152 = arith.constant 9.99999974E-6 : f32
    %388 = vector.broadcast %cst_152 : f32 to vector<1x32xf32>
    %389 = arith.addf %385, %388 : vector<1x32xf32>
    %390 = math.rsqrt %389 : vector<1x32xf32>
    %391 = vector.broadcast %390 : vector<1x32xf32> to vector<8x32xf32>
    %392 = arith.mulf %387, %391 : vector<8x32xf32>
    %c736 = arith.constant 736 : index
    %c0_153 = arith.constant 0 : index
    %393 = vector.load %arg2[%c736, %c0_153] : memref<1368x32xf32, #tpu.memory_space<vmem>>, vector<1x32xf32>
    %394 = vector.broadcast %393 : vector<1x32xf32> to vector<8x32xf32>
    %395 = arith.mulf %392, %394 : vector<8x32xf32>
    %c744 = arith.constant 744 : index
    %c0_154 = arith.constant 0 : index
    %396 = vector.load %arg2[%c744, %c0_154] : memref<1368x32xf32, #tpu.memory_space<vmem>>, vector<1x32xf32>
    %397 = vector.broadcast %396 : vector<1x32xf32> to vector<8x32xf32>
    %398 = arith.addf %395, %397 : vector<8x32xf32>
    %cst_155 = arith.constant 0.000000e+00 : f32
    %399 = vector.broadcast %cst_155 : f32 to vector<8x32xf32>
    %400 = arith.maximumf %398, %399 : vector<8x32xf32>
    %cst_156 = arith.constant dense<0.000000e+00> : vector<8x32xf32>
    %401 = tpu.matmul %1, %400, %cst_156 {dimension_numbers = #tpu.dot_dimension_numbers<[1], [0], [0], [1], [0, 0, 1, 1], [], []>} : vector<8x8xf32>, vector<8x32xf32>, vector<8x32xf32> -> vector<8x32xf32>
    %c752 = arith.constant 752 : index
    %c0_157 = arith.constant 0 : index
    %402 = vector.load %arg2[%c752, %c0_157] : memref<1368x32xf32, #tpu.memory_space<vmem>>, vector<32x32xf32>
    %cst_158 = arith.constant dense<0.000000e+00> : vector<8x32xf32>
    %403 = tpu.matmul %401, %402, %cst_158 {dimension_numbers = #tpu.dot_dimension_numbers<[1], [0], [0], [1], [0, 0, 1, 1], [], []>} : vector<8x32xf32>, vector<32x32xf32>, vector<8x32xf32> -> vector<8x32xf32>
    %c784 = arith.constant 784 : index
    %c0_159 = arith.constant 0 : index
    %404 = vector.load %arg2[%c784, %c0_159] : memref<1368x32xf32, #tpu.memory_space<vmem>>, vector<1x32xf32>
    %405 = vector.broadcast %404 : vector<1x32xf32> to vector<8x32xf32>
    %406 = arith.addf %403, %405 : vector<8x32xf32>
    %cst_160 = arith.constant dense<0.000000e+00> : vector<32xf32>
    %407 = vector.multi_reduction <add>, %406, %cst_160 [0] : vector<8x32xf32> to vector<32xf32>
    %408 = vector.shape_cast %407 : vector<32xf32> to vector<1x32xf32>
    %cst_161 = arith.constant 1.250000e-01 : f32
    %409 = vector.broadcast %cst_161 : f32 to vector<1x32xf32>
    %410 = arith.mulf %408, %409 : vector<1x32xf32>
    %411 = arith.mulf %406, %406 : vector<8x32xf32>
    %cst_162 = arith.constant dense<0.000000e+00> : vector<32xf32>
    %412 = vector.multi_reduction <add>, %411, %cst_162 [0] : vector<8x32xf32> to vector<32xf32>
    %413 = vector.shape_cast %412 : vector<32xf32> to vector<1x32xf32>
    %cst_163 = arith.constant 1.250000e-01 : f32
    %414 = vector.broadcast %cst_163 : f32 to vector<1x32xf32>
    %415 = arith.mulf %413, %414 : vector<1x32xf32>
    %416 = arith.mulf %410, %410 : vector<1x32xf32>
    %417 = arith.subf %415, %416 : vector<1x32xf32>
    %418 = vector.broadcast %410 : vector<1x32xf32> to vector<8x32xf32>
    %419 = arith.subf %406, %418 : vector<8x32xf32>
    %cst_164 = arith.constant 9.99999974E-6 : f32
    %420 = vector.broadcast %cst_164 : f32 to vector<1x32xf32>
    %421 = arith.addf %417, %420 : vector<1x32xf32>
    %422 = math.rsqrt %421 : vector<1x32xf32>
    %423 = vector.broadcast %422 : vector<1x32xf32> to vector<8x32xf32>
    %424 = arith.mulf %419, %423 : vector<8x32xf32>
    %c792 = arith.constant 792 : index
    %c0_165 = arith.constant 0 : index
    %425 = vector.load %arg2[%c792, %c0_165] : memref<1368x32xf32, #tpu.memory_space<vmem>>, vector<1x32xf32>
    %426 = vector.broadcast %425 : vector<1x32xf32> to vector<8x32xf32>
    %427 = arith.mulf %424, %426 : vector<8x32xf32>
    %c800 = arith.constant 800 : index
    %c0_166 = arith.constant 0 : index
    %428 = vector.load %arg2[%c800, %c0_166] : memref<1368x32xf32, #tpu.memory_space<vmem>>, vector<1x32xf32>
    %429 = vector.broadcast %428 : vector<1x32xf32> to vector<8x32xf32>
    %430 = arith.addf %427, %429 : vector<8x32xf32>
    %cst_167 = arith.constant 0.000000e+00 : f32
    %431 = vector.broadcast %cst_167 : f32 to vector<8x32xf32>
    %432 = arith.maximumf %430, %431 : vector<8x32xf32>
    %c200 = arith.constant 200 : index
    %c0_168 = arith.constant 0 : index
    %433 = vector.load %arg1[%c200, %c0_168] : memref<208x32xf32, #tpu.memory_space<vmem>>, vector<1x32xf32>
    %c1192 = arith.constant 1192 : index
    %c0_169 = arith.constant 0 : index
    %434 = vector.load %arg2[%c1192, %c0_169] : memref<1368x32xf32, #tpu.memory_space<vmem>>, vector<32x32xf32>
    %cst_170 = arith.constant dense<0.000000e+00> : vector<1x32xf32>
    %435 = tpu.matmul %433, %434, %cst_170 {dimension_numbers = #tpu.dot_dimension_numbers<[1], [0], [0], [1], [0, 0, 1, 1], [], []>} : vector<1x32xf32>, vector<32x32xf32>, vector<1x32xf32> -> vector<1x32xf32>
    %c1224 = arith.constant 1224 : index
    %c0_171 = arith.constant 0 : index
    %436 = vector.load %arg2[%c1224, %c0_171] : memref<1368x32xf32, #tpu.memory_space<vmem>>, vector<1x32xf32>
    %437 = arith.addf %435, %436 : vector<1x32xf32>
    %cst_172 = arith.constant 0.000000e+00 : f32
    %438 = vector.broadcast %cst_172 : f32 to vector<1x32xf32>
    %439 = arith.maximumf %437, %438 : vector<1x32xf32>
    %c1232 = arith.constant 1232 : index
    %c0_173 = arith.constant 0 : index
    %440 = vector.load %arg2[%c1232, %c0_173] : memref<1368x32xf32, #tpu.memory_space<vmem>>, vector<32x32xf32>
    %cst_174 = arith.constant dense<0.000000e+00> : vector<1x32xf32>
    %441 = tpu.matmul %439, %440, %cst_174 {dimension_numbers = #tpu.dot_dimension_numbers<[1], [0], [0], [1], [0, 0, 1, 1], [], []>} : vector<1x32xf32>, vector<32x32xf32>, vector<1x32xf32> -> vector<1x32xf32>
    %c1264 = arith.constant 1264 : index
    %c0_175 = arith.constant 0 : index
    %442 = vector.load %arg2[%c1264, %c0_175] : memref<1368x32xf32, #tpu.memory_space<vmem>>, vector<1x32xf32>
    %443 = arith.addf %441, %442 : vector<1x32xf32>
    %cst_176 = arith.constant 0.000000e+00 : f32
    %444 = vector.broadcast %cst_176 : f32 to vector<1x32xf32>
    %445 = arith.maximumf %443, %444 : vector<1x32xf32>
    %c1272 = arith.constant 1272 : index
    %c0_177 = arith.constant 0 : index
    %446 = vector.load %arg2[%c1272, %c0_177] : memref<1368x32xf32, #tpu.memory_space<vmem>>, vector<32x32xf32>
    %cst_178 = arith.constant dense<0.000000e+00> : vector<1x32xf32>
    %447 = tpu.matmul %445, %446, %cst_178 {dimension_numbers = #tpu.dot_dimension_numbers<[1], [0], [0], [1], [0, 0, 1, 1], [], []>} : vector<1x32xf32>, vector<32x32xf32>, vector<1x32xf32> -> vector<1x32xf32>
    %c1304 = arith.constant 1304 : index
    %c0_179 = arith.constant 0 : index
    %448 = vector.load %arg2[%c1304, %c0_179] : memref<1368x32xf32, #tpu.memory_space<vmem>>, vector<1x32xf32>
    %449 = arith.addf %447, %448 : vector<1x32xf32>
    %c0_180 = arith.constant 0 : index
    %c0_181 = arith.constant 0 : index
    %450 = vector.load %arg1[%c0_180, %c0_181] : memref<208x32xf32, #tpu.memory_space<vmem>>, vector<192x1xf32>
    %c808 = arith.constant 808 : index
    %c0_182 = arith.constant 0 : index
    %451 = vector.load %arg2[%c808, %c0_182] : memref<1368x32xf32, #tpu.memory_space<vmem>>, vector<1x1xf32>
    %cst_183 = arith.constant dense<0.000000e+00> : vector<192x1xf32>
    %452 = tpu.matmul %450, %451, %cst_183 {dimension_numbers = #tpu.dot_dimension_numbers<[1], [0], [0], [1], [0, 0, 1, 1], [], []>} : vector<192x1xf32>, vector<1x1xf32>, vector<192x1xf32> -> vector<192x1xf32>
    %cst_184 = arith.constant dense<0.000000e+00> : vector<192x1xf32>
    %453 = tpu.matmul %0, %452, %cst_184 {dimension_numbers = #tpu.dot_dimension_numbers<[1], [0], [0], [1], [0, 0, 1, 1], [], []>} : vector<192x192xf32>, vector<192x1xf32>, vector<192x1xf32> -> vector<192x1xf32>
    %c816 = arith.constant 816 : index
    %c0_185 = arith.constant 0 : index
    %454 = vector.load %arg2[%c816, %c0_185] : memref<1368x32xf32, #tpu.memory_space<vmem>>, vector<1x1xf32>
    %455 = vector.broadcast %454 : vector<1x1xf32> to vector<192x1xf32>
    %456 = arith.addf %453, %455 : vector<192x1xf32>
    %cst_186 = arith.constant dense<0.000000e+00> : vector<1xf32>
    %457 = vector.multi_reduction <add>, %456, %cst_186 [0] : vector<192x1xf32> to vector<1xf32>
    %458 = vector.shape_cast %457 : vector<1xf32> to vector<1x1xf32>
    %cst_187 = arith.constant 0.00520833349 : f32
    %459 = vector.broadcast %cst_187 : f32 to vector<1x1xf32>
    %460 = arith.mulf %458, %459 : vector<1x1xf32>
    %461 = arith.mulf %456, %456 : vector<192x1xf32>
    %cst_188 = arith.constant dense<0.000000e+00> : vector<1xf32>
    %462 = vector.multi_reduction <add>, %461, %cst_188 [0] : vector<192x1xf32> to vector<1xf32>
    %463 = vector.shape_cast %462 : vector<1xf32> to vector<1x1xf32>
    %cst_189 = arith.constant 0.00520833349 : f32
    %464 = vector.broadcast %cst_189 : f32 to vector<1x1xf32>
    %465 = arith.mulf %463, %464 : vector<1x1xf32>
    %466 = arith.mulf %460, %460 : vector<1x1xf32>
    %467 = arith.subf %465, %466 : vector<1x1xf32>
    %468 = vector.broadcast %460 : vector<1x1xf32> to vector<192x1xf32>
    %469 = arith.subf %456, %468 : vector<192x1xf32>
    %cst_190 = arith.constant 9.99999974E-6 : f32
    %470 = vector.broadcast %cst_190 : f32 to vector<1x1xf32>
    %471 = arith.addf %467, %470 : vector<1x1xf32>
    %472 = math.rsqrt %471 : vector<1x1xf32>
    %473 = vector.broadcast %472 : vector<1x1xf32> to vector<192x1xf32>
    %474 = arith.mulf %469, %473 : vector<192x1xf32>
    %c824 = arith.constant 824 : index
    %c0_191 = arith.constant 0 : index
    %475 = vector.load %arg2[%c824, %c0_191] : memref<1368x32xf32, #tpu.memory_space<vmem>>, vector<1x1xf32>
    %476 = vector.broadcast %475 : vector<1x1xf32> to vector<192x1xf32>
    %477 = arith.mulf %474, %476 : vector<192x1xf32>
    %c832 = arith.constant 832 : index
    %c0_192 = arith.constant 0 : index
    %478 = vector.load %arg2[%c832, %c0_192] : memref<1368x32xf32, #tpu.memory_space<vmem>>, vector<1x1xf32>
    %479 = vector.broadcast %478 : vector<1x1xf32> to vector<192x1xf32>
    %480 = arith.addf %477, %479 : vector<192x1xf32>
    %cst_193 = arith.constant 0.000000e+00 : f32
    %481 = vector.broadcast %cst_193 : f32 to vector<192x1xf32>
    %482 = arith.maximumf %480, %481 : vector<192x1xf32>
    %cst_194 = arith.constant dense<0.000000e+00> : vector<192x1xf32>
    %483 = tpu.matmul %0, %482, %cst_194 {dimension_numbers = #tpu.dot_dimension_numbers<[1], [0], [0], [1], [0, 0, 1, 1], [], []>} : vector<192x192xf32>, vector<192x1xf32>, vector<192x1xf32> -> vector<192x1xf32>
    %c840 = arith.constant 840 : index
    %c0_195 = arith.constant 0 : index
    %484 = vector.load %arg2[%c840, %c0_195] : memref<1368x32xf32, #tpu.memory_space<vmem>>, vector<1x4xf32>
    %cst_196 = arith.constant dense<0.000000e+00> : vector<192x4xf32>
    %485 = tpu.matmul %483, %484, %cst_196 {dimension_numbers = #tpu.dot_dimension_numbers<[1], [0], [0], [1], [0, 0, 1, 1], [], []>} : vector<192x1xf32>, vector<1x4xf32>, vector<192x4xf32> -> vector<192x4xf32>
    %c848 = arith.constant 848 : index
    %c0_197 = arith.constant 0 : index
    %486 = vector.load %arg2[%c848, %c0_197] : memref<1368x32xf32, #tpu.memory_space<vmem>>, vector<1x4xf32>
    %487 = vector.broadcast %486 : vector<1x4xf32> to vector<192x4xf32>
    %488 = arith.addf %485, %487 : vector<192x4xf32>
    %cst_198 = arith.constant dense<0.000000e+00> : vector<4xf32>
    %489 = vector.multi_reduction <add>, %488, %cst_198 [0] : vector<192x4xf32> to vector<4xf32>
    %490 = vector.shape_cast %489 : vector<4xf32> to vector<1x4xf32>
    %cst_199 = arith.constant 0.00520833349 : f32
    %491 = vector.broadcast %cst_199 : f32 to vector<1x4xf32>
    %492 = arith.mulf %490, %491 : vector<1x4xf32>
    %493 = arith.mulf %488, %488 : vector<192x4xf32>
    %cst_200 = arith.constant dense<0.000000e+00> : vector<4xf32>
    %494 = vector.multi_reduction <add>, %493, %cst_200 [0] : vector<192x4xf32> to vector<4xf32>
    %495 = vector.shape_cast %494 : vector<4xf32> to vector<1x4xf32>
    %cst_201 = arith.constant 0.00520833349 : f32
    %496 = vector.broadcast %cst_201 : f32 to vector<1x4xf32>
    %497 = arith.mulf %495, %496 : vector<1x4xf32>
    %498 = arith.mulf %492, %492 : vector<1x4xf32>
    %499 = arith.subf %497, %498 : vector<1x4xf32>
    %500 = vector.broadcast %492 : vector<1x4xf32> to vector<192x4xf32>
    %501 = arith.subf %488, %500 : vector<192x4xf32>
    %cst_202 = arith.constant 9.99999974E-6 : f32
    %502 = vector.broadcast %cst_202 : f32 to vector<1x4xf32>
    %503 = arith.addf %499, %502 : vector<1x4xf32>
    %504 = math.rsqrt %503 : vector<1x4xf32>
    %505 = vector.broadcast %504 : vector<1x4xf32> to vector<192x4xf32>
    %506 = arith.mulf %501, %505 : vector<192x4xf32>
    %c856 = arith.constant 856 : index
    %c0_203 = arith.constant 0 : index
    %507 = vector.load %arg2[%c856, %c0_203] : memref<1368x32xf32, #tpu.memory_space<vmem>>, vector<1x4xf32>
    %508 = vector.broadcast %507 : vector<1x4xf32> to vector<192x4xf32>
    %509 = arith.mulf %506, %508 : vector<192x4xf32>
    %c864 = arith.constant 864 : index
    %c0_204 = arith.constant 0 : index
    %510 = vector.load %arg2[%c864, %c0_204] : memref<1368x32xf32, #tpu.memory_space<vmem>>, vector<1x4xf32>
    %511 = vector.broadcast %510 : vector<1x4xf32> to vector<192x4xf32>
    %512 = arith.addf %509, %511 : vector<192x4xf32>
    %cst_205 = arith.constant 0.000000e+00 : f32
    %513 = vector.broadcast %cst_205 : f32 to vector<192x4xf32>
    %514 = arith.maximumf %512, %513 : vector<192x4xf32>
    %cst_206 = arith.constant dense<0.000000e+00> : vector<192x4xf32>
    %515 = tpu.matmul %0, %514, %cst_206 {dimension_numbers = #tpu.dot_dimension_numbers<[1], [0], [0], [1], [0, 0, 1, 1], [], []>} : vector<192x192xf32>, vector<192x4xf32>, vector<192x4xf32> -> vector<192x4xf32>
    %c872 = arith.constant 872 : index
    %c0_207 = arith.constant 0 : index
    %516 = vector.load %arg2[%c872, %c0_207] : memref<1368x32xf32, #tpu.memory_space<vmem>>, vector<4x4xf32>
    %cst_208 = arith.constant dense<0.000000e+00> : vector<192x4xf32>
    %517 = tpu.matmul %515, %516, %cst_208 {dimension_numbers = #tpu.dot_dimension_numbers<[1], [0], [0], [1], [0, 0, 1, 1], [], []>} : vector<192x4xf32>, vector<4x4xf32>, vector<192x4xf32> -> vector<192x4xf32>
    %c880 = arith.constant 880 : index
    %c0_209 = arith.constant 0 : index
    %518 = vector.load %arg2[%c880, %c0_209] : memref<1368x32xf32, #tpu.memory_space<vmem>>, vector<1x4xf32>
    %519 = vector.broadcast %518 : vector<1x4xf32> to vector<192x4xf32>
    %520 = arith.addf %517, %519 : vector<192x4xf32>
    %cst_210 = arith.constant dense<0.000000e+00> : vector<4xf32>
    %521 = vector.multi_reduction <add>, %520, %cst_210 [0] : vector<192x4xf32> to vector<4xf32>
    %522 = vector.shape_cast %521 : vector<4xf32> to vector<1x4xf32>
    %cst_211 = arith.constant 0.00520833349 : f32
    %523 = vector.broadcast %cst_211 : f32 to vector<1x4xf32>
    %524 = arith.mulf %522, %523 : vector<1x4xf32>
    %525 = arith.mulf %520, %520 : vector<192x4xf32>
    %cst_212 = arith.constant dense<0.000000e+00> : vector<4xf32>
    %526 = vector.multi_reduction <add>, %525, %cst_212 [0] : vector<192x4xf32> to vector<4xf32>
    %527 = vector.shape_cast %526 : vector<4xf32> to vector<1x4xf32>
    %cst_213 = arith.constant 0.00520833349 : f32
    %528 = vector.broadcast %cst_213 : f32 to vector<1x4xf32>
    %529 = arith.mulf %527, %528 : vector<1x4xf32>
    %530 = arith.mulf %524, %524 : vector<1x4xf32>
    %531 = arith.subf %529, %530 : vector<1x4xf32>
    %532 = vector.broadcast %524 : vector<1x4xf32> to vector<192x4xf32>
    %533 = arith.subf %520, %532 : vector<192x4xf32>
    %cst_214 = arith.constant 9.99999974E-6 : f32
    %534 = vector.broadcast %cst_214 : f32 to vector<1x4xf32>
    %535 = arith.addf %531, %534 : vector<1x4xf32>
    %536 = math.rsqrt %535 : vector<1x4xf32>
    %537 = vector.broadcast %536 : vector<1x4xf32> to vector<192x4xf32>
    %538 = arith.mulf %533, %537 : vector<192x4xf32>
    %c888 = arith.constant 888 : index
    %c0_215 = arith.constant 0 : index
    %539 = vector.load %arg2[%c888, %c0_215] : memref<1368x32xf32, #tpu.memory_space<vmem>>, vector<1x4xf32>
    %540 = vector.broadcast %539 : vector<1x4xf32> to vector<192x4xf32>
    %541 = arith.mulf %538, %540 : vector<192x4xf32>
    %c896 = arith.constant 896 : index
    %c0_216 = arith.constant 0 : index
    %542 = vector.load %arg2[%c896, %c0_216] : memref<1368x32xf32, #tpu.memory_space<vmem>>, vector<1x4xf32>
    %543 = vector.broadcast %542 : vector<1x4xf32> to vector<192x4xf32>
    %544 = arith.addf %541, %543 : vector<192x4xf32>
    %cst_217 = arith.constant 0.000000e+00 : f32
    %545 = vector.broadcast %cst_217 : f32 to vector<192x4xf32>
    %546 = arith.maximumf %544, %545 : vector<192x4xf32>
    %c904 = arith.constant 904 : index
    %c0_218 = arith.constant 0 : index
    %547 = vector.load %arg2[%c904, %c0_218] : memref<1368x32xf32, #tpu.memory_space<vmem>>, vector<4x12xf32>
    %cst_219 = arith.constant dense<0.000000e+00> : vector<192x12xf32>
    %548 = tpu.matmul %546, %547, %cst_219 {dimension_numbers = #tpu.dot_dimension_numbers<[1], [0], [0], [1], [0, 0, 1, 1], [], []>} : vector<192x4xf32>, vector<4x12xf32>, vector<192x12xf32> -> vector<192x12xf32>
    %549 = vector.extract_strided_slice %548 {offsets = [0, 0], sizes = [192, 4], strides = [1, 1]} : vector<192x12xf32> to vector<192x4xf32>
    %550 = vector.extract_strided_slice %548 {offsets = [0, 4], sizes = [192, 4], strides = [1, 1]} : vector<192x12xf32> to vector<192x4xf32>
    %551 = vector.extract_strided_slice %548 {offsets = [0, 8], sizes = [192, 4], strides = [1, 1]} : vector<192x12xf32> to vector<192x4xf32>
    %cst_220 = arith.constant 0.000000e+00 : f32
    %552 = vector.broadcast %cst_220 : f32 to vector<8x4xf32>
    %553 = vector.extract_strided_slice %549 {offsets = [0, 0], sizes = [184, 4], strides = [1, 1]} : vector<192x4xf32> to vector<184x4xf32>
    %554 = tpu.concatenate %552, %553 in 0 : vector<8x4xf32>, vector<184x4xf32> -> vector<192x4xf32>
    %555 = vector.extract_strided_slice %551 {offsets = [8, 0], sizes = [184, 4], strides = [1, 1]} : vector<192x4xf32> to vector<184x4xf32>
    %556 = tpu.concatenate %555, %552 in 0 : vector<184x4xf32>, vector<8x4xf32> -> vector<192x4xf32>
    %557 = arith.addf %550, %554 : vector<192x4xf32>
    %558 = arith.addf %557, %556 : vector<192x4xf32>
    %c912 = arith.constant 912 : index
    %c0_221 = arith.constant 0 : index
    %559 = vector.load %arg2[%c912, %c0_221] : memref<1368x32xf32, #tpu.memory_space<vmem>>, vector<1x4xf32>
    %560 = vector.broadcast %559 : vector<1x4xf32> to vector<192x4xf32>
    %561 = arith.addf %558, %560 : vector<192x4xf32>
    %c920 = arith.constant 920 : index
    %c0_222 = arith.constant 0 : index
    %562 = vector.load %arg2[%c920, %c0_222] : memref<1368x32xf32, #tpu.memory_space<vmem>>, vector<1x5xf32>
    %cst_223 = arith.constant dense<0.000000e+00> : vector<192x5xf32>
    %563 = tpu.matmul %450, %562, %cst_223 {dimension_numbers = #tpu.dot_dimension_numbers<[1], [0], [0], [1], [0, 0, 1, 1], [], []>} : vector<192x1xf32>, vector<1x5xf32>, vector<192x5xf32> -> vector<192x5xf32>
    %c928 = arith.constant 928 : index
    %c0_224 = arith.constant 0 : index
    %564 = vector.load %arg2[%c928, %c0_224] : memref<1368x32xf32, #tpu.memory_space<vmem>>, vector<4x5xf32>
    %cst_225 = arith.constant dense<0.000000e+00> : vector<192x5xf32>
    %565 = tpu.matmul %561, %564, %cst_225 {dimension_numbers = #tpu.dot_dimension_numbers<[1], [0], [0], [1], [0, 0, 1, 1], [], []>} : vector<192x4xf32>, vector<4x5xf32>, vector<192x5xf32> -> vector<192x5xf32>
    %566 = arith.addf %563, %565 : vector<192x5xf32>
    %cst_226 = arith.constant dense<0.000000e+00> : vector<192x5xf32>
    %567 = tpu.matmul %0, %566, %cst_226 {dimension_numbers = #tpu.dot_dimension_numbers<[1], [0], [0], [1], [0, 0, 1, 1], [], []>} : vector<192x192xf32>, vector<192x5xf32>, vector<192x5xf32> -> vector<192x5xf32>
    %c936 = arith.constant 936 : index
    %c0_227 = arith.constant 0 : index
    %568 = vector.load %arg2[%c936, %c0_227] : memref<1368x32xf32, #tpu.memory_space<vmem>>, vector<1x5xf32>
    %569 = vector.broadcast %568 : vector<1x5xf32> to vector<192x5xf32>
    %570 = arith.addf %567, %569 : vector<192x5xf32>
    %cst_228 = arith.constant dense<0.000000e+00> : vector<5xf32>
    %571 = vector.multi_reduction <add>, %570, %cst_228 [0] : vector<192x5xf32> to vector<5xf32>
    %572 = vector.shape_cast %571 : vector<5xf32> to vector<1x5xf32>
    %cst_229 = arith.constant 0.00520833349 : f32
    %573 = vector.broadcast %cst_229 : f32 to vector<1x5xf32>
    %574 = arith.mulf %572, %573 : vector<1x5xf32>
    %575 = arith.mulf %570, %570 : vector<192x5xf32>
    %cst_230 = arith.constant dense<0.000000e+00> : vector<5xf32>
    %576 = vector.multi_reduction <add>, %575, %cst_230 [0] : vector<192x5xf32> to vector<5xf32>
    %577 = vector.shape_cast %576 : vector<5xf32> to vector<1x5xf32>
    %cst_231 = arith.constant 0.00520833349 : f32
    %578 = vector.broadcast %cst_231 : f32 to vector<1x5xf32>
    %579 = arith.mulf %577, %578 : vector<1x5xf32>
    %580 = arith.mulf %574, %574 : vector<1x5xf32>
    %581 = arith.subf %579, %580 : vector<1x5xf32>
    %582 = vector.broadcast %574 : vector<1x5xf32> to vector<192x5xf32>
    %583 = arith.subf %570, %582 : vector<192x5xf32>
    %cst_232 = arith.constant 9.99999974E-6 : f32
    %584 = vector.broadcast %cst_232 : f32 to vector<1x5xf32>
    %585 = arith.addf %581, %584 : vector<1x5xf32>
    %586 = math.rsqrt %585 : vector<1x5xf32>
    %587 = vector.broadcast %586 : vector<1x5xf32> to vector<192x5xf32>
    %588 = arith.mulf %583, %587 : vector<192x5xf32>
    %c944 = arith.constant 944 : index
    %c0_233 = arith.constant 0 : index
    %589 = vector.load %arg2[%c944, %c0_233] : memref<1368x32xf32, #tpu.memory_space<vmem>>, vector<1x5xf32>
    %590 = vector.broadcast %589 : vector<1x5xf32> to vector<192x5xf32>
    %591 = arith.mulf %588, %590 : vector<192x5xf32>
    %c952 = arith.constant 952 : index
    %c0_234 = arith.constant 0 : index
    %592 = vector.load %arg2[%c952, %c0_234] : memref<1368x32xf32, #tpu.memory_space<vmem>>, vector<1x5xf32>
    %593 = vector.broadcast %592 : vector<1x5xf32> to vector<192x5xf32>
    %594 = arith.addf %591, %593 : vector<192x5xf32>
    %cst_235 = arith.constant 0.000000e+00 : f32
    %595 = vector.broadcast %cst_235 : f32 to vector<192x5xf32>
    %596 = arith.maximumf %594, %595 : vector<192x5xf32>
    %cst_236 = arith.constant dense<0.000000e+00> : vector<192x5xf32>
    %597 = tpu.matmul %0, %596, %cst_236 {dimension_numbers = #tpu.dot_dimension_numbers<[1], [0], [0], [1], [0, 0, 1, 1], [], []>} : vector<192x192xf32>, vector<192x5xf32>, vector<192x5xf32> -> vector<192x5xf32>
    %c960 = arith.constant 960 : index
    %c0_237 = arith.constant 0 : index
    %598 = vector.load %arg2[%c960, %c0_237] : memref<1368x32xf32, #tpu.memory_space<vmem>>, vector<5x5xf32>
    %cst_238 = arith.constant dense<0.000000e+00> : vector<192x5xf32>
    %599 = tpu.matmul %597, %598, %cst_238 {dimension_numbers = #tpu.dot_dimension_numbers<[1], [0], [0], [1], [0, 0, 1, 1], [], []>} : vector<192x5xf32>, vector<5x5xf32>, vector<192x5xf32> -> vector<192x5xf32>
    %c968 = arith.constant 968 : index
    %c0_239 = arith.constant 0 : index
    %600 = vector.load %arg2[%c968, %c0_239] : memref<1368x32xf32, #tpu.memory_space<vmem>>, vector<1x5xf32>
    %601 = vector.broadcast %600 : vector<1x5xf32> to vector<192x5xf32>
    %602 = arith.addf %599, %601 : vector<192x5xf32>
    %cst_240 = arith.constant dense<0.000000e+00> : vector<5xf32>
    %603 = vector.multi_reduction <add>, %602, %cst_240 [0] : vector<192x5xf32> to vector<5xf32>
    %604 = vector.shape_cast %603 : vector<5xf32> to vector<1x5xf32>
    %cst_241 = arith.constant 0.00520833349 : f32
    %605 = vector.broadcast %cst_241 : f32 to vector<1x5xf32>
    %606 = arith.mulf %604, %605 : vector<1x5xf32>
    %607 = arith.mulf %602, %602 : vector<192x5xf32>
    %cst_242 = arith.constant dense<0.000000e+00> : vector<5xf32>
    %608 = vector.multi_reduction <add>, %607, %cst_242 [0] : vector<192x5xf32> to vector<5xf32>
    %609 = vector.shape_cast %608 : vector<5xf32> to vector<1x5xf32>
    %cst_243 = arith.constant 0.00520833349 : f32
    %610 = vector.broadcast %cst_243 : f32 to vector<1x5xf32>
    %611 = arith.mulf %609, %610 : vector<1x5xf32>
    %612 = arith.mulf %606, %606 : vector<1x5xf32>
    %613 = arith.subf %611, %612 : vector<1x5xf32>
    %614 = vector.broadcast %606 : vector<1x5xf32> to vector<192x5xf32>
    %615 = arith.subf %602, %614 : vector<192x5xf32>
    %cst_244 = arith.constant 9.99999974E-6 : f32
    %616 = vector.broadcast %cst_244 : f32 to vector<1x5xf32>
    %617 = arith.addf %613, %616 : vector<1x5xf32>
    %618 = math.rsqrt %617 : vector<1x5xf32>
    %619 = vector.broadcast %618 : vector<1x5xf32> to vector<192x5xf32>
    %620 = arith.mulf %615, %619 : vector<192x5xf32>
    %c976 = arith.constant 976 : index
    %c0_245 = arith.constant 0 : index
    %621 = vector.load %arg2[%c976, %c0_245] : memref<1368x32xf32, #tpu.memory_space<vmem>>, vector<1x5xf32>
    %622 = vector.broadcast %621 : vector<1x5xf32> to vector<192x5xf32>
    %623 = arith.mulf %620, %622 : vector<192x5xf32>
    %c984 = arith.constant 984 : index
    %c0_246 = arith.constant 0 : index
    %624 = vector.load %arg2[%c984, %c0_246] : memref<1368x32xf32, #tpu.memory_space<vmem>>, vector<1x5xf32>
    %625 = vector.broadcast %624 : vector<1x5xf32> to vector<192x5xf32>
    %626 = arith.addf %623, %625 : vector<192x5xf32>
    %cst_247 = arith.constant 0.000000e+00 : f32
    %627 = vector.broadcast %cst_247 : f32 to vector<192x5xf32>
    %628 = arith.maximumf %626, %627 : vector<192x5xf32>
    %cst_248 = arith.constant dense<0.000000e+00> : vector<192x5xf32>
    %629 = tpu.matmul %0, %628, %cst_248 {dimension_numbers = #tpu.dot_dimension_numbers<[1], [0], [0], [1], [0, 0, 1, 1], [], []>} : vector<192x192xf32>, vector<192x5xf32>, vector<192x5xf32> -> vector<192x5xf32>
    %c992 = arith.constant 992 : index
    %c0_249 = arith.constant 0 : index
    %630 = vector.load %arg2[%c992, %c0_249] : memref<1368x32xf32, #tpu.memory_space<vmem>>, vector<5x5xf32>
    %cst_250 = arith.constant dense<0.000000e+00> : vector<192x5xf32>
    %631 = tpu.matmul %629, %630, %cst_250 {dimension_numbers = #tpu.dot_dimension_numbers<[1], [0], [0], [1], [0, 0, 1, 1], [], []>} : vector<192x5xf32>, vector<5x5xf32>, vector<192x5xf32> -> vector<192x5xf32>
    %c1000 = arith.constant 1000 : index
    %c0_251 = arith.constant 0 : index
    %632 = vector.load %arg2[%c1000, %c0_251] : memref<1368x32xf32, #tpu.memory_space<vmem>>, vector<1x5xf32>
    %633 = vector.broadcast %632 : vector<1x5xf32> to vector<192x5xf32>
    %634 = arith.addf %631, %633 : vector<192x5xf32>
    %cst_252 = arith.constant dense<0.000000e+00> : vector<5xf32>
    %635 = vector.multi_reduction <add>, %634, %cst_252 [0] : vector<192x5xf32> to vector<5xf32>
    %636 = vector.shape_cast %635 : vector<5xf32> to vector<1x5xf32>
    %cst_253 = arith.constant 0.00520833349 : f32
    %637 = vector.broadcast %cst_253 : f32 to vector<1x5xf32>
    %638 = arith.mulf %636, %637 : vector<1x5xf32>
    %639 = arith.mulf %634, %634 : vector<192x5xf32>
    %cst_254 = arith.constant dense<0.000000e+00> : vector<5xf32>
    %640 = vector.multi_reduction <add>, %639, %cst_254 [0] : vector<192x5xf32> to vector<5xf32>
    %641 = vector.shape_cast %640 : vector<5xf32> to vector<1x5xf32>
    %cst_255 = arith.constant 0.00520833349 : f32
    %642 = vector.broadcast %cst_255 : f32 to vector<1x5xf32>
    %643 = arith.mulf %641, %642 : vector<1x5xf32>
    %644 = arith.mulf %638, %638 : vector<1x5xf32>
    %645 = arith.subf %643, %644 : vector<1x5xf32>
    %646 = vector.broadcast %638 : vector<1x5xf32> to vector<192x5xf32>
    %647 = arith.subf %634, %646 : vector<192x5xf32>
    %cst_256 = arith.constant 9.99999974E-6 : f32
    %648 = vector.broadcast %cst_256 : f32 to vector<1x5xf32>
    %649 = arith.addf %645, %648 : vector<1x5xf32>
    %650 = math.rsqrt %649 : vector<1x5xf32>
    %651 = vector.broadcast %650 : vector<1x5xf32> to vector<192x5xf32>
    %652 = arith.mulf %647, %651 : vector<192x5xf32>
    %c1008 = arith.constant 1008 : index
    %c0_257 = arith.constant 0 : index
    %653 = vector.load %arg2[%c1008, %c0_257] : memref<1368x32xf32, #tpu.memory_space<vmem>>, vector<1x5xf32>
    %654 = vector.broadcast %653 : vector<1x5xf32> to vector<192x5xf32>
    %655 = arith.mulf %652, %654 : vector<192x5xf32>
    %c1016 = arith.constant 1016 : index
    %c0_258 = arith.constant 0 : index
    %656 = vector.load %arg2[%c1016, %c0_258] : memref<1368x32xf32, #tpu.memory_space<vmem>>, vector<1x5xf32>
    %657 = vector.broadcast %656 : vector<1x5xf32> to vector<192x5xf32>
    %658 = arith.addf %655, %657 : vector<192x5xf32>
    %cst_259 = arith.constant 0.000000e+00 : f32
    %659 = vector.broadcast %cst_259 : f32 to vector<192x5xf32>
    %660 = arith.maximumf %658, %659 : vector<192x5xf32>
    %c1024 = arith.constant 1024 : index
    %c0_260 = arith.constant 0 : index
    %661 = vector.load %arg2[%c1024, %c0_260] : memref<1368x32xf32, #tpu.memory_space<vmem>>, vector<5x15xf32>
    %cst_261 = arith.constant dense<0.000000e+00> : vector<192x15xf32>
    %662 = tpu.matmul %660, %661, %cst_261 {dimension_numbers = #tpu.dot_dimension_numbers<[1], [0], [0], [1], [0, 0, 1, 1], [], []>} : vector<192x5xf32>, vector<5x15xf32>, vector<192x15xf32> -> vector<192x15xf32>
    %663 = vector.extract_strided_slice %662 {offsets = [0, 0], sizes = [192, 5], strides = [1, 1]} : vector<192x15xf32> to vector<192x5xf32>
    %664 = vector.extract_strided_slice %662 {offsets = [0, 5], sizes = [192, 5], strides = [1, 1]} : vector<192x15xf32> to vector<192x5xf32>
    %665 = vector.extract_strided_slice %662 {offsets = [0, 10], sizes = [192, 5], strides = [1, 1]} : vector<192x15xf32> to vector<192x5xf32>
    %cst_262 = arith.constant 0.000000e+00 : f32
    %666 = vector.broadcast %cst_262 : f32 to vector<8x5xf32>
    %667 = vector.extract_strided_slice %663 {offsets = [0, 0], sizes = [184, 5], strides = [1, 1]} : vector<192x5xf32> to vector<184x5xf32>
    %668 = tpu.concatenate %666, %667 in 0 : vector<8x5xf32>, vector<184x5xf32> -> vector<192x5xf32>
    %669 = vector.extract_strided_slice %665 {offsets = [8, 0], sizes = [184, 5], strides = [1, 1]} : vector<192x5xf32> to vector<184x5xf32>
    %670 = tpu.concatenate %669, %666 in 0 : vector<184x5xf32>, vector<8x5xf32> -> vector<192x5xf32>
    %671 = arith.addf %664, %668 : vector<192x5xf32>
    %672 = arith.addf %671, %670 : vector<192x5xf32>
    %c1032 = arith.constant 1032 : index
    %c0_263 = arith.constant 0 : index
    %673 = vector.load %arg2[%c1032, %c0_263] : memref<1368x32xf32, #tpu.memory_space<vmem>>, vector<1x5xf32>
    %674 = vector.broadcast %673 : vector<1x5xf32> to vector<192x5xf32>
    %675 = arith.addf %672, %674 : vector<192x5xf32>
    %c1040 = arith.constant 1040 : index
    %c0_264 = arith.constant 0 : index
    %676 = vector.load %arg2[%c1040, %c0_264] : memref<1368x32xf32, #tpu.memory_space<vmem>>, vector<1x10xf32>
    %cst_265 = arith.constant dense<0.000000e+00> : vector<192x10xf32>
    %677 = tpu.matmul %450, %676, %cst_265 {dimension_numbers = #tpu.dot_dimension_numbers<[1], [0], [0], [1], [0, 0, 1, 1], [], []>} : vector<192x1xf32>, vector<1x10xf32>, vector<192x10xf32> -> vector<192x10xf32>
    %c1048 = arith.constant 1048 : index
    %c0_266 = arith.constant 0 : index
    %678 = vector.load %arg2[%c1048, %c0_266] : memref<1368x32xf32, #tpu.memory_space<vmem>>, vector<4x10xf32>
    %cst_267 = arith.constant dense<0.000000e+00> : vector<192x10xf32>
    %679 = tpu.matmul %561, %678, %cst_267 {dimension_numbers = #tpu.dot_dimension_numbers<[1], [0], [0], [1], [0, 0, 1, 1], [], []>} : vector<192x4xf32>, vector<4x10xf32>, vector<192x10xf32> -> vector<192x10xf32>
    %680 = arith.addf %677, %679 : vector<192x10xf32>
    %c1056 = arith.constant 1056 : index
    %c0_268 = arith.constant 0 : index
    %681 = vector.load %arg2[%c1056, %c0_268] : memref<1368x32xf32, #tpu.memory_space<vmem>>, vector<5x10xf32>
    %cst_269 = arith.constant dense<0.000000e+00> : vector<192x10xf32>
    %682 = tpu.matmul %675, %681, %cst_269 {dimension_numbers = #tpu.dot_dimension_numbers<[1], [0], [0], [1], [0, 0, 1, 1], [], []>} : vector<192x5xf32>, vector<5x10xf32>, vector<192x10xf32> -> vector<192x10xf32>
    %683 = arith.addf %680, %682 : vector<192x10xf32>
    %cst_270 = arith.constant dense<0.000000e+00> : vector<192x10xf32>
    %684 = tpu.matmul %0, %683, %cst_270 {dimension_numbers = #tpu.dot_dimension_numbers<[1], [0], [0], [1], [0, 0, 1, 1], [], []>} : vector<192x192xf32>, vector<192x10xf32>, vector<192x10xf32> -> vector<192x10xf32>
    %c1064 = arith.constant 1064 : index
    %c0_271 = arith.constant 0 : index
    %685 = vector.load %arg2[%c1064, %c0_271] : memref<1368x32xf32, #tpu.memory_space<vmem>>, vector<1x10xf32>
    %686 = vector.broadcast %685 : vector<1x10xf32> to vector<192x10xf32>
    %687 = arith.addf %684, %686 : vector<192x10xf32>
    %cst_272 = arith.constant dense<0.000000e+00> : vector<10xf32>
    %688 = vector.multi_reduction <add>, %687, %cst_272 [0] : vector<192x10xf32> to vector<10xf32>
    %689 = vector.shape_cast %688 : vector<10xf32> to vector<1x10xf32>
    %cst_273 = arith.constant 0.00520833349 : f32
    %690 = vector.broadcast %cst_273 : f32 to vector<1x10xf32>
    %691 = arith.mulf %689, %690 : vector<1x10xf32>
    %692 = arith.mulf %687, %687 : vector<192x10xf32>
    %cst_274 = arith.constant dense<0.000000e+00> : vector<10xf32>
    %693 = vector.multi_reduction <add>, %692, %cst_274 [0] : vector<192x10xf32> to vector<10xf32>
    %694 = vector.shape_cast %693 : vector<10xf32> to vector<1x10xf32>
    %cst_275 = arith.constant 0.00520833349 : f32
    %695 = vector.broadcast %cst_275 : f32 to vector<1x10xf32>
    %696 = arith.mulf %694, %695 : vector<1x10xf32>
    %697 = arith.mulf %691, %691 : vector<1x10xf32>
    %698 = arith.subf %696, %697 : vector<1x10xf32>
    %699 = vector.broadcast %691 : vector<1x10xf32> to vector<192x10xf32>
    %700 = arith.subf %687, %699 : vector<192x10xf32>
    %cst_276 = arith.constant 9.99999974E-6 : f32
    %701 = vector.broadcast %cst_276 : f32 to vector<1x10xf32>
    %702 = arith.addf %698, %701 : vector<1x10xf32>
    %703 = math.rsqrt %702 : vector<1x10xf32>
    %704 = vector.broadcast %703 : vector<1x10xf32> to vector<192x10xf32>
    %705 = arith.mulf %700, %704 : vector<192x10xf32>
    %c1072 = arith.constant 1072 : index
    %c0_277 = arith.constant 0 : index
    %706 = vector.load %arg2[%c1072, %c0_277] : memref<1368x32xf32, #tpu.memory_space<vmem>>, vector<1x10xf32>
    %707 = vector.broadcast %706 : vector<1x10xf32> to vector<192x10xf32>
    %708 = arith.mulf %705, %707 : vector<192x10xf32>
    %c1080 = arith.constant 1080 : index
    %c0_278 = arith.constant 0 : index
    %709 = vector.load %arg2[%c1080, %c0_278] : memref<1368x32xf32, #tpu.memory_space<vmem>>, vector<1x10xf32>
    %710 = vector.broadcast %709 : vector<1x10xf32> to vector<192x10xf32>
    %711 = arith.addf %708, %710 : vector<192x10xf32>
    %cst_279 = arith.constant 0.000000e+00 : f32
    %712 = vector.broadcast %cst_279 : f32 to vector<192x10xf32>
    %713 = arith.maximumf %711, %712 : vector<192x10xf32>
    %cst_280 = arith.constant dense<0.000000e+00> : vector<192x10xf32>
    %714 = tpu.matmul %0, %713, %cst_280 {dimension_numbers = #tpu.dot_dimension_numbers<[1], [0], [0], [1], [0, 0, 1, 1], [], []>} : vector<192x192xf32>, vector<192x10xf32>, vector<192x10xf32> -> vector<192x10xf32>
    %c1088 = arith.constant 1088 : index
    %c0_281 = arith.constant 0 : index
    %715 = vector.load %arg2[%c1088, %c0_281] : memref<1368x32xf32, #tpu.memory_space<vmem>>, vector<10x10xf32>
    %cst_282 = arith.constant dense<0.000000e+00> : vector<192x10xf32>
    %716 = tpu.matmul %714, %715, %cst_282 {dimension_numbers = #tpu.dot_dimension_numbers<[1], [0], [0], [1], [0, 0, 1, 1], [], []>} : vector<192x10xf32>, vector<10x10xf32>, vector<192x10xf32> -> vector<192x10xf32>
    %c1104 = arith.constant 1104 : index
    %c0_283 = arith.constant 0 : index
    %717 = vector.load %arg2[%c1104, %c0_283] : memref<1368x32xf32, #tpu.memory_space<vmem>>, vector<1x10xf32>
    %718 = vector.broadcast %717 : vector<1x10xf32> to vector<192x10xf32>
    %719 = arith.addf %716, %718 : vector<192x10xf32>
    %cst_284 = arith.constant dense<0.000000e+00> : vector<10xf32>
    %720 = vector.multi_reduction <add>, %719, %cst_284 [0] : vector<192x10xf32> to vector<10xf32>
    %721 = vector.shape_cast %720 : vector<10xf32> to vector<1x10xf32>
    %cst_285 = arith.constant 0.00520833349 : f32
    %722 = vector.broadcast %cst_285 : f32 to vector<1x10xf32>
    %723 = arith.mulf %721, %722 : vector<1x10xf32>
    %724 = arith.mulf %719, %719 : vector<192x10xf32>
    %cst_286 = arith.constant dense<0.000000e+00> : vector<10xf32>
    %725 = vector.multi_reduction <add>, %724, %cst_286 [0] : vector<192x10xf32> to vector<10xf32>
    %726 = vector.shape_cast %725 : vector<10xf32> to vector<1x10xf32>
    %cst_287 = arith.constant 0.00520833349 : f32
    %727 = vector.broadcast %cst_287 : f32 to vector<1x10xf32>
    %728 = arith.mulf %726, %727 : vector<1x10xf32>
    %729 = arith.mulf %723, %723 : vector<1x10xf32>
    %730 = arith.subf %728, %729 : vector<1x10xf32>
    %731 = vector.broadcast %723 : vector<1x10xf32> to vector<192x10xf32>
    %732 = arith.subf %719, %731 : vector<192x10xf32>
    %cst_288 = arith.constant 9.99999974E-6 : f32
    %733 = vector.broadcast %cst_288 : f32 to vector<1x10xf32>
    %734 = arith.addf %730, %733 : vector<1x10xf32>
    %735 = math.rsqrt %734 : vector<1x10xf32>
    %736 = vector.broadcast %735 : vector<1x10xf32> to vector<192x10xf32>
    %737 = arith.mulf %732, %736 : vector<192x10xf32>
    %c1112 = arith.constant 1112 : index
    %c0_289 = arith.constant 0 : index
    %738 = vector.load %arg2[%c1112, %c0_289] : memref<1368x32xf32, #tpu.memory_space<vmem>>, vector<1x10xf32>
    %739 = vector.broadcast %738 : vector<1x10xf32> to vector<192x10xf32>
    %740 = arith.mulf %737, %739 : vector<192x10xf32>
    %c1120 = arith.constant 1120 : index
    %c0_290 = arith.constant 0 : index
    %741 = vector.load %arg2[%c1120, %c0_290] : memref<1368x32xf32, #tpu.memory_space<vmem>>, vector<1x10xf32>
    %742 = vector.broadcast %741 : vector<1x10xf32> to vector<192x10xf32>
    %743 = arith.addf %740, %742 : vector<192x10xf32>
    %cst_291 = arith.constant 0.000000e+00 : f32
    %744 = vector.broadcast %cst_291 : f32 to vector<192x10xf32>
    %745 = arith.maximumf %743, %744 : vector<192x10xf32>
    %cst_292 = arith.constant dense<0.000000e+00> : vector<192x10xf32>
    %746 = tpu.matmul %0, %745, %cst_292 {dimension_numbers = #tpu.dot_dimension_numbers<[1], [0], [0], [1], [0, 0, 1, 1], [], []>} : vector<192x192xf32>, vector<192x10xf32>, vector<192x10xf32> -> vector<192x10xf32>
    %c1128 = arith.constant 1128 : index
    %c0_293 = arith.constant 0 : index
    %747 = vector.load %arg2[%c1128, %c0_293] : memref<1368x32xf32, #tpu.memory_space<vmem>>, vector<10x10xf32>
    %cst_294 = arith.constant dense<0.000000e+00> : vector<192x10xf32>
    %748 = tpu.matmul %746, %747, %cst_294 {dimension_numbers = #tpu.dot_dimension_numbers<[1], [0], [0], [1], [0, 0, 1, 1], [], []>} : vector<192x10xf32>, vector<10x10xf32>, vector<192x10xf32> -> vector<192x10xf32>
    %c1144 = arith.constant 1144 : index
    %c0_295 = arith.constant 0 : index
    %749 = vector.load %arg2[%c1144, %c0_295] : memref<1368x32xf32, #tpu.memory_space<vmem>>, vector<1x10xf32>
    %750 = vector.broadcast %749 : vector<1x10xf32> to vector<192x10xf32>
    %751 = arith.addf %748, %750 : vector<192x10xf32>
    %cst_296 = arith.constant dense<0.000000e+00> : vector<10xf32>
    %752 = vector.multi_reduction <add>, %751, %cst_296 [0] : vector<192x10xf32> to vector<10xf32>
    %753 = vector.shape_cast %752 : vector<10xf32> to vector<1x10xf32>
    %cst_297 = arith.constant 0.00520833349 : f32
    %754 = vector.broadcast %cst_297 : f32 to vector<1x10xf32>
    %755 = arith.mulf %753, %754 : vector<1x10xf32>
    %756 = arith.mulf %751, %751 : vector<192x10xf32>
    %cst_298 = arith.constant dense<0.000000e+00> : vector<10xf32>
    %757 = vector.multi_reduction <add>, %756, %cst_298 [0] : vector<192x10xf32> to vector<10xf32>
    %758 = vector.shape_cast %757 : vector<10xf32> to vector<1x10xf32>
    %cst_299 = arith.constant 0.00520833349 : f32
    %759 = vector.broadcast %cst_299 : f32 to vector<1x10xf32>
    %760 = arith.mulf %758, %759 : vector<1x10xf32>
    %761 = arith.mulf %755, %755 : vector<1x10xf32>
    %762 = arith.subf %760, %761 : vector<1x10xf32>
    %763 = vector.broadcast %755 : vector<1x10xf32> to vector<192x10xf32>
    %764 = arith.subf %751, %763 : vector<192x10xf32>
    %cst_300 = arith.constant 9.99999974E-6 : f32
    %765 = vector.broadcast %cst_300 : f32 to vector<1x10xf32>
    %766 = arith.addf %762, %765 : vector<1x10xf32>
    %767 = math.rsqrt %766 : vector<1x10xf32>
    %768 = vector.broadcast %767 : vector<1x10xf32> to vector<192x10xf32>
    %769 = arith.mulf %764, %768 : vector<192x10xf32>
    %c1152 = arith.constant 1152 : index
    %c0_301 = arith.constant 0 : index
    %770 = vector.load %arg2[%c1152, %c0_301] : memref<1368x32xf32, #tpu.memory_space<vmem>>, vector<1x10xf32>
    %771 = vector.broadcast %770 : vector<1x10xf32> to vector<192x10xf32>
    %772 = arith.mulf %769, %771 : vector<192x10xf32>
    %c1160 = arith.constant 1160 : index
    %c0_302 = arith.constant 0 : index
    %773 = vector.load %arg2[%c1160, %c0_302] : memref<1368x32xf32, #tpu.memory_space<vmem>>, vector<1x10xf32>
    %774 = vector.broadcast %773 : vector<1x10xf32> to vector<192x10xf32>
    %775 = arith.addf %772, %774 : vector<192x10xf32>
    %cst_303 = arith.constant 0.000000e+00 : f32
    %776 = vector.broadcast %cst_303 : f32 to vector<192x10xf32>
    %777 = arith.maximumf %775, %776 : vector<192x10xf32>
    %c1168 = arith.constant 1168 : index
    %c0_304 = arith.constant 0 : index
    %778 = vector.load %arg2[%c1168, %c0_304] : memref<1368x32xf32, #tpu.memory_space<vmem>>, vector<10x30xf32>
    %cst_305 = arith.constant dense<0.000000e+00> : vector<192x30xf32>
    %779 = tpu.matmul %777, %778, %cst_305 {dimension_numbers = #tpu.dot_dimension_numbers<[1], [0], [0], [1], [0, 0, 1, 1], [], []>} : vector<192x10xf32>, vector<10x30xf32>, vector<192x30xf32> -> vector<192x30xf32>
    %780 = vector.extract_strided_slice %779 {offsets = [0, 0], sizes = [192, 10], strides = [1, 1]} : vector<192x30xf32> to vector<192x10xf32>
    %781 = vector.extract_strided_slice %779 {offsets = [0, 10], sizes = [192, 10], strides = [1, 1]} : vector<192x30xf32> to vector<192x10xf32>
    %782 = vector.extract_strided_slice %779 {offsets = [0, 20], sizes = [192, 10], strides = [1, 1]} : vector<192x30xf32> to vector<192x10xf32>
    %cst_306 = arith.constant 0.000000e+00 : f32
    %783 = vector.broadcast %cst_306 : f32 to vector<8x10xf32>
    %784 = vector.extract_strided_slice %780 {offsets = [0, 0], sizes = [184, 10], strides = [1, 1]} : vector<192x10xf32> to vector<184x10xf32>
    %785 = tpu.concatenate %783, %784 in 0 : vector<8x10xf32>, vector<184x10xf32> -> vector<192x10xf32>
    %786 = vector.extract_strided_slice %782 {offsets = [8, 0], sizes = [184, 10], strides = [1, 1]} : vector<192x10xf32> to vector<184x10xf32>
    %787 = tpu.concatenate %786, %783 in 0 : vector<184x10xf32>, vector<8x10xf32> -> vector<192x10xf32>
    %788 = arith.addf %781, %785 : vector<192x10xf32>
    %789 = arith.addf %788, %787 : vector<192x10xf32>
    %c1184 = arith.constant 1184 : index
    %c0_307 = arith.constant 0 : index
    %790 = vector.load %arg2[%c1184, %c0_307] : memref<1368x32xf32, #tpu.memory_space<vmem>>, vector<1x10xf32>
    %791 = vector.broadcast %790 : vector<1x10xf32> to vector<192x10xf32>
    %792 = arith.addf %789, %791 : vector<192x10xf32>
    %793 = tpu.iota {dimensions = array<i32: 0>} : vector<192x1xi32>
    %c8_i32 = arith.constant 8 : i32
    %c0_i32 = arith.constant 0 : i32
    %794 = arith.cmpi eq, %c8_i32, %c0_i32 : i32
    %c1_i32 = arith.constant 1 : i32
    %795 = arith.select %794, %c1_i32, %c8_i32 : i32
    %796 = vector.broadcast %795 : i32 to vector<192x1xi32>
    %797 = arith.remsi %793, %796 : vector<192x1xi32>
    %c0_i32_308 = arith.constant 0 : i32
    %798 = vector.broadcast %c0_i32_308 : i32 to vector<192x1xi32>
    %799 = arith.cmpi ne, %797, %798 : vector<192x1xi32>
    %c0_i32_309 = arith.constant 0 : i32
    %800 = vector.broadcast %c0_i32_309 : i32 to vector<192x1xi32>
    %801 = arith.cmpi slt, %797, %800 : vector<192x1xi32>
    %c0_i32_310 = arith.constant 0 : i32
    %802 = arith.cmpi slt, %795, %c0_i32_310 : i32
    %803 = vector.broadcast %802 : i1 to vector<192x1xi1>
    %804 = vector.broadcast %803 : vector<192x1xi1> to vector<192x1xi1>
    %805 = arith.xori %801, %804 : vector<192x1xi1>
    %806 = arith.andi %805, %799 : vector<192x1xi1>
    %807 = vector.broadcast %795 : i32 to vector<192x1xi32>
    %808 = arith.addi %797, %807 : vector<192x1xi32>
    %809 = arith.select %806, %808, %797 : vector<192x1xi1>, vector<192x1xi32>
    %c0_i32_311 = arith.constant 0 : i32
    %810 = vector.broadcast %c0_i32_311 : i32 to vector<192x1xi32>
    %811 = arith.cmpi eq, %809, %810 : vector<192x1xi32>
    %812 = arith.extui %811 : vector<192x1xi1> to vector<192x1xi32>
    %813 = arith.sitofp %812 : vector<192x1xi32> to vector<192x1xf32>
    %814 = vector.extract_strided_slice %432 {offsets = [0, 0], sizes = [1, 32], strides = [1, 1]} : vector<8x32xf32> to vector<1x32xf32>
    %cst_312 = arith.constant 0.000000e+00 : f32
    %815 = vector.broadcast %cst_312 : f32 to vector<1x32xf32>
    %816 = arith.maximumf %814, %815 : vector<1x32xf32>
    %c1312 = arith.constant 1312 : index
    %c0_313 = arith.constant 0 : index
    %817 = vector.load %arg2[%c1312, %c0_313] : memref<1368x32xf32, #tpu.memory_space<vmem>>, vector<1x32xf32>
    %818 = arith.mulf %816, %817 : vector<1x32xf32>
    %cst_314 = arith.constant dense<0.000000e+00> : vector<1xf32>
    %819 = vector.multi_reduction <add>, %818, %cst_314 [1] : vector<1x32xf32> to vector<1xf32>
    %820 = vector.shape_cast %819 : vector<1xf32> to vector<1x1xf32>
    %cst_315 = arith.constant 0.000000e+00 : f32
    %821 = vector.broadcast %cst_315 : f32 to vector<1x32xf32>
    %822 = arith.maximumf %449, %821 : vector<1x32xf32>
    %c1352 = arith.constant 1352 : index
    %c0_316 = arith.constant 0 : index
    %823 = vector.load %arg2[%c1352, %c0_316] : memref<1368x32xf32, #tpu.memory_space<vmem>>, vector<1x32xf32>
    %824 = arith.mulf %822, %823 : vector<1x32xf32>
    %cst_317 = arith.constant dense<0.000000e+00> : vector<1xf32>
    %825 = vector.multi_reduction <add>, %824, %cst_317 [1] : vector<1x32xf32> to vector<1xf32>
    %826 = vector.shape_cast %825 : vector<1xf32> to vector<1x1xf32>
    %827 = arith.addf %820, %826 : vector<1x1xf32>
    %828 = arith.mulf %450, %813 : vector<192x1xf32>
    %cst_318 = arith.constant dense<0.000000e+00> : vector<1xf32>
    %829 = vector.multi_reduction <add>, %828, %cst_318 [0] : vector<192x1xf32> to vector<1xf32>
    %830 = vector.shape_cast %829 : vector<1xf32> to vector<1x1xf32>
    %cst_319 = arith.constant 0.0416666679 : f32
    %831 = vector.broadcast %cst_319 : f32 to vector<1x1xf32>
    %832 = arith.mulf %830, %831 : vector<1x1xf32>
    %cst_320 = arith.constant 0.000000e+00 : f32
    %833 = vector.broadcast %cst_320 : f32 to vector<1x1xf32>
    %834 = arith.maximumf %832, %833 : vector<1x1xf32>
    %c1320 = arith.constant 1320 : index
    %c0_321 = arith.constant 0 : index
    %835 = vector.load %arg2[%c1320, %c0_321] : memref<1368x32xf32, #tpu.memory_space<vmem>>, vector<1x1xf32>
    %836 = arith.mulf %834, %835 : vector<1x1xf32>
    %cst_322 = arith.constant dense<0.000000e+00> : vector<1xf32>
    %837 = vector.multi_reduction <add>, %836, %cst_322 [1] : vector<1x1xf32> to vector<1xf32>
    %838 = vector.shape_cast %837 : vector<1xf32> to vector<1x1xf32>
    %839 = arith.addf %827, %838 : vector<1x1xf32>
    %840 = vector.broadcast %813 : vector<192x1xf32> to vector<192x4xf32>
    %841 = arith.mulf %561, %840 : vector<192x4xf32>
    %cst_323 = arith.constant dense<0.000000e+00> : vector<4xf32>
    %842 = vector.multi_reduction <add>, %841, %cst_323 [0] : vector<192x4xf32> to vector<4xf32>
    %843 = vector.shape_cast %842 : vector<4xf32> to vector<1x4xf32>
    %cst_324 = arith.constant 0.0416666679 : f32
    %844 = vector.broadcast %cst_324 : f32 to vector<1x4xf32>
    %845 = arith.mulf %843, %844 : vector<1x4xf32>
    %cst_325 = arith.constant 0.000000e+00 : f32
    %846 = vector.broadcast %cst_325 : f32 to vector<1x4xf32>
    %847 = arith.maximumf %845, %846 : vector<1x4xf32>
    %c1328 = arith.constant 1328 : index
    %c0_326 = arith.constant 0 : index
    %848 = vector.load %arg2[%c1328, %c0_326] : memref<1368x32xf32, #tpu.memory_space<vmem>>, vector<1x4xf32>
    %849 = arith.mulf %847, %848 : vector<1x4xf32>
    %cst_327 = arith.constant dense<0.000000e+00> : vector<1xf32>
    %850 = vector.multi_reduction <add>, %849, %cst_327 [1] : vector<1x4xf32> to vector<1xf32>
    %851 = vector.shape_cast %850 : vector<1xf32> to vector<1x1xf32>
    %852 = arith.addf %839, %851 : vector<1x1xf32>
    %853 = vector.broadcast %813 : vector<192x1xf32> to vector<192x5xf32>
    %854 = arith.mulf %675, %853 : vector<192x5xf32>
    %cst_328 = arith.constant dense<0.000000e+00> : vector<5xf32>
    %855 = vector.multi_reduction <add>, %854, %cst_328 [0] : vector<192x5xf32> to vector<5xf32>
    %856 = vector.shape_cast %855 : vector<5xf32> to vector<1x5xf32>
    %cst_329 = arith.constant 0.0416666679 : f32
    %857 = vector.broadcast %cst_329 : f32 to vector<1x5xf32>
    %858 = arith.mulf %856, %857 : vector<1x5xf32>
    %cst_330 = arith.constant 0.000000e+00 : f32
    %859 = vector.broadcast %cst_330 : f32 to vector<1x5xf32>
    %860 = arith.maximumf %858, %859 : vector<1x5xf32>
    %c1336 = arith.constant 1336 : index
    %c0_331 = arith.constant 0 : index
    %861 = vector.load %arg2[%c1336, %c0_331] : memref<1368x32xf32, #tpu.memory_space<vmem>>, vector<1x5xf32>
    %862 = arith.mulf %860, %861 : vector<1x5xf32>
    %cst_332 = arith.constant dense<0.000000e+00> : vector<1xf32>
    %863 = vector.multi_reduction <add>, %862, %cst_332 [1] : vector<1x5xf32> to vector<1xf32>
    %864 = vector.shape_cast %863 : vector<1xf32> to vector<1x1xf32>
    %865 = arith.addf %852, %864 : vector<1x1xf32>
    %866 = vector.broadcast %813 : vector<192x1xf32> to vector<192x10xf32>
    %867 = arith.mulf %792, %866 : vector<192x10xf32>
    %cst_333 = arith.constant dense<0.000000e+00> : vector<10xf32>
    %868 = vector.multi_reduction <add>, %867, %cst_333 [0] : vector<192x10xf32> to vector<10xf32>
    %869 = vector.shape_cast %868 : vector<10xf32> to vector<1x10xf32>
    %cst_334 = arith.constant 0.0416666679 : f32
    %870 = vector.broadcast %cst_334 : f32 to vector<1x10xf32>
    %871 = arith.mulf %869, %870 : vector<1x10xf32>
    %cst_335 = arith.constant 0.000000e+00 : f32
    %872 = vector.broadcast %cst_335 : f32 to vector<1x10xf32>
    %873 = arith.maximumf %871, %872 : vector<1x10xf32>
    %c1344 = arith.constant 1344 : index
    %c0_336 = arith.constant 0 : index
    %874 = vector.load %arg2[%c1344, %c0_336] : memref<1368x32xf32, #tpu.memory_space<vmem>>, vector<1x10xf32>
    %875 = arith.mulf %873, %874 : vector<1x10xf32>
    %cst_337 = arith.constant dense<0.000000e+00> : vector<1xf32>
    %876 = vector.multi_reduction <add>, %875, %cst_337 [1] : vector<1x10xf32> to vector<1xf32>
    %877 = vector.shape_cast %876 : vector<1xf32> to vector<1x1xf32>
    %878 = arith.addf %865, %877 : vector<1x1xf32>
    %c1360 = arith.constant 1360 : index
    %c0_338 = arith.constant 0 : index
    %879 = vector.load %arg2[%c1360, %c0_338] : memref<1368x32xf32, #tpu.memory_space<vmem>>, vector<1x1xf32>
    %880 = arith.addf %878, %879 : vector<1x1xf32>
    %881 = arith.negf %880 : vector<1x1xf32>
    %882 = math.exp %881 : vector<1x1xf32>
    %cst_339 = arith.constant 1.000000e+00 : f32
    %883 = vector.broadcast %cst_339 : f32 to vector<1x1xf32>
    %884 = arith.addf %883, %882 : vector<1x1xf32>
    %885 = arith.divf %883, %884 : vector<1x1xf32>
    %c0_340 = arith.constant 0 : index
    %c0_341 = arith.constant 0 : index
    %886 = vector.load %arg3[%c0_340, %c0_341] : memref<1x1xf32, #tpu.memory_space<vmem>>, vector<1x1xf32>
    tpu.vector_store %arg3[%c0_340, %c0_341], %885 {strides = array<i32>} : memref<1x1xf32, #tpu.memory_space<vmem>>, vector<1x1xf32>,
    return
  }
}

</mosaic_0001>

<llo_original>
// kernel: _lambda_.1
$region0: #{_lambda_.1}
  #allocation0 [shape = 'u32[]', space=smem, size = 0x4, offset = 0x4, fixed_abs, tag = 'smem constant byte address 0x4 - core index']
  #allocation1 [shape = 'u32[72,128]{1,0:T(1,128)}', space=vmem, size = 0x9000, scoped, tag = 'internal scratch']
  %s0 = inlined_call_operand.vmem [shape: f32[192,192], index: 0, kind: input, shape index: {}]
  %s1 = inlined_call_operand.vmem [shape: f32[208,32], index: 1, kind: input, shape index: {}]
  %s2 = inlined_call_operand.hbm [shape: f32[1368,32], index: 2, kind: input, shape index: {}]
  %s3 = inlined_call_operand.hbm [shape: f32[1,1], index: 3, kind: output, shape index: {}]
  %s4 = sld [smem:[#allocation0]]
  $region26: #{_lambda_.1} parent=0
    _
  %s6 = ssub.s32 1, %s4
  %s7 = scalar_select 0, %s6, %s4
  $region1: #{_lambda_.1} parent=0
    #allocation2 [shape = 'u8[700416]{0}', space=vmem, size = 0xab000, scoped, tag = 'input window, operand 2, single buffered']
    #allocation3 [shape = 's32[1]{0}', space=sflag, size = 0x4, scoped, tag = 'scoped memory for _lambda_.1']
    #allocation4 [shape = 's32[1]{0}', space=sflag, size = 0x4, scoped, tag = 'scoped memory for _lambda_.1']
    #allocation5 [shape = 'u8[512]{0}', space=vmem, size = 0x400, scoped, tag = 'output window, operand 0, single buffered']
    %8 = vsyncpa [#allocation3], 0
    %9 = vsyncpa [#allocation4], 0
    // Predicated region
    $region2: #{_lambda_.1} parent=1 // pred_check
      _
    $region3: #{_lambda_.1} parent=1 // pred_check_branch
      %11 = sbr.rel (0) target = $region5
    $region4: #{_lambda_.1} parent=1 // pred_region
      _
    $region5: #{_lambda_.1} parent=1 // pred_fallthru
      _
    // Predicated region
    $region6: #{_lambda_.1} parent=1 // pred_check
      _
    $region7: #{_lambda_.1} parent=1 // pred_check_branch
      %13 = sbr.rel (0) target = $region9
    $region8: #{_lambda_.1} parent=1 // pred_region
      _
    $region9: #{_lambda_.1} parent=1 // pred_fallthru
      _
    // Predicated region
    $region10: #{_lambda_.1} parent=1 // pred_check
      _
    $region11: #{_lambda_.1} parent=1 // pred_check_branch
      %15 = sbr.rel (0) target = $region13
    $region12: #{_lambda_.1} parent=1 // pred_region
      %17 = vsyncadd [#allocation3], 0
      %s18 = sshll.u32 %s2, 4
      %s19 = int_to_ptr.hbm [resolvable:$true] %s18
      %s20 = sshll.u32 [#allocation2], 4
      %s21 = int_to_ptr.vmem [resolvable:$true] %s20
      %26 = dma.hbm_to_vmem [thread:$0]  %s19, 21888, %s21, [#allocation3], 128, 128, 8
    $region13: #{_lambda_.1} parent=1 // pred_fallthru
      _
    // Predicated region
    $region14: #{_lambda_.1} parent=1 // pred_check
      _
    $region15: #{_lambda_.1} parent=1 // pred_check_branch
      %28 = sbr.rel (0) target = $region17
    $region16: #{_lambda_.1} parent=1 // pred_region
      %30 = dma.done [#allocation3], 21888
    $region17: #{_lambda_.1} parent=1 // pred_fallthru
      _
    %v31 = vld [vmem:[%s0] sm:$0xff]
    %v32 = vld [vmem:[%s0 + $0x8] sm:$0xff]
    %v33 = vld [vmem:[%s0 + $0x10] sm:$0xff]
    %v34 = vld [vmem:[%s0 + $0x18] sm:$0xff]
    %v35 = vld [vmem:[%s0 + $0x20] sm:$0xff]
    %v36 = vld [vmem:[%s0 + $0x28] sm:$0xff]
    %v37 = vld [vmem:[%s0 + $0x30] sm:$0xff]
    %v38 = vld [vmem:[%s0 + $0x38] sm:$0xff]
    %v39 = vld [vmem:[%s0 + $0x40] sm:$0xff]
    %v40 = vld [vmem:[%s0 + $0x48] sm:$0xff]
    %v41 = vld [vmem:[%s0 + $0x50] sm:$0xff]
    %v42 = vld [vmem:[%s0 + $0x58] sm:$0xff]
    %v43 = vld [vmem:[%s0 + $0x60] sm:$0xff]
    %v44 = vld [vmem:[%s0 + $0x68] sm:$0xff]
    %v45 = vld [vmem:[%s0 + $0x70] sm:$0xff]
    %v46 = vld [vmem:[%s0 + $0x78] sm:$0xff]
    %v47 = vld [vmem:[%s0 + $0x80] sm:$0xff]
    %v48 = vld [vmem:[%s0 + $0x88] sm:$0xff]
    %v49 = vld [vmem:[%s0 + $0x90] sm:$0xff]
    %v50 = vld [vmem:[%s0 + $0x98] sm:$0xff]
    %v51 = vld [vmem:[%s0 + $0xa0] sm:$0xff]
    %v52 = vld [vmem:[%s0 + $0xa8] sm:$0xff]
    %v53 = vld [vmem:[%s0 + $0xb0] sm:$0xff]
    %v54 = vld [vmem:[%s0 + $0xb8] sm:$0xff]
    %v55 = vld [vmem:[%s0 + $0xc0] sm:$0xff]
    %v56 = vld [vmem:[%s0 + $0xc8] sm:$0xff]
    %v57 = vld [vmem:[%s0 + $0xd0] sm:$0xff]
    %v58 = vld [vmem:[%s0 + $0xd8] sm:$0xff]
    %v59 = vld [vmem:[%s0 + $0xe0] sm:$0xff]
    %v60 = vld [vmem:[%s0 + $0xe8] sm:$0xff]
    %v61 = vld [vmem:[%s0 + $0xf0] sm:$0xff]
    %v62 = vld [vmem:[%s0 + $0xf8] sm:$0xff]
    %v63 = vld [vmem:[%s0 + $0x100] sm:$0xff]
    %v64 = vld [vmem:[%s0 + $0x108] sm:$0xff]
    %v65 = vld [vmem:[%s0 + $0x110] sm:$0xff]
    %v66 = vld [vmem:[%s0 + $0x118] sm:$0xff]
    %v67 = vld [vmem:[%s0 + $0x120] sm:$0xff]
    %v68 = vld [vmem:[%s0 + $0x128] sm:$0xff]
    %v69 = vld [vmem:[%s0 + $0x130] sm:$0xff]
    %v70 = vld [vmem:[%s0 + $0x138] sm:$0xff]
    %v71 = vld [vmem:[%s0 + $0x140] sm:$0xff]
    %v72 = vld [vmem:[%s0 + $0x148] sm:$0xff]
    %v73 = vld [vmem:[%s0 + $0x150] sm:$0xff]
    %v74 = vld [vmem:[%s0 + $0x158] sm:$0xff]
    %v75 = vld [vmem:[%s0 + $0x160] sm:$0xff]
    %v76 = vld [vmem:[%s0 + $0x168] sm:$0xff]
    %v77 = vld [vmem:[%s0 + $0x170] sm:$0xff]
    %v78 = vld [vmem:[%s0 + $0x178] sm:$0xff]
    %v79 = vld [vmem:[%s1 + $0xc0] sm:$0xff]
    %v80 = vld [vmem:[#allocation2] sm:$0xff]
    %v81 = vld [vmem:[#allocation2 + $0x8] sm:$0xff]
    %v82 = vld [vmem:[#allocation2 + $0x10] sm:$0xff]
    %v83 = vld [vmem:[#allocation2 + $0x18] sm:$0xff]
    %v84 = vld [vmem:[#allocation2 + $0x20] sm:$0x1]
    %v85 = vperm.slane %v84, 0
    %vm86 = vcmask 261120
    %v88 = vsel %vm86, %v79, 0
    %90 = vmatpush.msra.mxu0 0.0
    %91 = vmatpush.msra.mxu0 0.0
    %92 = vmatpush.msra.mxu0 0.0
    %93 = vmatpush.msra.mxu0 0.0
    %94 = vmatpush.msra.mxu0 0.0
    %95 = vmatpush.msra.mxu0 0.0
    %96 = vmatpush.msra.mxu0 0.0
    %97 = vmatpush.msra.mxu0 0.0
    %98 = vmatpush.msra.mxu0 0.0
    %99 = vmatpush.msra.mxu0 0.0
    %100 = vmatpush.msra.mxu0 0.0
    %101 = vmatpush.msra.mxu0 0.0
    %102 = vmatpush.msra.mxu0 %v83
    %103 = vmatpush.msra.mxu0 %v82
    %104 = vmatpush.msra.mxu0 %v81
    %105 = vmatpush.msra.mxu0 %v80
    %106 = vmatmul.f32.gmra.mxu0 %v88
    %v107 = vpop.f32.mrf.mxu0
    %v108 = vadd.f32 %v85, %v107
    %109 = vdwg.mxu0
    %v110 = vmax.f32 %v108, 0.0
    %v111 = vld [vmem:[#allocation2 + $0x28] sm:$0xff]
    %v112 = vld [vmem:[#allocation2 + $0x30] sm:$0xff]
    %v113 = vld [vmem:[#allocation2 + $0x38] sm:$0xff]
    %v114 = vld [vmem:[#allocation2 + $0x40] sm:$0xff]
    %v115 = vld [vmem:[#allocation2 + $0x48] sm:$0x1]
    %v116 = vperm.slane %v115, 0
    %v118 = vsel %vm86, %v110, 0
    %120 = vmatpush.msra.mxu0 0.0
    %121 = vmatpush.msra.mxu0 0.0
    %122 = vmatpush.msra.mxu0 0.0
    %123 = vmatpush.msra.mxu0 0.0
    %124 = vmatpush.msra.mxu0 0.0
    %125 = vmatpush.msra.mxu0 0.0
    %126 = vmatpush.msra.mxu0 0.0
    %127 = vmatpush.msra.mxu0 0.0
    %128 = vmatpush.msra.mxu0 0.0
    %129 = vmatpush.msra.mxu0 0.0
    %130 = vmatpush.msra.mxu0 0.0
    %131 = vmatpush.msra.mxu0 0.0
    %132 = vmatpush.msra.mxu0 %v114
    %133 = vmatpush.msra.mxu0 %v113
    %134 = vmatpush.msra.mxu0 %v112
    %135 = vmatpush.msra.mxu0 %v111
    %136 = vmatmul.f32.gmra.mxu0 %v118
    %v137 = vpop.f32.mrf.mxu0
    %v138 = vadd.f32 %v116, %v137
    %139 = vdwg.mxu0
    %vm140 = vcmask 64512
    %v142 = vsel %vm140, %v31, 0
    %144 = vmatpush.msra.mxu0 0.0
    %145 = vmatpush.msra.mxu0 0.0
    %146 = vmatpush.msra.mxu0 0.0
    %147 = vmatpush.msra.mxu0 0.0
    %148 = vmatpush.msra.mxu0 0.0
    %149 = vmatpush.msra.mxu0 0.0
    %150 = vmatpush.msra.mxu0 0.0
    %151 = vmatpush.msra.mxu0 0.0
    %152 = vmatpush.msra.mxu0 0.0
    %153 = vmatpush.msra.mxu0 0.0
    %154 = vmatpush.msra.mxu0 0.0
    %155 = vmatpush.msra.mxu0 0.0
    %156 = vmatpush.msra.mxu0 0.0
    %157 = vmatpush.msra.mxu0 0.0
    %158 = vmatpush.msra.mxu0 0.0
    %159 = vmatpush.msra.mxu0 %v138
    %160 = vmatmul.f32.gmra.mxu0 %v142
    %v161 = vpop.f32.mrf.mxu0
    %v162 = vadd.f32 0.0, %v161
    %163 = vdwg.mxu0
    %v164 = vld [vmem:[#allocation2 + $0x50] sm:$0xff]
    %v165 = vld [vmem:[#allocation2 + $0x58] sm:$0xff]
    %v166 = vld [vmem:[#allocation2 + $0x60] sm:$0xff]
    %v167 = vld [vmem:[#allocation2 + $0x68] sm:$0xff]
    %v168 = vld [vmem:[#allocation2 + $0x70] sm:$0x1]
    %v169 = vperm.slane %v168, 0
    %v171 = vsel %vm86, %v162, 0
    %173 = vmatpush.msra.mxu0 0.0
    %174 = vmatpush.msra.mxu0 0.0
    %175 = vmatpush.msra.mxu0 0.0
    %176 = vmatpush.msra.mxu0 0.0
    %177 = vmatpush.msra.mxu0 0.0
    %178 = vmatpush.msra.mxu0 0.0
    %179 = vmatpush.msra.mxu0 0.0
    %180 = vmatpush.msra.mxu0 0.0
    %181 = vmatpush.msra.mxu0 0.0
    %182 = vmatpush.msra.mxu0 0.0
    %183 = vmatpush.msra.mxu0 0.0
    %184 = vmatpush.msra.mxu0 0.0
    %185 = vmatpush.msra.mxu0 %v167
    %186 = vmatpush.msra.mxu0 %v166
    %187 = vmatpush.msra.mxu0 %v165
    %188 = vmatpush.msra.mxu0 %v164
    %189 = vmatmul.f32.gmra.mxu0 %v171
    %v190 = vpop.f32.mrf.mxu0
    %v191 = vadd.f32 %v169, %v190
    %192 = vdwg.mxu0
    %v193 = vsel %vm86, %v191, 0.0
    %v194 = vrot.slane %v193, 4
    %v195 = vadd.f32 %v193, %v194
    %v196 = vrot.slane %v195, 2
    %v197 = vadd.f32 %v195, %v196
    %v198 = vrot.slane %v197, 1
    %v199 = vadd.f32 %v197, %v198
    %v200 = vmul.f32 %v199, 0.125
    %v201 = vmul.f32 %v191, %v191
    %v202 = vsel %vm86, %v201, 0.0
    %v203 = vrot.slane %v202, 4
    %v204 = vadd.f32 %v202, %v203
    %v205 = vrot.slane %v204, 2
    %v206 = vadd.f32 %v204, %v205
    %v207 = vrot.slane %v206, 1
    %v208 = vadd.f32 %v206, %v207
    %v209 = vmul.f32 %v208, 0.125
    %v210 = vmul.f32 %v200, %v200
    %v211 = vsub.f32 %v209, %v210
    %v212 = vsub.f32 %v191, %v200
    %v213 = vadd.f32 %v211, 1e-05
    %v214 = vrsqrt.pop %v213
    %v215 = vmul.f32 %v214, %v213
    %v216 = vmul.f32 %v215, %v214
    %v217 = vmul.f32 0.5, %v216
    %v218 = vsub.f32 1.5, %v217
    %v219 = vmul.f32 %v214, %v218
    %vm220 = vweird.f32 %v213
    %vm221 = vweird.f32 %v214
    %vm222 = vmor %vm220, %vm221
    %v223 = vsel %vm222, %v214, %v219
    %v224 = vmul.f32 %v212, %v223
    %v225 = vld [vmem:[#allocation2 + $0x78] sm:$0x1]
    %v226 = vperm.slane %v225, 0
    %v227 = vmul.f32 %v224, %v226
    %v228 = vld [vmem:[#allocation2 + $0x80] sm:$0x1]
    %v229 = vperm.slane %v228, 0
    %v230 = vadd.f32 %v227, %v229
    %v231 = vmax.f32 %v230, 0.0
    %232 = vmatpush.msra.mxu0 0.0
    %233 = vmatpush.msra.mxu0 0.0
    %234 = vmatpush.msra.mxu0 0.0
    %235 = vmatpush.msra.mxu0 0.0
    %236 = vmatpush.msra.mxu0 0.0
    %237 = vmatpush.msra.mxu0 0.0
    %238 = vmatpush.msra.mxu0 0.0
    %239 = vmatpush.msra.mxu0 0.0
    %240 = vmatpush.msra.mxu0 0.0
    %241 = vmatpush.msra.mxu0 0.0
    %242 = vmatpush.msra.mxu0 0.0
    %243 = vmatpush.msra.mxu0 0.0
    %244 = vmatpush.msra.mxu0 0.0
    %245 = vmatpush.msra.mxu0 0.0
    %246 = vmatpush.msra.mxu0 0.0
    %247 = vmatpush.msra.mxu0 %v231
    %248 = vmatmul.f32.gmra.mxu0 %v142
    %v249 = vpop.f32.mrf.mxu0
    %v250 = vadd.f32 0.0, %v249
    %251 = vdwg.mxu0
    %v252 = vld [vmem:[#allocation2 + $0x88] sm:$0xff]
    %v253 = vld [vmem:[#allocation2 + $0x90] sm:$0xff]
    %v254 = vld [vmem:[#allocation2 + $0x98] sm:$0xff]
    %v255 = vld [vmem:[#allocation2 + $0xa0] sm:$0xff]
    %v256 = vld [vmem:[#allocation2 + $0xa8] sm:$0x1]
    %v257 = vperm.slane %v256, 0
    %v259 = vsel %vm86, %v250, 0
    %261 = vmatpush.msra.mxu0 0.0
    %262 = vmatpush.msra.mxu0 0.0
    %263 = vmatpush.msra.mxu0 0.0
    %264 = vmatpush.msra.mxu0 0.0
    %265 = vmatpush.msra.mxu0 0.0
    %266 = vmatpush.msra.mxu0 0.0
    %267 = vmatpush.msra.mxu0 0.0
    %268 = vmatpush.msra.mxu0 0.0
    %269 = vmatpush.msra.mxu0 0.0
    %270 = vmatpush.msra.mxu0 0.0
    %271 = vmatpush.msra.mxu0 0.0
    %272 = vmatpush.msra.mxu0 0.0
    %273 = vmatpush.msra.mxu0 %v255
    %274 = vmatpush.msra.mxu0 %v254
    %275 = vmatpush.msra.mxu0 %v253
    %276 = vmatpush.msra.mxu0 %v252
    %277 = vmatmul.f32.gmra.mxu0 %v259
    %v278 = vpop.f32.mrf.mxu0
    %v279 = vadd.f32 %v257, %v278
    %280 = vdwg.mxu0
    %v281 = vsel %vm86, %v279, 0.0
    %v282 = vrot.slane %v281, 4
    %v283 = vadd.f32 %v281, %v282
    %v284 = vrot.slane %v283, 2
    %v285 = vadd.f32 %v283, %v284
    %v286 = vrot.slane %v285, 1
    %v287 = vadd.f32 %v285, %v286
    %v288 = vmul.f32 %v287, 0.125
    %v289 = vmul.f32 %v279, %v279
    %v290 = vsel %vm86, %v289, 0.0
    %v291 = vrot.slane %v290, 4
    %v292 = vadd.f32 %v290, %v291
    %v293 = vrot.slane %v292, 2
    %v294 = vadd.f32 %v292, %v293
    %v295 = vrot.slane %v294, 1
    %v296 = vadd.f32 %v294, %v295
    %v297 = vmul.f32 %v296, 0.125
    %v298 = vmul.f32 %v288, %v288
    %v299 = vsub.f32 %v297, %v298
    %v300 = vsub.f32 %v279, %v288
    %v301 = vadd.f32 %v299, 1e-05
    %v302 = vrsqrt.pop %v301
    %v303 = vmul.f32 %v302, %v301
    %v304 = vmul.f32 %v303, %v302
    %v305 = vmul.f32 0.5, %v304
    %v306 = vsub.f32 1.5, %v305
    %v307 = vmul.f32 %v302, %v306
    %vm308 = vweird.f32 %v301
    %vm309 = vweird.f32 %v302
    %vm310 = vmor %vm308, %vm309
    %v311 = vsel %vm310, %v302, %v307
    %v312 = vmul.f32 %v300, %v311
    %v313 = vld [vmem:[#allocation2 + $0xb0] sm:$0x1]
    %v314 = vperm.slane %v313, 0
    %v315 = vmul.f32 %v312, %v314
    %v316 = vld [vmem:[#allocation2 + $0xb8] sm:$0x1]
    %v317 = vperm.slane %v316, 0
    %v318 = vadd.f32 %v315, %v317
    %v319 = vmax.f32 %v318, 0.0
    %320 = vmatpush.msra.mxu0 0.0
    %321 = vmatpush.msra.mxu0 0.0
    %322 = vmatpush.msra.mxu0 0.0
    %323 = vmatpush.msra.mxu0 0.0
    %324 = vmatpush.msra.mxu0 0.0
    %325 = vmatpush.msra.mxu0 0.0
    %326 = vmatpush.msra.mxu0 0.0
    %327 = vmatpush.msra.mxu0 0.0
    %328 = vmatpush.msra.mxu0 0.0
    %329 = vmatpush.msra.mxu0 0.0
    %330 = vmatpush.msra.mxu0 0.0
    %331 = vmatpush.msra.mxu0 0.0
    %332 = vmatpush.msra.mxu0 0.0
    %333 = vmatpush.msra.mxu0 0.0
    %334 = vmatpush.msra.mxu0 0.0
    %335 = vmatpush.msra.mxu0 %v319
    %336 = vmatmul.f32.gmra.mxu0 %v142
    %v337 = vpop.f32.mrf.mxu0
    %v338 = vadd.f32 0.0, %v337
    %339 = vdwg.mxu0
    %v340 = vld [vmem:[#allocation2 + $0xc0] sm:$0xff]
    %v341 = vld [vmem:[#allocation2 + $0xc8] sm:$0xff]
    %v342 = vld [vmem:[#allocation2 + $0xd0] sm:$0xff]
    %v343 = vld [vmem:[#allocation2 + $0xd8] sm:$0xff]
    %v344 = vld [vmem:[#allocation2 + $0xe0] sm:$0x1]
    %v345 = vperm.slane %v344, 0
    %v347 = vsel %vm86, %v338, 0
    %349 = vmatpush.msra.mxu0 0.0
    %350 = vmatpush.msra.mxu0 0.0
    %351 = vmatpush.msra.mxu0 0.0
    %352 = vmatpush.msra.mxu0 0.0
    %353 = vmatpush.msra.mxu0 0.0
    %354 = vmatpush.msra.mxu0 0.0
    %355 = vmatpush.msra.mxu0 0.0
    %356 = vmatpush.msra.mxu0 0.0
    %357 = vmatpush.msra.mxu0 0.0
    %358 = vmatpush.msra.mxu0 0.0
    %359 = vmatpush.msra.mxu0 0.0
    %360 = vmatpush.msra.mxu0 0.0
    %361 = vmatpush.msra.mxu0 %v343
    %362 = vmatpush.msra.mxu0 %v342
    %363 = vmatpush.msra.mxu0 %v341
    %364 = vmatpush.msra.mxu0 %v340
    %365 = vmatmul.f32.gmra.mxu0 %v347
    %v366 = vpop.f32.mrf.mxu0
    %v367 = vadd.f32 %v345, %v366
    %368 = vdwg.mxu0
    %v369 = vsel %vm86, %v367, 0.0
    %v370 = vrot.slane %v369, 4
    %v371 = vadd.f32 %v369, %v370
    %v372 = vrot.slane %v371, 2
    %v373 = vadd.f32 %v371, %v372
    %v374 = vrot.slane %v373, 1
    %v375 = vadd.f32 %v373, %v374
    %v376 = vmul.f32 %v375, 0.125
    %v377 = vmul.f32 %v367, %v367
    %v378 = vsel %vm86, %v377, 0.0
    %v379 = vrot.slane %v378, 4
    %v380 = vadd.f32 %v378, %v379
    %v381 = vrot.slane %v380, 2
    %v382 = vadd.f32 %v380, %v381
    %v383 = vrot.slane %v382, 1
    %v384 = vadd.f32 %v382, %v383
    %v385 = vmul.f32 %v384, 0.125
    %v386 = vmul.f32 %v376, %v376
    %v387 = vsub.f32 %v385, %v386
    %v388 = vsub.f32 %v367, %v376
    %v389 = vadd.f32 %v387, 1e-05
    %v390 = vrsqrt.pop %v389
    %v391 = vmul.f32 %v390, %v389
    %v392 = vmul.f32 %v391, %v390
    %v393 = vmul.f32 0.5, %v392
    %v394 = vsub.f32 1.5, %v393
    %v395 = vmul.f32 %v390, %v394
    %vm396 = vweird.f32 %v389
    %vm397 = vweird.f32 %v390
    %vm398 = vmor %vm396, %vm397
    %v399 = vsel %vm398, %v390, %v395
    %v400 = vmul.f32 %v388, %v399
    %v401 = vld [vmem:[#allocation2 + $0xe8] sm:$0x1]
    %v402 = vperm.slane %v401, 0
    %v403 = vmul.f32 %v400, %v402
    %v404 = vld [vmem:[#allocation2 + $0xf0] sm:$0x1]
    %v405 = vperm.slane %v404, 0
    %v406 = vadd.f32 %v403, %v405
    %v407 = vmax.f32 %v406, 0.0
    %408 = vmatpush.msra.mxu0 0.0
    %409 = vmatpush.msra.mxu0 0.0
    %410 = vmatpush.msra.mxu0 0.0
    %411 = vmatpush.msra.mxu0 0.0
    %412 = vmatpush.msra.mxu0 0.0
    %413 = vmatpush.msra.mxu0 0.0
    %414 = vmatpush.msra.mxu0 0.0
    %415 = vmatpush.msra.mxu0 0.0
    %416 = vmatpush.msra.mxu0 0.0
    %417 = vmatpush.msra.mxu0 0.0
    %418 = vmatpush.msra.mxu0 0.0
    %419 = vmatpush.msra.mxu0 0.0
    %420 = vmatpush.msra.mxu0 0.0
    %421 = vmatpush.msra.mxu0 0.0
    %422 = vmatpush.msra.mxu0 0.0
    %423 = vmatpush.msra.mxu0 %v407
    %424 = vmatmul.f32.gmra.mxu0 %v142
    %v425 = vpop.f32.mrf.mxu0
    %v426 = vadd.f32 0.0, %v425
    %427 = vdwg.mxu0
    %v428 = vld [vmem:[#allocation2 + $0xf8] sm:$0xff]
    %v429 = vld [vmem:[#allocation2 + $0x100] sm:$0xff]
    %v430 = vld [vmem:[#allocation2 + $0x108] sm:$0xff]
    %v431 = vld [vmem:[#allocation2 + $0x110] sm:$0xff]
    %v432 = vld [vmem:[#allocation2 + $0x118] sm:$0x1]
    %v433 = vperm.slane %v432, 0
    %v435 = vsel %vm86, %v426, 0
    %437 = vmatpush.msra.mxu0 0.0
    %438 = vmatpush.msra.mxu0 0.0
    %439 = vmatpush.msra.mxu0 0.0
    %440 = vmatpush.msra.mxu0 0.0
    %441 = vmatpush.msra.mxu0 0.0
    %442 = vmatpush.msra.mxu0 0.0
    %443 = vmatpush.msra.mxu0 0.0
    %444 = vmatpush.msra.mxu0 0.0
    %445 = vmatpush.msra.mxu0 0.0
    %446 = vmatpush.msra.mxu0 0.0
    %447 = vmatpush.msra.mxu0 0.0
    %448 = vmatpush.msra.mxu0 0.0
    %449 = vmatpush.msra.mxu0 %v431
    %450 = vmatpush.msra.mxu0 %v430
    %451 = vmatpush.msra.mxu0 %v429
    %452 = vmatpush.msra.mxu0 %v428
    %453 = vmatmul.f32.gmra.mxu0 %v435
    %v454 = vpop.f32.mrf.mxu0
    %v455 = vadd.f32 %v433, %v454
    %456 = vdwg.mxu0
    %v457 = vsel %vm86, %v455, 0.0
    %v458 = vrot.slane %v457, 4
    %v459 = vadd.f32 %v457, %v458
    %v460 = vrot.slane %v459, 2
    %v461 = vadd.f32 %v459, %v460
    %v462 = vrot.slane %v461, 1
    %v463 = vadd.f32 %v461, %v462
    %v464 = vmul.f32 %v463, 0.125
    %v465 = vmul.f32 %v455, %v455
    %v466 = vsel %vm86, %v465, 0.0
    %v467 = vrot.slane %v466, 4
    %v468 = vadd.f32 %v466, %v467
    %v469 = vrot.slane %v468, 2
    %v470 = vadd.f32 %v468, %v469
    %v471 = vrot.slane %v470, 1
    %v472 = vadd.f32 %v470, %v471
    %v473 = vmul.f32 %v472, 0.125
    %v474 = vmul.f32 %v464, %v464
    %v475 = vsub.f32 %v473, %v474
    %v476 = vsub.f32 %v455, %v464
    %v477 = vadd.f32 %v475, 1e-05
    %v478 = vrsqrt.pop %v477
    %v479 = vmul.f32 %v478, %v477
    %v480 = vmul.f32 %v479, %v478
    %v481 = vmul.f32 0.5, %v480
    %v482 = vsub.f32 1.5, %v481
    %v483 = vmul.f32 %v478, %v482
    %vm484 = vweird.f32 %v477
    %vm485 = vweird.f32 %v478
    %vm486 = vmor %vm484, %vm485
    %v487 = vsel %vm486, %v478, %v483
    %v488 = vmul.f32 %v476, %v487
    %v489 = vld [vmem:[#allocation2 + $0x120] sm:$0x1]
    %v490 = vperm.slane %v489, 0
    %v491 = vmul.f32 %v488, %v490
    %v492 = vld [vmem:[#allocation2 + $0x128] sm:$0x1]
    %v493 = vperm.slane %v492, 0
    %v494 = vadd.f32 %v491, %v493
    %v495 = vmax.f32 %v494, 0.0
    %v496 = vadd.f32 %v138, %v495
    %497 = vmatpush.msra.mxu0 0.0
    %498 = vmatpush.msra.mxu0 0.0
    %499 = vmatpush.msra.mxu0 0.0
    %500 = vmatpush.msra.mxu0 0.0
    %501 = vmatpush.msra.mxu0 0.0
    %502 = vmatpush.msra.mxu0 0.0
    %503 = vmatpush.msra.mxu0 0.0
    %504 = vmatpush.msra.mxu0 0.0
    %505 = vmatpush.msra.mxu0 0.0
    %506 = vmatpush.msra.mxu0 0.0
    %507 = vmatpush.msra.mxu0 0.0
    %508 = vmatpush.msra.mxu0 0.0
    %509 = vmatpush.msra.mxu0 0.0
    %510 = vmatpush.msra.mxu0 0.0
    %511 = vmatpush.msra.mxu0 0.0
    %512 = vmatpush.msra.mxu0 %v496
    %513 = vmatmul.f32.gmra.mxu0 %v142
    %v514 = vpop.f32.mrf.mxu0
    %v515 = vadd.f32 0.0, %v514
    %516 = vdwg.mxu0
    %v517 = vld [vmem:[#allocation2 + $0x130] sm:$0xff]
    %v518 = vld [vmem:[#allocation2 + $0x138] sm:$0xff]
    %v519 = vld [vmem:[#allocation2 + $0x140] sm:$0xff]
    %v520 = vld [vmem:[#allocation2 + $0x148] sm:$0xff]
    %v521 = vld [vmem:[#allocation2 + $0x150] sm:$0x1]
    %v522 = vperm.slane %v521, 0
    %v524 = vsel %vm86, %v515, 0
    %526 = vmatpush.msra.mxu0 0.0
    %527 = vmatpush.msra.mxu0 0.0
    %528 = vmatpush.msra.mxu0 0.0
    %529 = vmatpush.msra.mxu0 0.0
    %530 = vmatpush.msra.mxu0 0.0
    %531 = vmatpush.msra.mxu0 0.0
    %532 = vmatpush.msra.mxu0 0.0
    %533 = vmatpush.msra.mxu0 0.0
    %534 = vmatpush.msra.mxu0 0.0
    %535 = vmatpush.msra.mxu0 0.0
    %536 = vmatpush.msra.mxu0 0.0
    %537 = vmatpush.msra.mxu0 0.0
    %538 = vmatpush.msra.mxu0 %v520
    %539 = vmatpush.msra.mxu0 %v519
    %540 = vmatpush.msra.mxu0 %v518
    %541 = vmatpush.msra.mxu0 %v517
    %542 = vmatmul.f32.gmra.mxu0 %v524
    %v543 = vpop.f32.mrf.mxu0
    %v544 = vadd.f32 %v522, %v543
    %545 = vdwg.mxu0
    %v546 = vsel %vm86, %v544, 0.0
    %v547 = vrot.slane %v546, 4
    %v548 = vadd.f32 %v546, %v547
    %v549 = vrot.slane %v548, 2
    %v550 = vadd.f32 %v548, %v549
    %v551 = vrot.slane %v550, 1
    %v552 = vadd.f32 %v550, %v551
    %v553 = vmul.f32 %v552, 0.125
    %v554 = vmul.f32 %v544, %v544
    %v555 = vsel %vm86, %v554, 0.0
    %v556 = vrot.slane %v555, 4
    %v557 = vadd.f32 %v555, %v556
    %v558 = vrot.slane %v557, 2
    %v559 = vadd.f32 %v557, %v558
    %v560 = vrot.slane %v559, 1
    %v561 = vadd.f32 %v559, %v560
    %v562 = vmul.f32 %v561, 0.125
    %v563 = vmul.f32 %v553, %v553
    %v564 = vsub.f32 %v562, %v563
    %v565 = vsub.f32 %v544, %v553
    %v566 = vadd.f32 %v564, 1e-05
    %v567 = vrsqrt.pop %v566
    %v568 = vmul.f32 %v567, %v566
    %v569 = vmul.f32 %v568, %v567
    %v570 = vmul.f32 0.5, %v569
    %v571 = vsub.f32 1.5, %v570
    %v572 = vmul.f32 %v567, %v571
    %vm573 = vweird.f32 %v566
    %vm574 = vweird.f32 %v567
    %vm575 = vmor %vm573, %vm574
    %v576 = vsel %vm575, %v567, %v572
    %v577 = vmul.f32 %v565, %v576
    %v578 = vld [vmem:[#allocation2 + $0x158] sm:$0x1]
    %v579 = vperm.slane %v578, 0
    %v580 = vmul.f32 %v577, %v579
    %v581 = vld [vmem:[#allocation2 + $0x160] sm:$0x1]
    %v582 = vperm.slane %v581, 0
    %v583 = vadd.f32 %v580, %v582
    %v584 = vmax.f32 %v583, 0.0
    %585 = vmatpush.msra.mxu0 0.0
    %586 = vmatpush.msra.mxu0 0.0
    %587 = vmatpush.msra.mxu0 0.0
    %588 = vmatpush.msra.mxu0 0.0
    %589 = vmatpush.msra.mxu0 0.0
    %590 = vmatpush.msra.mxu0 0.0
    %591 = vmatpush.msra.mxu0 0.0
    %592 = vmatpush.msra.mxu0 0.0
    %593 = vmatpush.msra.mxu0 0.0
    %594 = vmatpush.msra.mxu0 0.0
    %595 = vmatpush.msra.mxu0 0.0
    %596 = vmatpush.msra.mxu0 0.0
    %597 = vmatpush.msra.mxu0 0.0
    %598 = vmatpush.msra.mxu0 0.0
    %599 = vmatpush.msra.mxu0 0.0
    %600 = vmatpush.msra.mxu0 %v584
    %601 = vmatmul.f32.gmra.mxu0 %v142
    %v602 = vpop.f32.mrf.mxu0
    %v603 = vadd.f32 0.0, %v602
    %604 = vdwg.mxu0
    %v605 = vld [vmem:[#allocation2 + $0x168] sm:$0xff]
    %v606 = vld [vmem:[#allocation2 + $0x170] sm:$0xff]
    %v607 = vld [vmem:[#allocation2 + $0x178] sm:$0xff]
    %v608 = vld [vmem:[#allocation2 + $0x180] sm:$0xff]
    %v609 = vld [vmem:[#allocation2 + $0x188] sm:$0x1]
    %v610 = vperm.slane %v609, 0
    %v612 = vsel %vm86, %v603, 0
    %614 = vmatpush.msra.mxu0 0.0
    %615 = vmatpush.msra.mxu0 0.0
    %616 = vmatpush.msra.mxu0 0.0
    %617 = vmatpush.msra.mxu0 0.0
    %618 = vmatpush.msra.mxu0 0.0
    %619 = vmatpush.msra.mxu0 0.0
    %620 = vmatpush.msra.mxu0 0.0
    %621 = vmatpush.msra.mxu0 0.0
    %622 = vmatpush.msra.mxu0 0.0
    %623 = vmatpush.msra.mxu0 0.0
    %624 = vmatpush.msra.mxu0 0.0
    %625 = vmatpush.msra.mxu0 0.0
    %626 = vmatpush.msra.mxu0 %v608
    %627 = vmatpush.msra.mxu0 %v607
    %628 = vmatpush.msra.mxu0 %v606
    %629 = vmatpush.msra.mxu0 %v605
    %630 = vmatmul.f32.gmra.mxu0 %v612
    %v631 = vpop.f32.mrf.mxu0
    %v632 = vadd.f32 %v610, %v631
    %633 = vdwg.mxu0
    %v634 = vsel %vm86, %v632, 0.0
    %v635 = vrot.slane %v634, 4
    %v636 = vadd.f32 %v634, %v635
    %v637 = vrot.slane %v636, 2
    %v638 = vadd.f32 %v636, %v637
    %v639 = vrot.slane %v638, 1
    %v640 = vadd.f32 %v638, %v639
    %v641 = vmul.f32 %v640, 0.125
    %v642 = vmul.f32 %v632, %v632
    %v643 = vsel %vm86, %v642, 0.0
    %v644 = vrot.slane %v643, 4
    %v645 = vadd.f32 %v643, %v644
    %v646 = vrot.slane %v645, 2
    %v647 = vadd.f32 %v645, %v646
    %v648 = vrot.slane %v647, 1
    %v649 = vadd.f32 %v647, %v648
    %v650 = vmul.f32 %v649, 0.125
    %v651 = vmul.f32 %v641, %v641
    %v652 = vsub.f32 %v650, %v651
    %v653 = vsub.f32 %v632, %v641
    %v654 = vadd.f32 %v652, 1e-05
    %v655 = vrsqrt.pop %v654
    %v656 = vmul.f32 %v655, %v654
    %v657 = vmul.f32 %v656, %v655
    %v658 = vmul.f32 0.5, %v657
    %v659 = vsub.f32 1.5, %v658
    %v660 = vmul.f32 %v655, %v659
    %vm661 = vweird.f32 %v654
    %vm662 = vweird.f32 %v655
    %vm663 = vmor %vm661, %vm662
    %v664 = vsel %vm663, %v655, %v660
    %v665 = vmul.f32 %v653, %v664
    %v666 = vld [vmem:[#allocation2 + $0x190] sm:$0x1]
    %v667 = vperm.slane %v666, 0
    %v668 = vmul.f32 %v665, %v667
    %v669 = vld [vmem:[#allocation2 + $0x198] sm:$0x1]
    %v670 = vperm.slane %v669, 0
    %v671 = vadd.f32 %v668, %v670
    %v672 = vmax.f32 %v671, 0.0
    %673 = vmatpush.msra.mxu0 0.0
    %674 = vmatpush.msra.mxu0 0.0
    %675 = vmatpush.msra.mxu0 0.0
    %676 = vmatpush.msra.mxu0 0.0
    %677 = vmatpush.msra.mxu0 0.0
    %678 = vmatpush.msra.mxu0 0.0
    %679 = vmatpush.msra.mxu0 0.0
    %680 = vmatpush.msra.mxu0 0.0
    %681 = vmatpush.msra.mxu0 0.0
    %682 = vmatpush.msra.mxu0 0.0
    %683 = vmatpush.msra.mxu0 0.0
    %684 = vmatpush.msra.mxu0 0.0
    %685 = vmatpush.msra.mxu0 0.0
    %686 = vmatpush.msra.mxu0 0.0
    %687 = vmatpush.msra.mxu0 0.0
    %688 = vmatpush.msra.mxu0 %v672
    %689 = vmatmul.f32.gmra.mxu0 %v142
    %v690 = vpop.f32.mrf.mxu0
    %v691 = vadd.f32 0.0, %v690
    %692 = vdwg.mxu0
    %v693 = vld [vmem:[#allocation2 + $0x1a0] sm:$0xff]
    %v694 = vld [vmem:[#allocation2 + $0x1a8] sm:$0xff]
    %v695 = vld [vmem:[#allocation2 + $0x1b0] sm:$0xff]
    %v696 = vld [vmem:[#allocation2 + $0x1b8] sm:$0xff]
    %v697 = vld [vmem:[#allocation2 + $0x1c0] sm:$0x1]
    %v698 = vperm.slane %v697, 0
    %v700 = vsel %vm86, %v691, 0
    %702 = vmatpush.msra.mxu0 0.0
    %703 = vmatpush.msra.mxu0 0.0
    %704 = vmatpush.msra.mxu0 0.0
    %705 = vmatpush.msra.mxu0 0.0
    %706 = vmatpush.msra.mxu0 0.0
    %707 = vmatpush.msra.mxu0 0.0
    %708 = vmatpush.msra.mxu0 0.0
    %709 = vmatpush.msra.mxu0 0.0
    %710 = vmatpush.msra.mxu0 0.0
    %711 = vmatpush.msra.mxu0 0.0
    %712 = vmatpush.msra.mxu0 0.0
    %713 = vmatpush.msra.mxu0 0.0
    %714 = vmatpush.msra.mxu0 %v696
    %715 = vmatpush.msra.mxu0 %v695
    %716 = vmatpush.msra.mxu0 %v694
    %717 = vmatpush.msra.mxu0 %v693
    %718 = vmatmul.f32.gmra.mxu0 %v700
    %v719 = vpop.f32.mrf.mxu0
    %v720 = vadd.f32 %v698, %v719
    %721 = vdwg.mxu0
    %v722 = vsel %vm86, %v720, 0.0
    %v723 = vrot.slane %v722, 4
    %v724 = vadd.f32 %v722, %v723
    %v725 = vrot.slane %v724, 2
    %v726 = vadd.f32 %v724, %v725
    %v727 = vrot.slane %v726, 1
    %v728 = vadd.f32 %v726, %v727
    %v729 = vmul.f32 %v728, 0.125
    %v730 = vmul.f32 %v720, %v720
    %v731 = vsel %vm86, %v730, 0.0
    %v732 = vrot.slane %v731, 4
    %v733 = vadd.f32 %v731, %v732
    %v734 = vrot.slane %v733, 2
    %v735 = vadd.f32 %v733, %v734
    %v736 = vrot.slane %v735, 1
    %v737 = vadd.f32 %v735, %v736
    %v738 = vmul.f32 %v737, 0.125
    %v739 = vmul.f32 %v729, %v729
    %v740 = vsub.f32 %v738, %v739
    %v741 = vsub.f32 %v720, %v729
    %v742 = vadd.f32 %v740, 1e-05
    %v743 = vrsqrt.pop %v742
    %v744 = vmul.f32 %v743, %v742
    %v745 = vmul.f32 %v744, %v743
    %v746 = vmul.f32 0.5, %v745
    %v747 = vsub.f32 1.5, %v746
    %v748 = vmul.f32 %v743, %v747
    %vm749 = vweird.f32 %v742
    %vm750 = vweird.f32 %v743
    %vm751 = vmor %vm749, %vm750
    %v752 = vsel %vm751, %v743, %v748
    %v753 = vmul.f32 %v741, %v752
    %v754 = vld [vmem:[#allocation2 + $0x1c8] sm:$0x1]
    %v755 = vperm.slane %v754, 0
    %v756 = vmul.f32 %v753, %v755
    %v757 = vld [vmem:[#allocation2 + $0x1d0] sm:$0x1]
    %v758 = vperm.slane %v757, 0
    %v759 = vadd.f32 %v756, %v758
    %v760 = vmax.f32 %v759, 0.0
    %761 = vmatpush.msra.mxu0 0.0
    %762 = vmatpush.msra.mxu0 0.0
    %763 = vmatpush.msra.mxu0 0.0
    %764 = vmatpush.msra.mxu0 0.0
    %765 = vmatpush.msra.mxu0 0.0
    %766 = vmatpush.msra.mxu0 0.0
    %767 = vmatpush.msra.mxu0 0.0
    %768 = vmatpush.msra.mxu0 0.0
    %769 = vmatpush.msra.mxu0 0.0
    %770 = vmatpush.msra.mxu0 0.0
    %771 = vmatpush.msra.mxu0 0.0
    %772 = vmatpush.msra.mxu0 0.0
    %773 = vmatpush.msra.mxu0 0.0
    %774 = vmatpush.msra.mxu0 0.0
    %775 = vmatpush.msra.mxu0 0.0
    %776 = vmatpush.msra.mxu0 %v760
    %777 = vmatmul.f32.gmra.mxu0 %v142
    %v778 = vpop.f32.mrf.mxu0
    %v779 = vadd.f32 0.0, %v778
    %780 = vdwg.mxu0
    %v781 = vld [vmem:[#allocation2 + $0x1d8] sm:$0xff]
    %v782 = vld [vmem:[#allocation2 + $0x1e0] sm:$0xff]
    %v783 = vld [vmem:[#allocation2 + $0x1e8] sm:$0xff]
    %v784 = vld [vmem:[#allocation2 + $0x1f0] sm:$0xff]
    %v785 = vld [vmem:[#allocation2 + $0x1f8] sm:$0x1]
    %v786 = vperm.slane %v785, 0
    %v788 = vsel %vm86, %v779, 0
    %790 = vmatpush.msra.mxu0 0.0
    %791 = vmatpush.msra.mxu0 0.0
    %792 = vmatpush.msra.mxu0 0.0
    %793 = vmatpush.msra.mxu0 0.0
    %794 = vmatpush.msra.mxu0 0.0
    %795 = vmatpush.msra.mxu0 0.0
    %796 = vmatpush.msra.mxu0 0.0
    %797 = vmatpush.msra.mxu0 0.0
    %798 = vmatpush.msra.mxu0 0.0
    %799 = vmatpush.msra.mxu0 0.0
    %800 = vmatpush.msra.mxu0 0.0
    %801 = vmatpush.msra.mxu0 0.0
    %802 = vmatpush.msra.mxu0 %v784
    %803 = vmatpush.msra.mxu0 %v783
    %804 = vmatpush.msra.mxu0 %v782
    %805 = vmatpush.msra.mxu0 %v781
    %806 = vmatmul.f32.gmra.mxu0 %v788
    %v807 = vpop.f32.mrf.mxu0
    %v808 = vadd.f32 %v786, %v807
    %809 = vdwg.mxu0
    %v810 = vsel %vm86, %v808, 0.0
    %v811 = vrot.slane %v810, 4
    %v812 = vadd.f32 %v810, %v811
    %v813 = vrot.slane %v812, 2
    %v814 = vadd.f32 %v812, %v813
    %v815 = vrot.slane %v814, 1
    %v816 = vadd.f32 %v814, %v815
    %v817 = vmul.f32 %v816, 0.125
    %v818 = vmul.f32 %v808, %v808
    %v819 = vsel %vm86, %v818, 0.0
    %v820 = vrot.slane %v819, 4
    %v821 = vadd.f32 %v819, %v820
    %v822 = vrot.slane %v821, 2
    %v823 = vadd.f32 %v821, %v822
    %v824 = vrot.slane %v823, 1
    %v825 = vadd.f32 %v823, %v824
    %v826 = vmul.f32 %v825, 0.125
    %v827 = vmul.f32 %v817, %v817
    %v828 = vsub.f32 %v826, %v827
    %v829 = vsub.f32 %v808, %v817
    %v830 = vadd.f32 %v828, 1e-05
    %v831 = vrsqrt.pop %v830
    %v832 = vmul.f32 %v831, %v830
    %v833 = vmul.f32 %v832, %v831
    %v834 = vmul.f32 0.5, %v833
    %v835 = vsub.f32 1.5, %v834
    %v836 = vmul.f32 %v831, %v835
    %vm837 = vweird.f32 %v830
    %vm838 = vweird.f32 %v831
    %vm839 = vmor %vm837, %vm838
    %v840 = vsel %vm839, %v831, %v836
    %v841 = vmul.f32 %v829, %v840
    %v842 = vld [vmem:[#allocation2 + $0x200] sm:$0x1]
    %v843 = vperm.slane %v842, 0
    %v844 = vmul.f32 %v841, %v843
    %v845 = vld [vmem:[#allocation2 + $0x208] sm:$0x1]
    %v846 = vperm.slane %v845, 0
    %v847 = vadd.f32 %v844, %v846
    %v848 = vmax.f32 %v847, 0.0
    %v849 = vadd.f32 %v496, %v848
    %850 = vmatpush.msra.mxu0 0.0
    %851 = vmatpush.msra.mxu0 0.0
    %852 = vmatpush.msra.mxu0 0.0
    %853 = vmatpush.msra.mxu0 0.0
    %854 = vmatpush.msra.mxu0 0.0
    %855 = vmatpush.msra.mxu0 0.0
    %856 = vmatpush.msra.mxu0 0.0
    %857 = vmatpush.msra.mxu0 0.0
    %858 = vmatpush.msra.mxu0 0.0
    %859 = vmatpush.msra.mxu0 0.0
    %860 = vmatpush.msra.mxu0 0.0
    %861 = vmatpush.msra.mxu0 0.0
    %862 = vmatpush.msra.mxu0 0.0
    %863 = vmatpush.msra.mxu0 0.0
    %864 = vmatpush.msra.mxu0 0.0
    %865 = vmatpush.msra.mxu0 %v849
    %866 = vmatmul.f32.gmra.mxu0 %v142
    %v867 = vpop.f32.mrf.mxu0
    %v868 = vadd.f32 0.0, %v867
    %869 = vdwg.mxu0
    %v870 = vld [vmem:[#allocation2 + $0x210] sm:$0xff]
    %v871 = vld [vmem:[#allocation2 + $0x218] sm:$0xff]
    %v872 = vld [vmem:[#allocation2 + $0x220] sm:$0xff]
    %v873 = vld [vmem:[#allocation2 + $0x228] sm:$0xff]
    %v874 = vld [vmem:[#allocation2 + $0x230] sm:$0x1]
    %v875 = vperm.slane %v874, 0
    %v877 = vsel %vm86, %v868, 0
    %879 = vmatpush.msra.mxu0 0.0
    %880 = vmatpush.msra.mxu0 0.0
    %881 = vmatpush.msra.mxu0 0.0
    %882 = vmatpush.msra.mxu0 0.0
    %883 = vmatpush.msra.mxu0 0.0
    %884 = vmatpush.msra.mxu0 0.0
    %885 = vmatpush.msra.mxu0 0.0
    %886 = vmatpush.msra.mxu0 0.0
    %887 = vmatpush.msra.mxu0 0.0
    %888 = vmatpush.msra.mxu0 0.0
    %889 = vmatpush.msra.mxu0 0.0
    %890 = vmatpush.msra.mxu0 0.0
    %891 = vmatpush.msra.mxu0 %v873
    %892 = vmatpush.msra.mxu0 %v872
    %893 = vmatpush.msra.mxu0 %v871
    %894 = vmatpush.msra.mxu0 %v870
    %895 = vmatmul.f32.gmra.mxu0 %v877
    %v896 = vpop.f32.mrf.mxu0
    %v897 = vadd.f32 %v875, %v896
    %898 = vdwg.mxu0
    %v899 = vsel %vm86, %v897, 0.0
    %v900 = vrot.slane %v899, 4
    %v901 = vadd.f32 %v899, %v900
    %v902 = vrot.slane %v901, 2
    %v903 = vadd.f32 %v901, %v902
    %v904 = vrot.slane %v903, 1
    %v905 = vadd.f32 %v903, %v904
    %v906 = vmul.f32 %v905, 0.125
    %v907 = vmul.f32 %v897, %v897
    %v908 = vsel %vm86, %v907, 0.0
    %v909 = vrot.slane %v908, 4
    %v910 = vadd.f32 %v908, %v909
    %v911 = vrot.slane %v910, 2
    %v912 = vadd.f32 %v910, %v911
    %v913 = vrot.slane %v912, 1
    %v914 = vadd.f32 %v912, %v913
    %v915 = vmul.f32 %v914, 0.125
    %v916 = vmul.f32 %v906, %v906
    %v917 = vsub.f32 %v915, %v916
    %v918 = vsub.f32 %v897, %v906
    %v919 = vadd.f32 %v917, 1e-05
    %v920 = vrsqrt.pop %v919
    %v921 = vmul.f32 %v920, %v919
    %v922 = vmul.f32 %v921, %v920
    %v923 = vmul.f32 0.5, %v922
    %v924 = vsub.f32 1.5, %v923
    %v925 = vmul.f32 %v920, %v924
    %vm926 = vweird.f32 %v919
    %vm927 = vweird.f32 %v920
    %vm928 = vmor %vm926, %vm927
    %v929 = vsel %vm928, %v920, %v925
    %v930 = vmul.f32 %v918, %v929
    %v931 = vld [vmem:[#allocation2 + $0x238] sm:$0x1]
    %v932 = vperm.slane %v931, 0
    %v933 = vmul.f32 %v930, %v932
    %v934 = vld [vmem:[#allocation2 + $0x240] sm:$0x1]
    %v935 = vperm.slane %v934, 0
    %v936 = vadd.f32 %v933, %v935
    %v937 = vmax.f32 %v936, 0.0
    %938 = vmatpush.msra.mxu0 0.0
    %939 = vmatpush.msra.mxu0 0.0
    %940 = vmatpush.msra.mxu0 0.0
    %941 = vmatpush.msra.mxu0 0.0
    %942 = vmatpush.msra.mxu0 0.0
    %943 = vmatpush.msra.mxu0 0.0
    %944 = vmatpush.msra.mxu0 0.0
    %945 = vmatpush.msra.mxu0 0.0
    %946 = vmatpush.msra.mxu0 0.0
    %947 = vmatpush.msra.mxu0 0.0
    %948 = vmatpush.msra.mxu0 0.0
    %949 = vmatpush.msra.mxu0 0.0
    %950 = vmatpush.msra.mxu0 0.0
    %951 = vmatpush.msra.mxu0 0.0
    %952 = vmatpush.msra.mxu0 0.0
    %953 = vmatpush.msra.mxu0 %v937
    %954 = vmatmul.f32.gmra.mxu0 %v142
    %v955 = vpop.f32.mrf.mxu0
    %v956 = vadd.f32 0.0, %v955
    %957 = vdwg.mxu0
    %v958 = vld [vmem:[#allocation2 + $0x248] sm:$0xff]
    %v959 = vld [vmem:[#allocation2 + $0x250] sm:$0xff]
    %v960 = vld [vmem:[#allocation2 + $0x258] sm:$0xff]
    %v961 = vld [vmem:[#allocation2 + $0x260] sm:$0xff]
    %v962 = vld [vmem:[#allocation2 + $0x268] sm:$0x1]
    %v963 = vperm.slane %v962, 0
    %v965 = vsel %vm86, %v956, 0
    %967 = vmatpush.msra.mxu0 0.0
    %968 = vmatpush.msra.mxu0 0.0
    %969 = vmatpush.msra.mxu0 0.0
    %970 = vmatpush.msra.mxu0 0.0
    %971 = vmatpush.msra.mxu0 0.0
    %972 = vmatpush.msra.mxu0 0.0
    %973 = vmatpush.msra.mxu0 0.0
    %974 = vmatpush.msra.mxu0 0.0
    %975 = vmatpush.msra.mxu0 0.0
    %976 = vmatpush.msra.mxu0 0.0
    %977 = vmatpush.msra.mxu0 0.0
    %978 = vmatpush.msra.mxu0 0.0
    %979 = vmatpush.msra.mxu0 %v961
    %980 = vmatpush.msra.mxu0 %v960
    %981 = vmatpush.msra.mxu0 %v959
    %982 = vmatpush.msra.mxu0 %v958
    %983 = vmatmul.f32.gmra.mxu0 %v965
    %v984 = vpop.f32.mrf.mxu0
    %v985 = vadd.f32 %v963, %v984
    %986 = vdwg.mxu0
    %v987 = vsel %vm86, %v985, 0.0
    %v988 = vrot.slane %v987, 4
    %v989 = vadd.f32 %v987, %v988
    %v990 = vrot.slane %v989, 2
    %v991 = vadd.f32 %v989, %v990
    %v992 = vrot.slane %v991, 1
    %v993 = vadd.f32 %v991, %v992
    %v994 = vmul.f32 %v993, 0.125
    %v995 = vmul.f32 %v985, %v985
    %v996 = vsel %vm86, %v995, 0.0
    %v997 = vrot.slane %v996, 4
    %v998 = vadd.f32 %v996, %v997
    %v999 = vrot.slane %v998, 2
    %v1000 = vadd.f32 %v998, %v999
    %v1001 = vrot.slane %v1000, 1
    %v1002 = vadd.f32 %v1000, %v1001
    %v1003 = vmul.f32 %v1002, 0.125
    %v1004 = vmul.f32 %v994, %v994
    %v1005 = vsub.f32 %v1003, %v1004
    %v1006 = vsub.f32 %v985, %v994
    %v1007 = vadd.f32 %v1005, 1e-05
    %v1008 = vrsqrt.pop %v1007
    %v1009 = vmul.f32 %v1008, %v1007
    %v1010 = vmul.f32 %v1009, %v1008
    %v1011 = vmul.f32 0.5, %v1010
    %v1012 = vsub.f32 1.5, %v1011
    %v1013 = vmul.f32 %v1008, %v1012
    %vm1014 = vweird.f32 %v1007
    %vm1015 = vweird.f32 %v1008
    %vm1016 = vmor %vm1014, %vm1015
    %v1017 = vsel %vm1016, %v1008, %v1013
    %v1018 = vmul.f32 %v1006, %v1017
    %v1019 = vld [vmem:[#allocation2 + $0x270] sm:$0x1]
    %v1020 = vperm.slane %v1019, 0
    %v1021 = vmul.f32 %v1018, %v1020
    %v1022 = vld [vmem:[#allocation2 + $0x278] sm:$0x1]
    %v1023 = vperm.slane %v1022, 0
    %v1024 = vadd.f32 %v1021, %v1023
    %v1025 = vmax.f32 %v1024, 0.0
    %1026 = vmatpush.msra.mxu0 0.0
    %1027 = vmatpush.msra.mxu0 0.0
    %1028 = vmatpush.msra.mxu0 0.0
    %1029 = vmatpush.msra.mxu0 0.0
    %1030 = vmatpush.msra.mxu0 0.0
    %1031 = vmatpush.msra.mxu0 0.0
    %1032 = vmatpush.msra.mxu0 0.0
    %1033 = vmatpush.msra.mxu0 0.0
    %1034 = vmatpush.msra.mxu0 0.0
    %1035 = vmatpush.msra.mxu0 0.0
    %1036 = vmatpush.msra.mxu0 0.0
    %1037 = vmatpush.msra.mxu0 0.0
    %1038 = vmatpush.msra.mxu0 0.0
    %1039 = vmatpush.msra.mxu0 0.0
    %1040 = vmatpush.msra.mxu0 0.0
    %1041 = vmatpush.msra.mxu0 %v1025
    %1042 = vmatmul.f32.gmra.mxu0 %v142
    %v1043 = vpop.f32.mrf.mxu0
    %v1044 = vadd.f32 0.0, %v1043
    %1045 = vdwg.mxu0
    %v1046 = vld [vmem:[#allocation2 + $0x280] sm:$0xff]
    %v1047 = vld [vmem:[#allocation2 + $0x288] sm:$0xff]
    %v1048 = vld [vmem:[#allocation2 + $0x290] sm:$0xff]
    %v1049 = vld [vmem:[#allocation2 + $0x298] sm:$0xff]
    %v1050 = vld [vmem:[#allocation2 + $0x2a0] sm:$0x1]
    %v1051 = vperm.slane %v1050, 0
    %v1053 = vsel %vm86, %v1044, 0
    %1055 = vmatpush.msra.mxu0 0.0
    %1056 = vmatpush.msra.mxu0 0.0
    %1057 = vmatpush.msra.mxu0 0.0
    %1058 = vmatpush.msra.mxu0 0.0
    %1059 = vmatpush.msra.mxu0 0.0
    %1060 = vmatpush.msra.mxu0 0.0
    %1061 = vmatpush.msra.mxu0 0.0
    %1062 = vmatpush.msra.mxu0 0.0
    %1063 = vmatpush.msra.mxu0 0.0
    %1064 = vmatpush.msra.mxu0 0.0
    %1065 = vmatpush.msra.mxu0 0.0
    %1066 = vmatpush.msra.mxu0 0.0
    %1067 = vmatpush.msra.mxu0 %v1049
    %1068 = vmatpush.msra.mxu0 %v1048
    %1069 = vmatpush.msra.mxu0 %v1047
    %1070 = vmatpush.msra.mxu0 %v1046
    %1071 = vmatmul.f32.gmra.mxu0 %v1053
    %v1072 = vpop.f32.mrf.mxu0
    %v1073 = vadd.f32 %v1051, %v1072
    %1074 = vdwg.mxu0
    %v1075 = vsel %vm86, %v1073, 0.0
    %v1076 = vrot.slane %v1075, 4
    %v1077 = vadd.f32 %v1075, %v1076
    %v1078 = vrot.slane %v1077, 2
    %v1079 = vadd.f32 %v1077, %v1078
    %v1080 = vrot.slane %v1079, 1
    %v1081 = vadd.f32 %v1079, %v1080
    %v1082 = vmul.f32 %v1081, 0.125
    %v1083 = vmul.f32 %v1073, %v1073
    %v1084 = vsel %vm86, %v1083, 0.0
    %v1085 = vrot.slane %v1084, 4
    %v1086 = vadd.f32 %v1084, %v1085
    %v1087 = vrot.slane %v1086, 2
    %v1088 = vadd.f32 %v1086, %v1087
    %v1089 = vrot.slane %v1088, 1
    %v1090 = vadd.f32 %v1088, %v1089
    %v1091 = vmul.f32 %v1090, 0.125
    %v1092 = vmul.f32 %v1082, %v1082
    %v1093 = vsub.f32 %v1091, %v1092
    %v1094 = vsub.f32 %v1073, %v1082
    %v1095 = vadd.f32 %v1093, 1e-05
    %v1096 = vrsqrt.pop %v1095
    %v1097 = vmul.f32 %v1096, %v1095
    %v1098 = vmul.f32 %v1097, %v1096
    %v1099 = vmul.f32 0.5, %v1098
    %v1100 = vsub.f32 1.5, %v1099
    %v1101 = vmul.f32 %v1096, %v1100
    %vm1102 = vweird.f32 %v1095
    %vm1103 = vweird.f32 %v1096
    %vm1104 = vmor %vm1102, %vm1103
    %v1105 = vsel %vm1104, %v1096, %v1101
    %v1106 = vmul.f32 %v1094, %v1105
    %v1107 = vld [vmem:[#allocation2 + $0x2a8] sm:$0x1]
    %v1108 = vperm.slane %v1107, 0
    %v1109 = vmul.f32 %v1106, %v1108
    %v1110 = vld [vmem:[#allocation2 + $0x2b0] sm:$0x1]
    %v1111 = vperm.slane %v1110, 0
    %v1112 = vadd.f32 %v1109, %v1111
    %v1113 = vmax.f32 %v1112, 0.0
    %1114 = vmatpush.msra.mxu0 0.0
    %1115 = vmatpush.msra.mxu0 0.0
    %1116 = vmatpush.msra.mxu0 0.0
    %1117 = vmatpush.msra.mxu0 0.0
    %1118 = vmatpush.msra.mxu0 0.0
    %1119 = vmatpush.msra.mxu0 0.0
    %1120 = vmatpush.msra.mxu0 0.0
    %1121 = vmatpush.msra.mxu0 0.0
    %1122 = vmatpush.msra.mxu0 0.0
    %1123 = vmatpush.msra.mxu0 0.0
    %1124 = vmatpush.msra.mxu0 0.0
    %1125 = vmatpush.msra.mxu0 0.0
    %1126 = vmatpush.msra.mxu0 0.0
    %1127 = vmatpush.msra.mxu0 0.0
    %1128 = vmatpush.msra.mxu0 0.0
    %1129 = vmatpush.msra.mxu0 %v1113
    %1130 = vmatmul.f32.gmra.mxu0 %v142
    %v1131 = vpop.f32.mrf.mxu0
    %v1132 = vadd.f32 0.0, %v1131
    %1133 = vdwg.mxu0
    %v1134 = vld [vmem:[#allocation2 + $0x2b8] sm:$0xff]
    %v1135 = vld [vmem:[#allocation2 + $0x2c0] sm:$0xff]
    %v1136 = vld [vmem:[#allocation2 + $0x2c8] sm:$0xff]
    %v1137 = vld [vmem:[#allocation2 + $0x2d0] sm:$0xff]
    %v1138 = vld [vmem:[#allocation2 + $0x2d8] sm:$0x1]
    %v1139 = vperm.slane %v1138, 0
    %v1141 = vsel %vm86, %v1132, 0
    %1143 = vmatpush.msra.mxu0 0.0
    %1144 = vmatpush.msra.mxu0 0.0
    %1145 = vmatpush.msra.mxu0 0.0
    %1146 = vmatpush.msra.mxu0 0.0
    %1147 = vmatpush.msra.mxu0 0.0
    %1148 = vmatpush.msra.mxu0 0.0
    %1149 = vmatpush.msra.mxu0 0.0
    %1150 = vmatpush.msra.mxu0 0.0
    %1151 = vmatpush.msra.mxu0 0.0
    %1152 = vmatpush.msra.mxu0 0.0
    %1153 = vmatpush.msra.mxu0 0.0
    %1154 = vmatpush.msra.mxu0 0.0
    %1155 = vmatpush.msra.mxu0 %v1137
    %1156 = vmatpush.msra.mxu0 %v1136
    %1157 = vmatpush.msra.mxu0 %v1135
    %1158 = vmatpush.msra.mxu0 %v1134
    %1159 = vmatmul.f32.gmra.mxu0 %v1141
    %v1160 = vpop.f32.mrf.mxu0
    %v1161 = vadd.f32 %v1139, %v1160
    %1162 = vdwg.mxu0
    %v1163 = vsel %vm86, %v1161, 0.0
    %v1164 = vrot.slane %v1163, 4
    %v1165 = vadd.f32 %v1163, %v1164
    %v1166 = vrot.slane %v1165, 2
    %v1167 = vadd.f32 %v1165, %v1166
    %v1168 = vrot.slane %v1167, 1
    %v1169 = vadd.f32 %v1167, %v1168
    %v1170 = vmul.f32 %v1169, 0.125
    %v1171 = vmul.f32 %v1161, %v1161
    %v1172 = vsel %vm86, %v1171, 0.0
    %v1173 = vrot.slane %v1172, 4
    %v1174 = vadd.f32 %v1172, %v1173
    %v1175 = vrot.slane %v1174, 2
    %v1176 = vadd.f32 %v1174, %v1175
    %v1177 = vrot.slane %v1176, 1
    %v1178 = vadd.f32 %v1176, %v1177
    %v1179 = vmul.f32 %v1178, 0.125
    %v1180 = vmul.f32 %v1170, %v1170
    %v1181 = vsub.f32 %v1179, %v1180
    %v1182 = vsub.f32 %v1161, %v1170
    %v1183 = vadd.f32 %v1181, 1e-05
    %v1184 = vrsqrt.pop %v1183
    %v1185 = vmul.f32 %v1184, %v1183
    %v1186 = vmul.f32 %v1185, %v1184
    %v1187 = vmul.f32 0.5, %v1186
    %v1188 = vsub.f32 1.5, %v1187
    %v1189 = vmul.f32 %v1184, %v1188
    %vm1190 = vweird.f32 %v1183
    %vm1191 = vweird.f32 %v1184
    %vm1192 = vmor %vm1190, %vm1191
    %v1193 = vsel %vm1192, %v1184, %v1189
    %v1194 = vmul.f32 %v1182, %v1193
    %v1195 = vld [vmem:[#allocation2 + $0x2e0] sm:$0x1]
    %v1196 = vperm.slane %v1195, 0
    %v1197 = vmul.f32 %v1194, %v1196
    %v1198 = vld [vmem:[#allocation2 + $0x2e8] sm:$0x1]
    %v1199 = vperm.slane %v1198, 0
    %v1200 = vadd.f32 %v1197, %v1199
    %v1201 = vmax.f32 %v1200, 0.0
    %1202 = vmatpush.msra.mxu0 0.0
    %1203 = vmatpush.msra.mxu0 0.0
    %1204 = vmatpush.msra.mxu0 0.0
    %1205 = vmatpush.msra.mxu0 0.0
    %1206 = vmatpush.msra.mxu0 0.0
    %1207 = vmatpush.msra.mxu0 0.0
    %1208 = vmatpush.msra.mxu0 0.0
    %1209 = vmatpush.msra.mxu0 0.0
    %1210 = vmatpush.msra.mxu0 0.0
    %1211 = vmatpush.msra.mxu0 0.0
    %1212 = vmatpush.msra.mxu0 0.0
    %1213 = vmatpush.msra.mxu0 0.0
    %1214 = vmatpush.msra.mxu0 0.0
    %1215 = vmatpush.msra.mxu0 0.0
    %1216 = vmatpush.msra.mxu0 0.0
    %1217 = vmatpush.msra.mxu0 %v1201
    %1218 = vmatmul.f32.gmra.mxu0 %v142
    %v1219 = vpop.f32.mrf.mxu0
    %v1220 = vadd.f32 0.0, %v1219
    %1221 = vdwg.mxu0
    %v1222 = vld [vmem:[#allocation2 + $0x2f0] sm:$0xff]
    %v1223 = vld [vmem:[#allocation2 + $0x2f8] sm:$0xff]
    %v1224 = vld [vmem:[#allocation2 + $0x300] sm:$0xff]
    %v1225 = vld [vmem:[#allocation2 + $0x308] sm:$0xff]
    %v1226 = vld [vmem:[#allocation2 + $0x310] sm:$0x1]
    %v1227 = vperm.slane %v1226, 0
    %v1229 = vsel %vm86, %v1220, 0
    %1231 = vmatpush.msra.mxu0 0.0
    %1232 = vmatpush.msra.mxu0 0.0
    %1233 = vmatpush.msra.mxu0 0.0
    %1234 = vmatpush.msra.mxu0 0.0
    %1235 = vmatpush.msra.mxu0 0.0
    %1236 = vmatpush.msra.mxu0 0.0
    %1237 = vmatpush.msra.mxu0 0.0
    %1238 = vmatpush.msra.mxu0 0.0
    %1239 = vmatpush.msra.mxu0 0.0
    %1240 = vmatpush.msra.mxu0 0.0
    %1241 = vmatpush.msra.mxu0 0.0
    %1242 = vmatpush.msra.mxu0 0.0
    %1243 = vmatpush.msra.mxu0 %v1225
    %1244 = vmatpush.msra.mxu0 %v1224
    %1245 = vmatpush.msra.mxu0 %v1223
    %1246 = vmatpush.msra.mxu0 %v1222
    %1247 = vmatmul.f32.gmra.mxu0 %v1229
    %v1248 = vpop.f32.mrf.mxu0
    %v1249 = vadd.f32 %v1227, %v1248
    %1250 = vdwg.mxu0
    %v1251 = vsel %vm86, %v1249, 0.0
    %v1252 = vrot.slane %v1251, 4
    %v1253 = vadd.f32 %v1251, %v1252
    %v1254 = vrot.slane %v1253, 2
    %v1255 = vadd.f32 %v1253, %v1254
    %v1256 = vrot.slane %v1255, 1
    %v1257 = vadd.f32 %v1255, %v1256
    %v1258 = vmul.f32 %v1257, 0.125
    %v1259 = vmul.f32 %v1249, %v1249
    %v1260 = vsel %vm86, %v1259, 0.0
    %v1261 = vrot.slane %v1260, 4
    %v1262 = vadd.f32 %v1260, %v1261
    %v1263 = vrot.slane %v1262, 2
    %v1264 = vadd.f32 %v1262, %v1263
    %v1265 = vrot.slane %v1264, 1
    %v1266 = vadd.f32 %v1264, %v1265
    %v1267 = vmul.f32 %v1266, 0.125
    %v1268 = vmul.f32 %v1258, %v1258
    %v1269 = vsub.f32 %v1267, %v1268
    %v1270 = vsub.f32 %v1249, %v1258
    %v1271 = vadd.f32 %v1269, 1e-05
    %v1272 = vrsqrt.pop %v1271
    %v1273 = vmul.f32 %v1272, %v1271
    %v1274 = vmul.f32 %v1273, %v1272
    %v1275 = vmul.f32 0.5, %v1274
    %v1276 = vsub.f32 1.5, %v1275
    %v1277 = vmul.f32 %v1272, %v1276
    %vm1278 = vweird.f32 %v1271
    %vm1279 = vweird.f32 %v1272
    %vm1280 = vmor %vm1278, %vm1279
    %v1281 = vsel %vm1280, %v1272, %v1277
    %v1282 = vmul.f32 %v1270, %v1281
    %v1283 = vld [vmem:[#allocation2 + $0x318] sm:$0x1]
    %v1284 = vperm.slane %v1283, 0
    %v1285 = vmul.f32 %v1282, %v1284
    %v1286 = vld [vmem:[#allocation2 + $0x320] sm:$0x1]
    %v1287 = vperm.slane %v1286, 0
    %v1288 = vadd.f32 %v1285, %v1287
    %v1289 = vmax.f32 %v1288, 0.0
    %v1290 = vld [vmem:[%s1 + $0xc8] sm:$0x1]
    %v1291 = vld [vmem:[#allocation2 + $0x4a8] sm:$0xff]
    %v1292 = vld [vmem:[#allocation2 + $0x4b0] sm:$0xff]
    %v1293 = vld [vmem:[#allocation2 + $0x4b8] sm:$0xff]
    %v1294 = vld [vmem:[#allocation2 + $0x4c0] sm:$0xff]
    %v1295 = vld [vmem:[#allocation2 + $0x4c8] sm:$0x1]
    %v1297 = vsel %vm86, %v1290, 0
    %1299 = vmatpush.msra.mxu0 0.0
    %1300 = vmatpush.msra.mxu0 0.0
    %1301 = vmatpush.msra.mxu0 0.0
    %1302 = vmatpush.msra.mxu0 0.0
    %1303 = vmatpush.msra.mxu0 0.0
    %1304 = vmatpush.msra.mxu0 0.0
    %1305 = vmatpush.msra.mxu0 0.0
    %1306 = vmatpush.msra.mxu0 0.0
    %1307 = vmatpush.msra.mxu0 0.0
    %1308 = vmatpush.msra.mxu0 0.0
    %1309 = vmatpush.msra.mxu0 0.0
    %1310 = vmatpush.msra.mxu0 0.0
    %1311 = vmatpush.msra.mxu0 %v1294
    %1312 = vmatpush.msra.mxu0 %v1293
    %1313 = vmatpush.msra.mxu0 %v1292
    %1314 = vmatpush.msra.mxu0 %v1291
    %1315 = vmatmul.f32.gmra.mxu0 %v1297
    %v1316 = vpop.f32.mrf.mxu0
    %v1317 = vadd.f32 %v1295, %v1316
    %1318 = vdwg.mxu0
    %v1319 = vmax.f32 %v1317, 0.0
    %v1320 = vld [vmem:[#allocation2 + $0x4d0] sm:$0xff]
    %v1321 = vld [vmem:[#allocation2 + $0x4d8] sm:$0xff]
    %v1322 = vld [vmem:[#allocation2 + $0x4e0] sm:$0xff]
    %v1323 = vld [vmem:[#allocation2 + $0x4e8] sm:$0xff]
    %v1324 = vld [vmem:[#allocation2 + $0x4f0] sm:$0x1]
    %v1326 = vsel %vm86, %v1319, 0
    %1328 = vmatpush.msra.mxu0 0.0
    %1329 = vmatpush.msra.mxu0 0.0
    %1330 = vmatpush.msra.mxu0 0.0
    %1331 = vmatpush.msra.mxu0 0.0
    %1332 = vmatpush.msra.mxu0 0.0
    %1333 = vmatpush.msra.mxu0 0.0
    %1334 = vmatpush.msra.mxu0 0.0
    %1335 = vmatpush.msra.mxu0 0.0
    %1336 = vmatpush.msra.mxu0 0.0
    %1337 = vmatpush.msra.mxu0 0.0
    %1338 = vmatpush.msra.mxu0 0.0
    %1339 = vmatpush.msra.mxu0 0.0
    %1340 = vmatpush.msra.mxu0 %v1323
    %1341 = vmatpush.msra.mxu0 %v1322
    %1342 = vmatpush.msra.mxu0 %v1321
    %1343 = vmatpush.msra.mxu0 %v1320
    %1344 = vmatmul.f32.gmra.mxu0 %v1326
    %v1345 = vpop.f32.mrf.mxu0
    %v1346 = vadd.f32 %v1324, %v1345
    %1347 = vdwg.mxu0
    %v1348 = vmax.f32 %v1346, 0.0
    %v1349 = vld [vmem:[#allocation2 + $0x4f8] sm:$0xff]
    %v1350 = vld [vmem:[#allocation2 + $0x500] sm:$0xff]
    %v1351 = vld [vmem:[#allocation2 + $0x508] sm:$0xff]
    %v1352 = vld [vmem:[#allocation2 + $0x510] sm:$0xff]
    %v1353 = vld [vmem:[#allocation2 + $0x518] sm:$0x1]
    %v1355 = vsel %vm86, %v1348, 0
    %1357 = vmatpush.msra.mxu0 0.0
    %1358 = vmatpush.msra.mxu0 0.0
    %1359 = vmatpush.msra.mxu0 0.0
    %1360 = vmatpush.msra.mxu0 0.0
    %1361 = vmatpush.msra.mxu0 0.0
    %1362 = vmatpush.msra.mxu0 0.0
    %1363 = vmatpush.msra.mxu0 0.0
    %1364 = vmatpush.msra.mxu0 0.0
    %1365 = vmatpush.msra.mxu0 0.0
    %1366 = vmatpush.msra.mxu0 0.0
    %1367 = vmatpush.msra.mxu0 0.0
    %1368 = vmatpush.msra.mxu0 0.0
    %1369 = vmatpush.msra.mxu0 %v1352
    %1370 = vmatpush.msra.mxu0 %v1351
    %1371 = vmatpush.msra.mxu0 %v1350
    %1372 = vmatpush.msra.mxu0 %v1349
    %1373 = vmatmul.f32.gmra.mxu0 %v1355
    %v1374 = vpop.f32.mrf.mxu0
    %v1375 = vadd.f32 %v1353, %v1374
    %1376 = vdwg.mxu0
    %v1377 = vld [vmem:[%s1] sm:$0xff]
    %v1378 = vld [vmem:[%s1 + $0x8] sm:$0xff]
    %v1379 = vld [vmem:[%s1 + $0x10] sm:$0xff]
    %v1380 = vld [vmem:[%s1 + $0x18] sm:$0xff]
    %v1381 = vld [vmem:[%s1 + $0x20] sm:$0xff]
    %v1382 = vld [vmem:[%s1 + $0x28] sm:$0xff]
    %v1383 = vld [vmem:[%s1 + $0x30] sm:$0xff]
    %v1384 = vld [vmem:[%s1 + $0x38] sm:$0xff]
    %v1385 = vld [vmem:[%s1 + $0x40] sm:$0xff]
    %v1386 = vld [vmem:[%s1 + $0x48] sm:$0xff]
    %v1387 = vld [vmem:[%s1 + $0x50] sm:$0xff]
    %v1388 = vld [vmem:[%s1 + $0x58] sm:$0xff]
    %v1389 = vld [vmem:[%s1 + $0x60] sm:$0xff]
    %v1390 = vld [vmem:[%s1 + $0x68] sm:$0xff]
    %v1391 = vld [vmem:[%s1 + $0x70] sm:$0xff]
    %v1392 = vld [vmem:[%s1 + $0x78] sm:$0xff]
    %v1393 = vld [vmem:[%s1 + $0x80] sm:$0xff]
    %v1394 = vld [vmem:[%s1 + $0x88] sm:$0xff]
    %v1395 = vld [vmem:[%s1 + $0x90] sm:$0xff]
    %v1396 = vld [vmem:[%s1 + $0x98] sm:$0xff]
    %v1397 = vld [vmem:[%s1 + $0xa0] sm:$0xff]
    %v1398 = vld [vmem:[%s1 + $0xa8] sm:$0xff]
    %v1399 = vld [vmem:[%s1 + $0xb0] sm:$0xff]
    %v1400 = vld [vmem:[%s1 + $0xb8] sm:$0xff]
    %v1401 = vld [vmem:[#allocation2 + $0x328] sm:$0x1]
    %vm1402 = vcmask 7168
    %v1404 = vsel %vm1402, %v1377, 0
    %v1407 = vsel %vm1402, %v1378, 0
    %v1410 = vsel %vm1402, %v1379, 0
    %v1413 = vsel %vm1402, %v1380, 0
    %v1416 = vsel %vm1402, %v1381, 0
    %v1419 = vsel %vm1402, %v1382, 0
    %v1422 = vsel %vm1402, %v1383, 0
    %v1425 = vsel %vm1402, %v1384, 0
    %v1428 = vsel %vm1402, %v1385, 0
    %v1431 = vsel %vm1402, %v1386, 0
    %v1434 = vsel %vm1402, %v1387, 0
    %v1437 = vsel %vm1402, %v1388, 0
    %v1440 = vsel %vm1402, %v1389, 0
    %v1443 = vsel %vm1402, %v1390, 0
    %v1446 = vsel %vm1402, %v1391, 0
    %v1449 = vsel %vm1402, %v1392, 0
    %v1452 = vsel %vm1402, %v1393, 0
    %v1455 = vsel %vm1402, %v1394, 0
    %v1458 = vsel %vm1402, %v1395, 0
    %v1461 = vsel %vm1402, %v1396, 0
    %v1464 = vsel %vm1402, %v1397, 0
    %v1467 = vsel %vm1402, %v1398, 0
    %v1470 = vsel %vm1402, %v1399, 0
    %v1473 = vsel %vm1402, %v1400, 0
    %vm1475 = vcmask 1040384
    %v1477 = vsel %vm1475, %v1401, 0
    %1479 = vmatpush.msra.mxu0 0.0
    %1480 = vmatpush.msra.mxu0 0.0
    %1481 = vmatpush.msra.mxu0 0.0
    %1482 = vmatpush.msra.mxu0 0.0
    %1483 = vmatpush.msra.mxu0 0.0
    %1484 = vmatpush.msra.mxu0 0.0
    %1485 = vmatpush.msra.mxu0 0.0
    %1486 = vmatpush.msra.mxu0 0.0
    %1487 = vmatpush.msra.mxu0 0.0
    %1488 = vmatpush.msra.mxu0 0.0
    %1489 = vmatpush.msra.mxu0 0.0
    %1490 = vmatpush.msra.mxu0 0.0
    %1491 = vmatpush.msra.mxu0 0.0
    %1492 = vmatpush.msra.mxu0 0.0
    %1493 = vmatpush.msra.mxu0 0.0
    %1494 = vmatpush.msra.mxu0 %v1477
    %1495 = vmatmul.f32.gmra.mxu0 %v1404
    %v1496 = vpop.f32.mrf.mxu0
    %v1497 = vadd.f32 0.0, %v1496
    %1498 = vmatmul.f32.gmra.mxu0 %v1407
    %v1499 = vpop.f32.mrf.mxu0
    %v1500 = vadd.f32 0.0, %v1499
    %1501 = vmatmul.f32.gmra.mxu0 %v1410
    %v1502 = vpop.f32.mrf.mxu0
    %v1503 = vadd.f32 0.0, %v1502
    %1504 = vmatmul.f32.gmra.mxu0 %v1413
    %v1505 = vpop.f32.mrf.mxu0
    %v1506 = vadd.f32 0.0, %v1505
    %1507 = vmatmul.f32.gmra.mxu0 %v1416
    %v1508 = vpop.f32.mrf.mxu0
    %v1509 = vadd.f32 0.0, %v1508
    %1510 = vmatmul.f32.gmra.mxu0 %v1419
    %v1511 = vpop.f32.mrf.mxu0
    %v1512 = vadd.f32 0.0, %v1511
    %1513 = vmatmul.f32.gmra.mxu0 %v1422
    %v1514 = vpop.f32.mrf.mxu0
    %v1515 = vadd.f32 0.0, %v1514
    %1516 = vmatmul.f32.gmra.mxu0 %v1425
    %v1517 = vpop.f32.mrf.mxu0
    %v1518 = vadd.f32 0.0, %v1517
    %1519 = vmatmul.f32.gmra.mxu0 %v1428
    %v1520 = vpop.f32.mrf.mxu0
    %v1521 = vadd.f32 0.0, %v1520
    %1522 = vmatmul.f32.gmra.mxu0 %v1431
    %v1523 = vpop.f32.mrf.mxu0
    %v1524 = vadd.f32 0.0, %v1523
    %1525 = vmatmul.f32.gmra.mxu0 %v1434
    %v1526 = vpop.f32.mrf.mxu0
    %v1527 = vadd.f32 0.0, %v1526
    %1528 = vmatmul.f32.gmra.mxu0 %v1437
    %v1529 = vpop.f32.mrf.mxu0
    %v1530 = vadd.f32 0.0, %v1529
    %1531 = vmatmul.f32.gmra.mxu0 %v1440
    %v1532 = vpop.f32.mrf.mxu0
    %v1533 = vadd.f32 0.0, %v1532
    %1534 = vmatmul.f32.gmra.mxu0 %v1443
    %v1535 = vpop.f32.mrf.mxu0
    %v1536 = vadd.f32 0.0, %v1535
    %1537 = vmatmul.f32.gmra.mxu0 %v1446
    %v1538 = vpop.f32.mrf.mxu0
    %v1539 = vadd.f32 0.0, %v1538
    %1540 = vmatmul.f32.gmra.mxu0 %v1449
    %v1541 = vpop.f32.mrf.mxu0
    %v1542 = vadd.f32 0.0, %v1541
    %1543 = vmatmul.f32.gmra.mxu0 %v1452
    %v1544 = vpop.f32.mrf.mxu0
    %v1545 = vadd.f32 0.0, %v1544
    %1546 = vmatmul.f32.gmra.mxu0 %v1455
    %v1547 = vpop.f32.mrf.mxu0
    %v1548 = vadd.f32 0.0, %v1547
    %1549 = vmatmul.f32.gmra.mxu0 %v1458
    %v1550 = vpop.f32.mrf.mxu0
    %v1551 = vadd.f32 0.0, %v1550
    %1552 = vmatmul.f32.gmra.mxu0 %v1461
    %v1553 = vpop.f32.mrf.mxu0
    %v1554 = vadd.f32 0.0, %v1553
    %1555 = vmatmul.f32.gmra.mxu0 %v1464
    %v1556 = vpop.f32.mrf.mxu0
    %v1557 = vadd.f32 0.0, %v1556
    %1558 = vmatmul.f32.gmra.mxu0 %v1467
    %v1559 = vpop.f32.mrf.mxu0
    %v1560 = vadd.f32 0.0, %v1559
    %1561 = vmatmul.f32.gmra.mxu0 %v1470
    %v1562 = vpop.f32.mrf.mxu0
    %v1563 = vadd.f32 0.0, %v1562
    %1564 = vmatmul.f32.gmra.mxu0 %v1473
    %v1565 = vpop.f32.mrf.mxu0
    %v1566 = vadd.f32 0.0, %v1565
    %1567 = vdwg.mxu0
    %v1568 = vld [vmem:[#allocation2 + $0x330] sm:$0x1]
    %v1569 = vperm.slane %v1568, 0
    %vm1570 = vcmask 523264
    %v1572 = vsel %vm1570, %v32, 0
    %v1575 = vsel %vm1570, %v34, 0
    %v1578 = vsel %vm1570, %v36, 0
    %v1581 = vsel %vm1570, %v38, 0
    %v1584 = vsel %vm1570, %v40, 0
    %v1587 = vsel %vm1570, %v42, 0
    %v1590 = vsel %vm1570, %v44, 0
    %v1593 = vsel %vm1570, %v46, 0
    %v1596 = vsel %vm1570, %v48, 0
    %v1599 = vsel %vm1570, %v50, 0
    %v1602 = vsel %vm1570, %v52, 0
    %v1605 = vsel %vm1570, %v54, 0
    %v1608 = vsel %vm1570, %v56, 0
    %v1611 = vsel %vm1570, %v58, 0
    %v1614 = vsel %vm1570, %v60, 0
    %v1617 = vsel %vm1570, %v62, 0
    %v1620 = vsel %vm1570, %v64, 0
    %v1623 = vsel %vm1570, %v66, 0
    %v1626 = vsel %vm1570, %v68, 0
    %v1629 = vsel %vm1570, %v70, 0
    %v1632 = vsel %vm1570, %v72, 0
    %v1635 = vsel %vm1570, %v74, 0
    %v1638 = vsel %vm1570, %v76, 0
    %v1641 = vsel %vm1570, %v78, 0
    %1643 = vmatpush.msra.mxu0 %v1542
    %1644 = vmatpush.msra.mxu0 %v1539
    %1645 = vmatpush.msra.mxu0 %v1536
    %1646 = vmatpush.msra.mxu0 %v1533
    %1647 = vmatpush.msra.mxu0 %v1530
    %1648 = vmatpush.msra.mxu0 %v1527
    %1649 = vmatpush.msra.mxu0 %v1524
    %1650 = vmatpush.msra.mxu0 %v1521
    %1651 = vmatpush.msra.mxu0 %v1518
    %1652 = vmatpush.msra.mxu0 %v1515
    %1653 = vmatpush.msra.mxu0 %v1512
    %1654 = vmatpush.msra.mxu0 %v1509
    %1655 = vmatpush.msra.mxu0 %v1506
    %1656 = vmatpush.msra.mxu0 %v1503
    %1657 = vmatpush.msra.mxu0 %v1500
    %1658 = vmatpush.msra.mxu0 %v1497
    %1659 = vmatmul.f32.gmra.mxu0 %v31
    %v1660 = vpop.f32.mrf.mxu0
    %v1661 = vadd.f32 %v1569, %v1660
    %1662 = vmatmul.f32.gmra.mxu0 %v33
    %v1663 = vpop.f32.mrf.mxu0
    %v1664 = vadd.f32 %v1569, %v1663
    %1665 = vmatmul.f32.gmra.mxu0 %v35
    %v1666 = vpop.f32.mrf.mxu0
    %v1667 = vadd.f32 %v1569, %v1666
    %1668 = vmatmul.f32.gmra.mxu0 %v37
    %v1669 = vpop.f32.mrf.mxu0
    %v1670 = vadd.f32 %v1569, %v1669
    %1671 = vmatmul.f32.gmra.mxu0 %v39
    %v1672 = vpop.f32.mrf.mxu0
    %v1673 = vadd.f32 %v1569, %v1672
    %1674 = vmatmul.f32.gmra.mxu0 %v41
    %v1675 = vpop.f32.mrf.mxu0
    %v1676 = vadd.f32 %v1569, %v1675
    %1677 = vmatmul.f32.gmra.mxu0 %v43
    %v1678 = vpop.f32.mrf.mxu0
    %v1679 = vadd.f32 %v1569, %v1678
    %1680 = vmatmul.f32.gmra.mxu0 %v45
    %v1681 = vpop.f32.mrf.mxu0
    %v1682 = vadd.f32 %v1569, %v1681
    %1683 = vmatmul.f32.gmra.mxu0 %v47
    %v1684 = vpop.f32.mrf.mxu0
    %v1685 = vadd.f32 %v1569, %v1684
    %1686 = vmatmul.f32.gmra.mxu0 %v49
    %v1687 = vpop.f32.mrf.mxu0
    %v1688 = vadd.f32 %v1569, %v1687
    %1689 = vmatmul.f32.gmra.mxu0 %v51
    %v1690 = vpop.f32.mrf.mxu0
    %v1691 = vadd.f32 %v1569, %v1690
    %1692 = vmatmul.f32.gmra.mxu0 %v53
    %v1693 = vpop.f32.mrf.mxu0
    %v1694 = vadd.f32 %v1569, %v1693
    %1695 = vmatmul.f32.gmra.mxu0 %v55
    %v1696 = vpop.f32.mrf.mxu0
    %v1697 = vadd.f32 %v1569, %v1696
    %1698 = vmatmul.f32.gmra.mxu0 %v57
    %v1699 = vpop.f32.mrf.mxu0
    %v1700 = vadd.f32 %v1569, %v1699
    %1701 = vmatmul.f32.gmra.mxu0 %v59
    %v1702 = vpop.f32.mrf.mxu0
    %v1703 = vadd.f32 %v1569, %v1702
    %1704 = vmatmul.f32.gmra.mxu0 %v61
    %v1705 = vpop.f32.mrf.mxu0
    %v1706 = vadd.f32 %v1569, %v1705
    %1707 = vmatmul.f32.gmra.mxu0 %v63
    %v1708 = vpop.f32.mrf.mxu0
    %v1709 = vadd.f32 %v1569, %v1708
    %1710 = vmatmul.f32.gmra.mxu0 %v65
    %v1711 = vpop.f32.mrf.mxu0
    %v1712 = vadd.f32 %v1569, %v1711
    %1713 = vmatmul.f32.gmra.mxu0 %v67
    %v1714 = vpop.f32.mrf.mxu0
    %v1715 = vadd.f32 %v1569, %v1714
    %1716 = vmatmul.f32.gmra.mxu0 %v69
    %v1717 = vpop.f32.mrf.mxu0
    %v1718 = vadd.f32 %v1569, %v1717
    %1719 = vmatmul.f32.gmra.mxu0 %v71
    %v1720 = vpop.f32.mrf.mxu0
    %v1721 = vadd.f32 %v1569, %v1720
    %1722 = vmatmul.f32.gmra.mxu0 %v73
    %v1723 = vpop.f32.mrf.mxu0
    %v1724 = vadd.f32 %v1569, %v1723
    %1725 = vmatmul.f32.gmra.mxu0 %v75
    %v1726 = vpop.f32.mrf.mxu0
    %v1727 = vadd.f32 %v1569, %v1726
    %1728 = vmatmul.f32.gmra.mxu0 %v77
    %v1729 = vpop.f32.mrf.mxu0
    %v1730 = vadd.f32 %v1569, %v1729
    %1731 = vdwg.mxu0
    %1732 = vmatpush.msra.mxu0 0.0
    %1733 = vmatpush.msra.mxu0 0.0
    %1734 = vmatpush.msra.mxu0 0.0
    %1735 = vmatpush.msra.mxu0 0.0
    %1736 = vmatpush.msra.mxu0 0.0
    %1737 = vmatpush.msra.mxu0 0.0
    %1738 = vmatpush.msra.mxu0 0.0
    %1739 = vmatpush.msra.mxu0 0.0
    %1740 = vmatpush.msra.mxu0 %v1566
    %1741 = vmatpush.msra.mxu0 %v1563
    %1742 = vmatpush.msra.mxu0 %v1560
    %1743 = vmatpush.msra.mxu0 %v1557
    %1744 = vmatpush.msra.mxu0 %v1554
    %1745 = vmatpush.msra.mxu0 %v1551
    %1746 = vmatpush.msra.mxu0 %v1548
    %1747 = vmatpush.msra.mxu0 %v1545
    %1748 = vmatmul.f32.gmra.mxu0 %v1572
    %v1749 = vpop.f32.mrf.mxu0
    %v1750 = vadd.f32 %v1661, %v1749
    %1751 = vmatmul.f32.gmra.mxu0 %v1575
    %v1752 = vpop.f32.mrf.mxu0
    %v1753 = vadd.f32 %v1664, %v1752
    %1754 = vmatmul.f32.gmra.mxu0 %v1578
    %v1755 = vpop.f32.mrf.mxu0
    %v1756 = vadd.f32 %v1667, %v1755
    %1757 = vmatmul.f32.gmra.mxu0 %v1581
    %v1758 = vpop.f32.mrf.mxu0
    %v1759 = vadd.f32 %v1670, %v1758
    %1760 = vmatmul.f32.gmra.mxu0 %v1584
    %v1761 = vpop.f32.mrf.mxu0
    %v1762 = vadd.f32 %v1673, %v1761
    %1763 = vmatmul.f32.gmra.mxu0 %v1587
    %v1764 = vpop.f32.mrf.mxu0
    %v1765 = vadd.f32 %v1676, %v1764
    %1766 = vmatmul.f32.gmra.mxu0 %v1590
    %v1767 = vpop.f32.mrf.mxu0
    %v1768 = vadd.f32 %v1679, %v1767
    %1769 = vmatmul.f32.gmra.mxu0 %v1593
    %v1770 = vpop.f32.mrf.mxu0
    %v1771 = vadd.f32 %v1682, %v1770
    %1772 = vmatmul.f32.gmra.mxu0 %v1596
    %v1773 = vpop.f32.mrf.mxu0
    %v1774 = vadd.f32 %v1685, %v1773
    %1775 = vmatmul.f32.gmra.mxu0 %v1599
    %v1776 = vpop.f32.mrf.mxu0
    %v1777 = vadd.f32 %v1688, %v1776
    %1778 = vmatmul.f32.gmra.mxu0 %v1602
    %v1779 = vpop.f32.mrf.mxu0
    %v1780 = vadd.f32 %v1691, %v1779
    %1781 = vmatmul.f32.gmra.mxu0 %v1605
    %v1782 = vpop.f32.mrf.mxu0
    %v1783 = vadd.f32 %v1694, %v1782
    %1784 = vmatmul.f32.gmra.mxu0 %v1608
    %v1785 = vpop.f32.mrf.mxu0
    %v1786 = vadd.f32 %v1697, %v1785
    %1787 = vmatmul.f32.gmra.mxu0 %v1611
    %v1788 = vpop.f32.mrf.mxu0
    %v1789 = vadd.f32 %v1700, %v1788
    %1790 = vmatmul.f32.gmra.mxu0 %v1614
    %v1791 = vpop.f32.mrf.mxu0
    %v1792 = vadd.f32 %v1703, %v1791
    %1793 = vmatmul.f32.gmra.mxu0 %v1617
    %v1794 = vpop.f32.mrf.mxu0
    %v1795 = vadd.f32 %v1706, %v1794
    %1796 = vmatmul.f32.gmra.mxu0 %v1620
    %v1797 = vpop.f32.mrf.mxu0
    %v1798 = vadd.f32 %v1709, %v1797
    %1799 = vmatmul.f32.gmra.mxu0 %v1623
    %v1800 = vpop.f32.mrf.mxu0
    %v1801 = vadd.f32 %v1712, %v1800
    %1802 = vmatmul.f32.gmra.mxu0 %v1626
    %v1803 = vpop.f32.mrf.mxu0
    %v1804 = vadd.f32 %v1715, %v1803
    %1805 = vmatmul.f32.gmra.mxu0 %v1629
    %v1806 = vpop.f32.mrf.mxu0
    %v1807 = vadd.f32 %v1718, %v1806
    %1808 = vmatmul.f32.gmra.mxu0 %v1632
    %v1809 = vpop.f32.mrf.mxu0
    %v1810 = vadd.f32 %v1721, %v1809
    %1811 = vmatmul.f32.gmra.mxu0 %v1635
    %v1812 = vpop.f32.mrf.mxu0
    %v1813 = vadd.f32 %v1724, %v1812
    %1814 = vmatmul.f32.gmra.mxu0 %v1638
    %v1815 = vpop.f32.mrf.mxu0
    %v1816 = vadd.f32 %v1727, %v1815
    %1817 = vmatmul.f32.gmra.mxu0 %v1641
    %v1818 = vpop.f32.mrf.mxu0
    %v1819 = vadd.f32 %v1730, %v1818
    %1820 = vdwg.mxu0
    %v1821 = vsel %vm1402, %v1750, 0.0
    %v1822 = vsel %vm1402, %v1753, 0.0
    %v1823 = vadd.f32 %v1821, %v1822
    %v1824 = vsel %vm1402, %v1756, 0.0
    %v1825 = vadd.f32 %v1823, %v1824
    %v1826 = vsel %vm1402, %v1759, 0.0
    %v1827 = vadd.f32 %v1825, %v1826
    %v1828 = vsel %vm1402, %v1762, 0.0
    %v1829 = vadd.f32 %v1827, %v1828
    %v1830 = vsel %vm1402, %v1765, 0.0
    %v1831 = vadd.f32 %v1829, %v1830
    %v1832 = vsel %vm1402, %v1768, 0.0
    %v1833 = vadd.f32 %v1831, %v1832
    %v1834 = vsel %vm1402, %v1771, 0.0
    %v1835 = vadd.f32 %v1833, %v1834
    %v1836 = vsel %vm1402, %v1774, 0.0
    %v1837 = vadd.f32 %v1835, %v1836
    %v1838 = vsel %vm1402, %v1777, 0.0
    %v1839 = vadd.f32 %v1837, %v1838
    %v1840 = vsel %vm1402, %v1780, 0.0
    %v1841 = vadd.f32 %v1839, %v1840
    %v1842 = vsel %vm1402, %v1783, 0.0
    %v1843 = vadd.f32 %v1841, %v1842
    %v1844 = vsel %vm1402, %v1786, 0.0
    %v1845 = vadd.f32 %v1843, %v1844
    %v1846 = vsel %vm1402, %v1789, 0.0
    %v1847 = vadd.f32 %v1845, %v1846
    %v1848 = vsel %vm1402, %v1792, 0.0
    %v1849 = vadd.f32 %v1847, %v1848
    %v1850 = vsel %vm1402, %v1795, 0.0
    %v1851 = vadd.f32 %v1849, %v1850
    %v1852 = vsel %vm1402, %v1798, 0.0
    %v1853 = vadd.f32 %v1851, %v1852
    %v1854 = vsel %vm1402, %v1801, 0.0
    %v1855 = vadd.f32 %v1853, %v1854
    %v1856 = vsel %vm1402, %v1804, 0.0
    %v1857 = vadd.f32 %v1855, %v1856
    %v1858 = vsel %vm1402, %v1807, 0.0
    %v1859 = vadd.f32 %v1857, %v1858
    %v1860 = vsel %vm1402, %v1810, 0.0
    %v1861 = vadd.f32 %v1859, %v1860
    %v1862 = vsel %vm1402, %v1813, 0.0
    %v1863 = vadd.f32 %v1861, %v1862
    %v1864 = vsel %vm1402, %v1816, 0.0
    %v1865 = vadd.f32 %v1863, %v1864
    %v1866 = vsel %vm1402, %v1819, 0.0
    %v1867 = vadd.f32 %v1865, %v1866
    %v1868 = vrot.slane %v1867, 4
    %v1869 = vadd.f32 %v1867, %v1868
    %v1870 = vrot.slane %v1869, 2
    %v1871 = vadd.f32 %v1869, %v1870
    %v1872 = vrot.slane %v1871, 1
    %v1873 = vadd.f32 %v1871, %v1872
    %v1874 = vmul.f32 %v1873, 0.0052083335
    %v1875 = vmul.f32 %v1750, %v1750
    %v1876 = vmul.f32 %v1753, %v1753
    %v1877 = vmul.f32 %v1756, %v1756
    %v1878 = vmul.f32 %v1759, %v1759
    %v1879 = vmul.f32 %v1762, %v1762
    %v1880 = vmul.f32 %v1765, %v1765
    %v1881 = vmul.f32 %v1768, %v1768
    %v1882 = vmul.f32 %v1771, %v1771
    %v1883 = vmul.f32 %v1774, %v1774
    %v1884 = vmul.f32 %v1777, %v1777
    %v1885 = vmul.f32 %v1780, %v1780
    %v1886 = vmul.f32 %v1783, %v1783
    %v1887 = vmul.f32 %v1786, %v1786
    %v1888 = vmul.f32 %v1789, %v1789
    %v1889 = vmul.f32 %v1792, %v1792
    %v1890 = vmul.f32 %v1795, %v1795
    %v1891 = vmul.f32 %v1798, %v1798
    %v1892 = vmul.f32 %v1801, %v1801
    %v1893 = vmul.f32 %v1804, %v1804
    %v1894 = vmul.f32 %v1807, %v1807
    %v1895 = vmul.f32 %v1810, %v1810
    %v1896 = vmul.f32 %v1813, %v1813
    %v1897 = vmul.f32 %v1816, %v1816
    %v1898 = vmul.f32 %v1819, %v1819
    %v1899 = vsel %vm1402, %v1875, 0.0
    %v1900 = vsel %vm1402, %v1876, 0.0
    %v1901 = vadd.f32 %v1899, %v1900
    %v1902 = vsel %vm1402, %v1877, 0.0
    %v1903 = vadd.f32 %v1901, %v1902
    %v1904 = vsel %vm1402, %v1878, 0.0
    %v1905 = vadd.f32 %v1903, %v1904
    %v1906 = vsel %vm1402, %v1879, 0.0
    %v1907 = vadd.f32 %v1905, %v1906
    %v1908 = vsel %vm1402, %v1880, 0.0
    %v1909 = vadd.f32 %v1907, %v1908
    %v1910 = vsel %vm1402, %v1881, 0.0
    %v1911 = vadd.f32 %v1909, %v1910
    %v1912 = vsel %vm1402, %v1882, 0.0
    %v1913 = vadd.f32 %v1911, %v1912
    %v1914 = vsel %vm1402, %v1883, 0.0
    %v1915 = vadd.f32 %v1913, %v1914
    %v1916 = vsel %vm1402, %v1884, 0.0
    %v1917 = vadd.f32 %v1915, %v1916
    %v1918 = vsel %vm1402, %v1885, 0.0
    %v1919 = vadd.f32 %v1917, %v1918
    %v1920 = vsel %vm1402, %v1886, 0.0
    %v1921 = vadd.f32 %v1919, %v1920
    %v1922 = vsel %vm1402, %v1887, 0.0
    %v1923 = vadd.f32 %v1921, %v1922
    %v1924 = vsel %vm1402, %v1888, 0.0
    %v1925 = vadd.f32 %v1923, %v1924
    %v1926 = vsel %vm1402, %v1889, 0.0
    %v1927 = vadd.f32 %v1925, %v1926
    %v1928 = vsel %vm1402, %v1890, 0.0
    %v1929 = vadd.f32 %v1927, %v1928
    %v1930 = vsel %vm1402, %v1891, 0.0
    %v1931 = vadd.f32 %v1929, %v1930
    %v1932 = vsel %vm1402, %v1892, 0.0
    %v1933 = vadd.f32 %v1931, %v1932
    %v1934 = vsel %vm1402, %v1893, 0.0
    %v1935 = vadd.f32 %v1933, %v1934
    %v1936 = vsel %vm1402, %v1894, 0.0
    %v1937 = vadd.f32 %v1935, %v1936
    %v1938 = vsel %vm1402, %v1895, 0.0
    %v1939 = vadd.f32 %v1937, %v1938
    %v1940 = vsel %vm1402, %v1896, 0.0
    %v1941 = vadd.f32 %v1939, %v1940
    %v1942 = vsel %vm1402, %v1897, 0.0
    %v1943 = vadd.f32 %v1941, %v1942
    %v1944 = vsel %vm1402, %v1898, 0.0
    %v1945 = vadd.f32 %v1943, %v1944
    %v1946 = vrot.slane %v1945, 4
    %v1947 = vadd.f32 %v1945, %v1946
    %v1948 = vrot.slane %v1947, 2
    %v1949 = vadd.f32 %v1947, %v1948
    %v1950 = vrot.slane %v1949, 1
    %v1951 = vadd.f32 %v1949, %v1950
    %v1952 = vmul.f32 %v1951, 0.0052083335
    %v1953 = vmul.f32 %v1874, %v1874
    %v1954 = vsub.f32 %v1952, %v1953
    %v1955 = vsub.f32 %v1750, %v1874
    %v1956 = vsub.f32 %v1753, %v1874
    %v1957 = vsub.f32 %v1756, %v1874
    %v1958 = vsub.f32 %v1759, %v1874
    %v1959 = vsub.f32 %v1762, %v1874
    %v1960 = vsub.f32 %v1765, %v1874
    %v1961 = vsub.f32 %v1768, %v1874
    %v1962 = vsub.f32 %v1771, %v1874
    %v1963 = vsub.f32 %v1774, %v1874
    %v1964 = vsub.f32 %v1777, %v1874
    %v1965 = vsub.f32 %v1780, %v1874
    %v1966 = vsub.f32 %v1783, %v1874
    %v1967 = vsub.f32 %v1786, %v1874
    %v1968 = vsub.f32 %v1789, %v1874
    %v1969 = vsub.f32 %v1792, %v1874
    %v1970 = vsub.f32 %v1795, %v1874
    %v1971 = vsub.f32 %v1798, %v1874
    %v1972 = vsub.f32 %v1801, %v1874
    %v1973 = vsub.f32 %v1804, %v1874
    %v1974 = vsub.f32 %v1807, %v1874
    %v1975 = vsub.f32 %v1810, %v1874
    %v1976 = vsub.f32 %v1813, %v1874
    %v1977 = vsub.f32 %v1816, %v1874
    %v1978 = vsub.f32 %v1819, %v1874
    %v1979 = vadd.f32 %v1954, 1e-05
    %v1980 = vrsqrt.pop %v1979
    %v1981 = vmul.f32 %v1980, %v1979
    %v1982 = vmul.f32 %v1981, %v1980
    %v1983 = vmul.f32 0.5, %v1982
    %v1984 = vsub.f32 1.5, %v1983
    %v1985 = vmul.f32 %v1980, %v1984
    %vm1986 = vweird.f32 %v1979
    %vm1987 = vweird.f32 %v1980
    %vm1988 = vmor %vm1986, %vm1987
    %v1989 = vsel %vm1988, %v1980, %v1985
    %v1990 = vmul.f32 %v1955, %v1989
    %v1991 = vmul.f32 %v1956, %v1989
    %v1992 = vmul.f32 %v1957, %v1989
    %v1993 = vmul.f32 %v1958, %v1989
    %v1994 = vmul.f32 %v1959, %v1989
    %v1995 = vmul.f32 %v1960, %v1989
    %v1996 = vmul.f32 %v1961, %v1989
    %v1997 = vmul.f32 %v1962, %v1989
    %v1998 = vmul.f32 %v1963, %v1989
    %v1999 = vmul.f32 %v1964, %v1989
    %v2000 = vmul.f32 %v1965, %v1989
    %v2001 = vmul.f32 %v1966, %v1989
    %v2002 = vmul.f32 %v1967, %v1989
    %v2003 = vmul.f32 %v1968, %v1989
    %v2004 = vmul.f32 %v1969, %v1989
    %v2005 = vmul.f32 %v1970, %v1989
    %v2006 = vmul.f32 %v1971, %v1989
    %v2007 = vmul.f32 %v1972, %v1989
    %v2008 = vmul.f32 %v1973, %v1989
    %v2009 = vmul.f32 %v1974, %v1989
    %v2010 = vmul.f32 %v1975, %v1989
    %v2011 = vmul.f32 %v1976, %v1989
    %v2012 = vmul.f32 %v1977, %v1989
    %v2013 = vmul.f32 %v1978, %v1989
    %v2014 = vld [vmem:[#allocation2 + $0x338] sm:$0x1]
    %v2015 = vperm.slane %v2014, 0
    %v2016 = vmul.f32 %v1990, %v2015
    %v2017 = vmul.f32 %v1991, %v2015
    %v2018 = vmul.f32 %v1992, %v2015
    %v2019 = vmul.f32 %v1993, %v2015
    %v2020 = vmul.f32 %v1994, %v2015
    %v2021 = vmul.f32 %v1995, %v2015
    %v2022 = vmul.f32 %v1996, %v2015
    %v2023 = vmul.f32 %v1997, %v2015
    %v2024 = vmul.f32 %v1998, %v2015
    %v2025 = vmul.f32 %v1999, %v2015
    %v2026 = vmul.f32 %v2000, %v2015
    %v2027 = vmul.f32 %v2001, %v2015
    %v2028 = vmul.f32 %v2002, %v2015
    %v2029 = vmul.f32 %v2003, %v2015
    %v2030 = vmul.f32 %v2004, %v2015
    %v2031 = vmul.f32 %v2005, %v2015
    %v2032 = vmul.f32 %v2006, %v2015
    %v2033 = vmul.f32 %v2007, %v2015
    %v2034 = vmul.f32 %v2008, %v2015
    %v2035 = vmul.f32 %v2009, %v2015
    %v2036 = vmul.f32 %v2010, %v2015
    %v2037 = vmul.f32 %v2011, %v2015
    %v2038 = vmul.f32 %v2012, %v2015
    %v2039 = vmul.f32 %v2013, %v2015
    %v2040 = vld [vmem:[#allocation2 + $0x340] sm:$0x1]
    %v2041 = vperm.slane %v2040, 0
    %v2042 = vadd.f32 %v2016, %v2041
    %v2043 = vadd.f32 %v2017, %v2041
    %v2044 = vadd.f32 %v2018, %v2041
    %v2045 = vadd.f32 %v2019, %v2041
    %v2046 = vadd.f32 %v2020, %v2041
    %v2047 = vadd.f32 %v2021, %v2041
    %v2048 = vadd.f32 %v2022, %v2041
    %v2049 = vadd.f32 %v2023, %v2041
    %v2050 = vadd.f32 %v2024, %v2041
    %v2051 = vadd.f32 %v2025, %v2041
    %v2052 = vadd.f32 %v2026, %v2041
    %v2053 = vadd.f32 %v2027, %v2041
    %v2054 = vadd.f32 %v2028, %v2041
    %v2055 = vadd.f32 %v2029, %v2041
    %v2056 = vadd.f32 %v2030, %v2041
    %v2057 = vadd.f32 %v2031, %v2041
    %v2058 = vadd.f32 %v2032, %v2041
    %v2059 = vadd.f32 %v2033, %v2041
    %v2060 = vadd.f32 %v2034, %v2041
    %v2061 = vadd.f32 %v2035, %v2041
    %v2062 = vadd.f32 %v2036, %v2041
    %v2063 = vadd.f32 %v2037, %v2041
    %v2064 = vadd.f32 %v2038, %v2041
    %v2065 = vadd.f32 %v2039, %v2041
    %v2066 = vmax.f32 %v2042, 0.0
    %v2067 = vmax.f32 %v2043, 0.0
    %v2068 = vmax.f32 %v2044, 0.0
    %v2069 = vmax.f32 %v2045, 0.0
    %v2070 = vmax.f32 %v2046, 0.0
    %v2071 = vmax.f32 %v2047, 0.0
    %v2072 = vmax.f32 %v2048, 0.0
    %v2073 = vmax.f32 %v2049, 0.0
    %v2074 = vmax.f32 %v2050, 0.0
    %v2075 = vmax.f32 %v2051, 0.0
    %v2076 = vmax.f32 %v2052, 0.0
    %v2077 = vmax.f32 %v2053, 0.0
    %v2078 = vmax.f32 %v2054, 0.0
    %v2079 = vmax.f32 %v2055, 0.0
    %v2080 = vmax.f32 %v2056, 0.0
    %v2081 = vmax.f32 %v2057, 0.0
    %v2082 = vmax.f32 %v2058, 0.0
    %v2083 = vmax.f32 %v2059, 0.0
    %v2084 = vmax.f32 %v2060, 0.0
    %v2085 = vmax.f32 %v2061, 0.0
    %v2086 = vmax.f32 %v2062, 0.0
    %v2087 = vmax.f32 %v2063, 0.0
    %v2088 = vmax.f32 %v2064, 0.0
    %v2089 = vmax.f32 %v2065, 0.0
    %2090 = vmatpush.msra.mxu0 %v2081
    %2091 = vmatpush.msra.mxu0 %v2080
    %2092 = vmatpush.msra.mxu0 %v2079
    %2093 = vmatpush.msra.mxu0 %v2078
    %2094 = vmatpush.msra.mxu0 %v2077
    %2095 = vmatpush.msra.mxu0 %v2076
    %2096 = vmatpush.msra.mxu0 %v2075
    %2097 = vmatpush.msra.mxu0 %v2074
    %2098 = vmatpush.msra.mxu0 %v2073
    %2099 = vmatpush.msra.mxu0 %v2072
    %2100 = vmatpush.msra.mxu0 %v2071
    %2101 = vmatpush.msra.mxu0 %v2070
    %2102 = vmatpush.msra.mxu0 %v2069
    %2103 = vmatpush.msra.mxu0 %v2068
    %2104 = vmatpush.msra.mxu0 %v2067
    %2105 = vmatpush.msra.mxu0 %v2066
    %2106 = vmatmul.f32.gmra.mxu0 %v31
    %v2107 = vpop.f32.mrf.mxu0
    %v2108 = vadd.f32 0.0, %v2107
    %2109 = vmatmul.f32.gmra.mxu0 %v33
    %v2110 = vpop.f32.mrf.mxu0
    %v2111 = vadd.f32 0.0, %v2110
    %2112 = vmatmul.f32.gmra.mxu0 %v35
    %v2113 = vpop.f32.mrf.mxu0
    %v2114 = vadd.f32 0.0, %v2113
    %2115 = vmatmul.f32.gmra.mxu0 %v37
    %v2116 = vpop.f32.mrf.mxu0
    %v2117 = vadd.f32 0.0, %v2116
    %2118 = vmatmul.f32.gmra.mxu0 %v39
    %v2119 = vpop.f32.mrf.mxu0
    %v2120 = vadd.f32 0.0, %v2119
    %2121 = vmatmul.f32.gmra.mxu0 %v41
    %v2122 = vpop.f32.mrf.mxu0
    %v2123 = vadd.f32 0.0, %v2122
    %2124 = vmatmul.f32.gmra.mxu0 %v43
    %v2125 = vpop.f32.mrf.mxu0
    %v2126 = vadd.f32 0.0, %v2125
    %2127 = vmatmul.f32.gmra.mxu0 %v45
    %v2128 = vpop.f32.mrf.mxu0
    %v2129 = vadd.f32 0.0, %v2128
    %2130 = vmatmul.f32.gmra.mxu0 %v47
    %v2131 = vpop.f32.mrf.mxu0
    %v2132 = vadd.f32 0.0, %v2131
    %2133 = vmatmul.f32.gmra.mxu0 %v49
    %v2134 = vpop.f32.mrf.mxu0
    %v2135 = vadd.f32 0.0, %v2134
    %2136 = vmatmul.f32.gmra.mxu0 %v51
    %v2137 = vpop.f32.mrf.mxu0
    %v2138 = vadd.f32 0.0, %v2137
    %2139 = vmatmul.f32.gmra.mxu0 %v53
    %v2140 = vpop.f32.mrf.mxu0
    %v2141 = vadd.f32 0.0, %v2140
    %2142 = vmatmul.f32.gmra.mxu0 %v55
    %v2143 = vpop.f32.mrf.mxu0
    %v2144 = vadd.f32 0.0, %v2143
    %2145 = vmatmul.f32.gmra.mxu0 %v57
    %v2146 = vpop.f32.mrf.mxu0
    %v2147 = vadd.f32 0.0, %v2146
    %2148 = vmatmul.f32.gmra.mxu0 %v59
    %v2149 = vpop.f32.mrf.mxu0
    %v2150 = vadd.f32 0.0, %v2149
    %2151 = vmatmul.f32.gmra.mxu0 %v61
    %v2152 = vpop.f32.mrf.mxu0
    %v2153 = vadd.f32 0.0, %v2152
    %2154 = vmatmul.f32.gmra.mxu0 %v63
    %v2155 = vpop.f32.mrf.mxu0
    %v2156 = vadd.f32 0.0, %v2155
    %2157 = vmatmul.f32.gmra.mxu0 %v65
    %v2158 = vpop.f32.mrf.mxu0
    %v2159 = vadd.f32 0.0, %v2158
    %2160 = vmatmul.f32.gmra.mxu0 %v67
    %v2161 = vpop.f32.mrf.mxu0
    %v2162 = vadd.f32 0.0, %v2161
    %2163 = vmatmul.f32.gmra.mxu0 %v69
    %v2164 = vpop.f32.mrf.mxu0
    %v2165 = vadd.f32 0.0, %v2164
    %2166 = vmatmul.f32.gmra.mxu0 %v71
    %v2167 = vpop.f32.mrf.mxu0
    %v2168 = vadd.f32 0.0, %v2167
    %2169 = vmatmul.f32.gmra.mxu0 %v73
    %v2170 = vpop.f32.mrf.mxu0
    %v2171 = vadd.f32 0.0, %v2170
    %2172 = vmatmul.f32.gmra.mxu0 %v75
    %v2173 = vpop.f32.mrf.mxu0
    %v2174 = vadd.f32 0.0, %v2173
    %2175 = vmatmul.f32.gmra.mxu0 %v77
    %v2176 = vpop.f32.mrf.mxu0
    %v2177 = vadd.f32 0.0, %v2176
    %2178 = vdwg.mxu0
    %2179 = vmatpush.msra.mxu0 0.0
    %2180 = vmatpush.msra.mxu0 0.0
    %2181 = vmatpush.msra.mxu0 0.0
    %2182 = vmatpush.msra.mxu0 0.0
    %2183 = vmatpush.msra.mxu0 0.0
    %2184 = vmatpush.msra.mxu0 0.0
    %2185 = vmatpush.msra.mxu0 0.0
    %2186 = vmatpush.msra.mxu0 0.0
    %2187 = vmatpush.msra.mxu0 %v2089
    %2188 = vmatpush.msra.mxu0 %v2088
    %2189 = vmatpush.msra.mxu0 %v2087
    %2190 = vmatpush.msra.mxu0 %v2086
    %2191 = vmatpush.msra.mxu0 %v2085
    %2192 = vmatpush.msra.mxu0 %v2084
    %2193 = vmatpush.msra.mxu0 %v2083
    %2194 = vmatpush.msra.mxu0 %v2082
    %2195 = vmatmul.f32.gmra.mxu0 %v1572
    %v2196 = vpop.f32.mrf.mxu0
    %v2197 = vadd.f32 %v2108, %v2196
    %2198 = vmatmul.f32.gmra.mxu0 %v1575
    %v2199 = vpop.f32.mrf.mxu0
    %v2200 = vadd.f32 %v2111, %v2199
    %2201 = vmatmul.f32.gmra.mxu0 %v1578
    %v2202 = vpop.f32.mrf.mxu0
    %v2203 = vadd.f32 %v2114, %v2202
    %2204 = vmatmul.f32.gmra.mxu0 %v1581
    %v2205 = vpop.f32.mrf.mxu0
    %v2206 = vadd.f32 %v2117, %v2205
    %2207 = vmatmul.f32.gmra.mxu0 %v1584
    %v2208 = vpop.f32.mrf.mxu0
    %v2209 = vadd.f32 %v2120, %v2208
    %2210 = vmatmul.f32.gmra.mxu0 %v1587
    %v2211 = vpop.f32.mrf.mxu0
    %v2212 = vadd.f32 %v2123, %v2211
    %2213 = vmatmul.f32.gmra.mxu0 %v1590
    %v2214 = vpop.f32.mrf.mxu0
    %v2215 = vadd.f32 %v2126, %v2214
    %2216 = vmatmul.f32.gmra.mxu0 %v1593
    %v2217 = vpop.f32.mrf.mxu0
    %v2218 = vadd.f32 %v2129, %v2217
    %2219 = vmatmul.f32.gmra.mxu0 %v1596
    %v2220 = vpop.f32.mrf.mxu0
    %v2221 = vadd.f32 %v2132, %v2220
    %2222 = vmatmul.f32.gmra.mxu0 %v1599
    %v2223 = vpop.f32.mrf.mxu0
    %v2224 = vadd.f32 %v2135, %v2223
    %2225 = vmatmul.f32.gmra.mxu0 %v1602
    %v2226 = vpop.f32.mrf.mxu0
    %v2227 = vadd.f32 %v2138, %v2226
    %2228 = vmatmul.f32.gmra.mxu0 %v1605
    %v2229 = vpop.f32.mrf.mxu0
    %v2230 = vadd.f32 %v2141, %v2229
    %2231 = vmatmul.f32.gmra.mxu0 %v1608
    %v2232 = vpop.f32.mrf.mxu0
    %v2233 = vadd.f32 %v2144, %v2232
    %2234 = vmatmul.f32.gmra.mxu0 %v1611
    %v2235 = vpop.f32.mrf.mxu0
    %v2236 = vadd.f32 %v2147, %v2235
    %2237 = vmatmul.f32.gmra.mxu0 %v1614
    %v2238 = vpop.f32.mrf.mxu0
    %v2239 = vadd.f32 %v2150, %v2238
    %2240 = vmatmul.f32.gmra.mxu0 %v1617
    %v2241 = vpop.f32.mrf.mxu0
    %v2242 = vadd.f32 %v2153, %v2241
    %2243 = vmatmul.f32.gmra.mxu0 %v1620
    %v2244 = vpop.f32.mrf.mxu0
    %v2245 = vadd.f32 %v2156, %v2244
    %2246 = vmatmul.f32.gmra.mxu0 %v1623
    %v2247 = vpop.f32.mrf.mxu0
    %v2248 = vadd.f32 %v2159, %v2247
    %2249 = vmatmul.f32.gmra.mxu0 %v1626
    %v2250 = vpop.f32.mrf.mxu0
    %v2251 = vadd.f32 %v2162, %v2250
    %2252 = vmatmul.f32.gmra.mxu0 %v1629
    %v2253 = vpop.f32.mrf.mxu0
    %v2254 = vadd.f32 %v2165, %v2253
    %2255 = vmatmul.f32.gmra.mxu0 %v1632
    %v2256 = vpop.f32.mrf.mxu0
    %v2257 = vadd.f32 %v2168, %v2256
    %2258 = vmatmul.f32.gmra.mxu0 %v1635
    %v2259 = vpop.f32.mrf.mxu0
    %v2260 = vadd.f32 %v2171, %v2259
    %2261 = vmatmul.f32.gmra.mxu0 %v1638
    %v2262 = vpop.f32.mrf.mxu0
    %v2263 = vadd.f32 %v2174, %v2262
    %2264 = vmatmul.f32.gmra.mxu0 %v1641
    %v2265 = vpop.f32.mrf.mxu0
    %v2266 = vadd.f32 %v2177, %v2265
    %2267 = vdwg.mxu0
    %v2268 = vld [vmem:[#allocation2 + $0x348] sm:$0x1]
    %v2269 = vld [vmem:[#allocation2 + $0x350] sm:$0x1]
    %v2270 = vperm.slane %v2269, 0
    %v2272 = vsel %vm1402, %v2197, 0
    %v2275 = vsel %vm1402, %v2200, 0
    %v2278 = vsel %vm1402, %v2203, 0
    %v2281 = vsel %vm1402, %v2206, 0
    %v2284 = vsel %vm1402, %v2209, 0
    %v2287 = vsel %vm1402, %v2212, 0
    %v2290 = vsel %vm1402, %v2215, 0
    %v2293 = vsel %vm1402, %v2218, 0
    %v2296 = vsel %vm1402, %v2221, 0
    %v2299 = vsel %vm1402, %v2224, 0
    %v2302 = vsel %vm1402, %v2227, 0
    %v2305 = vsel %vm1402, %v2230, 0
    %v2308 = vsel %vm1402, %v2233, 0
    %v2311 = vsel %vm1402, %v2236, 0
    %v2314 = vsel %vm1402, %v2239, 0
    %v2317 = vsel %vm1402, %v2242, 0
    %v2320 = vsel %vm1402, %v2245, 0
    %v2323 = vsel %vm1402, %v2248, 0
    %v2326 = vsel %vm1402, %v2251, 0
    %v2329 = vsel %vm1402, %v2254, 0
    %v2332 = vsel %vm1402, %v2257, 0
    %v2335 = vsel %vm1402, %v2260, 0
    %v2338 = vsel %vm1402, %v2263, 0
    %v2341 = vsel %vm1402, %v2266, 0
    %v2344 = vsel %vm1475, %v2268, 0
    %2346 = vmatpush.msra.mxu0 0.0
    %2347 = vmatpush.msra.mxu0 0.0
    %2348 = vmatpush.msra.mxu0 0.0
    %2349 = vmatpush.msra.mxu0 0.0
    %2350 = vmatpush.msra.mxu0 0.0
    %2351 = vmatpush.msra.mxu0 0.0
    %2352 = vmatpush.msra.mxu0 0.0
    %2353 = vmatpush.msra.mxu0 0.0
    %2354 = vmatpush.msra.mxu0 0.0
    %2355 = vmatpush.msra.mxu0 0.0
    %2356 = vmatpush.msra.mxu0 0.0
    %2357 = vmatpush.msra.mxu0 0.0
    %2358 = vmatpush.msra.mxu0 0.0
    %2359 = vmatpush.msra.mxu0 0.0
    %2360 = vmatpush.msra.mxu0 0.0
    %2361 = vmatpush.msra.mxu0 %v2344
    %2362 = vmatmul.f32.gmra.mxu0 %v2272
    %v2363 = vpop.f32.mrf.mxu0
    %v2364 = vadd.f32 %v2270, %v2363
    %2365 = vmatmul.f32.gmra.mxu0 %v2275
    %v2366 = vpop.f32.mrf.mxu0
    %v2367 = vadd.f32 %v2270, %v2366
    %2368 = vmatmul.f32.gmra.mxu0 %v2278
    %v2369 = vpop.f32.mrf.mxu0
    %v2370 = vadd.f32 %v2270, %v2369
    %2371 = vmatmul.f32.gmra.mxu0 %v2281
    %v2372 = vpop.f32.mrf.mxu0
    %v2373 = vadd.f32 %v2270, %v2372
    %2374 = vmatmul.f32.gmra.mxu0 %v2284
    %v2375 = vpop.f32.mrf.mxu0
    %v2376 = vadd.f32 %v2270, %v2375
    %2377 = vmatmul.f32.gmra.mxu0 %v2287
    %v2378 = vpop.f32.mrf.mxu0
    %v2379 = vadd.f32 %v2270, %v2378
    %2380 = vmatmul.f32.gmra.mxu0 %v2290
    %v2381 = vpop.f32.mrf.mxu0
    %v2382 = vadd.f32 %v2270, %v2381
    %2383 = vmatmul.f32.gmra.mxu0 %v2293
    %v2384 = vpop.f32.mrf.mxu0
    %v2385 = vadd.f32 %v2270, %v2384
    %2386 = vmatmul.f32.gmra.mxu0 %v2296
    %v2387 = vpop.f32.mrf.mxu0
    %v2388 = vadd.f32 %v2270, %v2387
    %2389 = vmatmul.f32.gmra.mxu0 %v2299
    %v2390 = vpop.f32.mrf.mxu0
    %v2391 = vadd.f32 %v2270, %v2390
    %2392 = vmatmul.f32.gmra.mxu0 %v2302
    %v2393 = vpop.f32.mrf.mxu0
    %v2394 = vadd.f32 %v2270, %v2393
    %2395 = vmatmul.f32.gmra.mxu0 %v2305
    %v2396 = vpop.f32.mrf.mxu0
    %v2397 = vadd.f32 %v2270, %v2396
    %2398 = vmatmul.f32.gmra.mxu0 %v2308
    %v2399 = vpop.f32.mrf.mxu0
    %v2400 = vadd.f32 %v2270, %v2399
    %2401 = vmatmul.f32.gmra.mxu0 %v2311
    %v2402 = vpop.f32.mrf.mxu0
    %v2403 = vadd.f32 %v2270, %v2402
    %2404 = vmatmul.f32.gmra.mxu0 %v2314
    %v2405 = vpop.f32.mrf.mxu0
    %v2406 = vadd.f32 %v2270, %v2405
    %2407 = vmatmul.f32.gmra.mxu0 %v2317
    %v2408 = vpop.f32.mrf.mxu0
    %v2409 = vadd.f32 %v2270, %v2408
    %2410 = vmatmul.f32.gmra.mxu0 %v2320
    %v2411 = vpop.f32.mrf.mxu0
    %v2412 = vadd.f32 %v2270, %v2411
    %2413 = vmatmul.f32.gmra.mxu0 %v2323
    %v2414 = vpop.f32.mrf.mxu0
    %v2415 = vadd.f32 %v2270, %v2414
    %2416 = vmatmul.f32.gmra.mxu0 %v2326
    %v2417 = vpop.f32.mrf.mxu0
    %v2418 = vadd.f32 %v2270, %v2417
    %2419 = vmatmul.f32.gmra.mxu0 %v2329
    %v2420 = vpop.f32.mrf.mxu0
    %v2421 = vadd.f32 %v2270, %v2420
    %2422 = vmatmul.f32.gmra.mxu0 %v2332
    %v2423 = vpop.f32.mrf.mxu0
    %v2424 = vadd.f32 %v2270, %v2423
    %2425 = vmatmul.f32.gmra.mxu0 %v2335
    %v2426 = vpop.f32.mrf.mxu0
    %v2427 = vadd.f32 %v2270, %v2426
    %2428 = vmatmul.f32.gmra.mxu0 %v2338
    %v2429 = vpop.f32.mrf.mxu0
    %v2430 = vadd.f32 %v2270, %v2429
    %2431 = vmatmul.f32.gmra.mxu0 %v2341
    %v2432 = vpop.f32.mrf.mxu0
    %v2433 = vadd.f32 %v2270, %v2432
    %2434 = vdwg.mxu0
    %vm2435 = vcmask 31744
    %v2436 = vsel %vm2435, %v2364, 0.0
    %v2437 = vsel %vm2435, %v2367, 0.0
    %v2438 = vadd.f32 %v2436, %v2437
    %v2439 = vsel %vm2435, %v2370, 0.0
    %v2440 = vadd.f32 %v2438, %v2439
    %v2441 = vsel %vm2435, %v2373, 0.0
    %v2442 = vadd.f32 %v2440, %v2441
    %v2443 = vsel %vm2435, %v2376, 0.0
    %v2444 = vadd.f32 %v2442, %v2443
    %v2445 = vsel %vm2435, %v2379, 0.0
    %v2446 = vadd.f32 %v2444, %v2445
    %v2447 = vsel %vm2435, %v2382, 0.0
    %v2448 = vadd.f32 %v2446, %v2447
    %v2449 = vsel %vm2435, %v2385, 0.0
    %v2450 = vadd.f32 %v2448, %v2449
    %v2451 = vsel %vm2435, %v2388, 0.0
    %v2452 = vadd.f32 %v2450, %v2451
    %v2453 = vsel %vm2435, %v2391, 0.0
    %v2454 = vadd.f32 %v2452, %v2453
    %v2455 = vsel %vm2435, %v2394, 0.0
    %v2456 = vadd.f32 %v2454, %v2455
    %v2457 = vsel %vm2435, %v2397, 0.0
    %v2458 = vadd.f32 %v2456, %v2457
    %v2459 = vsel %vm2435, %v2400, 0.0
    %v2460 = vadd.f32 %v2458, %v2459
    %v2461 = vsel %vm2435, %v2403, 0.0
    %v2462 = vadd.f32 %v2460, %v2461
    %v2463 = vsel %vm2435, %v2406, 0.0
    %v2464 = vadd.f32 %v2462, %v2463
    %v2465 = vsel %vm2435, %v2409, 0.0
    %v2466 = vadd.f32 %v2464, %v2465
    %v2467 = vsel %vm2435, %v2412, 0.0
    %v2468 = vadd.f32 %v2466, %v2467
    %v2469 = vsel %vm2435, %v2415, 0.0
    %v2470 = vadd.f32 %v2468, %v2469
    %v2471 = vsel %vm2435, %v2418, 0.0
    %v2472 = vadd.f32 %v2470, %v2471
    %v2473 = vsel %vm2435, %v2421, 0.0
    %v2474 = vadd.f32 %v2472, %v2473
    %v2475 = vsel %vm2435, %v2424, 0.0
    %v2476 = vadd.f32 %v2474, %v2475
    %v2477 = vsel %vm2435, %v2427, 0.0
    %v2478 = vadd.f32 %v2476, %v2477
    %v2479 = vsel %vm2435, %v2430, 0.0
    %v2480 = vadd.f32 %v2478, %v2479
    %v2481 = vsel %vm2435, %v2433, 0.0
    %v2482 = vadd.f32 %v2480, %v2481
    %v2483 = vrot.slane %v2482, 4
    %v2484 = vadd.f32 %v2482, %v2483
    %v2485 = vrot.slane %v2484, 2
    %v2486 = vadd.f32 %v2484, %v2485
    %v2487 = vrot.slane %v2486, 1
    %v2488 = vadd.f32 %v2486, %v2487
    %v2489 = vmul.f32 %v2488, 0.0052083335
    %v2490 = vmul.f32 %v2364, %v2364
    %v2491 = vmul.f32 %v2367, %v2367
    %v2492 = vmul.f32 %v2370, %v2370
    %v2493 = vmul.f32 %v2373, %v2373
    %v2494 = vmul.f32 %v2376, %v2376
    %v2495 = vmul.f32 %v2379, %v2379
    %v2496 = vmul.f32 %v2382, %v2382
    %v2497 = vmul.f32 %v2385, %v2385
    %v2498 = vmul.f32 %v2388, %v2388
    %v2499 = vmul.f32 %v2391, %v2391
    %v2500 = vmul.f32 %v2394, %v2394
    %v2501 = vmul.f32 %v2397, %v2397
    %v2502 = vmul.f32 %v2400, %v2400
    %v2503 = vmul.f32 %v2403, %v2403
    %v2504 = vmul.f32 %v2406, %v2406
    %v2505 = vmul.f32 %v2409, %v2409
    %v2506 = vmul.f32 %v2412, %v2412
    %v2507 = vmul.f32 %v2415, %v2415
    %v2508 = vmul.f32 %v2418, %v2418
    %v2509 = vmul.f32 %v2421, %v2421
    %v2510 = vmul.f32 %v2424, %v2424
    %v2511 = vmul.f32 %v2427, %v2427
    %v2512 = vmul.f32 %v2430, %v2430
    %v2513 = vmul.f32 %v2433, %v2433
    %v2514 = vsel %vm2435, %v2490, 0.0
    %v2515 = vsel %vm2435, %v2491, 0.0
    %v2516 = vadd.f32 %v2514, %v2515
    %v2517 = vsel %vm2435, %v2492, 0.0
    %v2518 = vadd.f32 %v2516, %v2517
    %v2519 = vsel %vm2435, %v2493, 0.0
    %v2520 = vadd.f32 %v2518, %v2519
    %v2521 = vsel %vm2435, %v2494, 0.0
    %v2522 = vadd.f32 %v2520, %v2521
    %v2523 = vsel %vm2435, %v2495, 0.0
    %v2524 = vadd.f32 %v2522, %v2523
    %v2525 = vsel %vm2435, %v2496, 0.0
    %v2526 = vadd.f32 %v2524, %v2525
    %v2527 = vsel %vm2435, %v2497, 0.0
    %v2528 = vadd.f32 %v2526, %v2527
    %v2529 = vsel %vm2435, %v2498, 0.0
    %v2530 = vadd.f32 %v2528, %v2529
    %v2531 = vsel %vm2435, %v2499, 0.0
    %v2532 = vadd.f32 %v2530, %v2531
    %v2533 = vsel %vm2435, %v2500, 0.0
    %v2534 = vadd.f32 %v2532, %v2533
    %v2535 = vsel %vm2435, %v2501, 0.0
    %v2536 = vadd.f32 %v2534, %v2535
    %v2537 = vsel %vm2435, %v2502, 0.0
    %v2538 = vadd.f32 %v2536, %v2537
    %v2539 = vsel %vm2435, %v2503, 0.0
    %v2540 = vadd.f32 %v2538, %v2539
    %v2541 = vsel %vm2435, %v2504, 0.0
    %v2542 = vadd.f32 %v2540, %v2541
    %v2543 = vsel %vm2435, %v2505, 0.0
    %v2544 = vadd.f32 %v2542, %v2543
    %v2545 = vsel %vm2435, %v2506, 0.0
    %v2546 = vadd.f32 %v2544, %v2545
    %v2547 = vsel %vm2435, %v2507, 0.0
    %v2548 = vadd.f32 %v2546, %v2547
    %v2549 = vsel %vm2435, %v2508, 0.0
    %v2550 = vadd.f32 %v2548, %v2549
    %v2551 = vsel %vm2435, %v2509, 0.0
    %v2552 = vadd.f32 %v2550, %v2551
    %v2553 = vsel %vm2435, %v2510, 0.0
    %v2554 = vadd.f32 %v2552, %v2553
    %v2555 = vsel %vm2435, %v2511, 0.0
    %v2556 = vadd.f32 %v2554, %v2555
    %v2557 = vsel %vm2435, %v2512, 0.0
    %v2558 = vadd.f32 %v2556, %v2557
    %v2559 = vsel %vm2435, %v2513, 0.0
    %v2560 = vadd.f32 %v2558, %v2559
    %v2561 = vrot.slane %v2560, 4
    %v2562 = vadd.f32 %v2560, %v2561
    %v2563 = vrot.slane %v2562, 2
    %v2564 = vadd.f32 %v2562, %v2563
    %v2565 = vrot.slane %v2564, 1
    %v2566 = vadd.f32 %v2564, %v2565
    %v2567 = vmul.f32 %v2566, 0.0052083335
    %v2568 = vmul.f32 %v2489, %v2489
    %v2569 = vsub.f32 %v2567, %v2568
    %v2570 = vsub.f32 %v2364, %v2489
    %v2571 = vsub.f32 %v2367, %v2489
    %v2572 = vsub.f32 %v2370, %v2489
    %v2573 = vsub.f32 %v2373, %v2489
    %v2574 = vsub.f32 %v2376, %v2489
    %v2575 = vsub.f32 %v2379, %v2489
    %v2576 = vsub.f32 %v2382, %v2489
    %v2577 = vsub.f32 %v2385, %v2489
    %v2578 = vsub.f32 %v2388, %v2489
    %v2579 = vsub.f32 %v2391, %v2489
    %v2580 = vsub.f32 %v2394, %v2489
    %v2581 = vsub.f32 %v2397, %v2489
    %v2582 = vsub.f32 %v2400, %v2489
    %v2583 = vsub.f32 %v2403, %v2489
    %v2584 = vsub.f32 %v2406, %v2489
    %v2585 = vsub.f32 %v2409, %v2489
    %v2586 = vsub.f32 %v2412, %v2489
    %v2587 = vsub.f32 %v2415, %v2489
    %v2588 = vsub.f32 %v2418, %v2489
    %v2589 = vsub.f32 %v2421, %v2489
    %v2590 = vsub.f32 %v2424, %v2489
    %v2591 = vsub.f32 %v2427, %v2489
    %v2592 = vsub.f32 %v2430, %v2489
    %v2593 = vsub.f32 %v2433, %v2489
    %v2594 = vadd.f32 %v2569, 1e-05
    %v2595 = vrsqrt.pop %v2594
    %v2596 = vmul.f32 %v2595, %v2594
    %v2597 = vmul.f32 %v2596, %v2595
    %v2598 = vmul.f32 0.5, %v2597
    %v2599 = vsub.f32 1.5, %v2598
    %v2600 = vmul.f32 %v2595, %v2599
    %vm2601 = vweird.f32 %v2594
    %vm2602 = vweird.f32 %v2595
    %vm2603 = vmor %vm2601, %vm2602
    %v2604 = vsel %vm2603, %v2595, %v2600
    %v2605 = vmul.f32 %v2570, %v2604
    %v2606 = vmul.f32 %v2571, %v2604
    %v2607 = vmul.f32 %v2572, %v2604
    %v2608 = vmul.f32 %v2573, %v2604
    %v2609 = vmul.f32 %v2574, %v2604
    %v2610 = vmul.f32 %v2575, %v2604
    %v2611 = vmul.f32 %v2576, %v2604
    %v2612 = vmul.f32 %v2577, %v2604
    %v2613 = vmul.f32 %v2578, %v2604
    %v2614 = vmul.f32 %v2579, %v2604
    %v2615 = vmul.f32 %v2580, %v2604
    %v2616 = vmul.f32 %v2581, %v2604
    %v2617 = vmul.f32 %v2582, %v2604
    %v2618 = vmul.f32 %v2583, %v2604
    %v2619 = vmul.f32 %v2584, %v2604
    %v2620 = vmul.f32 %v2585, %v2604
    %v2621 = vmul.f32 %v2586, %v2604
    %v2622 = vmul.f32 %v2587, %v2604
    %v2623 = vmul.f32 %v2588, %v2604
    %v2624 = vmul.f32 %v2589, %v2604
    %v2625 = vmul.f32 %v2590, %v2604
    %v2626 = vmul.f32 %v2591, %v2604
    %v2627 = vmul.f32 %v2592, %v2604
    %v2628 = vmul.f32 %v2593, %v2604
    %v2629 = vld [vmem:[#allocation2 + $0x358] sm:$0x1]
    %v2630 = vperm.slane %v2629, 0
    %v2631 = vmul.f32 %v2605, %v2630
    %v2632 = vmul.f32 %v2606, %v2630
    %v2633 = vmul.f32 %v2607, %v2630
    %v2634 = vmul.f32 %v2608, %v2630
    %v2635 = vmul.f32 %v2609, %v2630
    %v2636 = vmul.f32 %v2610, %v2630
    %v2637 = vmul.f32 %v2611, %v2630
    %v2638 = vmul.f32 %v2612, %v2630
    %v2639 = vmul.f32 %v2613, %v2630
    %v2640 = vmul.f32 %v2614, %v2630
    %v2641 = vmul.f32 %v2615, %v2630
    %v2642 = vmul.f32 %v2616, %v2630
    %v2643 = vmul.f32 %v2617, %v2630
    %v2644 = vmul.f32 %v2618, %v2630
    %v2645 = vmul.f32 %v2619, %v2630
    %v2646 = vmul.f32 %v2620, %v2630
    %v2647 = vmul.f32 %v2621, %v2630
    %v2648 = vmul.f32 %v2622, %v2630
    %v2649 = vmul.f32 %v2623, %v2630
    %v2650 = vmul.f32 %v2624, %v2630
    %v2651 = vmul.f32 %v2625, %v2630
    %v2652 = vmul.f32 %v2626, %v2630
    %v2653 = vmul.f32 %v2627, %v2630
    %v2654 = vmul.f32 %v2628, %v2630
    %v2655 = vld [vmem:[#allocation2 + $0x360] sm:$0x1]
    %v2656 = vperm.slane %v2655, 0
    %v2657 = vadd.f32 %v2631, %v2656
    %v2658 = vadd.f32 %v2632, %v2656
    %v2659 = vadd.f32 %v2633, %v2656
    %v2660 = vadd.f32 %v2634, %v2656
    %v2661 = vadd.f32 %v2635, %v2656
    %v2662 = vadd.f32 %v2636, %v2656
    %v2663 = vadd.f32 %v2637, %v2656
    %v2664 = vadd.f32 %v2638, %v2656
    %v2665 = vadd.f32 %v2639, %v2656
    %v2666 = vadd.f32 %v2640, %v2656
    %v2667 = vadd.f32 %v2641, %v2656
    %v2668 = vadd.f32 %v2642, %v2656
    %v2669 = vadd.f32 %v2643, %v2656
    %v2670 = vadd.f32 %v2644, %v2656
    %v2671 = vadd.f32 %v2645, %v2656
    %v2672 = vadd.f32 %v2646, %v2656
    %v2673 = vadd.f32 %v2647, %v2656
    %v2674 = vadd.f32 %v2648, %v2656
    %v2675 = vadd.f32 %v2649, %v2656
    %v2676 = vadd.f32 %v2650, %v2656
    %v2677 = vadd.f32 %v2651, %v2656
    %v2678 = vadd.f32 %v2652, %v2656
    %v2679 = vadd.f32 %v2653, %v2656
    %v2680 = vadd.f32 %v2654, %v2656
    %v2681 = vmax.f32 %v2657, 0.0
    %v2682 = vmax.f32 %v2658, 0.0
    %v2683 = vmax.f32 %v2659, 0.0
    %v2684 = vmax.f32 %v2660, 0.0
    %v2685 = vmax.f32 %v2661, 0.0
    %v2686 = vmax.f32 %v2662, 0.0
    %v2687 = vmax.f32 %v2663, 0.0
    %v2688 = vmax.f32 %v2664, 0.0
    %v2689 = vmax.f32 %v2665, 0.0
    %v2690 = vmax.f32 %v2666, 0.0
    %v2691 = vmax.f32 %v2667, 0.0
    %v2692 = vmax.f32 %v2668, 0.0
    %v2693 = vmax.f32 %v2669, 0.0
    %v2694 = vmax.f32 %v2670, 0.0
    %v2695 = vmax.f32 %v2671, 0.0
    %v2696 = vmax.f32 %v2672, 0.0
    %v2697 = vmax.f32 %v2673, 0.0
    %v2698 = vmax.f32 %v2674, 0.0
    %v2699 = vmax.f32 %v2675, 0.0
    %v2700 = vmax.f32 %v2676, 0.0
    %v2701 = vmax.f32 %v2677, 0.0
    %v2702 = vmax.f32 %v2678, 0.0
    %v2703 = vmax.f32 %v2679, 0.0
    %v2704 = vmax.f32 %v2680, 0.0
    %2705 = vmatpush.msra.mxu0 %v2696
    %2706 = vmatpush.msra.mxu0 %v2695
    %2707 = vmatpush.msra.mxu0 %v2694
    %2708 = vmatpush.msra.mxu0 %v2693
    %2709 = vmatpush.msra.mxu0 %v2692
    %2710 = vmatpush.msra.mxu0 %v2691
    %2711 = vmatpush.msra.mxu0 %v2690
    %2712 = vmatpush.msra.mxu0 %v2689
    %2713 = vmatpush.msra.mxu0 %v2688
    %2714 = vmatpush.msra.mxu0 %v2687
    %2715 = vmatpush.msra.mxu0 %v2686
    %2716 = vmatpush.msra.mxu0 %v2685
    %2717 = vmatpush.msra.mxu0 %v2684
    %2718 = vmatpush.msra.mxu0 %v2683
    %2719 = vmatpush.msra.mxu0 %v2682
    %2720 = vmatpush.msra.mxu0 %v2681
    %2721 = vmatmul.f32.gmra.mxu0 %v31
    %v2722 = vpop.f32.mrf.mxu0
    %v2723 = vadd.f32 0.0, %v2722
    %2724 = vmatmul.f32.gmra.mxu0 %v33
    %v2725 = vpop.f32.mrf.mxu0
    %v2726 = vadd.f32 0.0, %v2725
    %2727 = vmatmul.f32.gmra.mxu0 %v35
    %v2728 = vpop.f32.mrf.mxu0
    %v2729 = vadd.f32 0.0, %v2728
    %2730 = vmatmul.f32.gmra.mxu0 %v37
    %v2731 = vpop.f32.mrf.mxu0
    %v2732 = vadd.f32 0.0, %v2731
    %2733 = vmatmul.f32.gmra.mxu0 %v39
    %v2734 = vpop.f32.mrf.mxu0
    %v2735 = vadd.f32 0.0, %v2734
    %2736 = vmatmul.f32.gmra.mxu0 %v41
    %v2737 = vpop.f32.mrf.mxu0
    %v2738 = vadd.f32 0.0, %v2737
    %2739 = vmatmul.f32.gmra.mxu0 %v43
    %v2740 = vpop.f32.mrf.mxu0
    %v2741 = vadd.f32 0.0, %v2740
    %2742 = vmatmul.f32.gmra.mxu0 %v45
    %v2743 = vpop.f32.mrf.mxu0
    %v2744 = vadd.f32 0.0, %v2743
    %2745 = vmatmul.f32.gmra.mxu0 %v47
    %v2746 = vpop.f32.mrf.mxu0
    %v2747 = vadd.f32 0.0, %v2746
    %2748 = vmatmul.f32.gmra.mxu0 %v49
    %v2749 = vpop.f32.mrf.mxu0
    %v2750 = vadd.f32 0.0, %v2749
    %2751 = vmatmul.f32.gmra.mxu0 %v51
    %v2752 = vpop.f32.mrf.mxu0
    %v2753 = vadd.f32 0.0, %v2752
    %2754 = vmatmul.f32.gmra.mxu0 %v53
    %v2755 = vpop.f32.mrf.mxu0
    %v2756 = vadd.f32 0.0, %v2755
    %2757 = vmatmul.f32.gmra.mxu0 %v55
    %v2758 = vpop.f32.mrf.mxu0
    %v2759 = vadd.f32 0.0, %v2758
    %2760 = vmatmul.f32.gmra.mxu0 %v57
    %v2761 = vpop.f32.mrf.mxu0
    %v2762 = vadd.f32 0.0, %v2761
    %2763 = vmatmul.f32.gmra.mxu0 %v59
    %v2764 = vpop.f32.mrf.mxu0
    %v2765 = vadd.f32 0.0, %v2764
    %2766 = vmatmul.f32.gmra.mxu0 %v61
    %v2767 = vpop.f32.mrf.mxu0
    %v2768 = vadd.f32 0.0, %v2767
    %2769 = vmatmul.f32.gmra.mxu0 %v63
    %v2770 = vpop.f32.mrf.mxu0
    %v2771 = vadd.f32 0.0, %v2770
    %2772 = vmatmul.f32.gmra.mxu0 %v65
    %v2773 = vpop.f32.mrf.mxu0
    %v2774 = vadd.f32 0.0, %v2773
    %2775 = vmatmul.f32.gmra.mxu0 %v67
    %v2776 = vpop.f32.mrf.mxu0
    %v2777 = vadd.f32 0.0, %v2776
    %2778 = vmatmul.f32.gmra.mxu0 %v69
    %v2779 = vpop.f32.mrf.mxu0
    %v2780 = vadd.f32 0.0, %v2779
    %2781 = vmatmul.f32.gmra.mxu0 %v71
    %v2782 = vpop.f32.mrf.mxu0
    %v2783 = vadd.f32 0.0, %v2782
    %2784 = vmatmul.f32.gmra.mxu0 %v73
    %v2785 = vpop.f32.mrf.mxu0
    %v2786 = vadd.f32 0.0, %v2785
    %2787 = vmatmul.f32.gmra.mxu0 %v75
    %v2788 = vpop.f32.mrf.mxu0
    %v2789 = vadd.f32 0.0, %v2788
    %2790 = vmatmul.f32.gmra.mxu0 %v77
    %v2791 = vpop.f32.mrf.mxu0
    %v2792 = vadd.f32 0.0, %v2791
    %2793 = vdwg.mxu0
    %2794 = vmatpush.msra.mxu0 0.0
    %2795 = vmatpush.msra.mxu0 0.0
    %2796 = vmatpush.msra.mxu0 0.0
    %2797 = vmatpush.msra.mxu0 0.0
    %2798 = vmatpush.msra.mxu0 0.0
    %2799 = vmatpush.msra.mxu0 0.0
    %2800 = vmatpush.msra.mxu0 0.0
    %2801 = vmatpush.msra.mxu0 0.0
    %2802 = vmatpush.msra.mxu0 %v2704
    %2803 = vmatpush.msra.mxu0 %v2703
    %2804 = vmatpush.msra.mxu0 %v2702
    %2805 = vmatpush.msra.mxu0 %v2701
    %2806 = vmatpush.msra.mxu0 %v2700
    %2807 = vmatpush.msra.mxu0 %v2699
    %2808 = vmatpush.msra.mxu0 %v2698
    %2809 = vmatpush.msra.mxu0 %v2697
    %2810 = vmatmul.f32.gmra.mxu0 %v1572
    %v2811 = vpop.f32.mrf.mxu0
    %v2812 = vadd.f32 %v2723, %v2811
    %2813 = vmatmul.f32.gmra.mxu0 %v1575
    %v2814 = vpop.f32.mrf.mxu0
    %v2815 = vadd.f32 %v2726, %v2814
    %2816 = vmatmul.f32.gmra.mxu0 %v1578
    %v2817 = vpop.f32.mrf.mxu0
    %v2818 = vadd.f32 %v2729, %v2817
    %2819 = vmatmul.f32.gmra.mxu0 %v1581
    %v2820 = vpop.f32.mrf.mxu0
    %v2821 = vadd.f32 %v2732, %v2820
    %2822 = vmatmul.f32.gmra.mxu0 %v1584
    %v2823 = vpop.f32.mrf.mxu0
    %v2824 = vadd.f32 %v2735, %v2823
    %2825 = vmatmul.f32.gmra.mxu0 %v1587
    %v2826 = vpop.f32.mrf.mxu0
    %v2827 = vadd.f32 %v2738, %v2826
    %2828 = vmatmul.f32.gmra.mxu0 %v1590
    %v2829 = vpop.f32.mrf.mxu0
    %v2830 = vadd.f32 %v2741, %v2829
    %2831 = vmatmul.f32.gmra.mxu0 %v1593
    %v2832 = vpop.f32.mrf.mxu0
    %v2833 = vadd.f32 %v2744, %v2832
    %2834 = vmatmul.f32.gmra.mxu0 %v1596
    %v2835 = vpop.f32.mrf.mxu0
    %v2836 = vadd.f32 %v2747, %v2835
    %2837 = vmatmul.f32.gmra.mxu0 %v1599
    %v2838 = vpop.f32.mrf.mxu0
    %v2839 = vadd.f32 %v2750, %v2838
    %2840 = vmatmul.f32.gmra.mxu0 %v1602
    %v2841 = vpop.f32.mrf.mxu0
    %v2842 = vadd.f32 %v2753, %v2841
    %2843 = vmatmul.f32.gmra.mxu0 %v1605
    %v2844 = vpop.f32.mrf.mxu0
    %v2845 = vadd.f32 %v2756, %v2844
    %2846 = vmatmul.f32.gmra.mxu0 %v1608
    %v2847 = vpop.f32.mrf.mxu0
    %v2848 = vadd.f32 %v2759, %v2847
    %2849 = vmatmul.f32.gmra.mxu0 %v1611
    %v2850 = vpop.f32.mrf.mxu0
    %v2851 = vadd.f32 %v2762, %v2850
    %2852 = vmatmul.f32.gmra.mxu0 %v1614
    %v2853 = vpop.f32.mrf.mxu0
    %v2854 = vadd.f32 %v2765, %v2853
    %2855 = vmatmul.f32.gmra.mxu0 %v1617
    %v2856 = vpop.f32.mrf.mxu0
    %v2857 = vadd.f32 %v2768, %v2856
    %2858 = vmatmul.f32.gmra.mxu0 %v1620
    %v2859 = vpop.f32.mrf.mxu0
    %v2860 = vadd.f32 %v2771, %v2859
    %2861 = vmatmul.f32.gmra.mxu0 %v1623
    %v2862 = vpop.f32.mrf.mxu0
    %v2863 = vadd.f32 %v2774, %v2862
    %2864 = vmatmul.f32.gmra.mxu0 %v1626
    %v2865 = vpop.f32.mrf.mxu0
    %v2866 = vadd.f32 %v2777, %v2865
    %2867 = vmatmul.f32.gmra.mxu0 %v1629
    %v2868 = vpop.f32.mrf.mxu0
    %v2869 = vadd.f32 %v2780, %v2868
    %2870 = vmatmul.f32.gmra.mxu0 %v1632
    %v2871 = vpop.f32.mrf.mxu0
    %v2872 = vadd.f32 %v2783, %v2871
    %2873 = vmatmul.f32.gmra.mxu0 %v1635
    %v2874 = vpop.f32.mrf.mxu0
    %v2875 = vadd.f32 %v2786, %v2874
    %2876 = vmatmul.f32.gmra.mxu0 %v1638
    %v2877 = vpop.f32.mrf.mxu0
    %v2878 = vadd.f32 %v2789, %v2877
    %2879 = vmatmul.f32.gmra.mxu0 %v1641
    %v2880 = vpop.f32.mrf.mxu0
    %v2881 = vadd.f32 %v2792, %v2880
    %2882 = vdwg.mxu0
    %v2883 = vld [vmem:[#allocation2 + $0x368] sm:$0xf]
    %v2884 = vld [vmem:[#allocation2 + $0x370] sm:$0x1]
    %v2885 = vperm.slane %v2884, 0
    %v2887 = vsel %vm2435, %v2812, 0
    %v2890 = vsel %vm2435, %v2815, 0
    %v2893 = vsel %vm2435, %v2818, 0
    %v2896 = vsel %vm2435, %v2821, 0
    %v2899 = vsel %vm2435, %v2824, 0
    %v2902 = vsel %vm2435, %v2827, 0
    %v2905 = vsel %vm2435, %v2830, 0
    %v2908 = vsel %vm2435, %v2833, 0
    %v2911 = vsel %vm2435, %v2836, 0
    %v2914 = vsel %vm2435, %v2839, 0
    %v2917 = vsel %vm2435, %v2842, 0
    %v2920 = vsel %vm2435, %v2845, 0
    %v2923 = vsel %vm2435, %v2848, 0
    %v2926 = vsel %vm2435, %v2851, 0
    %v2929 = vsel %vm2435, %v2854, 0
    %v2932 = vsel %vm2435, %v2857, 0
    %v2935 = vsel %vm2435, %v2860, 0
    %v2938 = vsel %vm2435, %v2863, 0
    %v2941 = vsel %vm2435, %v2866, 0
    %v2944 = vsel %vm2435, %v2869, 0
    %v2947 = vsel %vm2435, %v2872, 0
    %v2950 = vsel %vm2435, %v2875, 0
    %v2953 = vsel %vm2435, %v2878, 0
    %v2956 = vsel %vm2435, %v2881, 0
    %vm2958 = vcmask 1043456
    %v2960 = vsel %vm2958, %v2883, 0
    %2962 = vmatpush.msra.mxu0 0.0
    %2963 = vmatpush.msra.mxu0 0.0
    %2964 = vmatpush.msra.mxu0 0.0
    %2965 = vmatpush.msra.mxu0 0.0
    %2966 = vmatpush.msra.mxu0 0.0
    %2967 = vmatpush.msra.mxu0 0.0
    %2968 = vmatpush.msra.mxu0 0.0
    %2969 = vmatpush.msra.mxu0 0.0
    %2970 = vmatpush.msra.mxu0 0.0
    %2971 = vmatpush.msra.mxu0 0.0
    %2972 = vmatpush.msra.mxu0 0.0
    %2973 = vmatpush.msra.mxu0 0.0
    %2974 = vmatpush.msra.mxu0 0.0
    %2975 = vmatpush.msra.mxu0 0.0
    %2976 = vmatpush.msra.mxu0 0.0
    %2977 = vmatpush.msra.mxu0 %v2960
    %2978 = vmatmul.f32.gmra.mxu0 %v2887
    %v2979 = vpop.f32.mrf.mxu0
    %v2980 = vadd.f32 %v2885, %v2979
    %2981 = vmatmul.f32.gmra.mxu0 %v2890
    %v2982 = vpop.f32.mrf.mxu0
    %v2983 = vadd.f32 %v2885, %v2982
    %2984 = vmatmul.f32.gmra.mxu0 %v2893
    %v2985 = vpop.f32.mrf.mxu0
    %v2986 = vadd.f32 %v2885, %v2985
    %2987 = vmatmul.f32.gmra.mxu0 %v2896
    %v2988 = vpop.f32.mrf.mxu0
    %v2989 = vadd.f32 %v2885, %v2988
    %2990 = vmatmul.f32.gmra.mxu0 %v2899
    %v2991 = vpop.f32.mrf.mxu0
    %v2992 = vadd.f32 %v2885, %v2991
    %2993 = vmatmul.f32.gmra.mxu0 %v2902
    %v2994 = vpop.f32.mrf.mxu0
    %v2995 = vadd.f32 %v2885, %v2994
    %2996 = vmatmul.f32.gmra.mxu0 %v2905
    %v2997 = vpop.f32.mrf.mxu0
    %v2998 = vadd.f32 %v2885, %v2997
    %2999 = vmatmul.f32.gmra.mxu0 %v2908
    %v3000 = vpop.f32.mrf.mxu0
    %v3001 = vadd.f32 %v2885, %v3000
    %3002 = vmatmul.f32.gmra.mxu0 %v2911
    %v3003 = vpop.f32.mrf.mxu0
    %v3004 = vadd.f32 %v2885, %v3003
    %3005 = vmatmul.f32.gmra.mxu0 %v2914
    %v3006 = vpop.f32.mrf.mxu0
    %v3007 = vadd.f32 %v2885, %v3006
    %3008 = vmatmul.f32.gmra.mxu0 %v2917
    %v3009 = vpop.f32.mrf.mxu0
    %v3010 = vadd.f32 %v2885, %v3009
    %3011 = vmatmul.f32.gmra.mxu0 %v2920
    %v3012 = vpop.f32.mrf.mxu0
    %v3013 = vadd.f32 %v2885, %v3012
    %3014 = vmatmul.f32.gmra.mxu0 %v2923
    %v3015 = vpop.f32.mrf.mxu0
    %v3016 = vadd.f32 %v2885, %v3015
    %3017 = vmatmul.f32.gmra.mxu0 %v2926
    %v3018 = vpop.f32.mrf.mxu0
    %v3019 = vadd.f32 %v2885, %v3018
    %3020 = vmatmul.f32.gmra.mxu0 %v2929
    %v3021 = vpop.f32.mrf.mxu0
    %v3022 = vadd.f32 %v2885, %v3021
    %3023 = vmatmul.f32.gmra.mxu0 %v2932
    %v3024 = vpop.f32.mrf.mxu0
    %v3025 = vadd.f32 %v2885, %v3024
    %3026 = vmatmul.f32.gmra.mxu0 %v2935
    %v3027 = vpop.f32.mrf.mxu0
    %v3028 = vadd.f32 %v2885, %v3027
    %3029 = vmatmul.f32.gmra.mxu0 %v2938
    %v3030 = vpop.f32.mrf.mxu0
    %v3031 = vadd.f32 %v2885, %v3030
    %3032 = vmatmul.f32.gmra.mxu0 %v2941
    %v3033 = vpop.f32.mrf.mxu0
    %v3034 = vadd.f32 %v2885, %v3033
    %3035 = vmatmul.f32.gmra.mxu0 %v2944
    %v3036 = vpop.f32.mrf.mxu0
    %v3037 = vadd.f32 %v2885, %v3036
    %3038 = vmatmul.f32.gmra.mxu0 %v2947
    %v3039 = vpop.f32.mrf.mxu0
    %v3040 = vadd.f32 %v2885, %v3039
    %3041 = vmatmul.f32.gmra.mxu0 %v2950
    %v3042 = vpop.f32.mrf.mxu0
    %v3043 = vadd.f32 %v2885, %v3042
    %3044 = vmatmul.f32.gmra.mxu0 %v2953
    %v3045 = vpop.f32.mrf.mxu0
    %v3046 = vadd.f32 %v2885, %v3045
    %3047 = vmatmul.f32.gmra.mxu0 %v2956
    %v3048 = vpop.f32.mrf.mxu0
    %v3049 = vadd.f32 %v2885, %v3048
    %3050 = vdwg.mxu0
    %v3051 = vsel %vm2435, %v2980, 0.0
    %v3052 = vsel %vm2435, %v2983, 0.0
    %v3053 = vadd.f32 %v3051, %v3052
    %v3054 = vsel %vm2435, %v2986, 0.0
    %v3055 = vadd.f32 %v3053, %v3054
    %v3056 = vsel %vm2435, %v2989, 0.0
    %v3057 = vadd.f32 %v3055, %v3056
    %v3058 = vsel %vm2435, %v2992, 0.0
    %v3059 = vadd.f32 %v3057, %v3058
    %v3060 = vsel %vm2435, %v2995, 0.0
    %v3061 = vadd.f32 %v3059, %v3060
    %v3062 = vsel %vm2435, %v2998, 0.0
    %v3063 = vadd.f32 %v3061, %v3062
    %v3064 = vsel %vm2435, %v3001, 0.0
    %v3065 = vadd.f32 %v3063, %v3064
    %v3066 = vsel %vm2435, %v3004, 0.0
    %v3067 = vadd.f32 %v3065, %v3066
    %v3068 = vsel %vm2435, %v3007, 0.0
    %v3069 = vadd.f32 %v3067, %v3068
    %v3070 = vsel %vm2435, %v3010, 0.0
    %v3071 = vadd.f32 %v3069, %v3070
    %v3072 = vsel %vm2435, %v3013, 0.0
    %v3073 = vadd.f32 %v3071, %v3072
    %v3074 = vsel %vm2435, %v3016, 0.0
    %v3075 = vadd.f32 %v3073, %v3074
    %v3076 = vsel %vm2435, %v3019, 0.0
    %v3077 = vadd.f32 %v3075, %v3076
    %v3078 = vsel %vm2435, %v3022, 0.0
    %v3079 = vadd.f32 %v3077, %v3078
    %v3080 = vsel %vm2435, %v3025, 0.0
    %v3081 = vadd.f32 %v3079, %v3080
    %v3082 = vsel %vm2435, %v3028, 0.0
    %v3083 = vadd.f32 %v3081, %v3082
    %v3084 = vsel %vm2435, %v3031, 0.0
    %v3085 = vadd.f32 %v3083, %v3084
    %v3086 = vsel %vm2435, %v3034, 0.0
    %v3087 = vadd.f32 %v3085, %v3086
    %v3088 = vsel %vm2435, %v3037, 0.0
    %v3089 = vadd.f32 %v3087, %v3088
    %v3090 = vsel %vm2435, %v3040, 0.0
    %v3091 = vadd.f32 %v3089, %v3090
    %v3092 = vsel %vm2435, %v3043, 0.0
    %v3093 = vadd.f32 %v3091, %v3092
    %v3094 = vsel %vm2435, %v3046, 0.0
    %v3095 = vadd.f32 %v3093, %v3094
    %v3096 = vsel %vm2435, %v3049, 0.0
    %v3097 = vadd.f32 %v3095, %v3096
    %v3098 = vrot.slane %v3097, 4
    %v3099 = vadd.f32 %v3097, %v3098
    %v3100 = vrot.slane %v3099, 2
    %v3101 = vadd.f32 %v3099, %v3100
    %v3102 = vrot.slane %v3101, 1
    %v3103 = vadd.f32 %v3101, %v3102
    %v3104 = vmul.f32 %v3103, 0.0052083335
    %v3105 = vmul.f32 %v2980, %v2980
    %v3106 = vmul.f32 %v2983, %v2983
    %v3107 = vmul.f32 %v2986, %v2986
    %v3108 = vmul.f32 %v2989, %v2989
    %v3109 = vmul.f32 %v2992, %v2992
    %v3110 = vmul.f32 %v2995, %v2995
    %v3111 = vmul.f32 %v2998, %v2998
    %v3112 = vmul.f32 %v3001, %v3001
    %v3113 = vmul.f32 %v3004, %v3004
    %v3114 = vmul.f32 %v3007, %v3007
    %v3115 = vmul.f32 %v3010, %v3010
    %v3116 = vmul.f32 %v3013, %v3013
    %v3117 = vmul.f32 %v3016, %v3016
    %v3118 = vmul.f32 %v3019, %v3019
    %v3119 = vmul.f32 %v3022, %v3022
    %v3120 = vmul.f32 %v3025, %v3025
    %v3121 = vmul.f32 %v3028, %v3028
    %v3122 = vmul.f32 %v3031, %v3031
    %v3123 = vmul.f32 %v3034, %v3034
    %v3124 = vmul.f32 %v3037, %v3037
    %v3125 = vmul.f32 %v3040, %v3040
    %v3126 = vmul.f32 %v3043, %v3043
    %v3127 = vmul.f32 %v3046, %v3046
    %v3128 = vmul.f32 %v3049, %v3049
    %v3129 = vsel %vm2435, %v3105, 0.0
    %v3130 = vsel %vm2435, %v3106, 0.0
    %v3131 = vadd.f32 %v3129, %v3130
    %v3132 = vsel %vm2435, %v3107, 0.0
    %v3133 = vadd.f32 %v3131, %v3132
    %v3134 = vsel %vm2435, %v3108, 0.0
    %v3135 = vadd.f32 %v3133, %v3134
    %v3136 = vsel %vm2435, %v3109, 0.0
    %v3137 = vadd.f32 %v3135, %v3136
    %v3138 = vsel %vm2435, %v3110, 0.0
    %v3139 = vadd.f32 %v3137, %v3138
    %v3140 = vsel %vm2435, %v3111, 0.0
    %v3141 = vadd.f32 %v3139, %v3140
    %v3142 = vsel %vm2435, %v3112, 0.0
    %v3143 = vadd.f32 %v3141, %v3142
    %v3144 = vsel %vm2435, %v3113, 0.0
    %v3145 = vadd.f32 %v3143, %v3144
    %v3146 = vsel %vm2435, %v3114, 0.0
    %v3147 = vadd.f32 %v3145, %v3146
    %v3148 = vsel %vm2435, %v3115, 0.0
    %v3149 = vadd.f32 %v3147, %v3148
    %v3150 = vsel %vm2435, %v3116, 0.0
    %v3151 = vadd.f32 %v3149, %v3150
    %v3152 = vsel %vm2435, %v3117, 0.0
    %v3153 = vadd.f32 %v3151, %v3152
    %v3154 = vsel %vm2435, %v3118, 0.0
    %v3155 = vadd.f32 %v3153, %v3154
    %v3156 = vsel %vm2435, %v3119, 0.0
    %v3157 = vadd.f32 %v3155, %v3156
    %v3158 = vsel %vm2435, %v3120, 0.0
    %v3159 = vadd.f32 %v3157, %v3158
    %v3160 = vsel %vm2435, %v3121, 0.0
    %v3161 = vadd.f32 %v3159, %v3160
    %v3162 = vsel %vm2435, %v3122, 0.0
    %v3163 = vadd.f32 %v3161, %v3162
    %v3164 = vsel %vm2435, %v3123, 0.0
    %v3165 = vadd.f32 %v3163, %v3164
    %v3166 = vsel %vm2435, %v3124, 0.0
    %v3167 = vadd.f32 %v3165, %v3166
    %v3168 = vsel %vm2435, %v3125, 0.0
    %v3169 = vadd.f32 %v3167, %v3168
    %v3170 = vsel %vm2435, %v3126, 0.0
    %v3171 = vadd.f32 %v3169, %v3170
    %v3172 = vsel %vm2435, %v3127, 0.0
    %v3173 = vadd.f32 %v3171, %v3172
    %v3174 = vsel %vm2435, %v3128, 0.0
    %v3175 = vadd.f32 %v3173, %v3174
    %v3176 = vrot.slane %v3175, 4
    %v3177 = vadd.f32 %v3175, %v3176
    %v3178 = vrot.slane %v3177, 2
    %v3179 = vadd.f32 %v3177, %v3178
    %v3180 = vrot.slane %v3179, 1
    %v3181 = vadd.f32 %v3179, %v3180
    %v3182 = vmul.f32 %v3181, 0.0052083335
    %v3183 = vmul.f32 %v3104, %v3104
    %v3184 = vsub.f32 %v3182, %v3183
    %v3185 = vsub.f32 %v2980, %v3104
    %v3186 = vsub.f32 %v2983, %v3104
    %v3187 = vsub.f32 %v2986, %v3104
    %v3188 = vsub.f32 %v2989, %v3104
    %v3189 = vsub.f32 %v2992, %v3104
    %v3190 = vsub.f32 %v2995, %v3104
    %v3191 = vsub.f32 %v2998, %v3104
    %v3192 = vsub.f32 %v3001, %v3104
    %v3193 = vsub.f32 %v3004, %v3104
    %v3194 = vsub.f32 %v3007, %v3104
    %v3195 = vsub.f32 %v3010, %v3104
    %v3196 = vsub.f32 %v3013, %v3104
    %v3197 = vsub.f32 %v3016, %v3104
    %v3198 = vsub.f32 %v3019, %v3104
    %v3199 = vsub.f32 %v3022, %v3104
    %v3200 = vsub.f32 %v3025, %v3104
    %v3201 = vsub.f32 %v3028, %v3104
    %v3202 = vsub.f32 %v3031, %v3104
    %v3203 = vsub.f32 %v3034, %v3104
    %v3204 = vsub.f32 %v3037, %v3104
    %v3205 = vsub.f32 %v3040, %v3104
    %v3206 = vsub.f32 %v3043, %v3104
    %v3207 = vsub.f32 %v3046, %v3104
    %v3208 = vsub.f32 %v3049, %v3104
    %v3209 = vadd.f32 %v3184, 1e-05
    %v3210 = vrsqrt.pop %v3209
    %v3211 = vmul.f32 %v3210, %v3209
    %v3212 = vmul.f32 %v3211, %v3210
    %v3213 = vmul.f32 0.5, %v3212
    %v3214 = vsub.f32 1.5, %v3213
    %v3215 = vmul.f32 %v3210, %v3214
    %vm3216 = vweird.f32 %v3209
    %vm3217 = vweird.f32 %v3210
    %vm3218 = vmor %vm3216, %vm3217
    %v3219 = vsel %vm3218, %v3210, %v3215
    %v3220 = vmul.f32 %v3185, %v3219
    %v3221 = vmul.f32 %v3186, %v3219
    %v3222 = vmul.f32 %v3187, %v3219
    %v3223 = vmul.f32 %v3188, %v3219
    %v3224 = vmul.f32 %v3189, %v3219
    %v3225 = vmul.f32 %v3190, %v3219
    %v3226 = vmul.f32 %v3191, %v3219
    %v3227 = vmul.f32 %v3192, %v3219
    %v3228 = vmul.f32 %v3193, %v3219
    %v3229 = vmul.f32 %v3194, %v3219
    %v3230 = vmul.f32 %v3195, %v3219
    %v3231 = vmul.f32 %v3196, %v3219
    %v3232 = vmul.f32 %v3197, %v3219
    %v3233 = vmul.f32 %v3198, %v3219
    %v3234 = vmul.f32 %v3199, %v3219
    %v3235 = vmul.f32 %v3200, %v3219
    %v3236 = vmul.f32 %v3201, %v3219
    %v3237 = vmul.f32 %v3202, %v3219
    %v3238 = vmul.f32 %v3203, %v3219
    %v3239 = vmul.f32 %v3204, %v3219
    %v3240 = vmul.f32 %v3205, %v3219
    %v3241 = vmul.f32 %v3206, %v3219
    %v3242 = vmul.f32 %v3207, %v3219
    %v3243 = vmul.f32 %v3208, %v3219
    %v3244 = vld [vmem:[#allocation2 + $0x378] sm:$0x1]
    %v3245 = vperm.slane %v3244, 0
    %v3246 = vmul.f32 %v3220, %v3245
    %v3247 = vmul.f32 %v3221, %v3245
    %v3248 = vmul.f32 %v3222, %v3245
    %v3249 = vmul.f32 %v3223, %v3245
    %v3250 = vmul.f32 %v3224, %v3245
    %v3251 = vmul.f32 %v3225, %v3245
    %v3252 = vmul.f32 %v3226, %v3245
    %v3253 = vmul.f32 %v3227, %v3245
    %v3254 = vmul.f32 %v3228, %v3245
    %v3255 = vmul.f32 %v3229, %v3245
    %v3256 = vmul.f32 %v3230, %v3245
    %v3257 = vmul.f32 %v3231, %v3245
    %v3258 = vmul.f32 %v3232, %v3245
    %v3259 = vmul.f32 %v3233, %v3245
    %v3260 = vmul.f32 %v3234, %v3245
    %v3261 = vmul.f32 %v3235, %v3245
    %v3262 = vmul.f32 %v3236, %v3245
    %v3263 = vmul.f32 %v3237, %v3245
    %v3264 = vmul.f32 %v3238, %v3245
    %v3265 = vmul.f32 %v3239, %v3245
    %v3266 = vmul.f32 %v3240, %v3245
    %v3267 = vmul.f32 %v3241, %v3245
    %v3268 = vmul.f32 %v3242, %v3245
    %v3269 = vmul.f32 %v3243, %v3245
    %v3270 = vld [vmem:[#allocation2 + $0x380] sm:$0x1]
    %v3271 = vperm.slane %v3270, 0
    %v3272 = vadd.f32 %v3246, %v3271
    %v3273 = vadd.f32 %v3247, %v3271
    %v3274 = vadd.f32 %v3248, %v3271
    %v3275 = vadd.f32 %v3249, %v3271
    %v3276 = vadd.f32 %v3250, %v3271
    %v3277 = vadd.f32 %v3251, %v3271
    %v3278 = vadd.f32 %v3252, %v3271
    %v3279 = vadd.f32 %v3253, %v3271
    %v3280 = vadd.f32 %v3254, %v3271
    %v3281 = vadd.f32 %v3255, %v3271
    %v3282 = vadd.f32 %v3256, %v3271
    %v3283 = vadd.f32 %v3257, %v3271
    %v3284 = vadd.f32 %v3258, %v3271
    %v3285 = vadd.f32 %v3259, %v3271
    %v3286 = vadd.f32 %v3260, %v3271
    %v3287 = vadd.f32 %v3261, %v3271
    %v3288 = vadd.f32 %v3262, %v3271
    %v3289 = vadd.f32 %v3263, %v3271
    %v3290 = vadd.f32 %v3264, %v3271
    %v3291 = vadd.f32 %v3265, %v3271
    %v3292 = vadd.f32 %v3266, %v3271
    %v3293 = vadd.f32 %v3267, %v3271
    %v3294 = vadd.f32 %v3268, %v3271
    %v3295 = vadd.f32 %v3269, %v3271
    %v3296 = vmax.f32 %v3272, 0.0
    %v3297 = vmax.f32 %v3273, 0.0
    %v3298 = vmax.f32 %v3274, 0.0
    %v3299 = vmax.f32 %v3275, 0.0
    %v3300 = vmax.f32 %v3276, 0.0
    %v3301 = vmax.f32 %v3277, 0.0
    %v3302 = vmax.f32 %v3278, 0.0
    %v3303 = vmax.f32 %v3279, 0.0
    %v3304 = vmax.f32 %v3280, 0.0
    %v3305 = vmax.f32 %v3281, 0.0
    %v3306 = vmax.f32 %v3282, 0.0
    %v3307 = vmax.f32 %v3283, 0.0
    %v3308 = vmax.f32 %v3284, 0.0
    %v3309 = vmax.f32 %v3285, 0.0
    %v3310 = vmax.f32 %v3286, 0.0
    %v3311 = vmax.f32 %v3287, 0.0
    %v3312 = vmax.f32 %v3288, 0.0
    %v3313 = vmax.f32 %v3289, 0.0
    %v3314 = vmax.f32 %v3290, 0.0
    %v3315 = vmax.f32 %v3291, 0.0
    %v3316 = vmax.f32 %v3292, 0.0
    %v3317 = vmax.f32 %v3293, 0.0
    %v3318 = vmax.f32 %v3294, 0.0
    %v3319 = vmax.f32 %v3295, 0.0
    %v3320 = vld [vmem:[#allocation2 + $0x388] sm:$0xf]
    %v3322 = vsel %vm2435, %v3296, 0
    %v3325 = vsel %vm2435, %v3297, 0
    %v3328 = vsel %vm2435, %v3298, 0
    %v3331 = vsel %vm2435, %v3299, 0
    %v3334 = vsel %vm2435, %v3300, 0
    %v3337 = vsel %vm2435, %v3301, 0
    %v3340 = vsel %vm2435, %v3302, 0
    %v3343 = vsel %vm2435, %v3303, 0
    %v3346 = vsel %vm2435, %v3304, 0
    %v3349 = vsel %vm2435, %v3305, 0
    %v3352 = vsel %vm2435, %v3306, 0
    %v3355 = vsel %vm2435, %v3307, 0
    %v3358 = vsel %vm2435, %v3308, 0
    %v3361 = vsel %vm2435, %v3309, 0
    %v3364 = vsel %vm2435, %v3310, 0
    %v3367 = vsel %vm2435, %v3311, 0
    %v3370 = vsel %vm2435, %v3312, 0
    %v3373 = vsel %vm2435, %v3313, 0
    %v3376 = vsel %vm2435, %v3314, 0
    %v3379 = vsel %vm2435, %v3315, 0
    %v3382 = vsel %vm2435, %v3316, 0
    %v3385 = vsel %vm2435, %v3317, 0
    %v3388 = vsel %vm2435, %v3318, 0
    %v3391 = vsel %vm2435, %v3319, 0
    %v3394 = vsel %vm2958, %v3320, 0
    %3396 = vmatpush.msra.mxu0 0.0
    %3397 = vmatpush.msra.mxu0 0.0
    %3398 = vmatpush.msra.mxu0 0.0
    %3399 = vmatpush.msra.mxu0 0.0
    %3400 = vmatpush.msra.mxu0 0.0
    %3401 = vmatpush.msra.mxu0 0.0
    %3402 = vmatpush.msra.mxu0 0.0
    %3403 = vmatpush.msra.mxu0 0.0
    %3404 = vmatpush.msra.mxu0 0.0
    %3405 = vmatpush.msra.mxu0 0.0
    %3406 = vmatpush.msra.mxu0 0.0
    %3407 = vmatpush.msra.mxu0 0.0
    %3408 = vmatpush.msra.mxu0 0.0
    %3409 = vmatpush.msra.mxu0 0.0
    %3410 = vmatpush.msra.mxu0 0.0
    %3411 = vmatpush.msra.mxu0 %v3394
    %3412 = vmatmul.f32.gmra.mxu0 %v3322
    %v3413 = vpop.f32.mrf.mxu0
    %v3414 = vadd.f32 0.0, %v3413
    %3415 = vmatmul.f32.gmra.mxu0 %v3325
    %v3416 = vpop.f32.mrf.mxu0
    %v3417 = vadd.f32 0.0, %v3416
    %3418 = vmatmul.f32.gmra.mxu0 %v3328
    %v3419 = vpop.f32.mrf.mxu0
    %v3420 = vadd.f32 0.0, %v3419
    %3421 = vmatmul.f32.gmra.mxu0 %v3331
    %v3422 = vpop.f32.mrf.mxu0
    %v3423 = vadd.f32 0.0, %v3422
    %3424 = vmatmul.f32.gmra.mxu0 %v3334
    %v3425 = vpop.f32.mrf.mxu0
    %v3426 = vadd.f32 0.0, %v3425
    %3427 = vmatmul.f32.gmra.mxu0 %v3337
    %v3428 = vpop.f32.mrf.mxu0
    %v3429 = vadd.f32 0.0, %v3428
    %3430 = vmatmul.f32.gmra.mxu0 %v3340
    %v3431 = vpop.f32.mrf.mxu0
    %v3432 = vadd.f32 0.0, %v3431
    %3433 = vmatmul.f32.gmra.mxu0 %v3343
    %v3434 = vpop.f32.mrf.mxu0
    %v3435 = vadd.f32 0.0, %v3434
    %3436 = vmatmul.f32.gmra.mxu0 %v3346
    %v3437 = vpop.f32.mrf.mxu0
    %v3438 = vadd.f32 0.0, %v3437
    %3439 = vmatmul.f32.gmra.mxu0 %v3349
    %v3440 = vpop.f32.mrf.mxu0
    %v3441 = vadd.f32 0.0, %v3440
    %3442 = vmatmul.f32.gmra.mxu0 %v3352
    %v3443 = vpop.f32.mrf.mxu0
    %v3444 = vadd.f32 0.0, %v3443
    %3445 = vmatmul.f32.gmra.mxu0 %v3355
    %v3446 = vpop.f32.mrf.mxu0
    %v3447 = vadd.f32 0.0, %v3446
    %3448 = vmatmul.f32.gmra.mxu0 %v3358
    %v3449 = vpop.f32.mrf.mxu0
    %v3450 = vadd.f32 0.0, %v3449
    %3451 = vmatmul.f32.gmra.mxu0 %v3361
    %v3452 = vpop.f32.mrf.mxu0
    %v3453 = vadd.f32 0.0, %v3452
    %3454 = vmatmul.f32.gmra.mxu0 %v3364
    %v3455 = vpop.f32.mrf.mxu0
    %v3456 = vadd.f32 0.0, %v3455
    %3457 = vmatmul.f32.gmra.mxu0 %v3367
    %v3458 = vpop.f32.mrf.mxu0
    %v3459 = vadd.f32 0.0, %v3458
    %3460 = vmatmul.f32.gmra.mxu0 %v3370
    %v3461 = vpop.f32.mrf.mxu0
    %v3462 = vadd.f32 0.0, %v3461
    %3463 = vmatmul.f32.gmra.mxu0 %v3373
    %v3464 = vpop.f32.mrf.mxu0
    %v3465 = vadd.f32 0.0, %v3464
    %3466 = vmatmul.f32.gmra.mxu0 %v3376
    %v3467 = vpop.f32.mrf.mxu0
    %v3468 = vadd.f32 0.0, %v3467
    %3469 = vmatmul.f32.gmra.mxu0 %v3379
    %v3470 = vpop.f32.mrf.mxu0
    %v3471 = vadd.f32 0.0, %v3470
    %3472 = vmatmul.f32.gmra.mxu0 %v3382
    %v3473 = vpop.f32.mrf.mxu0
    %v3474 = vadd.f32 0.0, %v3473
    %3475 = vmatmul.f32.gmra.mxu0 %v3385
    %v3476 = vpop.f32.mrf.mxu0
    %v3477 = vadd.f32 0.0, %v3476
    %3478 = vmatmul.f32.gmra.mxu0 %v3388
    %v3479 = vpop.f32.mrf.mxu0
    %v3480 = vadd.f32 0.0, %v3479
    %3481 = vmatmul.f32.gmra.mxu0 %v3391
    %v3482 = vpop.f32.mrf.mxu0
    %v3483 = vadd.f32 0.0, %v3482
    %3484 = vdwg.mxu0
    %3509 = vrot.lane.b32.xlu0 0.0, 4
    %v3510 = vpop.permute.xlu0 %3509
    %3511 = vrot.lane.b32.xlu0 %v3414, 4
    %v3512 = vpop.permute.xlu0 %3511
    %3513 = vrot.lane.b32.xlu0 %v3417, 4
    %v3514 = vpop.permute.xlu0 %3513
    %3515 = vrot.lane.b32.xlu0 %v3420, 4
    %v3516 = vpop.permute.xlu0 %3515
    %3517 = vrot.lane.b32.xlu0 %v3423, 4
    %v3518 = vpop.permute.xlu0 %3517
    %3519 = vrot.lane.b32.xlu0 %v3426, 4
    %v3520 = vpop.permute.xlu0 %3519
    %3521 = vrot.lane.b32.xlu0 %v3429, 4
    %v3522 = vpop.permute.xlu0 %3521
    %3523 = vrot.lane.b32.xlu0 %v3432, 4
    %v3524 = vpop.permute.xlu0 %3523
    %3525 = vrot.lane.b32.xlu0 %v3435, 4
    %v3526 = vpop.permute.xlu0 %3525
    %3527 = vrot.lane.b32.xlu0 %v3438, 4
    %v3528 = vpop.permute.xlu0 %3527
    %3529 = vrot.lane.b32.xlu0 %v3441, 4
    %v3530 = vpop.permute.xlu0 %3529
    %3531 = vrot.lane.b32.xlu0 %v3444, 4
    %v3532 = vpop.permute.xlu0 %3531
    %3533 = vrot.lane.b32.xlu0 %v3447, 4
    %v3534 = vpop.permute.xlu0 %3533
    %3535 = vrot.lane.b32.xlu0 %v3450, 4
    %v3536 = vpop.permute.xlu0 %3535
    %3537 = vrot.lane.b32.xlu0 %v3453, 4
    %v3538 = vpop.permute.xlu0 %3537
    %3539 = vrot.lane.b32.xlu0 %v3456, 4
    %v3540 = vpop.permute.xlu0 %3539
    %3541 = vrot.lane.b32.xlu0 %v3459, 4
    %v3542 = vpop.permute.xlu0 %3541
    %3543 = vrot.lane.b32.xlu0 %v3462, 4
    %v3544 = vpop.permute.xlu0 %3543
    %3545 = vrot.lane.b32.xlu0 %v3465, 4
    %v3546 = vpop.permute.xlu0 %3545
    %3547 = vrot.lane.b32.xlu0 %v3468, 4
    %v3548 = vpop.permute.xlu0 %3547
    %3549 = vrot.lane.b32.xlu0 %v3471, 4
    %v3550 = vpop.permute.xlu0 %3549
    %3551 = vrot.lane.b32.xlu0 %v3474, 4
    %v3552 = vpop.permute.xlu0 %3551
    %3553 = vrot.lane.b32.xlu0 %v3477, 4
    %v3554 = vpop.permute.xlu0 %3553
    %3555 = vrot.lane.b32.xlu0 %v3480, 4
    %v3556 = vpop.permute.xlu0 %3555
    %v3581 = vadd.f32 %v3414, %v3510
    %v3582 = vadd.f32 %v3417, %v3512
    %v3583 = vadd.f32 %v3420, %v3514
    %v3584 = vadd.f32 %v3423, %v3516
    %v3585 = vadd.f32 %v3426, %v3518
    %v3586 = vadd.f32 %v3429, %v3520
    %v3587 = vadd.f32 %v3432, %v3522
    %v3588 = vadd.f32 %v3435, %v3524
    %v3589 = vadd.f32 %v3438, %v3526
    %v3590 = vadd.f32 %v3441, %v3528
    %v3591 = vadd.f32 %v3444, %v3530
    %v3592 = vadd.f32 %v3447, %v3532
    %v3593 = vadd.f32 %v3450, %v3534
    %v3594 = vadd.f32 %v3453, %v3536
    %v3595 = vadd.f32 %v3456, %v3538
    %v3596 = vadd.f32 %v3459, %v3540
    %v3597 = vadd.f32 %v3462, %v3542
    %v3598 = vadd.f32 %v3465, %v3544
    %v3599 = vadd.f32 %v3468, %v3546
    %v3600 = vadd.f32 %v3471, %v3548
    %v3601 = vadd.f32 %v3474, %v3550
    %v3602 = vadd.f32 %v3477, %v3552
    %v3603 = vadd.f32 %v3480, %v3554
    %v3604 = vadd.f32 %v3483, %v3556
    %3606 = vrot.lane.b32.xlu0 %v3417, 124
    %v3607 = vpop.permute.xlu0 %3606
    %3608 = vrot.lane.b32.xlu0 %v3420, 124
    %v3609 = vpop.permute.xlu0 %3608
    %3610 = vrot.lane.b32.xlu0 %v3423, 124
    %v3611 = vpop.permute.xlu0 %3610
    %3612 = vrot.lane.b32.xlu0 %v3426, 124
    %v3613 = vpop.permute.xlu0 %3612
    %3614 = vrot.lane.b32.xlu0 %v3429, 124
    %v3615 = vpop.permute.xlu0 %3614
    %3616 = vrot.lane.b32.xlu0 %v3432, 124
    %v3617 = vpop.permute.xlu0 %3616
    %3618 = vrot.lane.b32.xlu0 %v3435, 124
    %v3619 = vpop.permute.xlu0 %3618
    %3620 = vrot.lane.b32.xlu0 %v3438, 124
    %v3621 = vpop.permute.xlu0 %3620
    %3622 = vrot.lane.b32.xlu0 %v3441, 124
    %v3623 = vpop.permute.xlu0 %3622
    %3624 = vrot.lane.b32.xlu0 %v3444, 124
    %v3625 = vpop.permute.xlu0 %3624
    %3626 = vrot.lane.b32.xlu0 %v3447, 124
    %v3627 = vpop.permute.xlu0 %3626
    %3628 = vrot.lane.b32.xlu0 %v3450, 124
    %v3629 = vpop.permute.xlu0 %3628
    %3630 = vrot.lane.b32.xlu0 %v3453, 124
    %v3631 = vpop.permute.xlu0 %3630
    %3632 = vrot.lane.b32.xlu0 %v3456, 124
    %v3633 = vpop.permute.xlu0 %3632
    %3634 = vrot.lane.b32.xlu0 %v3459, 124
    %v3635 = vpop.permute.xlu0 %3634
    %3636 = vrot.lane.b32.xlu0 %v3462, 124
    %v3637 = vpop.permute.xlu0 %3636
    %3638 = vrot.lane.b32.xlu0 %v3465, 124
    %v3639 = vpop.permute.xlu0 %3638
    %3640 = vrot.lane.b32.xlu0 %v3468, 124
    %v3641 = vpop.permute.xlu0 %3640
    %3642 = vrot.lane.b32.xlu0 %v3471, 124
    %v3643 = vpop.permute.xlu0 %3642
    %3644 = vrot.lane.b32.xlu0 %v3474, 124
    %v3645 = vpop.permute.xlu0 %3644
    %3646 = vrot.lane.b32.xlu0 %v3477, 124
    %v3647 = vpop.permute.xlu0 %3646
    %3648 = vrot.lane.b32.xlu0 %v3480, 124
    %v3649 = vpop.permute.xlu0 %3648
    %3650 = vrot.lane.b32.xlu0 %v3483, 124
    %v3651 = vpop.permute.xlu0 %3650
    %3652 = vrot.lane.b32.xlu0 0.0, 124
    %v3653 = vpop.permute.xlu0 %3652
    %v3678 = vadd.f32 %v3581, %v3607
    %v3679 = vadd.f32 %v3582, %v3609
    %v3680 = vadd.f32 %v3583, %v3611
    %v3681 = vadd.f32 %v3584, %v3613
    %v3682 = vadd.f32 %v3585, %v3615
    %v3683 = vadd.f32 %v3586, %v3617
    %v3684 = vadd.f32 %v3587, %v3619
    %v3685 = vadd.f32 %v3588, %v3621
    %v3686 = vadd.f32 %v3589, %v3623
    %v3687 = vadd.f32 %v3590, %v3625
    %v3688 = vadd.f32 %v3591, %v3627
    %v3689 = vadd.f32 %v3592, %v3629
    %v3690 = vadd.f32 %v3593, %v3631
    %v3691 = vadd.f32 %v3594, %v3633
    %v3692 = vadd.f32 %v3595, %v3635
    %v3693 = vadd.f32 %v3596, %v3637
    %v3694 = vadd.f32 %v3597, %v3639
    %v3695 = vadd.f32 %v3598, %v3641
    %v3696 = vadd.f32 %v3599, %v3643
    %v3697 = vadd.f32 %v3600, %v3645
    %v3698 = vadd.f32 %v3601, %v3647
    %v3699 = vadd.f32 %v3602, %v3649
    %v3700 = vadd.f32 %v3603, %v3651
    %v3701 = vadd.f32 %v3604, %v3653
    %v3702 = vld [vmem:[#allocation2 + $0x390] sm:$0x1]
    %v3703 = vperm.slane %v3702, 0
    %3705 = vrot.lane.b32.xlu0 %v3703, 4
    %v3706 = vpop.permute.xlu0 %3705
    %v3708 = vadd.f32 %v3678, %v3706
    %v3709 = vadd.f32 %v3679, %v3706
    %v3710 = vadd.f32 %v3680, %v3706
    %v3711 = vadd.f32 %v3681, %v3706
    %v3712 = vadd.f32 %v3682, %v3706
    %v3713 = vadd.f32 %v3683, %v3706
    %v3714 = vadd.f32 %v3684, %v3706
    %v3715 = vadd.f32 %v3685, %v3706
    %v3716 = vadd.f32 %v3686, %v3706
    %v3717 = vadd.f32 %v3687, %v3706
    %v3718 = vadd.f32 %v3688, %v3706
    %v3719 = vadd.f32 %v3689, %v3706
    %v3720 = vadd.f32 %v3690, %v3706
    %v3721 = vadd.f32 %v3691, %v3706
    %v3722 = vadd.f32 %v3692, %v3706
    %v3723 = vadd.f32 %v3693, %v3706
    %v3724 = vadd.f32 %v3694, %v3706
    %v3725 = vadd.f32 %v3695, %v3706
    %v3726 = vadd.f32 %v3696, %v3706
    %v3727 = vadd.f32 %v3697, %v3706
    %v3728 = vadd.f32 %v3698, %v3706
    %v3729 = vadd.f32 %v3699, %v3706
    %v3730 = vadd.f32 %v3700, %v3706
    %v3731 = vadd.f32 %v3701, %v3706
    %v3732 = vld [vmem:[#allocation2 + $0x398] sm:$0x1]
    %v3733 = vld [vmem:[#allocation2 + $0x3a0] sm:$0xf]
    %3758 = vrot.lane.b32.xlu0 %v3708, 124
    %v3759 = vpop.permute.xlu0 %3758
    %3760 = vrot.lane.b32.xlu0 %v3709, 124
    %v3761 = vpop.permute.xlu0 %3760
    %3762 = vrot.lane.b32.xlu0 %v3710, 124
    %v3763 = vpop.permute.xlu0 %3762
    %3764 = vrot.lane.b32.xlu0 %v3711, 124
    %v3765 = vpop.permute.xlu0 %3764
    %3766 = vrot.lane.b32.xlu0 %v3712, 124
    %v3767 = vpop.permute.xlu0 %3766
    %3768 = vrot.lane.b32.xlu0 %v3713, 124
    %v3769 = vpop.permute.xlu0 %3768
    %3770 = vrot.lane.b32.xlu0 %v3714, 124
    %v3771 = vpop.permute.xlu0 %3770
    %3772 = vrot.lane.b32.xlu0 %v3715, 124
    %v3773 = vpop.permute.xlu0 %3772
    %3774 = vrot.lane.b32.xlu0 %v3716, 124
    %v3775 = vpop.permute.xlu0 %3774
    %3776 = vrot.lane.b32.xlu0 %v3717, 124
    %v3777 = vpop.permute.xlu0 %3776
    %3778 = vrot.lane.b32.xlu0 %v3718, 124
    %v3779 = vpop.permute.xlu0 %3778
    %3780 = vrot.lane.b32.xlu0 %v3719, 124
    %v3781 = vpop.permute.xlu0 %3780
    %3782 = vrot.lane.b32.xlu0 %v3720, 124
    %v3783 = vpop.permute.xlu0 %3782
    %3784 = vrot.lane.b32.xlu0 %v3721, 124
    %v3785 = vpop.permute.xlu0 %3784
    %3786 = vrot.lane.b32.xlu0 %v3722, 124
    %v3787 = vpop.permute.xlu0 %3786
    %3788 = vrot.lane.b32.xlu0 %v3723, 124
    %v3789 = vpop.permute.xlu0 %3788
    %3790 = vrot.lane.b32.xlu0 %v3724, 124
    %v3791 = vpop.permute.xlu0 %3790
    %3792 = vrot.lane.b32.xlu0 %v3725, 124
    %v3793 = vpop.permute.xlu0 %3792
    %3794 = vrot.lane.b32.xlu0 %v3726, 124
    %v3795 = vpop.permute.xlu0 %3794
    %3796 = vrot.lane.b32.xlu0 %v3727, 124
    %v3797 = vpop.permute.xlu0 %3796
    %3798 = vrot.lane.b32.xlu0 %v3728, 124
    %v3799 = vpop.permute.xlu0 %3798
    %3800 = vrot.lane.b32.xlu0 %v3729, 124
    %v3801 = vpop.permute.xlu0 %3800
    %3802 = vrot.lane.b32.xlu0 %v3730, 124
    %v3803 = vpop.permute.xlu0 %3802
    %3804 = vrot.lane.b32.xlu0 %v3731, 124
    %v3805 = vpop.permute.xlu0 %3804
    %v3806 = vsel %vm2435, %v3759, 0
    %v3808 = vsel %vm2435, %v3761, 0
    %v3810 = vsel %vm2435, %v3763, 0
    %v3812 = vsel %vm2435, %v3765, 0
    %v3814 = vsel %vm2435, %v3767, 0
    %v3816 = vsel %vm2435, %v3769, 0
    %v3818 = vsel %vm2435, %v3771, 0
    %v3820 = vsel %vm2435, %v3773, 0
    %v3822 = vsel %vm2435, %v3775, 0
    %v3824 = vsel %vm2435, %v3777, 0
    %v3826 = vsel %vm2435, %v3779, 0
    %v3828 = vsel %vm2435, %v3781, 0
    %v3830 = vsel %vm2435, %v3783, 0
    %v3832 = vsel %vm2435, %v3785, 0
    %v3834 = vsel %vm2435, %v3787, 0
    %v3836 = vsel %vm2435, %v3789, 0
    %v3838 = vsel %vm2435, %v3791, 0
    %v3840 = vsel %vm2435, %v3793, 0
    %v3842 = vsel %vm2435, %v3795, 0
    %v3844 = vsel %vm2435, %v3797, 0
    %v3846 = vsel %vm2435, %v3799, 0
    %v3848 = vsel %vm2435, %v3801, 0
    %v3850 = vsel %vm2435, %v3803, 0
    %v3852 = vsel %vm2435, %v3805, 0
    %v3855 = vsel %vm2958, %v3733, 0
    %3857 = vmatpush.msra.mxu0 0.0
    %3858 = vmatpush.msra.mxu0 0.0
    %3859 = vmatpush.msra.mxu0 0.0
    %3860 = vmatpush.msra.mxu0 0.0
    %3861 = vmatpush.msra.mxu0 0.0
    %3862 = vmatpush.msra.mxu0 0.0
    %3863 = vmatpush.msra.mxu0 0.0
    %3864 = vmatpush.msra.mxu0 0.0
    %3865 = vmatpush.msra.mxu0 0.0
    %3866 = vmatpush.msra.mxu0 0.0
    %3867 = vmatpush.msra.mxu0 0.0
    %3868 = vmatpush.msra.mxu0 0.0
    %3869 = vmatpush.msra.mxu0 0.0
    %3870 = vmatpush.msra.mxu0 0.0
    %3871 = vmatpush.msra.mxu0 0.0
    %3872 = vmatpush.msra.mxu0 %v3855
    %3873 = vmatmul.f32.gmra.mxu0 %v3806
    %v3874 = vpop.f32.mrf.mxu0
    %v3875 = vadd.f32 0.0, %v3874
    %3876 = vmatmul.f32.gmra.mxu0 %v3808
    %v3877 = vpop.f32.mrf.mxu0
    %v3878 = vadd.f32 0.0, %v3877
    %3879 = vmatmul.f32.gmra.mxu0 %v3810
    %v3880 = vpop.f32.mrf.mxu0
    %v3881 = vadd.f32 0.0, %v3880
    %3882 = vmatmul.f32.gmra.mxu0 %v3812
    %v3883 = vpop.f32.mrf.mxu0
    %v3884 = vadd.f32 0.0, %v3883
    %3885 = vmatmul.f32.gmra.mxu0 %v3814
    %v3886 = vpop.f32.mrf.mxu0
    %v3887 = vadd.f32 0.0, %v3886
    %3888 = vmatmul.f32.gmra.mxu0 %v3816
    %v3889 = vpop.f32.mrf.mxu0
    %v3890 = vadd.f32 0.0, %v3889
    %3891 = vmatmul.f32.gmra.mxu0 %v3818
    %v3892 = vpop.f32.mrf.mxu0
    %v3893 = vadd.f32 0.0, %v3892
    %3894 = vmatmul.f32.gmra.mxu0 %v3820
    %v3895 = vpop.f32.mrf.mxu0
    %v3896 = vadd.f32 0.0, %v3895
    %3897 = vmatmul.f32.gmra.mxu0 %v3822
    %v3898 = vpop.f32.mrf.mxu0
    %v3899 = vadd.f32 0.0, %v3898
    %3900 = vmatmul.f32.gmra.mxu0 %v3824
    %v3901 = vpop.f32.mrf.mxu0
    %v3902 = vadd.f32 0.0, %v3901
    %3903 = vmatmul.f32.gmra.mxu0 %v3826
    %v3904 = vpop.f32.mrf.mxu0
    %v3905 = vadd.f32 0.0, %v3904
    %3906 = vmatmul.f32.gmra.mxu0 %v3828
    %v3907 = vpop.f32.mrf.mxu0
    %v3908 = vadd.f32 0.0, %v3907
    %3909 = vmatmul.f32.gmra.mxu0 %v3830
    %v3910 = vpop.f32.mrf.mxu0
    %v3911 = vadd.f32 0.0, %v3910
    %3912 = vmatmul.f32.gmra.mxu0 %v3832
    %v3913 = vpop.f32.mrf.mxu0
    %v3914 = vadd.f32 0.0, %v3913
    %3915 = vmatmul.f32.gmra.mxu0 %v3834
    %v3916 = vpop.f32.mrf.mxu0
    %v3917 = vadd.f32 0.0, %v3916
    %3918 = vmatmul.f32.gmra.mxu0 %v3836
    %v3919 = vpop.f32.mrf.mxu0
    %v3920 = vadd.f32 0.0, %v3919
    %3921 = vmatmul.f32.gmra.mxu0 %v3838
    %v3922 = vpop.f32.mrf.mxu0
    %v3923 = vadd.f32 0.0, %v3922
    %3924 = vmatmul.f32.gmra.mxu0 %v3840
    %v3925 = vpop.f32.mrf.mxu0
    %v3926 = vadd.f32 0.0, %v3925
    %3927 = vmatmul.f32.gmra.mxu0 %v3842
    %v3928 = vpop.f32.mrf.mxu0
    %v3929 = vadd.f32 0.0, %v3928
    %3930 = vmatmul.f32.gmra.mxu0 %v3844
    %v3931 = vpop.f32.mrf.mxu0
    %v3932 = vadd.f32 0.0, %v3931
    %3933 = vmatmul.f32.gmra.mxu0 %v3846
    %v3934 = vpop.f32.mrf.mxu0
    %v3935 = vadd.f32 0.0, %v3934
    %3936 = vmatmul.f32.gmra.mxu0 %v3848
    %v3937 = vpop.f32.mrf.mxu0
    %v3938 = vadd.f32 0.0, %v3937
    %3939 = vmatmul.f32.gmra.mxu0 %v3850
    %v3940 = vpop.f32.mrf.mxu0
    %v3941 = vadd.f32 0.0, %v3940
    %3942 = vmatmul.f32.gmra.mxu0 %v3852
    %v3943 = vpop.f32.mrf.mxu0
    %v3944 = vadd.f32 0.0, %v3943
    %3945 = vdwg.mxu0
    %v3947 = vsel %vm1475, %v3732, 0
    %3949 = vmatpush.msra.mxu0 0.0
    %3950 = vmatpush.msra.mxu0 0.0
    %3951 = vmatpush.msra.mxu0 0.0
    %3952 = vmatpush.msra.mxu0 0.0
    %3953 = vmatpush.msra.mxu0 0.0
    %3954 = vmatpush.msra.mxu0 0.0
    %3955 = vmatpush.msra.mxu0 0.0
    %3956 = vmatpush.msra.mxu0 0.0
    %3957 = vmatpush.msra.mxu0 0.0
    %3958 = vmatpush.msra.mxu0 0.0
    %3959 = vmatpush.msra.mxu0 0.0
    %3960 = vmatpush.msra.mxu0 0.0
    %3961 = vmatpush.msra.mxu0 0.0
    %3962 = vmatpush.msra.mxu0 0.0
    %3963 = vmatpush.msra.mxu0 0.0
    %3964 = vmatpush.msra.mxu0 %v3947
    %3965 = vmatmul.f32.gmra.mxu0 %v1404
    %v3966 = vpop.f32.mrf.mxu0
    %v3967 = vadd.f32 %v3875, %v3966
    %3968 = vmatmul.f32.gmra.mxu0 %v1407
    %v3969 = vpop.f32.mrf.mxu0
    %v3970 = vadd.f32 %v3878, %v3969
    %3971 = vmatmul.f32.gmra.mxu0 %v1410
    %v3972 = vpop.f32.mrf.mxu0
    %v3973 = vadd.f32 %v3881, %v3972
    %3974 = vmatmul.f32.gmra.mxu0 %v1413
    %v3975 = vpop.f32.mrf.mxu0
    %v3976 = vadd.f32 %v3884, %v3975
    %3977 = vmatmul.f32.gmra.mxu0 %v1416
    %v3978 = vpop.f32.mrf.mxu0
    %v3979 = vadd.f32 %v3887, %v3978
    %3980 = vmatmul.f32.gmra.mxu0 %v1419
    %v3981 = vpop.f32.mrf.mxu0
    %v3982 = vadd.f32 %v3890, %v3981
    %3983 = vmatmul.f32.gmra.mxu0 %v1422
    %v3984 = vpop.f32.mrf.mxu0
    %v3985 = vadd.f32 %v3893, %v3984
    %3986 = vmatmul.f32.gmra.mxu0 %v1425
    %v3987 = vpop.f32.mrf.mxu0
    %v3988 = vadd.f32 %v3896, %v3987
    %3989 = vmatmul.f32.gmra.mxu0 %v1428
    %v3990 = vpop.f32.mrf.mxu0
    %v3991 = vadd.f32 %v3899, %v3990
    %3992 = vmatmul.f32.gmra.mxu0 %v1431
    %v3993 = vpop.f32.mrf.mxu0
    %v3994 = vadd.f32 %v3902, %v3993
    %3995 = vmatmul.f32.gmra.mxu0 %v1434
    %v3996 = vpop.f32.mrf.mxu0
    %v3997 = vadd.f32 %v3905, %v3996
    %3998 = vmatmul.f32.gmra.mxu0 %v1437
    %v3999 = vpop.f32.mrf.mxu0
    %v4000 = vadd.f32 %v3908, %v3999
    %4001 = vmatmul.f32.gmra.mxu0 %v1440
    %v4002 = vpop.f32.mrf.mxu0
    %v4003 = vadd.f32 %v3911, %v4002
    %4004 = vmatmul.f32.gmra.mxu0 %v1443
    %v4005 = vpop.f32.mrf.mxu0
    %v4006 = vadd.f32 %v3914, %v4005
    %4007 = vmatmul.f32.gmra.mxu0 %v1446
    %v4008 = vpop.f32.mrf.mxu0
    %v4009 = vadd.f32 %v3917, %v4008
    %4010 = vmatmul.f32.gmra.mxu0 %v1449
    %v4011 = vpop.f32.mrf.mxu0
    %v4012 = vadd.f32 %v3920, %v4011
    %4013 = vmatmul.f32.gmra.mxu0 %v1452
    %v4014 = vpop.f32.mrf.mxu0
    %v4015 = vadd.f32 %v3923, %v4014
    %4016 = vmatmul.f32.gmra.mxu0 %v1455
    %v4017 = vpop.f32.mrf.mxu0
    %v4018 = vadd.f32 %v3926, %v4017
    %4019 = vmatmul.f32.gmra.mxu0 %v1458
    %v4020 = vpop.f32.mrf.mxu0
    %v4021 = vadd.f32 %v3929, %v4020
    %4022 = vmatmul.f32.gmra.mxu0 %v1461
    %v4023 = vpop.f32.mrf.mxu0
    %v4024 = vadd.f32 %v3932, %v4023
    %4025 = vmatmul.f32.gmra.mxu0 %v1464
    %v4026 = vpop.f32.mrf.mxu0
    %v4027 = vadd.f32 %v3935, %v4026
    %4028 = vmatmul.f32.gmra.mxu0 %v1467
    %v4029 = vpop.f32.mrf.mxu0
    %v4030 = vadd.f32 %v3938, %v4029
    %4031 = vmatmul.f32.gmra.mxu0 %v1470
    %v4032 = vpop.f32.mrf.mxu0
    %v4033 = vadd.f32 %v3941, %v4032
    %4034 = vmatmul.f32.gmra.mxu0 %v1473
    %v4035 = vpop.f32.mrf.mxu0
    %v4036 = vadd.f32 %v3944, %v4035
    %4037 = vdwg.mxu0
    %v4038 = vld [vmem:[#allocation2 + $0x3a8] sm:$0x1]
    %v4039 = vperm.slane %v4038, 0
    %4040 = vmatpush.msra.mxu0 %v4012
    %4041 = vmatpush.msra.mxu0 %v4009
    %4042 = vmatpush.msra.mxu0 %v4006
    %4043 = vmatpush.msra.mxu0 %v4003
    %4044 = vmatpush.msra.mxu0 %v4000
    %4045 = vmatpush.msra.mxu0 %v3997
    %4046 = vmatpush.msra.mxu0 %v3994
    %4047 = vmatpush.msra.mxu0 %v3991
    %4048 = vmatpush.msra.mxu0 %v3988
    %4049 = vmatpush.msra.mxu0 %v3985
    %4050 = vmatpush.msra.mxu0 %v3982
    %4051 = vmatpush.msra.mxu0 %v3979
    %4052 = vmatpush.msra.mxu0 %v3976
    %4053 = vmatpush.msra.mxu0 %v3973
    %4054 = vmatpush.msra.mxu0 %v3970
    %4055 = vmatpush.msra.mxu0 %v3967
    %4056 = vmatmul.f32.gmra.mxu0 %v31
    %v4057 = vpop.f32.mrf.mxu0
    %v4058 = vadd.f32 %v4039, %v4057
    %4059 = vmatmul.f32.gmra.mxu0 %v33
    %v4060 = vpop.f32.mrf.mxu0
    %v4061 = vadd.f32 %v4039, %v4060
    %4062 = vmatmul.f32.gmra.mxu0 %v35
    %v4063 = vpop.f32.mrf.mxu0
    %v4064 = vadd.f32 %v4039, %v4063
    %4065 = vmatmul.f32.gmra.mxu0 %v37
    %v4066 = vpop.f32.mrf.mxu0
    %v4067 = vadd.f32 %v4039, %v4066
    %4068 = vmatmul.f32.gmra.mxu0 %v39
    %v4069 = vpop.f32.mrf.mxu0
    %v4070 = vadd.f32 %v4039, %v4069
    %4071 = vmatmul.f32.gmra.mxu0 %v41
    %v4072 = vpop.f32.mrf.mxu0
    %v4073 = vadd.f32 %v4039, %v4072
    %4074 = vmatmul.f32.gmra.mxu0 %v43
    %v4075 = vpop.f32.mrf.mxu0
    %v4076 = vadd.f32 %v4039, %v4075
    %4077 = vmatmul.f32.gmra.mxu0 %v45
    %v4078 = vpop.f32.mrf.mxu0
    %v4079 = vadd.f32 %v4039, %v4078
    %4080 = vmatmul.f32.gmra.mxu0 %v47
    %v4081 = vpop.f32.mrf.mxu0
    %v4082 = vadd.f32 %v4039, %v4081
    %4083 = vmatmul.f32.gmra.mxu0 %v49
    %v4084 = vpop.f32.mrf.mxu0
    %v4085 = vadd.f32 %v4039, %v4084
    %4086 = vmatmul.f32.gmra.mxu0 %v51
    %v4087 = vpop.f32.mrf.mxu0
    %v4088 = vadd.f32 %v4039, %v4087
    %4089 = vmatmul.f32.gmra.mxu0 %v53
    %v4090 = vpop.f32.mrf.mxu0
    %v4091 = vadd.f32 %v4039, %v4090
    %4092 = vmatmul.f32.gmra.mxu0 %v55
    %v4093 = vpop.f32.mrf.mxu0
    %v4094 = vadd.f32 %v4039, %v4093
    %4095 = vmatmul.f32.gmra.mxu0 %v57
    %v4096 = vpop.f32.mrf.mxu0
    %v4097 = vadd.f32 %v4039, %v4096
    %4098 = vmatmul.f32.gmra.mxu0 %v59
    %v4099 = vpop.f32.mrf.mxu0
    %v4100 = vadd.f32 %v4039, %v4099
    %4101 = vmatmul.f32.gmra.mxu0 %v61
    %v4102 = vpop.f32.mrf.mxu0
    %v4103 = vadd.f32 %v4039, %v4102
    %4104 = vmatmul.f32.gmra.mxu0 %v63
    %v4105 = vpop.f32.mrf.mxu0
    %v4106 = vadd.f32 %v4039, %v4105
    %4107 = vmatmul.f32.gmra.mxu0 %v65
    %v4108 = vpop.f32.mrf.mxu0
    %v4109 = vadd.f32 %v4039, %v4108
    %4110 = vmatmul.f32.gmra.mxu0 %v67
    %v4111 = vpop.f32.mrf.mxu0
    %v4112 = vadd.f32 %v4039, %v4111
    %4113 = vmatmul.f32.gmra.mxu0 %v69
    %v4114 = vpop.f32.mrf.mxu0
    %v4115 = vadd.f32 %v4039, %v4114
    %4116 = vmatmul.f32.gmra.mxu0 %v71
    %v4117 = vpop.f32.mrf.mxu0
    %v4118 = vadd.f32 %v4039, %v4117
    %4119 = vmatmul.f32.gmra.mxu0 %v73
    %v4120 = vpop.f32.mrf.mxu0
    %v4121 = vadd.f32 %v4039, %v4120
    %4122 = vmatmul.f32.gmra.mxu0 %v75
    %v4123 = vpop.f32.mrf.mxu0
    %v4124 = vadd.f32 %v4039, %v4123
    %4125 = vmatmul.f32.gmra.mxu0 %v77
    %v4126 = vpop.f32.mrf.mxu0
    %v4127 = vadd.f32 %v4039, %v4126
    %4128 = vdwg.mxu0
    %4129 = vmatpush.msra.mxu0 0.0
    %4130 = vmatpush.msra.mxu0 0.0
    %4131 = vmatpush.msra.mxu0 0.0
    %4132 = vmatpush.msra.mxu0 0.0
    %4133 = vmatpush.msra.mxu0 0.0
    %4134 = vmatpush.msra.mxu0 0.0
    %4135 = vmatpush.msra.mxu0 0.0
    %4136 = vmatpush.msra.mxu0 0.0
    %4137 = vmatpush.msra.mxu0 %v4036
    %4138 = vmatpush.msra.mxu0 %v4033
    %4139 = vmatpush.msra.mxu0 %v4030
    %4140 = vmatpush.msra.mxu0 %v4027
    %4141 = vmatpush.msra.mxu0 %v4024
    %4142 = vmatpush.msra.mxu0 %v4021
    %4143 = vmatpush.msra.mxu0 %v4018
    %4144 = vmatpush.msra.mxu0 %v4015
    %4145 = vmatmul.f32.gmra.mxu0 %v1572
    %v4146 = vpop.f32.mrf.mxu0
    %v4147 = vadd.f32 %v4058, %v4146
    %4148 = vmatmul.f32.gmra.mxu0 %v1575
    %v4149 = vpop.f32.mrf.mxu0
    %v4150 = vadd.f32 %v4061, %v4149
    %4151 = vmatmul.f32.gmra.mxu0 %v1578
    %v4152 = vpop.f32.mrf.mxu0
    %v4153 = vadd.f32 %v4064, %v4152
    %4154 = vmatmul.f32.gmra.mxu0 %v1581
    %v4155 = vpop.f32.mrf.mxu0
    %v4156 = vadd.f32 %v4067, %v4155
    %4157 = vmatmul.f32.gmra.mxu0 %v1584
    %v4158 = vpop.f32.mrf.mxu0
    %v4159 = vadd.f32 %v4070, %v4158
    %4160 = vmatmul.f32.gmra.mxu0 %v1587
    %v4161 = vpop.f32.mrf.mxu0
    %v4162 = vadd.f32 %v4073, %v4161
    %4163 = vmatmul.f32.gmra.mxu0 %v1590
    %v4164 = vpop.f32.mrf.mxu0
    %v4165 = vadd.f32 %v4076, %v4164
    %4166 = vmatmul.f32.gmra.mxu0 %v1593
    %v4167 = vpop.f32.mrf.mxu0
    %v4168 = vadd.f32 %v4079, %v4167
    %4169 = vmatmul.f32.gmra.mxu0 %v1596
    %v4170 = vpop.f32.mrf.mxu0
    %v4171 = vadd.f32 %v4082, %v4170
    %4172 = vmatmul.f32.gmra.mxu0 %v1599
    %v4173 = vpop.f32.mrf.mxu0
    %v4174 = vadd.f32 %v4085, %v4173
    %4175 = vmatmul.f32.gmra.mxu0 %v1602
    %v4176 = vpop.f32.mrf.mxu0
    %v4177 = vadd.f32 %v4088, %v4176
    %4178 = vmatmul.f32.gmra.mxu0 %v1605
    %v4179 = vpop.f32.mrf.mxu0
    %v4180 = vadd.f32 %v4091, %v4179
    %4181 = vmatmul.f32.gmra.mxu0 %v1608
    %v4182 = vpop.f32.mrf.mxu0
    %v4183 = vadd.f32 %v4094, %v4182
    %4184 = vmatmul.f32.gmra.mxu0 %v1611
    %v4185 = vpop.f32.mrf.mxu0
    %v4186 = vadd.f32 %v4097, %v4185
    %4187 = vmatmul.f32.gmra.mxu0 %v1614
    %v4188 = vpop.f32.mrf.mxu0
    %v4189 = vadd.f32 %v4100, %v4188
    %4190 = vmatmul.f32.gmra.mxu0 %v1617
    %v4191 = vpop.f32.mrf.mxu0
    %v4192 = vadd.f32 %v4103, %v4191
    %4193 = vmatmul.f32.gmra.mxu0 %v1620
    %v4194 = vpop.f32.mrf.mxu0
    %v4195 = vadd.f32 %v4106, %v4194
    %4196 = vmatmul.f32.gmra.mxu0 %v1623
    %v4197 = vpop.f32.mrf.mxu0
    %v4198 = vadd.f32 %v4109, %v4197
    %4199 = vmatmul.f32.gmra.mxu0 %v1626
    %v4200 = vpop.f32.mrf.mxu0
    %v4201 = vadd.f32 %v4112, %v4200
    %4202 = vmatmul.f32.gmra.mxu0 %v1629
    %v4203 = vpop.f32.mrf.mxu0
    %v4204 = vadd.f32 %v4115, %v4203
    %4205 = vmatmul.f32.gmra.mxu0 %v1632
    %v4206 = vpop.f32.mrf.mxu0
    %v4207 = vadd.f32 %v4118, %v4206
    %4208 = vmatmul.f32.gmra.mxu0 %v1635
    %v4209 = vpop.f32.mrf.mxu0
    %v4210 = vadd.f32 %v4121, %v4209
    %4211 = vmatmul.f32.gmra.mxu0 %v1638
    %v4212 = vpop.f32.mrf.mxu0
    %v4213 = vadd.f32 %v4124, %v4212
    %4214 = vmatmul.f32.gmra.mxu0 %v1641
    %v4215 = vpop.f32.mrf.mxu0
    %v4216 = vadd.f32 %v4127, %v4215
    %4217 = vdwg.mxu0
    %vm4218 = vcmask 39936
    %v4219 = vsel %vm4218, %v4147, 0.0
    %v4220 = vsel %vm4218, %v4150, 0.0
    %v4221 = vadd.f32 %v4219, %v4220
    %v4222 = vsel %vm4218, %v4153, 0.0
    %v4223 = vadd.f32 %v4221, %v4222
    %v4224 = vsel %vm4218, %v4156, 0.0
    %v4225 = vadd.f32 %v4223, %v4224
    %v4226 = vsel %vm4218, %v4159, 0.0
    %v4227 = vadd.f32 %v4225, %v4226
    %v4228 = vsel %vm4218, %v4162, 0.0
    %v4229 = vadd.f32 %v4227, %v4228
    %v4230 = vsel %vm4218, %v4165, 0.0
    %v4231 = vadd.f32 %v4229, %v4230
    %v4232 = vsel %vm4218, %v4168, 0.0
    %v4233 = vadd.f32 %v4231, %v4232
    %v4234 = vsel %vm4218, %v4171, 0.0
    %v4235 = vadd.f32 %v4233, %v4234
    %v4236 = vsel %vm4218, %v4174, 0.0
    %v4237 = vadd.f32 %v4235, %v4236
    %v4238 = vsel %vm4218, %v4177, 0.0
    %v4239 = vadd.f32 %v4237, %v4238
    %v4240 = vsel %vm4218, %v4180, 0.0
    %v4241 = vadd.f32 %v4239, %v4240
    %v4242 = vsel %vm4218, %v4183, 0.0
    %v4243 = vadd.f32 %v4241, %v4242
    %v4244 = vsel %vm4218, %v4186, 0.0
    %v4245 = vadd.f32 %v4243, %v4244
    %v4246 = vsel %vm4218, %v4189, 0.0
    %v4247 = vadd.f32 %v4245, %v4246
    %v4248 = vsel %vm4218, %v4192, 0.0
    %v4249 = vadd.f32 %v4247, %v4248
    %v4250 = vsel %vm4218, %v4195, 0.0
    %v4251 = vadd.f32 %v4249, %v4250
    %v4252 = vsel %vm4218, %v4198, 0.0
    %v4253 = vadd.f32 %v4251, %v4252
    %v4254 = vsel %vm4218, %v4201, 0.0
    %v4255 = vadd.f32 %v4253, %v4254
    %v4256 = vsel %vm4218, %v4204, 0.0
    %v4257 = vadd.f32 %v4255, %v4256
    %v4258 = vsel %vm4218, %v4207, 0.0
    %v4259 = vadd.f32 %v4257, %v4258
    %v4260 = vsel %vm4218, %v4210, 0.0
    %v4261 = vadd.f32 %v4259, %v4260
    %v4262 = vsel %vm4218, %v4213, 0.0
    %v4263 = vadd.f32 %v4261, %v4262
    %v4264 = vsel %vm4218, %v4216, 0.0
    %v4265 = vadd.f32 %v4263, %v4264
    %v4266 = vrot.slane %v4265, 4
    %v4267 = vadd.f32 %v4265, %v4266
    %v4268 = vrot.slane %v4267, 2
    %v4269 = vadd.f32 %v4267, %v4268
    %v4270 = vrot.slane %v4269, 1
    %v4271 = vadd.f32 %v4269, %v4270
    %v4272 = vmul.f32 %v4271, 0.0052083335
    %v4273 = vmul.f32 %v4147, %v4147
    %v4274 = vmul.f32 %v4150, %v4150
    %v4275 = vmul.f32 %v4153, %v4153
    %v4276 = vmul.f32 %v4156, %v4156
    %v4277 = vmul.f32 %v4159, %v4159
    %v4278 = vmul.f32 %v4162, %v4162
    %v4279 = vmul.f32 %v4165, %v4165
    %v4280 = vmul.f32 %v4168, %v4168
    %v4281 = vmul.f32 %v4171, %v4171
    %v4282 = vmul.f32 %v4174, %v4174
    %v4283 = vmul.f32 %v4177, %v4177
    %v4284 = vmul.f32 %v4180, %v4180
    %v4285 = vmul.f32 %v4183, %v4183
    %v4286 = vmul.f32 %v4186, %v4186
    %v4287 = vmul.f32 %v4189, %v4189
    %v4288 = vmul.f32 %v4192, %v4192
    %v4289 = vmul.f32 %v4195, %v4195
    %v4290 = vmul.f32 %v4198, %v4198
    %v4291 = vmul.f32 %v4201, %v4201
    %v4292 = vmul.f32 %v4204, %v4204
    %v4293 = vmul.f32 %v4207, %v4207
    %v4294 = vmul.f32 %v4210, %v4210
    %v4295 = vmul.f32 %v4213, %v4213
    %v4296 = vmul.f32 %v4216, %v4216
    %v4297 = vsel %vm4218, %v4273, 0.0
    %v4298 = vsel %vm4218, %v4274, 0.0
    %v4299 = vadd.f32 %v4297, %v4298
    %v4300 = vsel %vm4218, %v4275, 0.0
    %v4301 = vadd.f32 %v4299, %v4300
    %v4302 = vsel %vm4218, %v4276, 0.0
    %v4303 = vadd.f32 %v4301, %v4302
    %v4304 = vsel %vm4218, %v4277, 0.0
    %v4305 = vadd.f32 %v4303, %v4304
    %v4306 = vsel %vm4218, %v4278, 0.0
    %v4307 = vadd.f32 %v4305, %v4306
    %v4308 = vsel %vm4218, %v4279, 0.0
    %v4309 = vadd.f32 %v4307, %v4308
    %v4310 = vsel %vm4218, %v4280, 0.0
    %v4311 = vadd.f32 %v4309, %v4310
    %v4312 = vsel %vm4218, %v4281, 0.0
    %v4313 = vadd.f32 %v4311, %v4312
    %v4314 = vsel %vm4218, %v4282, 0.0
    %v4315 = vadd.f32 %v4313, %v4314
    %v4316 = vsel %vm4218, %v4283, 0.0
    %v4317 = vadd.f32 %v4315, %v4316
    %v4318 = vsel %vm4218, %v4284, 0.0
    %v4319 = vadd.f32 %v4317, %v4318
    %v4320 = vsel %vm4218, %v4285, 0.0
    %v4321 = vadd.f32 %v4319, %v4320
    %v4322 = vsel %vm4218, %v4286, 0.0
    %v4323 = vadd.f32 %v4321, %v4322
    %v4324 = vsel %vm4218, %v4287, 0.0
    %v4325 = vadd.f32 %v4323, %v4324
    %v4326 = vsel %vm4218, %v4288, 0.0
    %v4327 = vadd.f32 %v4325, %v4326
    %v4328 = vsel %vm4218, %v4289, 0.0
    %v4329 = vadd.f32 %v4327, %v4328
    %v4330 = vsel %vm4218, %v4290, 0.0
    %v4331 = vadd.f32 %v4329, %v4330
    %v4332 = vsel %vm4218, %v4291, 0.0
    %v4333 = vadd.f32 %v4331, %v4332
    %v4334 = vsel %vm4218, %v4292, 0.0
    %v4335 = vadd.f32 %v4333, %v4334
    %v4336 = vsel %vm4218, %v4293, 0.0
    %v4337 = vadd.f32 %v4335, %v4336
    %v4338 = vsel %vm4218, %v4294, 0.0
    %v4339 = vadd.f32 %v4337, %v4338
    %v4340 = vsel %vm4218, %v4295, 0.0
    %v4341 = vadd.f32 %v4339, %v4340
    %v4342 = vsel %vm4218, %v4296, 0.0
    %v4343 = vadd.f32 %v4341, %v4342
    %v4344 = vrot.slane %v4343, 4
    %v4345 = vadd.f32 %v4343, %v4344
    %v4346 = vrot.slane %v4345, 2
    %v4347 = vadd.f32 %v4345, %v4346
    %v4348 = vrot.slane %v4347, 1
    %v4349 = vadd.f32 %v4347, %v4348
    %v4350 = vmul.f32 %v4349, 0.0052083335
    %v4351 = vmul.f32 %v4272, %v4272
    %v4352 = vsub.f32 %v4350, %v4351
    %v4353 = vsub.f32 %v4147, %v4272
    %v4354 = vsub.f32 %v4150, %v4272
    %v4355 = vsub.f32 %v4153, %v4272
    %v4356 = vsub.f32 %v4156, %v4272
    %v4357 = vsub.f32 %v4159, %v4272
    %v4358 = vsub.f32 %v4162, %v4272
    %v4359 = vsub.f32 %v4165, %v4272
    %v4360 = vsub.f32 %v4168, %v4272
    %v4361 = vsub.f32 %v4171, %v4272
    %v4362 = vsub.f32 %v4174, %v4272
    %v4363 = vsub.f32 %v4177, %v4272
    %v4364 = vsub.f32 %v4180, %v4272
    %v4365 = vsub.f32 %v4183, %v4272
    %v4366 = vsub.f32 %v4186, %v4272
    %v4367 = vsub.f32 %v4189, %v4272
    %v4368 = vsub.f32 %v4192, %v4272
    %v4369 = vsub.f32 %v4195, %v4272
    %v4370 = vsub.f32 %v4198, %v4272
    %v4371 = vsub.f32 %v4201, %v4272
    %v4372 = vsub.f32 %v4204, %v4272
    %v4373 = vsub.f32 %v4207, %v4272
    %v4374 = vsub.f32 %v4210, %v4272
    %v4375 = vsub.f32 %v4213, %v4272
    %v4376 = vsub.f32 %v4216, %v4272
    %v4377 = vadd.f32 %v4352, 1e-05
    %v4378 = vrsqrt.pop %v4377
    %v4379 = vmul.f32 %v4378, %v4377
    %v4380 = vmul.f32 %v4379, %v4378
    %v4381 = vmul.f32 0.5, %v4380
    %v4382 = vsub.f32 1.5, %v4381
    %v4383 = vmul.f32 %v4378, %v4382
    %vm4384 = vweird.f32 %v4377
    %vm4385 = vweird.f32 %v4378
    %vm4386 = vmor %vm4384, %vm4385
    %v4387 = vsel %vm4386, %v4378, %v4383
    %v4388 = vmul.f32 %v4353, %v4387
    %v4389 = vmul.f32 %v4354, %v4387
    %v4390 = vmul.f32 %v4355, %v4387
    %v4391 = vmul.f32 %v4356, %v4387
    %v4392 = vmul.f32 %v4357, %v4387
    %v4393 = vmul.f32 %v4358, %v4387
    %v4394 = vmul.f32 %v4359, %v4387
    %v4395 = vmul.f32 %v4360, %v4387
    %v4396 = vmul.f32 %v4361, %v4387
    %v4397 = vmul.f32 %v4362, %v4387
    %v4398 = vmul.f32 %v4363, %v4387
    %v4399 = vmul.f32 %v4364, %v4387
    %v4400 = vmul.f32 %v4365, %v4387
    %v4401 = vmul.f32 %v4366, %v4387
    %v4402 = vmul.f32 %v4367, %v4387
    %v4403 = vmul.f32 %v4368, %v4387
    %v4404 = vmul.f32 %v4369, %v4387
    %v4405 = vmul.f32 %v4370, %v4387
    %v4406 = vmul.f32 %v4371, %v4387
    %v4407 = vmul.f32 %v4372, %v4387
    %v4408 = vmul.f32 %v4373, %v4387
    %v4409 = vmul.f32 %v4374, %v4387
    %v4410 = vmul.f32 %v4375, %v4387
    %v4411 = vmul.f32 %v4376, %v4387
    %v4412 = vld [vmem:[#allocation2 + $0x3b0] sm:$0x1]
    %v4413 = vperm.slane %v4412, 0
    %v4414 = vmul.f32 %v4388, %v4413
    %v4415 = vmul.f32 %v4389, %v4413
    %v4416 = vmul.f32 %v4390, %v4413
    %v4417 = vmul.f32 %v4391, %v4413
    %v4418 = vmul.f32 %v4392, %v4413
    %v4419 = vmul.f32 %v4393, %v4413
    %v4420 = vmul.f32 %v4394, %v4413
    %v4421 = vmul.f32 %v4395, %v4413
    %v4422 = vmul.f32 %v4396, %v4413
    %v4423 = vmul.f32 %v4397, %v4413
    %v4424 = vmul.f32 %v4398, %v4413
    %v4425 = vmul.f32 %v4399, %v4413
    %v4426 = vmul.f32 %v4400, %v4413
    %v4427 = vmul.f32 %v4401, %v4413
    %v4428 = vmul.f32 %v4402, %v4413
    %v4429 = vmul.f32 %v4403, %v4413
    %v4430 = vmul.f32 %v4404, %v4413
    %v4431 = vmul.f32 %v4405, %v4413
    %v4432 = vmul.f32 %v4406, %v4413
    %v4433 = vmul.f32 %v4407, %v4413
    %v4434 = vmul.f32 %v4408, %v4413
    %v4435 = vmul.f32 %v4409, %v4413
    %v4436 = vmul.f32 %v4410, %v4413
    %v4437 = vmul.f32 %v4411, %v4413
    %v4438 = vld [vmem:[#allocation2 + $0x3b8] sm:$0x1]
    %v4439 = vperm.slane %v4438, 0
    %v4440 = vadd.f32 %v4414, %v4439
    %v4441 = vadd.f32 %v4415, %v4439
    %v4442 = vadd.f32 %v4416, %v4439
    %v4443 = vadd.f32 %v4417, %v4439
    %v4444 = vadd.f32 %v4418, %v4439
    %v4445 = vadd.f32 %v4419, %v4439
    %v4446 = vadd.f32 %v4420, %v4439
    %v4447 = vadd.f32 %v4421, %v4439
    %v4448 = vadd.f32 %v4422, %v4439
    %v4449 = vadd.f32 %v4423, %v4439
    %v4450 = vadd.f32 %v4424, %v4439
    %v4451 = vadd.f32 %v4425, %v4439
    %v4452 = vadd.f32 %v4426, %v4439
    %v4453 = vadd.f32 %v4427, %v4439
    %v4454 = vadd.f32 %v4428, %v4439
    %v4455 = vadd.f32 %v4429, %v4439
    %v4456 = vadd.f32 %v4430, %v4439
    %v4457 = vadd.f32 %v4431, %v4439
    %v4458 = vadd.f32 %v4432, %v4439
    %v4459 = vadd.f32 %v4433, %v4439
    %v4460 = vadd.f32 %v4434, %v4439
    %v4461 = vadd.f32 %v4435, %v4439
    %v4462 = vadd.f32 %v4436, %v4439
    %v4463 = vadd.f32 %v4437, %v4439
    %v4464 = vmax.f32 %v4440, 0.0
    %v4465 = vmax.f32 %v4441, 0.0
    %v4466 = vmax.f32 %v4442, 0.0
    %v4467 = vmax.f32 %v4443, 0.0
    %v4468 = vmax.f32 %v4444, 0.0
    %v4469 = vmax.f32 %v4445, 0.0
    %v4470 = vmax.f32 %v4446, 0.0
    %v4471 = vmax.f32 %v4447, 0.0
    %v4472 = vmax.f32 %v4448, 0.0
    %v4473 = vmax.f32 %v4449, 0.0
    %v4474 = vmax.f32 %v4450, 0.0
    %v4475 = vmax.f32 %v4451, 0.0
    %v4476 = vmax.f32 %v4452, 0.0
    %v4477 = vmax.f32 %v4453, 0.0
    %v4478 = vmax.f32 %v4454, 0.0
    %v4479 = vmax.f32 %v4455, 0.0
    %v4480 = vmax.f32 %v4456, 0.0
    %v4481 = vmax.f32 %v4457, 0.0
    %v4482 = vmax.f32 %v4458, 0.0
    %v4483 = vmax.f32 %v4459, 0.0
    %v4484 = vmax.f32 %v4460, 0.0
    %v4485 = vmax.f32 %v4461, 0.0
    %v4486 = vmax.f32 %v4462, 0.0
    %v4487 = vmax.f32 %v4463, 0.0
    %4488 = vmatpush.msra.mxu0 %v4479
    %4489 = vmatpush.msra.mxu0 %v4478
    %4490 = vmatpush.msra.mxu0 %v4477
    %4491 = vmatpush.msra.mxu0 %v4476
    %4492 = vmatpush.msra.mxu0 %v4475
    %4493 = vmatpush.msra.mxu0 %v4474
    %4494 = vmatpush.msra.mxu0 %v4473
    %4495 = vmatpush.msra.mxu0 %v4472
    %4496 = vmatpush.msra.mxu0 %v4471
    %4497 = vmatpush.msra.mxu0 %v4470
    %4498 = vmatpush.msra.mxu0 %v4469
    %4499 = vmatpush.msra.mxu0 %v4468
    %4500 = vmatpush.msra.mxu0 %v4467
    %4501 = vmatpush.msra.mxu0 %v4466
    %4502 = vmatpush.msra.mxu0 %v4465
    %4503 = vmatpush.msra.mxu0 %v4464
    %4504 = vmatmul.f32.gmra.mxu0 %v31
    %v4505 = vpop.f32.mrf.mxu0
    %v4506 = vadd.f32 0.0, %v4505
    %4507 = vmatmul.f32.gmra.mxu0 %v33
    %v4508 = vpop.f32.mrf.mxu0
    %v4509 = vadd.f32 0.0, %v4508
    %4510 = vmatmul.f32.gmra.mxu0 %v35
    %v4511 = vpop.f32.mrf.mxu0
    %v4512 = vadd.f32 0.0, %v4511
    %4513 = vmatmul.f32.gmra.mxu0 %v37
    %v4514 = vpop.f32.mrf.mxu0
    %v4515 = vadd.f32 0.0, %v4514
    %4516 = vmatmul.f32.gmra.mxu0 %v39
    %v4517 = vpop.f32.mrf.mxu0
    %v4518 = vadd.f32 0.0, %v4517
    %4519 = vmatmul.f32.gmra.mxu0 %v41
    %v4520 = vpop.f32.mrf.mxu0
    %v4521 = vadd.f32 0.0, %v4520
    %4522 = vmatmul.f32.gmra.mxu0 %v43
    %v4523 = vpop.f32.mrf.mxu0
    %v4524 = vadd.f32 0.0, %v4523
    %4525 = vmatmul.f32.gmra.mxu0 %v45
    %v4526 = vpop.f32.mrf.mxu0
    %v4527 = vadd.f32 0.0, %v4526
    %4528 = vmatmul.f32.gmra.mxu0 %v47
    %v4529 = vpop.f32.mrf.mxu0
    %v4530 = vadd.f32 0.0, %v4529
    %4531 = vmatmul.f32.gmra.mxu0 %v49
    %v4532 = vpop.f32.mrf.mxu0
    %v4533 = vadd.f32 0.0, %v4532
    %4534 = vmatmul.f32.gmra.mxu0 %v51
    %v4535 = vpop.f32.mrf.mxu0
    %v4536 = vadd.f32 0.0, %v4535
    %4537 = vmatmul.f32.gmra.mxu0 %v53
    %v4538 = vpop.f32.mrf.mxu0
    %v4539 = vadd.f32 0.0, %v4538
    %4540 = vmatmul.f32.gmra.mxu0 %v55
    %v4541 = vpop.f32.mrf.mxu0
    %v4542 = vadd.f32 0.0, %v4541
    %4543 = vmatmul.f32.gmra.mxu0 %v57
    %v4544 = vpop.f32.mrf.mxu0
    %v4545 = vadd.f32 0.0, %v4544
    %4546 = vmatmul.f32.gmra.mxu0 %v59
    %v4547 = vpop.f32.mrf.mxu0
    %v4548 = vadd.f32 0.0, %v4547
    %4549 = vmatmul.f32.gmra.mxu0 %v61
    %v4550 = vpop.f32.mrf.mxu0
    %v4551 = vadd.f32 0.0, %v4550
    %4552 = vmatmul.f32.gmra.mxu0 %v63
    %v4553 = vpop.f32.mrf.mxu0
    %v4554 = vadd.f32 0.0, %v4553
    %4555 = vmatmul.f32.gmra.mxu0 %v65
    %v4556 = vpop.f32.mrf.mxu0
    %v4557 = vadd.f32 0.0, %v4556
    %4558 = vmatmul.f32.gmra.mxu0 %v67
    %v4559 = vpop.f32.mrf.mxu0
    %v4560 = vadd.f32 0.0, %v4559
    %4561 = vmatmul.f32.gmra.mxu0 %v69
    %v4562 = vpop.f32.mrf.mxu0
    %v4563 = vadd.f32 0.0, %v4562
    %4564 = vmatmul.f32.gmra.mxu0 %v71
    %v4565 = vpop.f32.mrf.mxu0
    %v4566 = vadd.f32 0.0, %v4565
    %4567 = vmatmul.f32.gmra.mxu0 %v73
    %v4568 = vpop.f32.mrf.mxu0
    %v4569 = vadd.f32 0.0, %v4568
    %4570 = vmatmul.f32.gmra.mxu0 %v75
    %v4571 = vpop.f32.mrf.mxu0
    %v4572 = vadd.f32 0.0, %v4571
    %4573 = vmatmul.f32.gmra.mxu0 %v77
    %v4574 = vpop.f32.mrf.mxu0
    %v4575 = vadd.f32 0.0, %v4574
    %4576 = vdwg.mxu0
    %4577 = vmatpush.msra.mxu0 0.0
    %4578 = vmatpush.msra.mxu0 0.0
    %4579 = vmatpush.msra.mxu0 0.0
    %4580 = vmatpush.msra.mxu0 0.0
    %4581 = vmatpush.msra.mxu0 0.0
    %4582 = vmatpush.msra.mxu0 0.0
    %4583 = vmatpush.msra.mxu0 0.0
    %4584 = vmatpush.msra.mxu0 0.0
    %4585 = vmatpush.msra.mxu0 %v4487
    %4586 = vmatpush.msra.mxu0 %v4486
    %4587 = vmatpush.msra.mxu0 %v4485
    %4588 = vmatpush.msra.mxu0 %v4484
    %4589 = vmatpush.msra.mxu0 %v4483
    %4590 = vmatpush.msra.mxu0 %v4482
    %4591 = vmatpush.msra.mxu0 %v4481
    %4592 = vmatpush.msra.mxu0 %v4480
    %4593 = vmatmul.f32.gmra.mxu0 %v1572
    %v4594 = vpop.f32.mrf.mxu0
    %v4595 = vadd.f32 %v4506, %v4594
    %4596 = vmatmul.f32.gmra.mxu0 %v1575
    %v4597 = vpop.f32.mrf.mxu0
    %v4598 = vadd.f32 %v4509, %v4597
    %4599 = vmatmul.f32.gmra.mxu0 %v1578
    %v4600 = vpop.f32.mrf.mxu0
    %v4601 = vadd.f32 %v4512, %v4600
    %4602 = vmatmul.f32.gmra.mxu0 %v1581
    %v4603 = vpop.f32.mrf.mxu0
    %v4604 = vadd.f32 %v4515, %v4603
    %4605 = vmatmul.f32.gmra.mxu0 %v1584
    %v4606 = vpop.f32.mrf.mxu0
    %v4607 = vadd.f32 %v4518, %v4606
    %4608 = vmatmul.f32.gmra.mxu0 %v1587
    %v4609 = vpop.f32.mrf.mxu0
    %v4610 = vadd.f32 %v4521, %v4609
    %4611 = vmatmul.f32.gmra.mxu0 %v1590
    %v4612 = vpop.f32.mrf.mxu0
    %v4613 = vadd.f32 %v4524, %v4612
    %4614 = vmatmul.f32.gmra.mxu0 %v1593
    %v4615 = vpop.f32.mrf.mxu0
    %v4616 = vadd.f32 %v4527, %v4615
    %4617 = vmatmul.f32.gmra.mxu0 %v1596
    %v4618 = vpop.f32.mrf.mxu0
    %v4619 = vadd.f32 %v4530, %v4618
    %4620 = vmatmul.f32.gmra.mxu0 %v1599
    %v4621 = vpop.f32.mrf.mxu0
    %v4622 = vadd.f32 %v4533, %v4621
    %4623 = vmatmul.f32.gmra.mxu0 %v1602
    %v4624 = vpop.f32.mrf.mxu0
    %v4625 = vadd.f32 %v4536, %v4624
    %4626 = vmatmul.f32.gmra.mxu0 %v1605
    %v4627 = vpop.f32.mrf.mxu0
    %v4628 = vadd.f32 %v4539, %v4627
    %4629 = vmatmul.f32.gmra.mxu0 %v1608
    %v4630 = vpop.f32.mrf.mxu0
    %v4631 = vadd.f32 %v4542, %v4630
    %4632 = vmatmul.f32.gmra.mxu0 %v1611
    %v4633 = vpop.f32.mrf.mxu0
    %v4634 = vadd.f32 %v4545, %v4633
    %4635 = vmatmul.f32.gmra.mxu0 %v1614
    %v4636 = vpop.f32.mrf.mxu0
    %v4637 = vadd.f32 %v4548, %v4636
    %4638 = vmatmul.f32.gmra.mxu0 %v1617
    %v4639 = vpop.f32.mrf.mxu0
    %v4640 = vadd.f32 %v4551, %v4639
    %4641 = vmatmul.f32.gmra.mxu0 %v1620
    %v4642 = vpop.f32.mrf.mxu0
    %v4643 = vadd.f32 %v4554, %v4642
    %4644 = vmatmul.f32.gmra.mxu0 %v1623
    %v4645 = vpop.f32.mrf.mxu0
    %v4646 = vadd.f32 %v4557, %v4645
    %4647 = vmatmul.f32.gmra.mxu0 %v1626
    %v4648 = vpop.f32.mrf.mxu0
    %v4649 = vadd.f32 %v4560, %v4648
    %4650 = vmatmul.f32.gmra.mxu0 %v1629
    %v4651 = vpop.f32.mrf.mxu0
    %v4652 = vadd.f32 %v4563, %v4651
    %4653 = vmatmul.f32.gmra.mxu0 %v1632
    %v4654 = vpop.f32.mrf.mxu0
    %v4655 = vadd.f32 %v4566, %v4654
    %4656 = vmatmul.f32.gmra.mxu0 %v1635
    %v4657 = vpop.f32.mrf.mxu0
    %v4658 = vadd.f32 %v4569, %v4657
    %4659 = vmatmul.f32.gmra.mxu0 %v1638
    %v4660 = vpop.f32.mrf.mxu0
    %v4661 = vadd.f32 %v4572, %v4660
    %4662 = vmatmul.f32.gmra.mxu0 %v1641
    %v4663 = vpop.f32.mrf.mxu0
    %v4664 = vadd.f32 %v4575, %v4663
    %4665 = vdwg.mxu0
    %v4666 = vld [vmem:[#allocation2 + $0x3c0] sm:$0x1f]
    %v4667 = vld [vmem:[#allocation2 + $0x3c8] sm:$0x1]
    %v4668 = vperm.slane %v4667, 0
    %v4670 = vsel %vm4218, %v4595, 0
    %v4673 = vsel %vm4218, %v4598, 0
    %v4676 = vsel %vm4218, %v4601, 0
    %v4679 = vsel %vm4218, %v4604, 0
    %v4682 = vsel %vm4218, %v4607, 0
    %v4685 = vsel %vm4218, %v4610, 0
    %v4688 = vsel %vm4218, %v4613, 0
    %v4691 = vsel %vm4218, %v4616, 0
    %v4694 = vsel %vm4218, %v4619, 0
    %v4697 = vsel %vm4218, %v4622, 0
    %v4700 = vsel %vm4218, %v4625, 0
    %v4703 = vsel %vm4218, %v4628, 0
    %v4706 = vsel %vm4218, %v4631, 0
    %v4709 = vsel %vm4218, %v4634, 0
    %v4712 = vsel %vm4218, %v4637, 0
    %v4715 = vsel %vm4218, %v4640, 0
    %v4718 = vsel %vm4218, %v4643, 0
    %v4721 = vsel %vm4218, %v4646, 0
    %v4724 = vsel %vm4218, %v4649, 0
    %v4727 = vsel %vm4218, %v4652, 0
    %v4730 = vsel %vm4218, %v4655, 0
    %v4733 = vsel %vm4218, %v4658, 0
    %v4736 = vsel %vm4218, %v4661, 0
    %v4739 = vsel %vm4218, %v4664, 0
    %vm4741 = vcmask 1044480
    %v4743 = vsel %vm4741, %v4666, 0
    %4745 = vmatpush.msra.mxu0 0.0
    %4746 = vmatpush.msra.mxu0 0.0
    %4747 = vmatpush.msra.mxu0 0.0
    %4748 = vmatpush.msra.mxu0 0.0
    %4749 = vmatpush.msra.mxu0 0.0
    %4750 = vmatpush.msra.mxu0 0.0
    %4751 = vmatpush.msra.mxu0 0.0
    %4752 = vmatpush.msra.mxu0 0.0
    %4753 = vmatpush.msra.mxu0 0.0
    %4754 = vmatpush.msra.mxu0 0.0
    %4755 = vmatpush.msra.mxu0 0.0
    %4756 = vmatpush.msra.mxu0 0.0
    %4757 = vmatpush.msra.mxu0 0.0
    %4758 = vmatpush.msra.mxu0 0.0
    %4759 = vmatpush.msra.mxu0 0.0
    %4760 = vmatpush.msra.mxu0 %v4743
    %4761 = vmatmul.f32.gmra.mxu0 %v4670
    %v4762 = vpop.f32.mrf.mxu0
    %v4763 = vadd.f32 %v4668, %v4762
    %4764 = vmatmul.f32.gmra.mxu0 %v4673
    %v4765 = vpop.f32.mrf.mxu0
    %v4766 = vadd.f32 %v4668, %v4765
    %4767 = vmatmul.f32.gmra.mxu0 %v4676
    %v4768 = vpop.f32.mrf.mxu0
    %v4769 = vadd.f32 %v4668, %v4768
    %4770 = vmatmul.f32.gmra.mxu0 %v4679
    %v4771 = vpop.f32.mrf.mxu0
    %v4772 = vadd.f32 %v4668, %v4771
    %4773 = vmatmul.f32.gmra.mxu0 %v4682
    %v4774 = vpop.f32.mrf.mxu0
    %v4775 = vadd.f32 %v4668, %v4774
    %4776 = vmatmul.f32.gmra.mxu0 %v4685
    %v4777 = vpop.f32.mrf.mxu0
    %v4778 = vadd.f32 %v4668, %v4777
    %4779 = vmatmul.f32.gmra.mxu0 %v4688
    %v4780 = vpop.f32.mrf.mxu0
    %v4781 = vadd.f32 %v4668, %v4780
    %4782 = vmatmul.f32.gmra.mxu0 %v4691
    %v4783 = vpop.f32.mrf.mxu0
    %v4784 = vadd.f32 %v4668, %v4783
    %4785 = vmatmul.f32.gmra.mxu0 %v4694
    %v4786 = vpop.f32.mrf.mxu0
    %v4787 = vadd.f32 %v4668, %v4786
    %4788 = vmatmul.f32.gmra.mxu0 %v4697
    %v4789 = vpop.f32.mrf.mxu0
    %v4790 = vadd.f32 %v4668, %v4789
    %4791 = vmatmul.f32.gmra.mxu0 %v4700
    %v4792 = vpop.f32.mrf.mxu0
    %v4793 = vadd.f32 %v4668, %v4792
    %4794 = vmatmul.f32.gmra.mxu0 %v4703
    %v4795 = vpop.f32.mrf.mxu0
    %v4796 = vadd.f32 %v4668, %v4795
    %4797 = vmatmul.f32.gmra.mxu0 %v4706
    %v4798 = vpop.f32.mrf.mxu0
    %v4799 = vadd.f32 %v4668, %v4798
    %4800 = vmatmul.f32.gmra.mxu0 %v4709
    %v4801 = vpop.f32.mrf.mxu0
    %v4802 = vadd.f32 %v4668, %v4801
    %4803 = vmatmul.f32.gmra.mxu0 %v4712
    %v4804 = vpop.f32.mrf.mxu0
    %v4805 = vadd.f32 %v4668, %v4804
    %4806 = vmatmul.f32.gmra.mxu0 %v4715
    %v4807 = vpop.f32.mrf.mxu0
    %v4808 = vadd.f32 %v4668, %v4807
    %4809 = vmatmul.f32.gmra.mxu0 %v4718
    %v4810 = vpop.f32.mrf.mxu0
    %v4811 = vadd.f32 %v4668, %v4810
    %4812 = vmatmul.f32.gmra.mxu0 %v4721
    %v4813 = vpop.f32.mrf.mxu0
    %v4814 = vadd.f32 %v4668, %v4813
    %4815 = vmatmul.f32.gmra.mxu0 %v4724
    %v4816 = vpop.f32.mrf.mxu0
    %v4817 = vadd.f32 %v4668, %v4816
    %4818 = vmatmul.f32.gmra.mxu0 %v4727
    %v4819 = vpop.f32.mrf.mxu0
    %v4820 = vadd.f32 %v4668, %v4819
    %4821 = vmatmul.f32.gmra.mxu0 %v4730
    %v4822 = vpop.f32.mrf.mxu0
    %v4823 = vadd.f32 %v4668, %v4822
    %4824 = vmatmul.f32.gmra.mxu0 %v4733
    %v4825 = vpop.f32.mrf.mxu0
    %v4826 = vadd.f32 %v4668, %v4825
    %4827 = vmatmul.f32.gmra.mxu0 %v4736
    %v4828 = vpop.f32.mrf.mxu0
    %v4829 = vadd.f32 %v4668, %v4828
    %4830 = vmatmul.f32.gmra.mxu0 %v4739
    %v4831 = vpop.f32.mrf.mxu0
    %v4832 = vadd.f32 %v4668, %v4831
    %4833 = vdwg.mxu0
    %v4834 = vsel %vm4218, %v4763, 0.0
    %v4835 = vsel %vm4218, %v4766, 0.0
    %v4836 = vadd.f32 %v4834, %v4835
    %v4837 = vsel %vm4218, %v4769, 0.0
    %v4838 = vadd.f32 %v4836, %v4837
    %v4839 = vsel %vm4218, %v4772, 0.0
    %v4840 = vadd.f32 %v4838, %v4839
    %v4841 = vsel %vm4218, %v4775, 0.0
    %v4842 = vadd.f32 %v4840, %v4841
    %v4843 = vsel %vm4218, %v4778, 0.0
    %v4844 = vadd.f32 %v4842, %v4843
    %v4845 = vsel %vm4218, %v4781, 0.0
    %v4846 = vadd.f32 %v4844, %v4845
    %v4847 = vsel %vm4218, %v4784, 0.0
    %v4848 = vadd.f32 %v4846, %v4847
    %v4849 = vsel %vm4218, %v4787, 0.0
    %v4850 = vadd.f32 %v4848, %v4849
    %v4851 = vsel %vm4218, %v4790, 0.0
    %v4852 = vadd.f32 %v4850, %v4851
    %v4853 = vsel %vm4218, %v4793, 0.0
    %v4854 = vadd.f32 %v4852, %v4853
    %v4855 = vsel %vm4218, %v4796, 0.0
    %v4856 = vadd.f32 %v4854, %v4855
    %v4857 = vsel %vm4218, %v4799, 0.0
    %v4858 = vadd.f32 %v4856, %v4857
    %v4859 = vsel %vm4218, %v4802, 0.0
    %v4860 = vadd.f32 %v4858, %v4859
    %v4861 = vsel %vm4218, %v4805, 0.0
    %v4862 = vadd.f32 %v4860, %v4861
    %v4863 = vsel %vm4218, %v4808, 0.0
    %v4864 = vadd.f32 %v4862, %v4863
    %v4865 = vsel %vm4218, %v4811, 0.0
    %v4866 = vadd.f32 %v4864, %v4865
    %v4867 = vsel %vm4218, %v4814, 0.0
    %v4868 = vadd.f32 %v4866, %v4867
    %v4869 = vsel %vm4218, %v4817, 0.0
    %v4870 = vadd.f32 %v4868, %v4869
    %v4871 = vsel %vm4218, %v4820, 0.0
    %v4872 = vadd.f32 %v4870, %v4871
    %v4873 = vsel %vm4218, %v4823, 0.0
    %v4874 = vadd.f32 %v4872, %v4873
    %v4875 = vsel %vm4218, %v4826, 0.0
    %v4876 = vadd.f32 %v4874, %v4875
    %v4877 = vsel %vm4218, %v4829, 0.0
    %v4878 = vadd.f32 %v4876, %v4877
    %v4879 = vsel %vm4218, %v4832, 0.0
    %v4880 = vadd.f32 %v4878, %v4879
    %v4881 = vrot.slane %v4880, 4
    %v4882 = vadd.f32 %v4880, %v4881
    %v4883 = vrot.slane %v4882, 2
    %v4884 = vadd.f32 %v4882, %v4883
    %v4885 = vrot.slane %v4884, 1
    %v4886 = vadd.f32 %v4884, %v4885
    %v4887 = vmul.f32 %v4886, 0.0052083335
    %v4888 = vmul.f32 %v4763, %v4763
    %v4889 = vmul.f32 %v4766, %v4766
    %v4890 = vmul.f32 %v4769, %v4769
    %v4891 = vmul.f32 %v4772, %v4772
    %v4892 = vmul.f32 %v4775, %v4775
    %v4893 = vmul.f32 %v4778, %v4778
    %v4894 = vmul.f32 %v4781, %v4781
    %v4895 = vmul.f32 %v4784, %v4784
    %v4896 = vmul.f32 %v4787, %v4787
    %v4897 = vmul.f32 %v4790, %v4790
    %v4898 = vmul.f32 %v4793, %v4793
    %v4899 = vmul.f32 %v4796, %v4796
    %v4900 = vmul.f32 %v4799, %v4799
    %v4901 = vmul.f32 %v4802, %v4802
    %v4902 = vmul.f32 %v4805, %v4805
    %v4903 = vmul.f32 %v4808, %v4808
    %v4904 = vmul.f32 %v4811, %v4811
    %v4905 = vmul.f32 %v4814, %v4814
    %v4906 = vmul.f32 %v4817, %v4817
    %v4907 = vmul.f32 %v4820, %v4820
    %v4908 = vmul.f32 %v4823, %v4823
    %v4909 = vmul.f32 %v4826, %v4826
    %v4910 = vmul.f32 %v4829, %v4829
    %v4911 = vmul.f32 %v4832, %v4832
    %v4912 = vsel %vm4218, %v4888, 0.0
    %v4913 = vsel %vm4218, %v4889, 0.0
    %v4914 = vadd.f32 %v4912, %v4913
    %v4915 = vsel %vm4218, %v4890, 0.0
    %v4916 = vadd.f32 %v4914, %v4915
    %v4917 = vsel %vm4218, %v4891, 0.0
    %v4918 = vadd.f32 %v4916, %v4917
    %v4919 = vsel %vm4218, %v4892, 0.0
    %v4920 = vadd.f32 %v4918, %v4919
    %v4921 = vsel %vm4218, %v4893, 0.0
    %v4922 = vadd.f32 %v4920, %v4921
    %v4923 = vsel %vm4218, %v4894, 0.0
    %v4924 = vadd.f32 %v4922, %v4923
    %v4925 = vsel %vm4218, %v4895, 0.0
    %v4926 = vadd.f32 %v4924, %v4925
    %v4927 = vsel %vm4218, %v4896, 0.0
    %v4928 = vadd.f32 %v4926, %v4927
    %v4929 = vsel %vm4218, %v4897, 0.0
    %v4930 = vadd.f32 %v4928, %v4929
    %v4931 = vsel %vm4218, %v4898, 0.0
    %v4932 = vadd.f32 %v4930, %v4931
    %v4933 = vsel %vm4218, %v4899, 0.0
    %v4934 = vadd.f32 %v4932, %v4933
    %v4935 = vsel %vm4218, %v4900, 0.0
    %v4936 = vadd.f32 %v4934, %v4935
    %v4937 = vsel %vm4218, %v4901, 0.0
    %v4938 = vadd.f32 %v4936, %v4937
    %v4939 = vsel %vm4218, %v4902, 0.0
    %v4940 = vadd.f32 %v4938, %v4939
    %v4941 = vsel %vm4218, %v4903, 0.0
    %v4942 = vadd.f32 %v4940, %v4941
    %v4943 = vsel %vm4218, %v4904, 0.0
    %v4944 = vadd.f32 %v4942, %v4943
    %v4945 = vsel %vm4218, %v4905, 0.0
    %v4946 = vadd.f32 %v4944, %v4945
    %v4947 = vsel %vm4218, %v4906, 0.0
    %v4948 = vadd.f32 %v4946, %v4947
    %v4949 = vsel %vm4218, %v4907, 0.0
    %v4950 = vadd.f32 %v4948, %v4949
    %v4951 = vsel %vm4218, %v4908, 0.0
    %v4952 = vadd.f32 %v4950, %v4951
    %v4953 = vsel %vm4218, %v4909, 0.0
    %v4954 = vadd.f32 %v4952, %v4953
    %v4955 = vsel %vm4218, %v4910, 0.0
    %v4956 = vadd.f32 %v4954, %v4955
    %v4957 = vsel %vm4218, %v4911, 0.0
    %v4958 = vadd.f32 %v4956, %v4957
    %v4959 = vrot.slane %v4958, 4
    %v4960 = vadd.f32 %v4958, %v4959
    %v4961 = vrot.slane %v4960, 2
    %v4962 = vadd.f32 %v4960, %v4961
    %v4963 = vrot.slane %v4962, 1
    %v4964 = vadd.f32 %v4962, %v4963
    %v4965 = vmul.f32 %v4964, 0.0052083335
    %v4966 = vmul.f32 %v4887, %v4887
    %v4967 = vsub.f32 %v4965, %v4966
    %v4968 = vsub.f32 %v4763, %v4887
    %v4969 = vsub.f32 %v4766, %v4887
    %v4970 = vsub.f32 %v4769, %v4887
    %v4971 = vsub.f32 %v4772, %v4887
    %v4972 = vsub.f32 %v4775, %v4887
    %v4973 = vsub.f32 %v4778, %v4887
    %v4974 = vsub.f32 %v4781, %v4887
    %v4975 = vsub.f32 %v4784, %v4887
    %v4976 = vsub.f32 %v4787, %v4887
    %v4977 = vsub.f32 %v4790, %v4887
    %v4978 = vsub.f32 %v4793, %v4887
    %v4979 = vsub.f32 %v4796, %v4887
    %v4980 = vsub.f32 %v4799, %v4887
    %v4981 = vsub.f32 %v4802, %v4887
    %v4982 = vsub.f32 %v4805, %v4887
    %v4983 = vsub.f32 %v4808, %v4887
    %v4984 = vsub.f32 %v4811, %v4887
    %v4985 = vsub.f32 %v4814, %v4887
    %v4986 = vsub.f32 %v4817, %v4887
    %v4987 = vsub.f32 %v4820, %v4887
    %v4988 = vsub.f32 %v4823, %v4887
    %v4989 = vsub.f32 %v4826, %v4887
    %v4990 = vsub.f32 %v4829, %v4887
    %v4991 = vsub.f32 %v4832, %v4887
    %v4992 = vadd.f32 %v4967, 1e-05
    %v4993 = vrsqrt.pop %v4992
    %v4994 = vmul.f32 %v4993, %v4992
    %v4995 = vmul.f32 %v4994, %v4993
    %v4996 = vmul.f32 0.5, %v4995
    %v4997 = vsub.f32 1.5, %v4996
    %v4998 = vmul.f32 %v4993, %v4997
    %vm4999 = vweird.f32 %v4992
    %vm5000 = vweird.f32 %v4993
    %vm5001 = vmor %vm4999, %vm5000
    %v5002 = vsel %vm5001, %v4993, %v4998
    %v5003 = vmul.f32 %v4968, %v5002
    %v5004 = vmul.f32 %v4969, %v5002
    %v5005 = vmul.f32 %v4970, %v5002
    %v5006 = vmul.f32 %v4971, %v5002
    %v5007 = vmul.f32 %v4972, %v5002
    %v5008 = vmul.f32 %v4973, %v5002
    %v5009 = vmul.f32 %v4974, %v5002
    %v5010 = vmul.f32 %v4975, %v5002
    %v5011 = vmul.f32 %v4976, %v5002
    %v5012 = vmul.f32 %v4977, %v5002
    %v5013 = vmul.f32 %v4978, %v5002
    %v5014 = vmul.f32 %v4979, %v5002
    %v5015 = vmul.f32 %v4980, %v5002
    %v5016 = vmul.f32 %v4981, %v5002
    %v5017 = vmul.f32 %v4982, %v5002
    %v5018 = vmul.f32 %v4983, %v5002
    %v5019 = vmul.f32 %v4984, %v5002
    %v5020 = vmul.f32 %v4985, %v5002
    %v5021 = vmul.f32 %v4986, %v5002
    %v5022 = vmul.f32 %v4987, %v5002
    %v5023 = vmul.f32 %v4988, %v5002
    %v5024 = vmul.f32 %v4989, %v5002
    %v5025 = vmul.f32 %v4990, %v5002
    %v5026 = vmul.f32 %v4991, %v5002
    %v5027 = vld [vmem:[#allocation2 + $0x3d0] sm:$0x1]
    %v5028 = vperm.slane %v5027, 0
    %v5029 = vmul.f32 %v5003, %v5028
    %v5030 = vmul.f32 %v5004, %v5028
    %v5031 = vmul.f32 %v5005, %v5028
    %v5032 = vmul.f32 %v5006, %v5028
    %v5033 = vmul.f32 %v5007, %v5028
    %v5034 = vmul.f32 %v5008, %v5028
    %v5035 = vmul.f32 %v5009, %v5028
    %v5036 = vmul.f32 %v5010, %v5028
    %v5037 = vmul.f32 %v5011, %v5028
    %v5038 = vmul.f32 %v5012, %v5028
    %v5039 = vmul.f32 %v5013, %v5028
    %v5040 = vmul.f32 %v5014, %v5028
    %v5041 = vmul.f32 %v5015, %v5028
    %v5042 = vmul.f32 %v5016, %v5028
    %v5043 = vmul.f32 %v5017, %v5028
    %v5044 = vmul.f32 %v5018, %v5028
    %v5045 = vmul.f32 %v5019, %v5028
    %v5046 = vmul.f32 %v5020, %v5028
    %v5047 = vmul.f32 %v5021, %v5028
    %v5048 = vmul.f32 %v5022, %v5028
    %v5049 = vmul.f32 %v5023, %v5028
    %v5050 = vmul.f32 %v5024, %v5028
    %v5051 = vmul.f32 %v5025, %v5028
    %v5052 = vmul.f32 %v5026, %v5028
    %v5053 = vld [vmem:[#allocation2 + $0x3d8] sm:$0x1]
    %v5054 = vperm.slane %v5053, 0
    %v5055 = vadd.f32 %v5029, %v5054
    %v5056 = vadd.f32 %v5030, %v5054
    %v5057 = vadd.f32 %v5031, %v5054
    %v5058 = vadd.f32 %v5032, %v5054
    %v5059 = vadd.f32 %v5033, %v5054
    %v5060 = vadd.f32 %v5034, %v5054
    %v5061 = vadd.f32 %v5035, %v5054
    %v5062 = vadd.f32 %v5036, %v5054
    %v5063 = vadd.f32 %v5037, %v5054
    %v5064 = vadd.f32 %v5038, %v5054
    %v5065 = vadd.f32 %v5039, %v5054
    %v5066 = vadd.f32 %v5040, %v5054
    %v5067 = vadd.f32 %v5041, %v5054
    %v5068 = vadd.f32 %v5042, %v5054
    %v5069 = vadd.f32 %v5043, %v5054
    %v5070 = vadd.f32 %v5044, %v5054
    %v5071 = vadd.f32 %v5045, %v5054
    %v5072 = vadd.f32 %v5046, %v5054
    %v5073 = vadd.f32 %v5047, %v5054
    %v5074 = vadd.f32 %v5048, %v5054
    %v5075 = vadd.f32 %v5049, %v5054
    %v5076 = vadd.f32 %v5050, %v5054
    %v5077 = vadd.f32 %v5051, %v5054
    %v5078 = vadd.f32 %v5052, %v5054
    %v5079 = vmax.f32 %v5055, 0.0
    %v5080 = vmax.f32 %v5056, 0.0
    %v5081 = vmax.f32 %v5057, 0.0
    %v5082 = vmax.f32 %v5058, 0.0
    %v5083 = vmax.f32 %v5059, 0.0
    %v5084 = vmax.f32 %v5060, 0.0
    %v5085 = vmax.f32 %v5061, 0.0
    %v5086 = vmax.f32 %v5062, 0.0
    %v5087 = vmax.f32 %v5063, 0.0
    %v5088 = vmax.f32 %v5064, 0.0
    %v5089 = vmax.f32 %v5065, 0.0
    %v5090 = vmax.f32 %v5066, 0.0
    %v5091 = vmax.f32 %v5067, 0.0
    %v5092 = vmax.f32 %v5068, 0.0
    %v5093 = vmax.f32 %v5069, 0.0
    %v5094 = vmax.f32 %v5070, 0.0
    %v5095 = vmax.f32 %v5071, 0.0
    %v5096 = vmax.f32 %v5072, 0.0
    %v5097 = vmax.f32 %v5073, 0.0
    %v5098 = vmax.f32 %v5074, 0.0
    %v5099 = vmax.f32 %v5075, 0.0
    %v5100 = vmax.f32 %v5076, 0.0
    %v5101 = vmax.f32 %v5077, 0.0
    %v5102 = vmax.f32 %v5078, 0.0
    %5103 = vmatpush.msra.mxu0 %v5094
    %5104 = vmatpush.msra.mxu0 %v5093
    %5105 = vmatpush.msra.mxu0 %v5092
    %5106 = vmatpush.msra.mxu0 %v5091
    %5107 = vmatpush.msra.mxu0 %v5090
    %5108 = vmatpush.msra.mxu0 %v5089
    %5109 = vmatpush.msra.mxu0 %v5088
    %5110 = vmatpush.msra.mxu0 %v5087
    %5111 = vmatpush.msra.mxu0 %v5086
    %5112 = vmatpush.msra.mxu0 %v5085
    %5113 = vmatpush.msra.mxu0 %v5084
    %5114 = vmatpush.msra.mxu0 %v5083
    %5115 = vmatpush.msra.mxu0 %v5082
    %5116 = vmatpush.msra.mxu0 %v5081
    %5117 = vmatpush.msra.mxu0 %v5080
    %5118 = vmatpush.msra.mxu0 %v5079
    %5119 = vmatmul.f32.gmra.mxu0 %v31
    %v5120 = vpop.f32.mrf.mxu0
    %v5121 = vadd.f32 0.0, %v5120
    %5122 = vmatmul.f32.gmra.mxu0 %v33
    %v5123 = vpop.f32.mrf.mxu0
    %v5124 = vadd.f32 0.0, %v5123
    %5125 = vmatmul.f32.gmra.mxu0 %v35
    %v5126 = vpop.f32.mrf.mxu0
    %v5127 = vadd.f32 0.0, %v5126
    %5128 = vmatmul.f32.gmra.mxu0 %v37
    %v5129 = vpop.f32.mrf.mxu0
    %v5130 = vadd.f32 0.0, %v5129
    %5131 = vmatmul.f32.gmra.mxu0 %v39
    %v5132 = vpop.f32.mrf.mxu0
    %v5133 = vadd.f32 0.0, %v5132
    %5134 = vmatmul.f32.gmra.mxu0 %v41
    %v5135 = vpop.f32.mrf.mxu0
    %v5136 = vadd.f32 0.0, %v5135
    %5137 = vmatmul.f32.gmra.mxu0 %v43
    %v5138 = vpop.f32.mrf.mxu0
    %v5139 = vadd.f32 0.0, %v5138
    %5140 = vmatmul.f32.gmra.mxu0 %v45
    %v5141 = vpop.f32.mrf.mxu0
    %v5142 = vadd.f32 0.0, %v5141
    %5143 = vmatmul.f32.gmra.mxu0 %v47
    %v5144 = vpop.f32.mrf.mxu0
    %v5145 = vadd.f32 0.0, %v5144
    %5146 = vmatmul.f32.gmra.mxu0 %v49
    %v5147 = vpop.f32.mrf.mxu0
    %v5148 = vadd.f32 0.0, %v5147
    %5149 = vmatmul.f32.gmra.mxu0 %v51
    %v5150 = vpop.f32.mrf.mxu0
    %v5151 = vadd.f32 0.0, %v5150
    %5152 = vmatmul.f32.gmra.mxu0 %v53
    %v5153 = vpop.f32.mrf.mxu0
    %v5154 = vadd.f32 0.0, %v5153
    %5155 = vmatmul.f32.gmra.mxu0 %v55
    %v5156 = vpop.f32.mrf.mxu0
    %v5157 = vadd.f32 0.0, %v5156
    %5158 = vmatmul.f32.gmra.mxu0 %v57
    %v5159 = vpop.f32.mrf.mxu0
    %v5160 = vadd.f32 0.0, %v5159
    %5161 = vmatmul.f32.gmra.mxu0 %v59
    %v5162 = vpop.f32.mrf.mxu0
    %v5163 = vadd.f32 0.0, %v5162
    %5164 = vmatmul.f32.gmra.mxu0 %v61
    %v5165 = vpop.f32.mrf.mxu0
    %v5166 = vadd.f32 0.0, %v5165
    %5167 = vmatmul.f32.gmra.mxu0 %v63
    %v5168 = vpop.f32.mrf.mxu0
    %v5169 = vadd.f32 0.0, %v5168
    %5170 = vmatmul.f32.gmra.mxu0 %v65
    %v5171 = vpop.f32.mrf.mxu0
    %v5172 = vadd.f32 0.0, %v5171
    %5173 = vmatmul.f32.gmra.mxu0 %v67
    %v5174 = vpop.f32.mrf.mxu0
    %v5175 = vadd.f32 0.0, %v5174
    %5176 = vmatmul.f32.gmra.mxu0 %v69
    %v5177 = vpop.f32.mrf.mxu0
    %v5178 = vadd.f32 0.0, %v5177
    %5179 = vmatmul.f32.gmra.mxu0 %v71
    %v5180 = vpop.f32.mrf.mxu0
    %v5181 = vadd.f32 0.0, %v5180
    %5182 = vmatmul.f32.gmra.mxu0 %v73
    %v5183 = vpop.f32.mrf.mxu0
    %v5184 = vadd.f32 0.0, %v5183
    %5185 = vmatmul.f32.gmra.mxu0 %v75
    %v5186 = vpop.f32.mrf.mxu0
    %v5187 = vadd.f32 0.0, %v5186
    %5188 = vmatmul.f32.gmra.mxu0 %v77
    %v5189 = vpop.f32.mrf.mxu0
    %v5190 = vadd.f32 0.0, %v5189
    %5191 = vdwg.mxu0
    %5192 = vmatpush.msra.mxu0 0.0
    %5193 = vmatpush.msra.mxu0 0.0
    %5194 = vmatpush.msra.mxu0 0.0
    %5195 = vmatpush.msra.mxu0 0.0
    %5196 = vmatpush.msra.mxu0 0.0
    %5197 = vmatpush.msra.mxu0 0.0
    %5198 = vmatpush.msra.mxu0 0.0
    %5199 = vmatpush.msra.mxu0 0.0
    %5200 = vmatpush.msra.mxu0 %v5102
    %5201 = vmatpush.msra.mxu0 %v5101
    %5202 = vmatpush.msra.mxu0 %v5100
    %5203 = vmatpush.msra.mxu0 %v5099
    %5204 = vmatpush.msra.mxu0 %v5098
    %5205 = vmatpush.msra.mxu0 %v5097
    %5206 = vmatpush.msra.mxu0 %v5096
    %5207 = vmatpush.msra.mxu0 %v5095
    %5208 = vmatmul.f32.gmra.mxu0 %v1572
    %v5209 = vpop.f32.mrf.mxu0
    %v5210 = vadd.f32 %v5121, %v5209
    %5211 = vmatmul.f32.gmra.mxu0 %v1575
    %v5212 = vpop.f32.mrf.mxu0
    %v5213 = vadd.f32 %v5124, %v5212
    %5214 = vmatmul.f32.gmra.mxu0 %v1578
    %v5215 = vpop.f32.mrf.mxu0
    %v5216 = vadd.f32 %v5127, %v5215
    %5217 = vmatmul.f32.gmra.mxu0 %v1581
    %v5218 = vpop.f32.mrf.mxu0
    %v5219 = vadd.f32 %v5130, %v5218
    %5220 = vmatmul.f32.gmra.mxu0 %v1584
    %v5221 = vpop.f32.mrf.mxu0
    %v5222 = vadd.f32 %v5133, %v5221
    %5223 = vmatmul.f32.gmra.mxu0 %v1587
    %v5224 = vpop.f32.mrf.mxu0
    %v5225 = vadd.f32 %v5136, %v5224
    %5226 = vmatmul.f32.gmra.mxu0 %v1590
    %v5227 = vpop.f32.mrf.mxu0
    %v5228 = vadd.f32 %v5139, %v5227
    %5229 = vmatmul.f32.gmra.mxu0 %v1593
    %v5230 = vpop.f32.mrf.mxu0
    %v5231 = vadd.f32 %v5142, %v5230
    %5232 = vmatmul.f32.gmra.mxu0 %v1596
    %v5233 = vpop.f32.mrf.mxu0
    %v5234 = vadd.f32 %v5145, %v5233
    %5235 = vmatmul.f32.gmra.mxu0 %v1599
    %v5236 = vpop.f32.mrf.mxu0
    %v5237 = vadd.f32 %v5148, %v5236
    %5238 = vmatmul.f32.gmra.mxu0 %v1602
    %v5239 = vpop.f32.mrf.mxu0
    %v5240 = vadd.f32 %v5151, %v5239
    %5241 = vmatmul.f32.gmra.mxu0 %v1605
    %v5242 = vpop.f32.mrf.mxu0
    %v5243 = vadd.f32 %v5154, %v5242
    %5244 = vmatmul.f32.gmra.mxu0 %v1608
    %v5245 = vpop.f32.mrf.mxu0
    %v5246 = vadd.f32 %v5157, %v5245
    %5247 = vmatmul.f32.gmra.mxu0 %v1611
    %v5248 = vpop.f32.mrf.mxu0
    %v5249 = vadd.f32 %v5160, %v5248
    %5250 = vmatmul.f32.gmra.mxu0 %v1614
    %v5251 = vpop.f32.mrf.mxu0
    %v5252 = vadd.f32 %v5163, %v5251
    %5253 = vmatmul.f32.gmra.mxu0 %v1617
    %v5254 = vpop.f32.mrf.mxu0
    %v5255 = vadd.f32 %v5166, %v5254
    %5256 = vmatmul.f32.gmra.mxu0 %v1620
    %v5257 = vpop.f32.mrf.mxu0
    %v5258 = vadd.f32 %v5169, %v5257
    %5259 = vmatmul.f32.gmra.mxu0 %v1623
    %v5260 = vpop.f32.mrf.mxu0
    %v5261 = vadd.f32 %v5172, %v5260
    %5262 = vmatmul.f32.gmra.mxu0 %v1626
    %v5263 = vpop.f32.mrf.mxu0
    %v5264 = vadd.f32 %v5175, %v5263
    %5265 = vmatmul.f32.gmra.mxu0 %v1629
    %v5266 = vpop.f32.mrf.mxu0
    %v5267 = vadd.f32 %v5178, %v5266
    %5268 = vmatmul.f32.gmra.mxu0 %v1632
    %v5269 = vpop.f32.mrf.mxu0
    %v5270 = vadd.f32 %v5181, %v5269
    %5271 = vmatmul.f32.gmra.mxu0 %v1635
    %v5272 = vpop.f32.mrf.mxu0
    %v5273 = vadd.f32 %v5184, %v5272
    %5274 = vmatmul.f32.gmra.mxu0 %v1638
    %v5275 = vpop.f32.mrf.mxu0
    %v5276 = vadd.f32 %v5187, %v5275
    %5277 = vmatmul.f32.gmra.mxu0 %v1641
    %v5278 = vpop.f32.mrf.mxu0
    %v5279 = vadd.f32 %v5190, %v5278
    %5280 = vdwg.mxu0
    %v5281 = vld [vmem:[#allocation2 + $0x3e0] sm:$0x1f]
    %v5282 = vld [vmem:[#allocation2 + $0x3e8] sm:$0x1]
    %v5283 = vperm.slane %v5282, 0
    %v5285 = vsel %vm4218, %v5210, 0
    %v5288 = vsel %vm4218, %v5213, 0
    %v5291 = vsel %vm4218, %v5216, 0
    %v5294 = vsel %vm4218, %v5219, 0
    %v5297 = vsel %vm4218, %v5222, 0
    %v5300 = vsel %vm4218, %v5225, 0
    %v5303 = vsel %vm4218, %v5228, 0
    %v5306 = vsel %vm4218, %v5231, 0
    %v5309 = vsel %vm4218, %v5234, 0
    %v5312 = vsel %vm4218, %v5237, 0
    %v5315 = vsel %vm4218, %v5240, 0
    %v5318 = vsel %vm4218, %v5243, 0
    %v5321 = vsel %vm4218, %v5246, 0
    %v5324 = vsel %vm4218, %v5249, 0
    %v5327 = vsel %vm4218, %v5252, 0
    %v5330 = vsel %vm4218, %v5255, 0
    %v5333 = vsel %vm4218, %v5258, 0
    %v5336 = vsel %vm4218, %v5261, 0
    %v5339 = vsel %vm4218, %v5264, 0
    %v5342 = vsel %vm4218, %v5267, 0
    %v5345 = vsel %vm4218, %v5270, 0
    %v5348 = vsel %vm4218, %v5273, 0
    %v5351 = vsel %vm4218, %v5276, 0
    %v5354 = vsel %vm4218, %v5279, 0
    %v5357 = vsel %vm4741, %v5281, 0
    %5359 = vmatpush.msra.mxu0 0.0
    %5360 = vmatpush.msra.mxu0 0.0
    %5361 = vmatpush.msra.mxu0 0.0
    %5362 = vmatpush.msra.mxu0 0.0
    %5363 = vmatpush.msra.mxu0 0.0
    %5364 = vmatpush.msra.mxu0 0.0
    %5365 = vmatpush.msra.mxu0 0.0
    %5366 = vmatpush.msra.mxu0 0.0
    %5367 = vmatpush.msra.mxu0 0.0
    %5368 = vmatpush.msra.mxu0 0.0
    %5369 = vmatpush.msra.mxu0 0.0
    %5370 = vmatpush.msra.mxu0 0.0
    %5371 = vmatpush.msra.mxu0 0.0
    %5372 = vmatpush.msra.mxu0 0.0
    %5373 = vmatpush.msra.mxu0 0.0
    %5374 = vmatpush.msra.mxu0 %v5357
    %5375 = vmatmul.f32.gmra.mxu0 %v5285
    %v5376 = vpop.f32.mrf.mxu0
    %v5377 = vadd.f32 %v5283, %v5376
    %5378 = vmatmul.f32.gmra.mxu0 %v5288
    %v5379 = vpop.f32.mrf.mxu0
    %v5380 = vadd.f32 %v5283, %v5379
    %5381 = vmatmul.f32.gmra.mxu0 %v5291
    %v5382 = vpop.f32.mrf.mxu0
    %v5383 = vadd.f32 %v5283, %v5382
    %5384 = vmatmul.f32.gmra.mxu0 %v5294
    %v5385 = vpop.f32.mrf.mxu0
    %v5386 = vadd.f32 %v5283, %v5385
    %5387 = vmatmul.f32.gmra.mxu0 %v5297
    %v5388 = vpop.f32.mrf.mxu0
    %v5389 = vadd.f32 %v5283, %v5388
    %5390 = vmatmul.f32.gmra.mxu0 %v5300
    %v5391 = vpop.f32.mrf.mxu0
    %v5392 = vadd.f32 %v5283, %v5391
    %5393 = vmatmul.f32.gmra.mxu0 %v5303
    %v5394 = vpop.f32.mrf.mxu0
    %v5395 = vadd.f32 %v5283, %v5394
    %5396 = vmatmul.f32.gmra.mxu0 %v5306
    %v5397 = vpop.f32.mrf.mxu0
    %v5398 = vadd.f32 %v5283, %v5397
    %5399 = vmatmul.f32.gmra.mxu0 %v5309
    %v5400 = vpop.f32.mrf.mxu0
    %v5401 = vadd.f32 %v5283, %v5400
    %5402 = vmatmul.f32.gmra.mxu0 %v5312
    %v5403 = vpop.f32.mrf.mxu0
    %v5404 = vadd.f32 %v5283, %v5403
    %5405 = vmatmul.f32.gmra.mxu0 %v5315
    %v5406 = vpop.f32.mrf.mxu0
    %v5407 = vadd.f32 %v5283, %v5406
    %5408 = vmatmul.f32.gmra.mxu0 %v5318
    %v5409 = vpop.f32.mrf.mxu0
    %v5410 = vadd.f32 %v5283, %v5409
    %5411 = vmatmul.f32.gmra.mxu0 %v5321
    %v5412 = vpop.f32.mrf.mxu0
    %v5413 = vadd.f32 %v5283, %v5412
    %5414 = vmatmul.f32.gmra.mxu0 %v5324
    %v5415 = vpop.f32.mrf.mxu0
    %v5416 = vadd.f32 %v5283, %v5415
    %5417 = vmatmul.f32.gmra.mxu0 %v5327
    %v5418 = vpop.f32.mrf.mxu0
    %v5419 = vadd.f32 %v5283, %v5418
    %5420 = vmatmul.f32.gmra.mxu0 %v5330
    %v5421 = vpop.f32.mrf.mxu0
    %v5422 = vadd.f32 %v5283, %v5421
    %5423 = vmatmul.f32.gmra.mxu0 %v5333
    %v5424 = vpop.f32.mrf.mxu0
    %v5425 = vadd.f32 %v5283, %v5424
    %5426 = vmatmul.f32.gmra.mxu0 %v5336
    %v5427 = vpop.f32.mrf.mxu0
    %v5428 = vadd.f32 %v5283, %v5427
    %5429 = vmatmul.f32.gmra.mxu0 %v5339
    %v5430 = vpop.f32.mrf.mxu0
    %v5431 = vadd.f32 %v5283, %v5430
    %5432 = vmatmul.f32.gmra.mxu0 %v5342
    %v5433 = vpop.f32.mrf.mxu0
    %v5434 = vadd.f32 %v5283, %v5433
    %5435 = vmatmul.f32.gmra.mxu0 %v5345
    %v5436 = vpop.f32.mrf.mxu0
    %v5437 = vadd.f32 %v5283, %v5436
    %5438 = vmatmul.f32.gmra.mxu0 %v5348
    %v5439 = vpop.f32.mrf.mxu0
    %v5440 = vadd.f32 %v5283, %v5439
    %5441 = vmatmul.f32.gmra.mxu0 %v5351
    %v5442 = vpop.f32.mrf.mxu0
    %v5443 = vadd.f32 %v5283, %v5442
    %5444 = vmatmul.f32.gmra.mxu0 %v5354
    %v5445 = vpop.f32.mrf.mxu0
    %v5446 = vadd.f32 %v5283, %v5445
    %5447 = vdwg.mxu0
    %v5448 = vsel %vm4218, %v5377, 0.0
    %v5449 = vsel %vm4218, %v5380, 0.0
    %v5450 = vadd.f32 %v5448, %v5449
    %v5451 = vsel %vm4218, %v5383, 0.0
    %v5452 = vadd.f32 %v5450, %v5451
    %v5453 = vsel %vm4218, %v5386, 0.0
    %v5454 = vadd.f32 %v5452, %v5453
    %v5455 = vsel %vm4218, %v5389, 0.0
    %v5456 = vadd.f32 %v5454, %v5455
    %v5457 = vsel %vm4218, %v5392, 0.0
    %v5458 = vadd.f32 %v5456, %v5457
    %v5459 = vsel %vm4218, %v5395, 0.0
    %v5460 = vadd.f32 %v5458, %v5459
    %v5461 = vsel %vm4218, %v5398, 0.0
    %v5462 = vadd.f32 %v5460, %v5461
    %v5463 = vsel %vm4218, %v5401, 0.0
    %v5464 = vadd.f32 %v5462, %v5463
    %v5465 = vsel %vm4218, %v5404, 0.0
    %v5466 = vadd.f32 %v5464, %v5465
    %v5467 = vsel %vm4218, %v5407, 0.0
    %v5468 = vadd.f32 %v5466, %v5467
    %v5469 = vsel %vm4218, %v5410, 0.0
    %v5470 = vadd.f32 %v5468, %v5469
    %v5471 = vsel %vm4218, %v5413, 0.0
    %v5472 = vadd.f32 %v5470, %v5471
    %v5473 = vsel %vm4218, %v5416, 0.0
    %v5474 = vadd.f32 %v5472, %v5473
    %v5475 = vsel %vm4218, %v5419, 0.0
    %v5476 = vadd.f32 %v5474, %v5475
    %v5477 = vsel %vm4218, %v5422, 0.0
    %v5478 = vadd.f32 %v5476, %v5477
    %v5479 = vsel %vm4218, %v5425, 0.0
    %v5480 = vadd.f32 %v5478, %v5479
    %v5481 = vsel %vm4218, %v5428, 0.0
    %v5482 = vadd.f32 %v5480, %v5481
    %v5483 = vsel %vm4218, %v5431, 0.0
    %v5484 = vadd.f32 %v5482, %v5483
    %v5485 = vsel %vm4218, %v5434, 0.0
    %v5486 = vadd.f32 %v5484, %v5485
    %v5487 = vsel %vm4218, %v5437, 0.0
    %v5488 = vadd.f32 %v5486, %v5487
    %v5489 = vsel %vm4218, %v5440, 0.0
    %v5490 = vadd.f32 %v5488, %v5489
    %v5491 = vsel %vm4218, %v5443, 0.0
    %v5492 = vadd.f32 %v5490, %v5491
    %v5493 = vsel %vm4218, %v5446, 0.0
    %v5494 = vadd.f32 %v5492, %v5493
    %v5495 = vrot.slane %v5494, 4
    %v5496 = vadd.f32 %v5494, %v5495
    %v5497 = vrot.slane %v5496, 2
    %v5498 = vadd.f32 %v5496, %v5497
    %v5499 = vrot.slane %v5498, 1
    %v5500 = vadd.f32 %v5498, %v5499
    %v5501 = vmul.f32 %v5500, 0.0052083335
    %v5502 = vmul.f32 %v5377, %v5377
    %v5503 = vmul.f32 %v5380, %v5380
    %v5504 = vmul.f32 %v5383, %v5383
    %v5505 = vmul.f32 %v5386, %v5386
    %v5506 = vmul.f32 %v5389, %v5389
    %v5507 = vmul.f32 %v5392, %v5392
    %v5508 = vmul.f32 %v5395, %v5395
    %v5509 = vmul.f32 %v5398, %v5398
    %v5510 = vmul.f32 %v5401, %v5401
    %v5511 = vmul.f32 %v5404, %v5404
    %v5512 = vmul.f32 %v5407, %v5407
    %v5513 = vmul.f32 %v5410, %v5410
    %v5514 = vmul.f32 %v5413, %v5413
    %v5515 = vmul.f32 %v5416, %v5416
    %v5516 = vmul.f32 %v5419, %v5419
    %v5517 = vmul.f32 %v5422, %v5422
    %v5518 = vmul.f32 %v5425, %v5425
    %v5519 = vmul.f32 %v5428, %v5428
    %v5520 = vmul.f32 %v5431, %v5431
    %v5521 = vmul.f32 %v5434, %v5434
    %v5522 = vmul.f32 %v5437, %v5437
    %v5523 = vmul.f32 %v5440, %v5440
    %v5524 = vmul.f32 %v5443, %v5443
    %v5525 = vmul.f32 %v5446, %v5446
    %v5526 = vsel %vm4218, %v5502, 0.0
    %v5527 = vsel %vm4218, %v5503, 0.0
    %v5528 = vadd.f32 %v5526, %v5527
    %v5529 = vsel %vm4218, %v5504, 0.0
    %v5530 = vadd.f32 %v5528, %v5529
    %v5531 = vsel %vm4218, %v5505, 0.0
    %v5532 = vadd.f32 %v5530, %v5531
    %v5533 = vsel %vm4218, %v5506, 0.0
    %v5534 = vadd.f32 %v5532, %v5533
    %v5535 = vsel %vm4218, %v5507, 0.0
    %v5536 = vadd.f32 %v5534, %v5535
    %v5537 = vsel %vm4218, %v5508, 0.0
    %v5538 = vadd.f32 %v5536, %v5537
    %v5539 = vsel %vm4218, %v5509, 0.0
    %v5540 = vadd.f32 %v5538, %v5539
    %v5541 = vsel %vm4218, %v5510, 0.0
    %v5542 = vadd.f32 %v5540, %v5541
    %v5543 = vsel %vm4218, %v5511, 0.0
    %v5544 = vadd.f32 %v5542, %v5543
    %v5545 = vsel %vm4218, %v5512, 0.0
    %v5546 = vadd.f32 %v5544, %v5545
    %v5547 = vsel %vm4218, %v5513, 0.0
    %v5548 = vadd.f32 %v5546, %v5547
    %v5549 = vsel %vm4218, %v5514, 0.0
    %v5550 = vadd.f32 %v5548, %v5549
    %v5551 = vsel %vm4218, %v5515, 0.0
    %v5552 = vadd.f32 %v5550, %v5551
    %v5553 = vsel %vm4218, %v5516, 0.0
    %v5554 = vadd.f32 %v5552, %v5553
    %v5555 = vsel %vm4218, %v5517, 0.0
    %v5556 = vadd.f32 %v5554, %v5555
    %v5557 = vsel %vm4218, %v5518, 0.0
    %v5558 = vadd.f32 %v5556, %v5557
    %v5559 = vsel %vm4218, %v5519, 0.0
    %v5560 = vadd.f32 %v5558, %v5559
    %v5561 = vsel %vm4218, %v5520, 0.0
    %v5562 = vadd.f32 %v5560, %v5561
    %v5563 = vsel %vm4218, %v5521, 0.0
    %v5564 = vadd.f32 %v5562, %v5563
    %v5565 = vsel %vm4218, %v5522, 0.0
    %v5566 = vadd.f32 %v5564, %v5565
    %v5567 = vsel %vm4218, %v5523, 0.0
    %v5568 = vadd.f32 %v5566, %v5567
    %v5569 = vsel %vm4218, %v5524, 0.0
    %v5570 = vadd.f32 %v5568, %v5569
    %v5571 = vsel %vm4218, %v5525, 0.0
    %v5572 = vadd.f32 %v5570, %v5571
    %v5573 = vrot.slane %v5572, 4
    %v5574 = vadd.f32 %v5572, %v5573
    %v5575 = vrot.slane %v5574, 2
    %v5576 = vadd.f32 %v5574, %v5575
    %v5577 = vrot.slane %v5576, 1
    %v5578 = vadd.f32 %v5576, %v5577
    %v5579 = vmul.f32 %v5578, 0.0052083335
    %v5580 = vmul.f32 %v5501, %v5501
    %v5581 = vsub.f32 %v5579, %v5580
    %v5582 = vsub.f32 %v5377, %v5501
    %v5583 = vsub.f32 %v5380, %v5501
    %v5584 = vsub.f32 %v5383, %v5501
    %v5585 = vsub.f32 %v5386, %v5501
    %v5586 = vsub.f32 %v5389, %v5501
    %v5587 = vsub.f32 %v5392, %v5501
    %v5588 = vsub.f32 %v5395, %v5501
    %v5589 = vsub.f32 %v5398, %v5501
    %v5590 = vsub.f32 %v5401, %v5501
    %v5591 = vsub.f32 %v5404, %v5501
    %v5592 = vsub.f32 %v5407, %v5501
    %v5593 = vsub.f32 %v5410, %v5501
    %v5594 = vsub.f32 %v5413, %v5501
    %v5595 = vsub.f32 %v5416, %v5501
    %v5596 = vsub.f32 %v5419, %v5501
    %v5597 = vsub.f32 %v5422, %v5501
    %v5598 = vsub.f32 %v5425, %v5501
    %v5599 = vsub.f32 %v5428, %v5501
    %v5600 = vsub.f32 %v5431, %v5501
    %v5601 = vsub.f32 %v5434, %v5501
    %v5602 = vsub.f32 %v5437, %v5501
    %v5603 = vsub.f32 %v5440, %v5501
    %v5604 = vsub.f32 %v5443, %v5501
    %v5605 = vsub.f32 %v5446, %v5501
    %v5606 = vadd.f32 %v5581, 1e-05
    %v5607 = vrsqrt.pop %v5606
    %v5608 = vmul.f32 %v5607, %v5606
    %v5609 = vmul.f32 %v5608, %v5607
    %v5610 = vmul.f32 0.5, %v5609
    %v5611 = vsub.f32 1.5, %v5610
    %v5612 = vmul.f32 %v5607, %v5611
    %vm5613 = vweird.f32 %v5606
    %vm5614 = vweird.f32 %v5607
    %vm5615 = vmor %vm5613, %vm5614
    %v5616 = vsel %vm5615, %v5607, %v5612
    %v5617 = vmul.f32 %v5582, %v5616
    %v5618 = vmul.f32 %v5583, %v5616
    %v5619 = vmul.f32 %v5584, %v5616
    %v5620 = vmul.f32 %v5585, %v5616
    %v5621 = vmul.f32 %v5586, %v5616
    %v5622 = vmul.f32 %v5587, %v5616
    %v5623 = vmul.f32 %v5588, %v5616
    %v5624 = vmul.f32 %v5589, %v5616
    %v5625 = vmul.f32 %v5590, %v5616
    %v5626 = vmul.f32 %v5591, %v5616
    %v5627 = vmul.f32 %v5592, %v5616
    %v5628 = vmul.f32 %v5593, %v5616
    %v5629 = vmul.f32 %v5594, %v5616
    %v5630 = vmul.f32 %v5595, %v5616
    %v5631 = vmul.f32 %v5596, %v5616
    %v5632 = vmul.f32 %v5597, %v5616
    %v5633 = vmul.f32 %v5598, %v5616
    %v5634 = vmul.f32 %v5599, %v5616
    %v5635 = vmul.f32 %v5600, %v5616
    %v5636 = vmul.f32 %v5601, %v5616
    %v5637 = vmul.f32 %v5602, %v5616
    %v5638 = vmul.f32 %v5603, %v5616
    %v5639 = vmul.f32 %v5604, %v5616
    %v5640 = vmul.f32 %v5605, %v5616
    %v5641 = vld [vmem:[#allocation2 + $0x3f0] sm:$0x1]
    %v5642 = vperm.slane %v5641, 0
    %v5643 = vmul.f32 %v5617, %v5642
    %v5644 = vmul.f32 %v5618, %v5642
    %v5645 = vmul.f32 %v5619, %v5642
    %v5646 = vmul.f32 %v5620, %v5642
    %v5647 = vmul.f32 %v5621, %v5642
    %v5648 = vmul.f32 %v5622, %v5642
    %v5649 = vmul.f32 %v5623, %v5642
    %v5650 = vmul.f32 %v5624, %v5642
    %v5651 = vmul.f32 %v5625, %v5642
    %v5652 = vmul.f32 %v5626, %v5642
    %v5653 = vmul.f32 %v5627, %v5642
    %v5654 = vmul.f32 %v5628, %v5642
    %v5655 = vmul.f32 %v5629, %v5642
    %v5656 = vmul.f32 %v5630, %v5642
    %v5657 = vmul.f32 %v5631, %v5642
    %v5658 = vmul.f32 %v5632, %v5642
    %v5659 = vmul.f32 %v5633, %v5642
    %v5660 = vmul.f32 %v5634, %v5642
    %v5661 = vmul.f32 %v5635, %v5642
    %v5662 = vmul.f32 %v5636, %v5642
    %v5663 = vmul.f32 %v5637, %v5642
    %v5664 = vmul.f32 %v5638, %v5642
    %v5665 = vmul.f32 %v5639, %v5642
    %v5666 = vmul.f32 %v5640, %v5642
    %v5667 = vld [vmem:[#allocation2 + $0x3f8] sm:$0x1]
    %v5668 = vperm.slane %v5667, 0
    %v5669 = vadd.f32 %v5643, %v5668
    %v5670 = vadd.f32 %v5644, %v5668
    %v5671 = vadd.f32 %v5645, %v5668
    %v5672 = vadd.f32 %v5646, %v5668
    %v5673 = vadd.f32 %v5647, %v5668
    %v5674 = vadd.f32 %v5648, %v5668
    %v5675 = vadd.f32 %v5649, %v5668
    %v5676 = vadd.f32 %v5650, %v5668
    %v5677 = vadd.f32 %v5651, %v5668
    %v5678 = vadd.f32 %v5652, %v5668
    %v5679 = vadd.f32 %v5653, %v5668
    %v5680 = vadd.f32 %v5654, %v5668
    %v5681 = vadd.f32 %v5655, %v5668
    %v5682 = vadd.f32 %v5656, %v5668
    %v5683 = vadd.f32 %v5657, %v5668
    %v5684 = vadd.f32 %v5658, %v5668
    %v5685 = vadd.f32 %v5659, %v5668
    %v5686 = vadd.f32 %v5660, %v5668
    %v5687 = vadd.f32 %v5661, %v5668
    %v5688 = vadd.f32 %v5662, %v5668
    %v5689 = vadd.f32 %v5663, %v5668
    %v5690 = vadd.f32 %v5664, %v5668
    %v5691 = vadd.f32 %v5665, %v5668
    %v5692 = vadd.f32 %v5666, %v5668
    %v5693 = vmax.f32 %v5669, 0.0
    %v5694 = vmax.f32 %v5670, 0.0
    %v5695 = vmax.f32 %v5671, 0.0
    %v5696 = vmax.f32 %v5672, 0.0
    %v5697 = vmax.f32 %v5673, 0.0
    %v5698 = vmax.f32 %v5674, 0.0
    %v5699 = vmax.f32 %v5675, 0.0
    %v5700 = vmax.f32 %v5676, 0.0
    %v5701 = vmax.f32 %v5677, 0.0
    %v5702 = vmax.f32 %v5678, 0.0
    %v5703 = vmax.f32 %v5679, 0.0
    %v5704 = vmax.f32 %v5680, 0.0
    %v5705 = vmax.f32 %v5681, 0.0
    %v5706 = vmax.f32 %v5682, 0.0
    %v5707 = vmax.f32 %v5683, 0.0
    %v5708 = vmax.f32 %v5684, 0.0
    %v5709 = vmax.f32 %v5685, 0.0
    %v5710 = vmax.f32 %v5686, 0.0
    %v5711 = vmax.f32 %v5687, 0.0
    %v5712 = vmax.f32 %v5688, 0.0
    %v5713 = vmax.f32 %v5689, 0.0
    %v5714 = vmax.f32 %v5690, 0.0
    %v5715 = vmax.f32 %v5691, 0.0
    %v5716 = vmax.f32 %v5692, 0.0
    %v5717 = vld [vmem:[#allocation2 + $0x400] sm:$0x1f]
    %v5719 = vsel %vm4218, %v5693, 0
    %v5722 = vsel %vm4218, %v5694, 0
    %v5725 = vsel %vm4218, %v5695, 0
    %v5728 = vsel %vm4218, %v5696, 0
    %v5731 = vsel %vm4218, %v5697, 0
    %v5734 = vsel %vm4218, %v5698, 0
    %v5737 = vsel %vm4218, %v5699, 0
    %v5740 = vsel %vm4218, %v5700, 0
    %v5743 = vsel %vm4218, %v5701, 0
    %v5746 = vsel %vm4218, %v5702, 0
    %v5749 = vsel %vm4218, %v5703, 0
    %v5752 = vsel %vm4218, %v5704, 0
    %v5755 = vsel %vm4218, %v5705, 0
    %v5758 = vsel %vm4218, %v5706, 0
    %v5761 = vsel %vm4218, %v5707, 0
    %v5764 = vsel %vm4218, %v5708, 0
    %v5767 = vsel %vm4218, %v5709, 0
    %v5770 = vsel %vm4218, %v5710, 0
    %v5773 = vsel %vm4218, %v5711, 0
    %v5776 = vsel %vm4218, %v5712, 0
    %v5779 = vsel %vm4218, %v5713, 0
    %v5782 = vsel %vm4218, %v5714, 0
    %v5785 = vsel %vm4218, %v5715, 0
    %v5788 = vsel %vm4218, %v5716, 0
    %v5791 = vsel %vm4741, %v5717, 0
    %5793 = vmatpush.msra.mxu0 0.0
    %5794 = vmatpush.msra.mxu0 0.0
    %5795 = vmatpush.msra.mxu0 0.0
    %5796 = vmatpush.msra.mxu0 0.0
    %5797 = vmatpush.msra.mxu0 0.0
    %5798 = vmatpush.msra.mxu0 0.0
    %5799 = vmatpush.msra.mxu0 0.0
    %5800 = vmatpush.msra.mxu0 0.0
    %5801 = vmatpush.msra.mxu0 0.0
    %5802 = vmatpush.msra.mxu0 0.0
    %5803 = vmatpush.msra.mxu0 0.0
    %5804 = vmatpush.msra.mxu0 0.0
    %5805 = vmatpush.msra.mxu0 0.0
    %5806 = vmatpush.msra.mxu0 0.0
    %5807 = vmatpush.msra.mxu0 0.0
    %5808 = vmatpush.msra.mxu0 %v5791
    %5809 = vmatmul.f32.gmra.mxu0 %v5719
    %v5810 = vpop.f32.mrf.mxu0
    %v5811 = vadd.f32 0.0, %v5810
    %5812 = vmatmul.f32.gmra.mxu0 %v5722
    %v5813 = vpop.f32.mrf.mxu0
    %v5814 = vadd.f32 0.0, %v5813
    %5815 = vmatmul.f32.gmra.mxu0 %v5725
    %v5816 = vpop.f32.mrf.mxu0
    %v5817 = vadd.f32 0.0, %v5816
    %5818 = vmatmul.f32.gmra.mxu0 %v5728
    %v5819 = vpop.f32.mrf.mxu0
    %v5820 = vadd.f32 0.0, %v5819
    %5821 = vmatmul.f32.gmra.mxu0 %v5731
    %v5822 = vpop.f32.mrf.mxu0
    %v5823 = vadd.f32 0.0, %v5822
    %5824 = vmatmul.f32.gmra.mxu0 %v5734
    %v5825 = vpop.f32.mrf.mxu0
    %v5826 = vadd.f32 0.0, %v5825
    %5827 = vmatmul.f32.gmra.mxu0 %v5737
    %v5828 = vpop.f32.mrf.mxu0
    %v5829 = vadd.f32 0.0, %v5828
    %5830 = vmatmul.f32.gmra.mxu0 %v5740
    %v5831 = vpop.f32.mrf.mxu0
    %v5832 = vadd.f32 0.0, %v5831
    %5833 = vmatmul.f32.gmra.mxu0 %v5743
    %v5834 = vpop.f32.mrf.mxu0
    %v5835 = vadd.f32 0.0, %v5834
    %5836 = vmatmul.f32.gmra.mxu0 %v5746
    %v5837 = vpop.f32.mrf.mxu0
    %v5838 = vadd.f32 0.0, %v5837
    %5839 = vmatmul.f32.gmra.mxu0 %v5749
    %v5840 = vpop.f32.mrf.mxu0
    %v5841 = vadd.f32 0.0, %v5840
    %5842 = vmatmul.f32.gmra.mxu0 %v5752
    %v5843 = vpop.f32.mrf.mxu0
    %v5844 = vadd.f32 0.0, %v5843
    %5845 = vmatmul.f32.gmra.mxu0 %v5755
    %v5846 = vpop.f32.mrf.mxu0
    %v5847 = vadd.f32 0.0, %v5846
    %5848 = vmatmul.f32.gmra.mxu0 %v5758
    %v5849 = vpop.f32.mrf.mxu0
    %v5850 = vadd.f32 0.0, %v5849
    %5851 = vmatmul.f32.gmra.mxu0 %v5761
    %v5852 = vpop.f32.mrf.mxu0
    %v5853 = vadd.f32 0.0, %v5852
    %5854 = vmatmul.f32.gmra.mxu0 %v5764
    %v5855 = vpop.f32.mrf.mxu0
    %v5856 = vadd.f32 0.0, %v5855
    %5857 = vmatmul.f32.gmra.mxu0 %v5767
    %v5858 = vpop.f32.mrf.mxu0
    %v5859 = vadd.f32 0.0, %v5858
    %5860 = vmatmul.f32.gmra.mxu0 %v5770
    %v5861 = vpop.f32.mrf.mxu0
    %v5862 = vadd.f32 0.0, %v5861
    %5863 = vmatmul.f32.gmra.mxu0 %v5773
    %v5864 = vpop.f32.mrf.mxu0
    %v5865 = vadd.f32 0.0, %v5864
    %5866 = vmatmul.f32.gmra.mxu0 %v5776
    %v5867 = vpop.f32.mrf.mxu0
    %v5868 = vadd.f32 0.0, %v5867
    %5869 = vmatmul.f32.gmra.mxu0 %v5779
    %v5870 = vpop.f32.mrf.mxu0
    %v5871 = vadd.f32 0.0, %v5870
    %5872 = vmatmul.f32.gmra.mxu0 %v5782
    %v5873 = vpop.f32.mrf.mxu0
    %v5874 = vadd.f32 0.0, %v5873
    %5875 = vmatmul.f32.gmra.mxu0 %v5785
    %v5876 = vpop.f32.mrf.mxu0
    %v5877 = vadd.f32 0.0, %v5876
    %5878 = vmatmul.f32.gmra.mxu0 %v5788
    %v5879 = vpop.f32.mrf.mxu0
    %v5880 = vadd.f32 0.0, %v5879
    %5881 = vdwg.mxu0
    %5905 = vrot.lane.b32.xlu0 0.0, 5
    %v5906 = vpop.permute.xlu0 %5905
    %5907 = vrot.lane.b32.xlu0 %v5811, 5
    %v5908 = vpop.permute.xlu0 %5907
    %5909 = vrot.lane.b32.xlu0 %v5814, 5
    %v5910 = vpop.permute.xlu0 %5909
    %5911 = vrot.lane.b32.xlu0 %v5817, 5
    %v5912 = vpop.permute.xlu0 %5911
    %5913 = vrot.lane.b32.xlu0 %v5820, 5
    %v5914 = vpop.permute.xlu0 %5913
    %5915 = vrot.lane.b32.xlu0 %v5823, 5
    %v5916 = vpop.permute.xlu0 %5915
    %5917 = vrot.lane.b32.xlu0 %v5826, 5
    %v5918 = vpop.permute.xlu0 %5917
    %5919 = vrot.lane.b32.xlu0 %v5829, 5
    %v5920 = vpop.permute.xlu0 %5919
    %5921 = vrot.lane.b32.xlu0 %v5832, 5
    %v5922 = vpop.permute.xlu0 %5921
    %5923 = vrot.lane.b32.xlu0 %v5835, 5
    %v5924 = vpop.permute.xlu0 %5923
    %5925 = vrot.lane.b32.xlu0 %v5838, 5
    %v5926 = vpop.permute.xlu0 %5925
    %5927 = vrot.lane.b32.xlu0 %v5841, 5
    %v5928 = vpop.permute.xlu0 %5927
    %5929 = vrot.lane.b32.xlu0 %v5844, 5
    %v5930 = vpop.permute.xlu0 %5929
    %5931 = vrot.lane.b32.xlu0 %v5847, 5
    %v5932 = vpop.permute.xlu0 %5931
    %5933 = vrot.lane.b32.xlu0 %v5850, 5
    %v5934 = vpop.permute.xlu0 %5933
    %5935 = vrot.lane.b32.xlu0 %v5853, 5
    %v5936 = vpop.permute.xlu0 %5935
    %5937 = vrot.lane.b32.xlu0 %v5856, 5
    %v5938 = vpop.permute.xlu0 %5937
    %5939 = vrot.lane.b32.xlu0 %v5859, 5
    %v5940 = vpop.permute.xlu0 %5939
    %5941 = vrot.lane.b32.xlu0 %v5862, 5
    %v5942 = vpop.permute.xlu0 %5941
    %5943 = vrot.lane.b32.xlu0 %v5865, 5
    %v5944 = vpop.permute.xlu0 %5943
    %5945 = vrot.lane.b32.xlu0 %v5868, 5
    %v5946 = vpop.permute.xlu0 %5945
    %5947 = vrot.lane.b32.xlu0 %v5871, 5
    %v5948 = vpop.permute.xlu0 %5947
    %5949 = vrot.lane.b32.xlu0 %v5874, 5
    %v5950 = vpop.permute.xlu0 %5949
    %5951 = vrot.lane.b32.xlu0 %v5877, 5
    %v5952 = vpop.permute.xlu0 %5951
    %v5977 = vadd.f32 %v5811, %v5906
    %v5978 = vadd.f32 %v5814, %v5908
    %v5979 = vadd.f32 %v5817, %v5910
    %v5980 = vadd.f32 %v5820, %v5912
    %v5981 = vadd.f32 %v5823, %v5914
    %v5982 = vadd.f32 %v5826, %v5916
    %v5983 = vadd.f32 %v5829, %v5918
    %v5984 = vadd.f32 %v5832, %v5920
    %v5985 = vadd.f32 %v5835, %v5922
    %v5986 = vadd.f32 %v5838, %v5924
    %v5987 = vadd.f32 %v5841, %v5926
    %v5988 = vadd.f32 %v5844, %v5928
    %v5989 = vadd.f32 %v5847, %v5930
    %v5990 = vadd.f32 %v5850, %v5932
    %v5991 = vadd.f32 %v5853, %v5934
    %v5992 = vadd.f32 %v5856, %v5936
    %v5993 = vadd.f32 %v5859, %v5938
    %v5994 = vadd.f32 %v5862, %v5940
    %v5995 = vadd.f32 %v5865, %v5942
    %v5996 = vadd.f32 %v5868, %v5944
    %v5997 = vadd.f32 %v5871, %v5946
    %v5998 = vadd.f32 %v5874, %v5948
    %v5999 = vadd.f32 %v5877, %v5950
    %v6000 = vadd.f32 %v5880, %v5952
    %6002 = vrot.lane.b32.xlu0 %v5814, 123
    %v6003 = vpop.permute.xlu0 %6002
    %6004 = vrot.lane.b32.xlu0 %v5817, 123
    %v6005 = vpop.permute.xlu0 %6004
    %6006 = vrot.lane.b32.xlu0 %v5820, 123
    %v6007 = vpop.permute.xlu0 %6006
    %6008 = vrot.lane.b32.xlu0 %v5823, 123
    %v6009 = vpop.permute.xlu0 %6008
    %6010 = vrot.lane.b32.xlu0 %v5826, 123
    %v6011 = vpop.permute.xlu0 %6010
    %6012 = vrot.lane.b32.xlu0 %v5829, 123
    %v6013 = vpop.permute.xlu0 %6012
    %6014 = vrot.lane.b32.xlu0 %v5832, 123
    %v6015 = vpop.permute.xlu0 %6014
    %6016 = vrot.lane.b32.xlu0 %v5835, 123
    %v6017 = vpop.permute.xlu0 %6016
    %6018 = vrot.lane.b32.xlu0 %v5838, 123
    %v6019 = vpop.permute.xlu0 %6018
    %6020 = vrot.lane.b32.xlu0 %v5841, 123
    %v6021 = vpop.permute.xlu0 %6020
    %6022 = vrot.lane.b32.xlu0 %v5844, 123
    %v6023 = vpop.permute.xlu0 %6022
    %6024 = vrot.lane.b32.xlu0 %v5847, 123
    %v6025 = vpop.permute.xlu0 %6024
    %6026 = vrot.lane.b32.xlu0 %v5850, 123
    %v6027 = vpop.permute.xlu0 %6026
    %6028 = vrot.lane.b32.xlu0 %v5853, 123
    %v6029 = vpop.permute.xlu0 %6028
    %6030 = vrot.lane.b32.xlu0 %v5856, 123
    %v6031 = vpop.permute.xlu0 %6030
    %6032 = vrot.lane.b32.xlu0 %v5859, 123
    %v6033 = vpop.permute.xlu0 %6032
    %6034 = vrot.lane.b32.xlu0 %v5862, 123
    %v6035 = vpop.permute.xlu0 %6034
    %6036 = vrot.lane.b32.xlu0 %v5865, 123
    %v6037 = vpop.permute.xlu0 %6036
    %6038 = vrot.lane.b32.xlu0 %v5868, 123
    %v6039 = vpop.permute.xlu0 %6038
    %6040 = vrot.lane.b32.xlu0 %v5871, 123
    %v6041 = vpop.permute.xlu0 %6040
    %6042 = vrot.lane.b32.xlu0 %v5874, 123
    %v6043 = vpop.permute.xlu0 %6042
    %6044 = vrot.lane.b32.xlu0 %v5877, 123
    %v6045 = vpop.permute.xlu0 %6044
    %6046 = vrot.lane.b32.xlu0 %v5880, 123
    %v6047 = vpop.permute.xlu0 %6046
    %6048 = vrot.lane.b32.xlu0 0.0, 123
    %v6049 = vpop.permute.xlu0 %6048
    %v6074 = vadd.f32 %v5977, %v6003
    %v6075 = vadd.f32 %v5978, %v6005
    %v6076 = vadd.f32 %v5979, %v6007
    %v6077 = vadd.f32 %v5980, %v6009
    %v6078 = vadd.f32 %v5981, %v6011
    %v6079 = vadd.f32 %v5982, %v6013
    %v6080 = vadd.f32 %v5983, %v6015
    %v6081 = vadd.f32 %v5984, %v6017
    %v6082 = vadd.f32 %v5985, %v6019
    %v6083 = vadd.f32 %v5986, %v6021
    %v6084 = vadd.f32 %v5987, %v6023
    %v6085 = vadd.f32 %v5988, %v6025
    %v6086 = vadd.f32 %v5989, %v6027
    %v6087 = vadd.f32 %v5990, %v6029
    %v6088 = vadd.f32 %v5991, %v6031
    %v6089 = vadd.f32 %v5992, %v6033
    %v6090 = vadd.f32 %v5993, %v6035
    %v6091 = vadd.f32 %v5994, %v6037
    %v6092 = vadd.f32 %v5995, %v6039
    %v6093 = vadd.f32 %v5996, %v6041
    %v6094 = vadd.f32 %v5997, %v6043
    %v6095 = vadd.f32 %v5998, %v6045
    %v6096 = vadd.f32 %v5999, %v6047
    %v6097 = vadd.f32 %v6000, %v6049
    %v6098 = vld [vmem:[#allocation2 + $0x408] sm:$0x1]
    %v6099 = vperm.slane %v6098, 0
    %6101 = vrot.lane.b32.xlu0 %v6099, 5
    %v6102 = vpop.permute.xlu0 %6101
    %v6104 = vadd.f32 %v6074, %v6102
    %v6105 = vadd.f32 %v6075, %v6102
    %v6106 = vadd.f32 %v6076, %v6102
    %v6107 = vadd.f32 %v6077, %v6102
    %v6108 = vadd.f32 %v6078, %v6102
    %v6109 = vadd.f32 %v6079, %v6102
    %v6110 = vadd.f32 %v6080, %v6102
    %v6111 = vadd.f32 %v6081, %v6102
    %v6112 = vadd.f32 %v6082, %v6102
    %v6113 = vadd.f32 %v6083, %v6102
    %v6114 = vadd.f32 %v6084, %v6102
    %v6115 = vadd.f32 %v6085, %v6102
    %v6116 = vadd.f32 %v6086, %v6102
    %v6117 = vadd.f32 %v6087, %v6102
    %v6118 = vadd.f32 %v6088, %v6102
    %v6119 = vadd.f32 %v6089, %v6102
    %v6120 = vadd.f32 %v6090, %v6102
    %v6121 = vadd.f32 %v6091, %v6102
    %v6122 = vadd.f32 %v6092, %v6102
    %v6123 = vadd.f32 %v6093, %v6102
    %v6124 = vadd.f32 %v6094, %v6102
    %v6125 = vadd.f32 %v6095, %v6102
    %v6126 = vadd.f32 %v6096, %v6102
    %v6127 = vadd.f32 %v6097, %v6102
    %v6128 = vld [vmem:[#allocation2 + $0x410] sm:$0x1]
    %v6129 = vld [vmem:[#allocation2 + $0x418] sm:$0xf]
    %v6131 = vsel %vm2958, %v6129, 0
    %6133 = vmatpush.msra.mxu0 0.0
    %6134 = vmatpush.msra.mxu0 0.0
    %6135 = vmatpush.msra.mxu0 0.0
    %6136 = vmatpush.msra.mxu0 0.0
    %6137 = vmatpush.msra.mxu0 0.0
    %6138 = vmatpush.msra.mxu0 0.0
    %6139 = vmatpush.msra.mxu0 0.0
    %6140 = vmatpush.msra.mxu0 0.0
    %6141 = vmatpush.msra.mxu0 0.0
    %6142 = vmatpush.msra.mxu0 0.0
    %6143 = vmatpush.msra.mxu0 0.0
    %6144 = vmatpush.msra.mxu0 0.0
    %6145 = vmatpush.msra.mxu0 0.0
    %6146 = vmatpush.msra.mxu0 0.0
    %6147 = vmatpush.msra.mxu0 0.0
    %6148 = vmatpush.msra.mxu0 %v6131
    %6149 = vmatmul.f32.gmra.mxu0 %v3806
    %v6150 = vpop.f32.mrf.mxu0
    %v6151 = vadd.f32 0.0, %v6150
    %6152 = vmatmul.f32.gmra.mxu0 %v3808
    %v6153 = vpop.f32.mrf.mxu0
    %v6154 = vadd.f32 0.0, %v6153
    %6155 = vmatmul.f32.gmra.mxu0 %v3810
    %v6156 = vpop.f32.mrf.mxu0
    %v6157 = vadd.f32 0.0, %v6156
    %6158 = vmatmul.f32.gmra.mxu0 %v3812
    %v6159 = vpop.f32.mrf.mxu0
    %v6160 = vadd.f32 0.0, %v6159
    %6161 = vmatmul.f32.gmra.mxu0 %v3814
    %v6162 = vpop.f32.mrf.mxu0
    %v6163 = vadd.f32 0.0, %v6162
    %6164 = vmatmul.f32.gmra.mxu0 %v3816
    %v6165 = vpop.f32.mrf.mxu0
    %v6166 = vadd.f32 0.0, %v6165
    %6167 = vmatmul.f32.gmra.mxu0 %v3818
    %v6168 = vpop.f32.mrf.mxu0
    %v6169 = vadd.f32 0.0, %v6168
    %6170 = vmatmul.f32.gmra.mxu0 %v3820
    %v6171 = vpop.f32.mrf.mxu0
    %v6172 = vadd.f32 0.0, %v6171
    %6173 = vmatmul.f32.gmra.mxu0 %v3822
    %v6174 = vpop.f32.mrf.mxu0
    %v6175 = vadd.f32 0.0, %v6174
    %6176 = vmatmul.f32.gmra.mxu0 %v3824
    %v6177 = vpop.f32.mrf.mxu0
    %v6178 = vadd.f32 0.0, %v6177
    %6179 = vmatmul.f32.gmra.mxu0 %v3826
    %v6180 = vpop.f32.mrf.mxu0
    %v6181 = vadd.f32 0.0, %v6180
    %6182 = vmatmul.f32.gmra.mxu0 %v3828
    %v6183 = vpop.f32.mrf.mxu0
    %v6184 = vadd.f32 0.0, %v6183
    %6185 = vmatmul.f32.gmra.mxu0 %v3830
    %v6186 = vpop.f32.mrf.mxu0
    %v6187 = vadd.f32 0.0, %v6186
    %6188 = vmatmul.f32.gmra.mxu0 %v3832
    %v6189 = vpop.f32.mrf.mxu0
    %v6190 = vadd.f32 0.0, %v6189
    %6191 = vmatmul.f32.gmra.mxu0 %v3834
    %v6192 = vpop.f32.mrf.mxu0
    %v6193 = vadd.f32 0.0, %v6192
    %6194 = vmatmul.f32.gmra.mxu0 %v3836
    %v6195 = vpop.f32.mrf.mxu0
    %v6196 = vadd.f32 0.0, %v6195
    %6197 = vmatmul.f32.gmra.mxu0 %v3838
    %v6198 = vpop.f32.mrf.mxu0
    %v6199 = vadd.f32 0.0, %v6198
    %6200 = vmatmul.f32.gmra.mxu0 %v3840
    %v6201 = vpop.f32.mrf.mxu0
    %v6202 = vadd.f32 0.0, %v6201
    %6203 = vmatmul.f32.gmra.mxu0 %v3842
    %v6204 = vpop.f32.mrf.mxu0
    %v6205 = vadd.f32 0.0, %v6204
    %6206 = vmatmul.f32.gmra.mxu0 %v3844
    %v6207 = vpop.f32.mrf.mxu0
    %v6208 = vadd.f32 0.0, %v6207
    %6209 = vmatmul.f32.gmra.mxu0 %v3846
    %v6210 = vpop.f32.mrf.mxu0
    %v6211 = vadd.f32 0.0, %v6210
    %6212 = vmatmul.f32.gmra.mxu0 %v3848
    %v6213 = vpop.f32.mrf.mxu0
    %v6214 = vadd.f32 0.0, %v6213
    %6215 = vmatmul.f32.gmra.mxu0 %v3850
    %v6216 = vpop.f32.mrf.mxu0
    %v6217 = vadd.f32 0.0, %v6216
    %6218 = vmatmul.f32.gmra.mxu0 %v3852
    %v6219 = vpop.f32.mrf.mxu0
    %v6220 = vadd.f32 0.0, %v6219
    %6221 = vdwg.mxu0
    %v6223 = vsel %vm1475, %v6128, 0
    %6225 = vmatpush.msra.mxu0 0.0
    %6226 = vmatpush.msra.mxu0 0.0
    %6227 = vmatpush.msra.mxu0 0.0
    %6228 = vmatpush.msra.mxu0 0.0
    %6229 = vmatpush.msra.mxu0 0.0
    %6230 = vmatpush.msra.mxu0 0.0
    %6231 = vmatpush.msra.mxu0 0.0
    %6232 = vmatpush.msra.mxu0 0.0
    %6233 = vmatpush.msra.mxu0 0.0
    %6234 = vmatpush.msra.mxu0 0.0
    %6235 = vmatpush.msra.mxu0 0.0
    %6236 = vmatpush.msra.mxu0 0.0
    %6237 = vmatpush.msra.mxu0 0.0
    %6238 = vmatpush.msra.mxu0 0.0
    %6239 = vmatpush.msra.mxu0 0.0
    %6240 = vmatpush.msra.mxu0 %v6223
    %6241 = vmatmul.f32.gmra.mxu0 %v1404
    %v6242 = vpop.f32.mrf.mxu0
    %v6243 = vadd.f32 %v6151, %v6242
    %6244 = vmatmul.f32.gmra.mxu0 %v1407
    %v6245 = vpop.f32.mrf.mxu0
    %v6246 = vadd.f32 %v6154, %v6245
    %6247 = vmatmul.f32.gmra.mxu0 %v1410
    %v6248 = vpop.f32.mrf.mxu0
    %v6249 = vadd.f32 %v6157, %v6248
    %6250 = vmatmul.f32.gmra.mxu0 %v1413
    %v6251 = vpop.f32.mrf.mxu0
    %v6252 = vadd.f32 %v6160, %v6251
    %6253 = vmatmul.f32.gmra.mxu0 %v1416
    %v6254 = vpop.f32.mrf.mxu0
    %v6255 = vadd.f32 %v6163, %v6254
    %6256 = vmatmul.f32.gmra.mxu0 %v1419
    %v6257 = vpop.f32.mrf.mxu0
    %v6258 = vadd.f32 %v6166, %v6257
    %6259 = vmatmul.f32.gmra.mxu0 %v1422
    %v6260 = vpop.f32.mrf.mxu0
    %v6261 = vadd.f32 %v6169, %v6260
    %6262 = vmatmul.f32.gmra.mxu0 %v1425
    %v6263 = vpop.f32.mrf.mxu0
    %v6264 = vadd.f32 %v6172, %v6263
    %6265 = vmatmul.f32.gmra.mxu0 %v1428
    %v6266 = vpop.f32.mrf.mxu0
    %v6267 = vadd.f32 %v6175, %v6266
    %6268 = vmatmul.f32.gmra.mxu0 %v1431
    %v6269 = vpop.f32.mrf.mxu0
    %v6270 = vadd.f32 %v6178, %v6269
    %6271 = vmatmul.f32.gmra.mxu0 %v1434
    %v6272 = vpop.f32.mrf.mxu0
    %v6273 = vadd.f32 %v6181, %v6272
    %6274 = vmatmul.f32.gmra.mxu0 %v1437
    %v6275 = vpop.f32.mrf.mxu0
    %v6276 = vadd.f32 %v6184, %v6275
    %6277 = vmatmul.f32.gmra.mxu0 %v1440
    %v6278 = vpop.f32.mrf.mxu0
    %v6279 = vadd.f32 %v6187, %v6278
    %6280 = vmatmul.f32.gmra.mxu0 %v1443
    %v6281 = vpop.f32.mrf.mxu0
    %v6282 = vadd.f32 %v6190, %v6281
    %6283 = vmatmul.f32.gmra.mxu0 %v1446
    %v6284 = vpop.f32.mrf.mxu0
    %v6285 = vadd.f32 %v6193, %v6284
    %6286 = vmatmul.f32.gmra.mxu0 %v1449
    %v6287 = vpop.f32.mrf.mxu0
    %v6288 = vadd.f32 %v6196, %v6287
    %6289 = vmatmul.f32.gmra.mxu0 %v1452
    %v6290 = vpop.f32.mrf.mxu0
    %v6291 = vadd.f32 %v6199, %v6290
    %6292 = vmatmul.f32.gmra.mxu0 %v1455
    %v6293 = vpop.f32.mrf.mxu0
    %v6294 = vadd.f32 %v6202, %v6293
    %6295 = vmatmul.f32.gmra.mxu0 %v1458
    %v6296 = vpop.f32.mrf.mxu0
    %v6297 = vadd.f32 %v6205, %v6296
    %6298 = vmatmul.f32.gmra.mxu0 %v1461
    %v6299 = vpop.f32.mrf.mxu0
    %v6300 = vadd.f32 %v6208, %v6299
    %6301 = vmatmul.f32.gmra.mxu0 %v1464
    %v6302 = vpop.f32.mrf.mxu0
    %v6303 = vadd.f32 %v6211, %v6302
    %6304 = vmatmul.f32.gmra.mxu0 %v1467
    %v6305 = vpop.f32.mrf.mxu0
    %v6306 = vadd.f32 %v6214, %v6305
    %6307 = vmatmul.f32.gmra.mxu0 %v1470
    %v6308 = vpop.f32.mrf.mxu0
    %v6309 = vadd.f32 %v6217, %v6308
    %6310 = vmatmul.f32.gmra.mxu0 %v1473
    %v6311 = vpop.f32.mrf.mxu0
    %v6312 = vadd.f32 %v6220, %v6311
    %6313 = vdwg.mxu0
    %v6314 = vld [vmem:[#allocation2 + $0x420] sm:$0x1f]
    %6339 = vrot.lane.b32.xlu0 %v6104, 123
    %v6340 = vpop.permute.xlu0 %6339
    %6341 = vrot.lane.b32.xlu0 %v6105, 123
    %v6342 = vpop.permute.xlu0 %6341
    %6343 = vrot.lane.b32.xlu0 %v6106, 123
    %v6344 = vpop.permute.xlu0 %6343
    %6345 = vrot.lane.b32.xlu0 %v6107, 123
    %v6346 = vpop.permute.xlu0 %6345
    %6347 = vrot.lane.b32.xlu0 %v6108, 123
    %v6348 = vpop.permute.xlu0 %6347
    %6349 = vrot.lane.b32.xlu0 %v6109, 123
    %v6350 = vpop.permute.xlu0 %6349
    %6351 = vrot.lane.b32.xlu0 %v6110, 123
    %v6352 = vpop.permute.xlu0 %6351
    %6353 = vrot.lane.b32.xlu0 %v6111, 123
    %v6354 = vpop.permute.xlu0 %6353
    %6355 = vrot.lane.b32.xlu0 %v6112, 123
    %v6356 = vpop.permute.xlu0 %6355
    %6357 = vrot.lane.b32.xlu0 %v6113, 123
    %v6358 = vpop.permute.xlu0 %6357
    %6359 = vrot.lane.b32.xlu0 %v6114, 123
    %v6360 = vpop.permute.xlu0 %6359
    %6361 = vrot.lane.b32.xlu0 %v6115, 123
    %v6362 = vpop.permute.xlu0 %6361
    %6363 = vrot.lane.b32.xlu0 %v6116, 123
    %v6364 = vpop.permute.xlu0 %6363
    %6365 = vrot.lane.b32.xlu0 %v6117, 123
    %v6366 = vpop.permute.xlu0 %6365
    %6367 = vrot.lane.b32.xlu0 %v6118, 123
    %v6368 = vpop.permute.xlu0 %6367
    %6369 = vrot.lane.b32.xlu0 %v6119, 123
    %v6370 = vpop.permute.xlu0 %6369
    %6371 = vrot.lane.b32.xlu0 %v6120, 123
    %v6372 = vpop.permute.xlu0 %6371
    %6373 = vrot.lane.b32.xlu0 %v6121, 123
    %v6374 = vpop.permute.xlu0 %6373
    %6375 = vrot.lane.b32.xlu0 %v6122, 123
    %v6376 = vpop.permute.xlu0 %6375
    %6377 = vrot.lane.b32.xlu0 %v6123, 123
    %v6378 = vpop.permute.xlu0 %6377
    %6379 = vrot.lane.b32.xlu0 %v6124, 123
    %v6380 = vpop.permute.xlu0 %6379
    %6381 = vrot.lane.b32.xlu0 %v6125, 123
    %v6382 = vpop.permute.xlu0 %6381
    %6383 = vrot.lane.b32.xlu0 %v6126, 123
    %v6384 = vpop.permute.xlu0 %6383
    %6385 = vrot.lane.b32.xlu0 %v6127, 123
    %v6386 = vpop.permute.xlu0 %6385
    %v6387 = vsel %vm4218, %v6340, 0
    %v6389 = vsel %vm4218, %v6342, 0
    %v6391 = vsel %vm4218, %v6344, 0
    %v6393 = vsel %vm4218, %v6346, 0
    %v6395 = vsel %vm4218, %v6348, 0
    %v6397 = vsel %vm4218, %v6350, 0
    %v6399 = vsel %vm4218, %v6352, 0
    %v6401 = vsel %vm4218, %v6354, 0
    %v6403 = vsel %vm4218, %v6356, 0
    %v6405 = vsel %vm4218, %v6358, 0
    %v6407 = vsel %vm4218, %v6360, 0
    %v6409 = vsel %vm4218, %v6362, 0
    %v6411 = vsel %vm4218, %v6364, 0
    %v6413 = vsel %vm4218, %v6366, 0
    %v6415 = vsel %vm4218, %v6368, 0
    %v6417 = vsel %vm4218, %v6370, 0
    %v6419 = vsel %vm4218, %v6372, 0
    %v6421 = vsel %vm4218, %v6374, 0
    %v6423 = vsel %vm4218, %v6376, 0
    %v6425 = vsel %vm4218, %v6378, 0
    %v6427 = vsel %vm4218, %v6380, 0
    %v6429 = vsel %vm4218, %v6382, 0
    %v6431 = vsel %vm4218, %v6384, 0
    %v6433 = vsel %vm4218, %v6386, 0
    %v6436 = vsel %vm4741, %v6314, 0
    %6438 = vmatpush.msra.mxu0 0.0
    %6439 = vmatpush.msra.mxu0 0.0
    %6440 = vmatpush.msra.mxu0 0.0
    %6441 = vmatpush.msra.mxu0 0.0
    %6442 = vmatpush.msra.mxu0 0.0
    %6443 = vmatpush.msra.mxu0 0.0
    %6444 = vmatpush.msra.mxu0 0.0
    %6445 = vmatpush.msra.mxu0 0.0
    %6446 = vmatpush.msra.mxu0 0.0
    %6447 = vmatpush.msra.mxu0 0.0
    %6448 = vmatpush.msra.mxu0 0.0
    %6449 = vmatpush.msra.mxu0 0.0
    %6450 = vmatpush.msra.mxu0 0.0
    %6451 = vmatpush.msra.mxu0 0.0
    %6452 = vmatpush.msra.mxu0 0.0
    %6453 = vmatpush.msra.mxu0 %v6436
    %6454 = vmatmul.f32.gmra.mxu0 %v6387
    %v6455 = vpop.f32.mrf.mxu0
    %v6456 = vadd.f32 0.0, %v6455
    %6457 = vmatmul.f32.gmra.mxu0 %v6389
    %v6458 = vpop.f32.mrf.mxu0
    %v6459 = vadd.f32 0.0, %v6458
    %6460 = vmatmul.f32.gmra.mxu0 %v6391
    %v6461 = vpop.f32.mrf.mxu0
    %v6462 = vadd.f32 0.0, %v6461
    %6463 = vmatmul.f32.gmra.mxu0 %v6393
    %v6464 = vpop.f32.mrf.mxu0
    %v6465 = vadd.f32 0.0, %v6464
    %6466 = vmatmul.f32.gmra.mxu0 %v6395
    %v6467 = vpop.f32.mrf.mxu0
    %v6468 = vadd.f32 0.0, %v6467
    %6469 = vmatmul.f32.gmra.mxu0 %v6397
    %v6470 = vpop.f32.mrf.mxu0
    %v6471 = vadd.f32 0.0, %v6470
    %6472 = vmatmul.f32.gmra.mxu0 %v6399
    %v6473 = vpop.f32.mrf.mxu0
    %v6474 = vadd.f32 0.0, %v6473
    %6475 = vmatmul.f32.gmra.mxu0 %v6401
    %v6476 = vpop.f32.mrf.mxu0
    %v6477 = vadd.f32 0.0, %v6476
    %6478 = vmatmul.f32.gmra.mxu0 %v6403
    %v6479 = vpop.f32.mrf.mxu0
    %v6480 = vadd.f32 0.0, %v6479
    %6481 = vmatmul.f32.gmra.mxu0 %v6405
    %v6482 = vpop.f32.mrf.mxu0
    %v6483 = vadd.f32 0.0, %v6482
    %6484 = vmatmul.f32.gmra.mxu0 %v6407
    %v6485 = vpop.f32.mrf.mxu0
    %v6486 = vadd.f32 0.0, %v6485
    %6487 = vmatmul.f32.gmra.mxu0 %v6409
    %v6488 = vpop.f32.mrf.mxu0
    %v6489 = vadd.f32 0.0, %v6488
    %6490 = vmatmul.f32.gmra.mxu0 %v6411
    %v6491 = vpop.f32.mrf.mxu0
    %v6492 = vadd.f32 0.0, %v6491
    %6493 = vmatmul.f32.gmra.mxu0 %v6413
    %v6494 = vpop.f32.mrf.mxu0
    %v6495 = vadd.f32 0.0, %v6494
    %6496 = vmatmul.f32.gmra.mxu0 %v6415
    %v6497 = vpop.f32.mrf.mxu0
    %v6498 = vadd.f32 0.0, %v6497
    %6499 = vmatmul.f32.gmra.mxu0 %v6417
    %v6500 = vpop.f32.mrf.mxu0
    %v6501 = vadd.f32 0.0, %v6500
    %6502 = vmatmul.f32.gmra.mxu0 %v6419
    %v6503 = vpop.f32.mrf.mxu0
    %v6504 = vadd.f32 0.0, %v6503
    %6505 = vmatmul.f32.gmra.mxu0 %v6421
    %v6506 = vpop.f32.mrf.mxu0
    %v6507 = vadd.f32 0.0, %v6506
    %6508 = vmatmul.f32.gmra.mxu0 %v6423
    %v6509 = vpop.f32.mrf.mxu0
    %v6510 = vadd.f32 0.0, %v6509
    %6511 = vmatmul.f32.gmra.mxu0 %v6425
    %v6512 = vpop.f32.mrf.mxu0
    %v6513 = vadd.f32 0.0, %v6512
    %6514 = vmatmul.f32.gmra.mxu0 %v6427
    %v6515 = vpop.f32.mrf.mxu0
    %v6516 = vadd.f32 0.0, %v6515
    %6517 = vmatmul.f32.gmra.mxu0 %v6429
    %v6518 = vpop.f32.mrf.mxu0
    %v6519 = vadd.f32 0.0, %v6518
    %6520 = vmatmul.f32.gmra.mxu0 %v6431
    %v6521 = vpop.f32.mrf.mxu0
    %v6522 = vadd.f32 0.0, %v6521
    %6523 = vmatmul.f32.gmra.mxu0 %v6433
    %v6524 = vpop.f32.mrf.mxu0
    %v6525 = vadd.f32 0.0, %v6524
    %6526 = vdwg.mxu0
    %v6527 = vadd.f32 %v6243, %v6456
    %v6528 = vadd.f32 %v6246, %v6459
    %v6529 = vadd.f32 %v6249, %v6462
    %v6530 = vadd.f32 %v6252, %v6465
    %v6531 = vadd.f32 %v6255, %v6468
    %v6532 = vadd.f32 %v6258, %v6471
    %v6533 = vadd.f32 %v6261, %v6474
    %v6534 = vadd.f32 %v6264, %v6477
    %v6535 = vadd.f32 %v6267, %v6480
    %v6536 = vadd.f32 %v6270, %v6483
    %v6537 = vadd.f32 %v6273, %v6486
    %v6538 = vadd.f32 %v6276, %v6489
    %v6539 = vadd.f32 %v6279, %v6492
    %v6540 = vadd.f32 %v6282, %v6495
    %v6541 = vadd.f32 %v6285, %v6498
    %v6542 = vadd.f32 %v6288, %v6501
    %v6543 = vadd.f32 %v6291, %v6504
    %v6544 = vadd.f32 %v6294, %v6507
    %v6545 = vadd.f32 %v6297, %v6510
    %v6546 = vadd.f32 %v6300, %v6513
    %v6547 = vadd.f32 %v6303, %v6516
    %v6548 = vadd.f32 %v6306, %v6519
    %v6549 = vadd.f32 %v6309, %v6522
    %v6550 = vadd.f32 %v6312, %v6525
    %v6551 = vld [vmem:[#allocation2 + $0x428] sm:$0x1]
    %v6552 = vperm.slane %v6551, 0
    %6553 = vmatpush.msra.mxu0 %v6542
    %6554 = vmatpush.msra.mxu0 %v6541
    %6555 = vmatpush.msra.mxu0 %v6540
    %6556 = vmatpush.msra.mxu0 %v6539
    %6557 = vmatpush.msra.mxu0 %v6538
    %6558 = vmatpush.msra.mxu0 %v6537
    %6559 = vmatpush.msra.mxu0 %v6536
    %6560 = vmatpush.msra.mxu0 %v6535
    %6561 = vmatpush.msra.mxu0 %v6534
    %6562 = vmatpush.msra.mxu0 %v6533
    %6563 = vmatpush.msra.mxu0 %v6532
    %6564 = vmatpush.msra.mxu0 %v6531
    %6565 = vmatpush.msra.mxu0 %v6530
    %6566 = vmatpush.msra.mxu0 %v6529
    %6567 = vmatpush.msra.mxu0 %v6528
    %6568 = vmatpush.msra.mxu0 %v6527
    %6569 = vmatmul.f32.gmra.mxu0 %v31
    %v6570 = vpop.f32.mrf.mxu0
    %v6571 = vadd.f32 %v6552, %v6570
    %6572 = vmatmul.f32.gmra.mxu0 %v33
    %v6573 = vpop.f32.mrf.mxu0
    %v6574 = vadd.f32 %v6552, %v6573
    %6575 = vmatmul.f32.gmra.mxu0 %v35
    %v6576 = vpop.f32.mrf.mxu0
    %v6577 = vadd.f32 %v6552, %v6576
    %6578 = vmatmul.f32.gmra.mxu0 %v37
    %v6579 = vpop.f32.mrf.mxu0
    %v6580 = vadd.f32 %v6552, %v6579
    %6581 = vmatmul.f32.gmra.mxu0 %v39
    %v6582 = vpop.f32.mrf.mxu0
    %v6583 = vadd.f32 %v6552, %v6582
    %6584 = vmatmul.f32.gmra.mxu0 %v41
    %v6585 = vpop.f32.mrf.mxu0
    %v6586 = vadd.f32 %v6552, %v6585
    %6587 = vmatmul.f32.gmra.mxu0 %v43
    %v6588 = vpop.f32.mrf.mxu0
    %v6589 = vadd.f32 %v6552, %v6588
    %6590 = vmatmul.f32.gmra.mxu0 %v45
    %v6591 = vpop.f32.mrf.mxu0
    %v6592 = vadd.f32 %v6552, %v6591
    %6593 = vmatmul.f32.gmra.mxu0 %v47
    %v6594 = vpop.f32.mrf.mxu0
    %v6595 = vadd.f32 %v6552, %v6594
    %6596 = vmatmul.f32.gmra.mxu0 %v49
    %v6597 = vpop.f32.mrf.mxu0
    %v6598 = vadd.f32 %v6552, %v6597
    %6599 = vmatmul.f32.gmra.mxu0 %v51
    %v6600 = vpop.f32.mrf.mxu0
    %v6601 = vadd.f32 %v6552, %v6600
    %6602 = vmatmul.f32.gmra.mxu0 %v53
    %v6603 = vpop.f32.mrf.mxu0
    %v6604 = vadd.f32 %v6552, %v6603
    %6605 = vmatmul.f32.gmra.mxu0 %v55
    %v6606 = vpop.f32.mrf.mxu0
    %v6607 = vadd.f32 %v6552, %v6606
    %6608 = vmatmul.f32.gmra.mxu0 %v57
    %v6609 = vpop.f32.mrf.mxu0
    %v6610 = vadd.f32 %v6552, %v6609
    %6611 = vmatmul.f32.gmra.mxu0 %v59
    %v6612 = vpop.f32.mrf.mxu0
    %v6613 = vadd.f32 %v6552, %v6612
    %6614 = vmatmul.f32.gmra.mxu0 %v61
    %v6615 = vpop.f32.mrf.mxu0
    %v6616 = vadd.f32 %v6552, %v6615
    %6617 = vmatmul.f32.gmra.mxu0 %v63
    %v6618 = vpop.f32.mrf.mxu0
    %v6619 = vadd.f32 %v6552, %v6618
    %6620 = vmatmul.f32.gmra.mxu0 %v65
    %v6621 = vpop.f32.mrf.mxu0
    %v6622 = vadd.f32 %v6552, %v6621
    %6623 = vmatmul.f32.gmra.mxu0 %v67
    %v6624 = vpop.f32.mrf.mxu0
    %v6625 = vadd.f32 %v6552, %v6624
    %6626 = vmatmul.f32.gmra.mxu0 %v69
    %v6627 = vpop.f32.mrf.mxu0
    %v6628 = vadd.f32 %v6552, %v6627
    %6629 = vmatmul.f32.gmra.mxu0 %v71
    %v6630 = vpop.f32.mrf.mxu0
    %v6631 = vadd.f32 %v6552, %v6630
    %6632 = vmatmul.f32.gmra.mxu0 %v73
    %v6633 = vpop.f32.mrf.mxu0
    %v6634 = vadd.f32 %v6552, %v6633
    %6635 = vmatmul.f32.gmra.mxu0 %v75
    %v6636 = vpop.f32.mrf.mxu0
    %v6637 = vadd.f32 %v6552, %v6636
    %6638 = vmatmul.f32.gmra.mxu0 %v77
    %v6639 = vpop.f32.mrf.mxu0
    %v6640 = vadd.f32 %v6552, %v6639
    %6641 = vdwg.mxu0
    %6642 = vmatpush.msra.mxu0 0.0
    %6643 = vmatpush.msra.mxu0 0.0
    %6644 = vmatpush.msra.mxu0 0.0
    %6645 = vmatpush.msra.mxu0 0.0
    %6646 = vmatpush.msra.mxu0 0.0
    %6647 = vmatpush.msra.mxu0 0.0
    %6648 = vmatpush.msra.mxu0 0.0
    %6649 = vmatpush.msra.mxu0 0.0
    %6650 = vmatpush.msra.mxu0 %v6550
    %6651 = vmatpush.msra.mxu0 %v6549
    %6652 = vmatpush.msra.mxu0 %v6548
    %6653 = vmatpush.msra.mxu0 %v6547
    %6654 = vmatpush.msra.mxu0 %v6546
    %6655 = vmatpush.msra.mxu0 %v6545
    %6656 = vmatpush.msra.mxu0 %v6544
    %6657 = vmatpush.msra.mxu0 %v6543
    %6658 = vmatmul.f32.gmra.mxu0 %v1572
    %v6659 = vpop.f32.mrf.mxu0
    %v6660 = vadd.f32 %v6571, %v6659
    %6661 = vmatmul.f32.gmra.mxu0 %v1575
    %v6662 = vpop.f32.mrf.mxu0
    %v6663 = vadd.f32 %v6574, %v6662
    %6664 = vmatmul.f32.gmra.mxu0 %v1578
    %v6665 = vpop.f32.mrf.mxu0
    %v6666 = vadd.f32 %v6577, %v6665
    %6667 = vmatmul.f32.gmra.mxu0 %v1581
    %v6668 = vpop.f32.mrf.mxu0
    %v6669 = vadd.f32 %v6580, %v6668
    %6670 = vmatmul.f32.gmra.mxu0 %v1584
    %v6671 = vpop.f32.mrf.mxu0
    %v6672 = vadd.f32 %v6583, %v6671
    %6673 = vmatmul.f32.gmra.mxu0 %v1587
    %v6674 = vpop.f32.mrf.mxu0
    %v6675 = vadd.f32 %v6586, %v6674
    %6676 = vmatmul.f32.gmra.mxu0 %v1590
    %v6677 = vpop.f32.mrf.mxu0
    %v6678 = vadd.f32 %v6589, %v6677
    %6679 = vmatmul.f32.gmra.mxu0 %v1593
    %v6680 = vpop.f32.mrf.mxu0
    %v6681 = vadd.f32 %v6592, %v6680
    %6682 = vmatmul.f32.gmra.mxu0 %v1596
    %v6683 = vpop.f32.mrf.mxu0
    %v6684 = vadd.f32 %v6595, %v6683
    %6685 = vmatmul.f32.gmra.mxu0 %v1599
    %v6686 = vpop.f32.mrf.mxu0
    %v6687 = vadd.f32 %v6598, %v6686
    %6688 = vmatmul.f32.gmra.mxu0 %v1602
    %v6689 = vpop.f32.mrf.mxu0
    %v6690 = vadd.f32 %v6601, %v6689
    %6691 = vmatmul.f32.gmra.mxu0 %v1605
    %v6692 = vpop.f32.mrf.mxu0
    %v6693 = vadd.f32 %v6604, %v6692
    %6694 = vmatmul.f32.gmra.mxu0 %v1608
    %v6695 = vpop.f32.mrf.mxu0
    %v6696 = vadd.f32 %v6607, %v6695
    %6697 = vmatmul.f32.gmra.mxu0 %v1611
    %v6698 = vpop.f32.mrf.mxu0
    %v6699 = vadd.f32 %v6610, %v6698
    %6700 = vmatmul.f32.gmra.mxu0 %v1614
    %v6701 = vpop.f32.mrf.mxu0
    %v6702 = vadd.f32 %v6613, %v6701
    %6703 = vmatmul.f32.gmra.mxu0 %v1617
    %v6704 = vpop.f32.mrf.mxu0
    %v6705 = vadd.f32 %v6616, %v6704
    %6706 = vmatmul.f32.gmra.mxu0 %v1620
    %v6707 = vpop.f32.mrf.mxu0
    %v6708 = vadd.f32 %v6619, %v6707
    %6709 = vmatmul.f32.gmra.mxu0 %v1623
    %v6710 = vpop.f32.mrf.mxu0
    %v6711 = vadd.f32 %v6622, %v6710
    %6712 = vmatmul.f32.gmra.mxu0 %v1626
    %v6713 = vpop.f32.mrf.mxu0
    %v6714 = vadd.f32 %v6625, %v6713
    %6715 = vmatmul.f32.gmra.mxu0 %v1629
    %v6716 = vpop.f32.mrf.mxu0
    %v6717 = vadd.f32 %v6628, %v6716
    %6718 = vmatmul.f32.gmra.mxu0 %v1632
    %v6719 = vpop.f32.mrf.mxu0
    %v6720 = vadd.f32 %v6631, %v6719
    %6721 = vmatmul.f32.gmra.mxu0 %v1635
    %v6722 = vpop.f32.mrf.mxu0
    %v6723 = vadd.f32 %v6634, %v6722
    %6724 = vmatmul.f32.gmra.mxu0 %v1638
    %v6725 = vpop.f32.mrf.mxu0
    %v6726 = vadd.f32 %v6637, %v6725
    %6727 = vmatmul.f32.gmra.mxu0 %v1641
    %v6728 = vpop.f32.mrf.mxu0
    %v6729 = vadd.f32 %v6640, %v6728
    %6730 = vdwg.mxu0
    %vm6731 = vcmask 80896
    %v6732 = vsel %vm6731, %v6660, 0.0
    %v6733 = vsel %vm6731, %v6663, 0.0
    %v6734 = vadd.f32 %v6732, %v6733
    %v6735 = vsel %vm6731, %v6666, 0.0
    %v6736 = vadd.f32 %v6734, %v6735
    %v6737 = vsel %vm6731, %v6669, 0.0
    %v6738 = vadd.f32 %v6736, %v6737
    %v6739 = vsel %vm6731, %v6672, 0.0
    %v6740 = vadd.f32 %v6738, %v6739
    %v6741 = vsel %vm6731, %v6675, 0.0
    %v6742 = vadd.f32 %v6740, %v6741
    %v6743 = vsel %vm6731, %v6678, 0.0
    %v6744 = vadd.f32 %v6742, %v6743
    %v6745 = vsel %vm6731, %v6681, 0.0
    %v6746 = vadd.f32 %v6744, %v6745
    %v6747 = vsel %vm6731, %v6684, 0.0
    %v6748 = vadd.f32 %v6746, %v6747
    %v6749 = vsel %vm6731, %v6687, 0.0
    %v6750 = vadd.f32 %v6748, %v6749
    %v6751 = vsel %vm6731, %v6690, 0.0
    %v6752 = vadd.f32 %v6750, %v6751
    %v6753 = vsel %vm6731, %v6693, 0.0
    %v6754 = vadd.f32 %v6752, %v6753
    %v6755 = vsel %vm6731, %v6696, 0.0
    %v6756 = vadd.f32 %v6754, %v6755
    %v6757 = vsel %vm6731, %v6699, 0.0
    %v6758 = vadd.f32 %v6756, %v6757
    %v6759 = vsel %vm6731, %v6702, 0.0
    %v6760 = vadd.f32 %v6758, %v6759
    %v6761 = vsel %vm6731, %v6705, 0.0
    %v6762 = vadd.f32 %v6760, %v6761
    %v6763 = vsel %vm6731, %v6708, 0.0
    %v6764 = vadd.f32 %v6762, %v6763
    %v6765 = vsel %vm6731, %v6711, 0.0
    %v6766 = vadd.f32 %v6764, %v6765
    %v6767 = vsel %vm6731, %v6714, 0.0
    %v6768 = vadd.f32 %v6766, %v6767
    %v6769 = vsel %vm6731, %v6717, 0.0
    %v6770 = vadd.f32 %v6768, %v6769
    %v6771 = vsel %vm6731, %v6720, 0.0
    %v6772 = vadd.f32 %v6770, %v6771
    %v6773 = vsel %vm6731, %v6723, 0.0
    %v6774 = vadd.f32 %v6772, %v6773
    %v6775 = vsel %vm6731, %v6726, 0.0
    %v6776 = vadd.f32 %v6774, %v6775
    %v6777 = vsel %vm6731, %v6729, 0.0
    %v6778 = vadd.f32 %v6776, %v6777
    %v6779 = vrot.slane %v6778, 4
    %v6780 = vadd.f32 %v6778, %v6779
    %v6781 = vrot.slane %v6780, 2
    %v6782 = vadd.f32 %v6780, %v6781
    %v6783 = vrot.slane %v6782, 1
    %v6784 = vadd.f32 %v6782, %v6783
    %v6785 = vmul.f32 %v6784, 0.0052083335
    %v6786 = vmul.f32 %v6660, %v6660
    %v6787 = vmul.f32 %v6663, %v6663
    %v6788 = vmul.f32 %v6666, %v6666
    %v6789 = vmul.f32 %v6669, %v6669
    %v6790 = vmul.f32 %v6672, %v6672
    %v6791 = vmul.f32 %v6675, %v6675
    %v6792 = vmul.f32 %v6678, %v6678
    %v6793 = vmul.f32 %v6681, %v6681
    %v6794 = vmul.f32 %v6684, %v6684
    %v6795 = vmul.f32 %v6687, %v6687
    %v6796 = vmul.f32 %v6690, %v6690
    %v6797 = vmul.f32 %v6693, %v6693
    %v6798 = vmul.f32 %v6696, %v6696
    %v6799 = vmul.f32 %v6699, %v6699
    %v6800 = vmul.f32 %v6702, %v6702
    %v6801 = vmul.f32 %v6705, %v6705
    %v6802 = vmul.f32 %v6708, %v6708
    %v6803 = vmul.f32 %v6711, %v6711
    %v6804 = vmul.f32 %v6714, %v6714
    %v6805 = vmul.f32 %v6717, %v6717
    %v6806 = vmul.f32 %v6720, %v6720
    %v6807 = vmul.f32 %v6723, %v6723
    %v6808 = vmul.f32 %v6726, %v6726
    %v6809 = vmul.f32 %v6729, %v6729
    %v6810 = vsel %vm6731, %v6786, 0.0
    %v6811 = vsel %vm6731, %v6787, 0.0
    %v6812 = vadd.f32 %v6810, %v6811
    %v6813 = vsel %vm6731, %v6788, 0.0
    %v6814 = vadd.f32 %v6812, %v6813
    %v6815 = vsel %vm6731, %v6789, 0.0
    %v6816 = vadd.f32 %v6814, %v6815
    %v6817 = vsel %vm6731, %v6790, 0.0
    %v6818 = vadd.f32 %v6816, %v6817
    %v6819 = vsel %vm6731, %v6791, 0.0
    %v6820 = vadd.f32 %v6818, %v6819
    %v6821 = vsel %vm6731, %v6792, 0.0
    %v6822 = vadd.f32 %v6820, %v6821
    %v6823 = vsel %vm6731, %v6793, 0.0
    %v6824 = vadd.f32 %v6822, %v6823
    %v6825 = vsel %vm6731, %v6794, 0.0
    %v6826 = vadd.f32 %v6824, %v6825
    %v6827 = vsel %vm6731, %v6795, 0.0
    %v6828 = vadd.f32 %v6826, %v6827
    %v6829 = vsel %vm6731, %v6796, 0.0
    %v6830 = vadd.f32 %v6828, %v6829
    %v6831 = vsel %vm6731, %v6797, 0.0
    %v6832 = vadd.f32 %v6830, %v6831
    %v6833 = vsel %vm6731, %v6798, 0.0
    %v6834 = vadd.f32 %v6832, %v6833
    %v6835 = vsel %vm6731, %v6799, 0.0
    %v6836 = vadd.f32 %v6834, %v6835
    %v6837 = vsel %vm6731, %v6800, 0.0
    %v6838 = vadd.f32 %v6836, %v6837
    %v6839 = vsel %vm6731, %v6801, 0.0
    %v6840 = vadd.f32 %v6838, %v6839
    %v6841 = vsel %vm6731, %v6802, 0.0
    %v6842 = vadd.f32 %v6840, %v6841
    %v6843 = vsel %vm6731, %v6803, 0.0
    %v6844 = vadd.f32 %v6842, %v6843
    %v6845 = vsel %vm6731, %v6804, 0.0
    %v6846 = vadd.f32 %v6844, %v6845
    %v6847 = vsel %vm6731, %v6805, 0.0
    %v6848 = vadd.f32 %v6846, %v6847
    %v6849 = vsel %vm6731, %v6806, 0.0
    %v6850 = vadd.f32 %v6848, %v6849
    %v6851 = vsel %vm6731, %v6807, 0.0
    %v6852 = vadd.f32 %v6850, %v6851
    %v6853 = vsel %vm6731, %v6808, 0.0
    %v6854 = vadd.f32 %v6852, %v6853
    %v6855 = vsel %vm6731, %v6809, 0.0
    %v6856 = vadd.f32 %v6854, %v6855
    %v6857 = vrot.slane %v6856, 4
    %v6858 = vadd.f32 %v6856, %v6857
    %v6859 = vrot.slane %v6858, 2
    %v6860 = vadd.f32 %v6858, %v6859
    %v6861 = vrot.slane %v6860, 1
    %v6862 = vadd.f32 %v6860, %v6861
    %v6863 = vmul.f32 %v6862, 0.0052083335
    %v6864 = vmul.f32 %v6785, %v6785
    %v6865 = vsub.f32 %v6863, %v6864
    %v6866 = vsub.f32 %v6660, %v6785
    %v6867 = vsub.f32 %v6663, %v6785
    %v6868 = vsub.f32 %v6666, %v6785
    %v6869 = vsub.f32 %v6669, %v6785
    %v6870 = vsub.f32 %v6672, %v6785
    %v6871 = vsub.f32 %v6675, %v6785
    %v6872 = vsub.f32 %v6678, %v6785
    %v6873 = vsub.f32 %v6681, %v6785
    %v6874 = vsub.f32 %v6684, %v6785
    %v6875 = vsub.f32 %v6687, %v6785
    %v6876 = vsub.f32 %v6690, %v6785
    %v6877 = vsub.f32 %v6693, %v6785
    %v6878 = vsub.f32 %v6696, %v6785
    %v6879 = vsub.f32 %v6699, %v6785
    %v6880 = vsub.f32 %v6702, %v6785
    %v6881 = vsub.f32 %v6705, %v6785
    %v6882 = vsub.f32 %v6708, %v6785
    %v6883 = vsub.f32 %v6711, %v6785
    %v6884 = vsub.f32 %v6714, %v6785
    %v6885 = vsub.f32 %v6717, %v6785
    %v6886 = vsub.f32 %v6720, %v6785
    %v6887 = vsub.f32 %v6723, %v6785
    %v6888 = vsub.f32 %v6726, %v6785
    %v6889 = vsub.f32 %v6729, %v6785
    %v6890 = vadd.f32 %v6865, 1e-05
    %v6891 = vrsqrt.pop %v6890
    %v6892 = vmul.f32 %v6891, %v6890
    %v6893 = vmul.f32 %v6892, %v6891
    %v6894 = vmul.f32 0.5, %v6893
    %v6895 = vsub.f32 1.5, %v6894
    %v6896 = vmul.f32 %v6891, %v6895
    %vm6897 = vweird.f32 %v6890
    %vm6898 = vweird.f32 %v6891
    %vm6899 = vmor %vm6897, %vm6898
    %v6900 = vsel %vm6899, %v6891, %v6896
    %v6901 = vmul.f32 %v6866, %v6900
    %v6902 = vmul.f32 %v6867, %v6900
    %v6903 = vmul.f32 %v6868, %v6900
    %v6904 = vmul.f32 %v6869, %v6900
    %v6905 = vmul.f32 %v6870, %v6900
    %v6906 = vmul.f32 %v6871, %v6900
    %v6907 = vmul.f32 %v6872, %v6900
    %v6908 = vmul.f32 %v6873, %v6900
    %v6909 = vmul.f32 %v6874, %v6900
    %v6910 = vmul.f32 %v6875, %v6900
    %v6911 = vmul.f32 %v6876, %v6900
    %v6912 = vmul.f32 %v6877, %v6900
    %v6913 = vmul.f32 %v6878, %v6900
    %v6914 = vmul.f32 %v6879, %v6900
    %v6915 = vmul.f32 %v6880, %v6900
    %v6916 = vmul.f32 %v6881, %v6900
    %v6917 = vmul.f32 %v6882, %v6900
    %v6918 = vmul.f32 %v6883, %v6900
    %v6919 = vmul.f32 %v6884, %v6900
    %v6920 = vmul.f32 %v6885, %v6900
    %v6921 = vmul.f32 %v6886, %v6900
    %v6922 = vmul.f32 %v6887, %v6900
    %v6923 = vmul.f32 %v6888, %v6900
    %v6924 = vmul.f32 %v6889, %v6900
    %v6925 = vld [vmem:[#allocation2 + $0x430] sm:$0x1]
    %v6926 = vperm.slane %v6925, 0
    %v6927 = vmul.f32 %v6901, %v6926
    %v6928 = vmul.f32 %v6902, %v6926
    %v6929 = vmul.f32 %v6903, %v6926
    %v6930 = vmul.f32 %v6904, %v6926
    %v6931 = vmul.f32 %v6905, %v6926
    %v6932 = vmul.f32 %v6906, %v6926
    %v6933 = vmul.f32 %v6907, %v6926
    %v6934 = vmul.f32 %v6908, %v6926
    %v6935 = vmul.f32 %v6909, %v6926
    %v6936 = vmul.f32 %v6910, %v6926
    %v6937 = vmul.f32 %v6911, %v6926
    %v6938 = vmul.f32 %v6912, %v6926
    %v6939 = vmul.f32 %v6913, %v6926
    %v6940 = vmul.f32 %v6914, %v6926
    %v6941 = vmul.f32 %v6915, %v6926
    %v6942 = vmul.f32 %v6916, %v6926
    %v6943 = vmul.f32 %v6917, %v6926
    %v6944 = vmul.f32 %v6918, %v6926
    %v6945 = vmul.f32 %v6919, %v6926
    %v6946 = vmul.f32 %v6920, %v6926
    %v6947 = vmul.f32 %v6921, %v6926
    %v6948 = vmul.f32 %v6922, %v6926
    %v6949 = vmul.f32 %v6923, %v6926
    %v6950 = vmul.f32 %v6924, %v6926
    %v6951 = vld [vmem:[#allocation2 + $0x438] sm:$0x1]
    %v6952 = vperm.slane %v6951, 0
    %v6953 = vadd.f32 %v6927, %v6952
    %v6954 = vadd.f32 %v6928, %v6952
    %v6955 = vadd.f32 %v6929, %v6952
    %v6956 = vadd.f32 %v6930, %v6952
    %v6957 = vadd.f32 %v6931, %v6952
    %v6958 = vadd.f32 %v6932, %v6952
    %v6959 = vadd.f32 %v6933, %v6952
    %v6960 = vadd.f32 %v6934, %v6952
    %v6961 = vadd.f32 %v6935, %v6952
    %v6962 = vadd.f32 %v6936, %v6952
    %v6963 = vadd.f32 %v6937, %v6952
    %v6964 = vadd.f32 %v6938, %v6952
    %v6965 = vadd.f32 %v6939, %v6952
    %v6966 = vadd.f32 %v6940, %v6952
    %v6967 = vadd.f32 %v6941, %v6952
    %v6968 = vadd.f32 %v6942, %v6952
    %v6969 = vadd.f32 %v6943, %v6952
    %v6970 = vadd.f32 %v6944, %v6952
    %v6971 = vadd.f32 %v6945, %v6952
    %v6972 = vadd.f32 %v6946, %v6952
    %v6973 = vadd.f32 %v6947, %v6952
    %v6974 = vadd.f32 %v6948, %v6952
    %v6975 = vadd.f32 %v6949, %v6952
    %v6976 = vadd.f32 %v6950, %v6952
    %v6977 = vmax.f32 %v6953, 0.0
    %v6978 = vmax.f32 %v6954, 0.0
    %v6979 = vmax.f32 %v6955, 0.0
    %v6980 = vmax.f32 %v6956, 0.0
    %v6981 = vmax.f32 %v6957, 0.0
    %v6982 = vmax.f32 %v6958, 0.0
    %v6983 = vmax.f32 %v6959, 0.0
    %v6984 = vmax.f32 %v6960, 0.0
    %v6985 = vmax.f32 %v6961, 0.0
    %v6986 = vmax.f32 %v6962, 0.0
    %v6987 = vmax.f32 %v6963, 0.0
    %v6988 = vmax.f32 %v6964, 0.0
    %v6989 = vmax.f32 %v6965, 0.0
    %v6990 = vmax.f32 %v6966, 0.0
    %v6991 = vmax.f32 %v6967, 0.0
    %v6992 = vmax.f32 %v6968, 0.0
    %v6993 = vmax.f32 %v6969, 0.0
    %v6994 = vmax.f32 %v6970, 0.0
    %v6995 = vmax.f32 %v6971, 0.0
    %v6996 = vmax.f32 %v6972, 0.0
    %v6997 = vmax.f32 %v6973, 0.0
    %v6998 = vmax.f32 %v6974, 0.0
    %v6999 = vmax.f32 %v6975, 0.0
    %v7000 = vmax.f32 %v6976, 0.0
    %7001 = vmatpush.msra.mxu0 %v6992
    %7002 = vmatpush.msra.mxu0 %v6991
    %7003 = vmatpush.msra.mxu0 %v6990
    %7004 = vmatpush.msra.mxu0 %v6989
    %7005 = vmatpush.msra.mxu0 %v6988
    %7006 = vmatpush.msra.mxu0 %v6987
    %7007 = vmatpush.msra.mxu0 %v6986
    %7008 = vmatpush.msra.mxu0 %v6985
    %7009 = vmatpush.msra.mxu0 %v6984
    %7010 = vmatpush.msra.mxu0 %v6983
    %7011 = vmatpush.msra.mxu0 %v6982
    %7012 = vmatpush.msra.mxu0 %v6981
    %7013 = vmatpush.msra.mxu0 %v6980
    %7014 = vmatpush.msra.mxu0 %v6979
    %7015 = vmatpush.msra.mxu0 %v6978
    %7016 = vmatpush.msra.mxu0 %v6977
    %7017 = vmatmul.f32.gmra.mxu0 %v31
    %v7018 = vpop.f32.mrf.mxu0
    %v7019 = vadd.f32 0.0, %v7018
    %7020 = vmatmul.f32.gmra.mxu0 %v33
    %v7021 = vpop.f32.mrf.mxu0
    %v7022 = vadd.f32 0.0, %v7021
    %7023 = vmatmul.f32.gmra.mxu0 %v35
    %v7024 = vpop.f32.mrf.mxu0
    %v7025 = vadd.f32 0.0, %v7024
    %7026 = vmatmul.f32.gmra.mxu0 %v37
    %v7027 = vpop.f32.mrf.mxu0
    %v7028 = vadd.f32 0.0, %v7027
    %7029 = vmatmul.f32.gmra.mxu0 %v39
    %v7030 = vpop.f32.mrf.mxu0
    %v7031 = vadd.f32 0.0, %v7030
    %7032 = vmatmul.f32.gmra.mxu0 %v41
    %v7033 = vpop.f32.mrf.mxu0
    %v7034 = vadd.f32 0.0, %v7033
    %7035 = vmatmul.f32.gmra.mxu0 %v43
    %v7036 = vpop.f32.mrf.mxu0
    %v7037 = vadd.f32 0.0, %v7036
    %7038 = vmatmul.f32.gmra.mxu0 %v45
    %v7039 = vpop.f32.mrf.mxu0
    %v7040 = vadd.f32 0.0, %v7039
    %7041 = vmatmul.f32.gmra.mxu0 %v47
    %v7042 = vpop.f32.mrf.mxu0
    %v7043 = vadd.f32 0.0, %v7042
    %7044 = vmatmul.f32.gmra.mxu0 %v49
    %v7045 = vpop.f32.mrf.mxu0
    %v7046 = vadd.f32 0.0, %v7045
    %7047 = vmatmul.f32.gmra.mxu0 %v51
    %v7048 = vpop.f32.mrf.mxu0
    %v7049 = vadd.f32 0.0, %v7048
    %7050 = vmatmul.f32.gmra.mxu0 %v53
    %v7051 = vpop.f32.mrf.mxu0
    %v7052 = vadd.f32 0.0, %v7051
    %7053 = vmatmul.f32.gmra.mxu0 %v55
    %v7054 = vpop.f32.mrf.mxu0
    %v7055 = vadd.f32 0.0, %v7054
    %7056 = vmatmul.f32.gmra.mxu0 %v57
    %v7057 = vpop.f32.mrf.mxu0
    %v7058 = vadd.f32 0.0, %v7057
    %7059 = vmatmul.f32.gmra.mxu0 %v59
    %v7060 = vpop.f32.mrf.mxu0
    %v7061 = vadd.f32 0.0, %v7060
    %7062 = vmatmul.f32.gmra.mxu0 %v61
    %v7063 = vpop.f32.mrf.mxu0
    %v7064 = vadd.f32 0.0, %v7063
    %7065 = vmatmul.f32.gmra.mxu0 %v63
    %v7066 = vpop.f32.mrf.mxu0
    %v7067 = vadd.f32 0.0, %v7066
    %7068 = vmatmul.f32.gmra.mxu0 %v65
    %v7069 = vpop.f32.mrf.mxu0
    %v7070 = vadd.f32 0.0, %v7069
    %7071 = vmatmul.f32.gmra.mxu0 %v67
    %v7072 = vpop.f32.mrf.mxu0
    %v7073 = vadd.f32 0.0, %v7072
    %7074 = vmatmul.f32.gmra.mxu0 %v69
    %v7075 = vpop.f32.mrf.mxu0
    %v7076 = vadd.f32 0.0, %v7075
    %7077 = vmatmul.f32.gmra.mxu0 %v71
    %v7078 = vpop.f32.mrf.mxu0
    %v7079 = vadd.f32 0.0, %v7078
    %7080 = vmatmul.f32.gmra.mxu0 %v73
    %v7081 = vpop.f32.mrf.mxu0
    %v7082 = vadd.f32 0.0, %v7081
    %7083 = vmatmul.f32.gmra.mxu0 %v75
    %v7084 = vpop.f32.mrf.mxu0
    %v7085 = vadd.f32 0.0, %v7084
    %7086 = vmatmul.f32.gmra.mxu0 %v77
    %v7087 = vpop.f32.mrf.mxu0
    %v7088 = vadd.f32 0.0, %v7087
    %7089 = vdwg.mxu0
    %7090 = vmatpush.msra.mxu0 0.0
    %7091 = vmatpush.msra.mxu0 0.0
    %7092 = vmatpush.msra.mxu0 0.0
    %7093 = vmatpush.msra.mxu0 0.0
    %7094 = vmatpush.msra.mxu0 0.0
    %7095 = vmatpush.msra.mxu0 0.0
    %7096 = vmatpush.msra.mxu0 0.0
    %7097 = vmatpush.msra.mxu0 0.0
    %7098 = vmatpush.msra.mxu0 %v7000
    %7099 = vmatpush.msra.mxu0 %v6999
    %7100 = vmatpush.msra.mxu0 %v6998
    %7101 = vmatpush.msra.mxu0 %v6997
    %7102 = vmatpush.msra.mxu0 %v6996
    %7103 = vmatpush.msra.mxu0 %v6995
    %7104 = vmatpush.msra.mxu0 %v6994
    %7105 = vmatpush.msra.mxu0 %v6993
    %7106 = vmatmul.f32.gmra.mxu0 %v1572
    %v7107 = vpop.f32.mrf.mxu0
    %v7108 = vadd.f32 %v7019, %v7107
    %7109 = vmatmul.f32.gmra.mxu0 %v1575
    %v7110 = vpop.f32.mrf.mxu0
    %v7111 = vadd.f32 %v7022, %v7110
    %7112 = vmatmul.f32.gmra.mxu0 %v1578
    %v7113 = vpop.f32.mrf.mxu0
    %v7114 = vadd.f32 %v7025, %v7113
    %7115 = vmatmul.f32.gmra.mxu0 %v1581
    %v7116 = vpop.f32.mrf.mxu0
    %v7117 = vadd.f32 %v7028, %v7116
    %7118 = vmatmul.f32.gmra.mxu0 %v1584
    %v7119 = vpop.f32.mrf.mxu0
    %v7120 = vadd.f32 %v7031, %v7119
    %7121 = vmatmul.f32.gmra.mxu0 %v1587
    %v7122 = vpop.f32.mrf.mxu0
    %v7123 = vadd.f32 %v7034, %v7122
    %7124 = vmatmul.f32.gmra.mxu0 %v1590
    %v7125 = vpop.f32.mrf.mxu0
    %v7126 = vadd.f32 %v7037, %v7125
    %7127 = vmatmul.f32.gmra.mxu0 %v1593
    %v7128 = vpop.f32.mrf.mxu0
    %v7129 = vadd.f32 %v7040, %v7128
    %7130 = vmatmul.f32.gmra.mxu0 %v1596
    %v7131 = vpop.f32.mrf.mxu0
    %v7132 = vadd.f32 %v7043, %v7131
    %7133 = vmatmul.f32.gmra.mxu0 %v1599
    %v7134 = vpop.f32.mrf.mxu0
    %v7135 = vadd.f32 %v7046, %v7134
    %7136 = vmatmul.f32.gmra.mxu0 %v1602
    %v7137 = vpop.f32.mrf.mxu0
    %v7138 = vadd.f32 %v7049, %v7137
    %7139 = vmatmul.f32.gmra.mxu0 %v1605
    %v7140 = vpop.f32.mrf.mxu0
    %v7141 = vadd.f32 %v7052, %v7140
    %7142 = vmatmul.f32.gmra.mxu0 %v1608
    %v7143 = vpop.f32.mrf.mxu0
    %v7144 = vadd.f32 %v7055, %v7143
    %7145 = vmatmul.f32.gmra.mxu0 %v1611
    %v7146 = vpop.f32.mrf.mxu0
    %v7147 = vadd.f32 %v7058, %v7146
    %7148 = vmatmul.f32.gmra.mxu0 %v1614
    %v7149 = vpop.f32.mrf.mxu0
    %v7150 = vadd.f32 %v7061, %v7149
    %7151 = vmatmul.f32.gmra.mxu0 %v1617
    %v7152 = vpop.f32.mrf.mxu0
    %v7153 = vadd.f32 %v7064, %v7152
    %7154 = vmatmul.f32.gmra.mxu0 %v1620
    %v7155 = vpop.f32.mrf.mxu0
    %v7156 = vadd.f32 %v7067, %v7155
    %7157 = vmatmul.f32.gmra.mxu0 %v1623
    %v7158 = vpop.f32.mrf.mxu0
    %v7159 = vadd.f32 %v7070, %v7158
    %7160 = vmatmul.f32.gmra.mxu0 %v1626
    %v7161 = vpop.f32.mrf.mxu0
    %v7162 = vadd.f32 %v7073, %v7161
    %7163 = vmatmul.f32.gmra.mxu0 %v1629
    %v7164 = vpop.f32.mrf.mxu0
    %v7165 = vadd.f32 %v7076, %v7164
    %7166 = vmatmul.f32.gmra.mxu0 %v1632
    %v7167 = vpop.f32.mrf.mxu0
    %v7168 = vadd.f32 %v7079, %v7167
    %7169 = vmatmul.f32.gmra.mxu0 %v1635
    %v7170 = vpop.f32.mrf.mxu0
    %v7171 = vadd.f32 %v7082, %v7170
    %7172 = vmatmul.f32.gmra.mxu0 %v1638
    %v7173 = vpop.f32.mrf.mxu0
    %v7174 = vadd.f32 %v7085, %v7173
    %7175 = vmatmul.f32.gmra.mxu0 %v1641
    %v7176 = vpop.f32.mrf.mxu0
    %v7177 = vadd.f32 %v7088, %v7176
    %7178 = vdwg.mxu0
    %v7179 = vld [vmem:[#allocation2 + $0x440] sm:$0xff]
    %v7180 = vld [vmem:[#allocation2 + $0x448] sm:$0x3]
    %v7181 = vld [vmem:[#allocation2 + $0x450] sm:$0x1]
    %v7182 = vperm.slane %v7181, 0
    %v7184 = vsel %vm6731, %v7108, 0
    %v7187 = vsel %vm6731, %v7111, 0
    %v7190 = vsel %vm6731, %v7114, 0
    %v7193 = vsel %vm6731, %v7117, 0
    %v7196 = vsel %vm6731, %v7120, 0
    %v7199 = vsel %vm6731, %v7123, 0
    %v7202 = vsel %vm6731, %v7126, 0
    %v7205 = vsel %vm6731, %v7129, 0
    %v7208 = vsel %vm6731, %v7132, 0
    %v7211 = vsel %vm6731, %v7135, 0
    %v7214 = vsel %vm6731, %v7138, 0
    %v7217 = vsel %vm6731, %v7141, 0
    %v7220 = vsel %vm6731, %v7144, 0
    %v7223 = vsel %vm6731, %v7147, 0
    %v7226 = vsel %vm6731, %v7150, 0
    %v7229 = vsel %vm6731, %v7153, 0
    %v7232 = vsel %vm6731, %v7156, 0
    %v7235 = vsel %vm6731, %v7159, 0
    %v7238 = vsel %vm6731, %v7162, 0
    %v7241 = vsel %vm6731, %v7165, 0
    %v7244 = vsel %vm6731, %v7168, 0
    %v7247 = vsel %vm6731, %v7171, 0
    %v7250 = vsel %vm6731, %v7174, 0
    %v7253 = vsel %vm6731, %v7177, 0
    %vm7255 = vcmask 1041408
    %v7257 = vsel %vm7255, %v7180, 0
    %7259 = vmatpush.msra.mxu0 0.0
    %7260 = vmatpush.msra.mxu0 0.0
    %7261 = vmatpush.msra.mxu0 0.0
    %7262 = vmatpush.msra.mxu0 0.0
    %7263 = vmatpush.msra.mxu0 0.0
    %7264 = vmatpush.msra.mxu0 0.0
    %7265 = vmatpush.msra.mxu0 0.0
    %7266 = vmatpush.msra.mxu0 0.0
    %7267 = vmatpush.msra.mxu0 0.0
    %7268 = vmatpush.msra.mxu0 0.0
    %7269 = vmatpush.msra.mxu0 0.0
    %7270 = vmatpush.msra.mxu0 0.0
    %7271 = vmatpush.msra.mxu0 0.0
    %7272 = vmatpush.msra.mxu0 0.0
    %7273 = vmatpush.msra.mxu0 %v7257
    %7274 = vmatpush.msra.mxu0 %v7179
    %7275 = vmatmul.f32.gmra.mxu0 %v7184
    %v7276 = vpop.f32.mrf.mxu0
    %v7277 = vadd.f32 %v7182, %v7276
    %7278 = vmatmul.f32.gmra.mxu0 %v7187
    %v7279 = vpop.f32.mrf.mxu0
    %v7280 = vadd.f32 %v7182, %v7279
    %7281 = vmatmul.f32.gmra.mxu0 %v7190
    %v7282 = vpop.f32.mrf.mxu0
    %v7283 = vadd.f32 %v7182, %v7282
    %7284 = vmatmul.f32.gmra.mxu0 %v7193
    %v7285 = vpop.f32.mrf.mxu0
    %v7286 = vadd.f32 %v7182, %v7285
    %7287 = vmatmul.f32.gmra.mxu0 %v7196
    %v7288 = vpop.f32.mrf.mxu0
    %v7289 = vadd.f32 %v7182, %v7288
    %7290 = vmatmul.f32.gmra.mxu0 %v7199
    %v7291 = vpop.f32.mrf.mxu0
    %v7292 = vadd.f32 %v7182, %v7291
    %7293 = vmatmul.f32.gmra.mxu0 %v7202
    %v7294 = vpop.f32.mrf.mxu0
    %v7295 = vadd.f32 %v7182, %v7294
    %7296 = vmatmul.f32.gmra.mxu0 %v7205
    %v7297 = vpop.f32.mrf.mxu0
    %v7298 = vadd.f32 %v7182, %v7297
    %7299 = vmatmul.f32.gmra.mxu0 %v7208
    %v7300 = vpop.f32.mrf.mxu0
    %v7301 = vadd.f32 %v7182, %v7300
    %7302 = vmatmul.f32.gmra.mxu0 %v7211
    %v7303 = vpop.f32.mrf.mxu0
    %v7304 = vadd.f32 %v7182, %v7303
    %7305 = vmatmul.f32.gmra.mxu0 %v7214
    %v7306 = vpop.f32.mrf.mxu0
    %v7307 = vadd.f32 %v7182, %v7306
    %7308 = vmatmul.f32.gmra.mxu0 %v7217
    %v7309 = vpop.f32.mrf.mxu0
    %v7310 = vadd.f32 %v7182, %v7309
    %7311 = vmatmul.f32.gmra.mxu0 %v7220
    %v7312 = vpop.f32.mrf.mxu0
    %v7313 = vadd.f32 %v7182, %v7312
    %7314 = vmatmul.f32.gmra.mxu0 %v7223
    %v7315 = vpop.f32.mrf.mxu0
    %v7316 = vadd.f32 %v7182, %v7315
    %7317 = vmatmul.f32.gmra.mxu0 %v7226
    %v7318 = vpop.f32.mrf.mxu0
    %v7319 = vadd.f32 %v7182, %v7318
    %7320 = vmatmul.f32.gmra.mxu0 %v7229
    %v7321 = vpop.f32.mrf.mxu0
    %v7322 = vadd.f32 %v7182, %v7321
    %7323 = vmatmul.f32.gmra.mxu0 %v7232
    %v7324 = vpop.f32.mrf.mxu0
    %v7325 = vadd.f32 %v7182, %v7324
    %7326 = vmatmul.f32.gmra.mxu0 %v7235
    %v7327 = vpop.f32.mrf.mxu0
    %v7328 = vadd.f32 %v7182, %v7327
    %7329 = vmatmul.f32.gmra.mxu0 %v7238
    %v7330 = vpop.f32.mrf.mxu0
    %v7331 = vadd.f32 %v7182, %v7330
    %7332 = vmatmul.f32.gmra.mxu0 %v7241
    %v7333 = vpop.f32.mrf.mxu0
    %v7334 = vadd.f32 %v7182, %v7333
    %7335 = vmatmul.f32.gmra.mxu0 %v7244
    %v7336 = vpop.f32.mrf.mxu0
    %v7337 = vadd.f32 %v7182, %v7336
    %7338 = vmatmul.f32.gmra.mxu0 %v7247
    %v7339 = vpop.f32.mrf.mxu0
    %v7340 = vadd.f32 %v7182, %v7339
    %7341 = vmatmul.f32.gmra.mxu0 %v7250
    %v7342 = vpop.f32.mrf.mxu0
    %v7343 = vadd.f32 %v7182, %v7342
    %7344 = vmatmul.f32.gmra.mxu0 %v7253
    %v7345 = vpop.f32.mrf.mxu0
    %v7346 = vadd.f32 %v7182, %v7345
    %7347 = vdwg.mxu0
    %v7348 = vsel %vm6731, %v7277, 0.0
    %v7349 = vsel %vm6731, %v7280, 0.0
    %v7350 = vadd.f32 %v7348, %v7349
    %v7351 = vsel %vm6731, %v7283, 0.0
    %v7352 = vadd.f32 %v7350, %v7351
    %v7353 = vsel %vm6731, %v7286, 0.0
    %v7354 = vadd.f32 %v7352, %v7353
    %v7355 = vsel %vm6731, %v7289, 0.0
    %v7356 = vadd.f32 %v7354, %v7355
    %v7357 = vsel %vm6731, %v7292, 0.0
    %v7358 = vadd.f32 %v7356, %v7357
    %v7359 = vsel %vm6731, %v7295, 0.0
    %v7360 = vadd.f32 %v7358, %v7359
    %v7361 = vsel %vm6731, %v7298, 0.0
    %v7362 = vadd.f32 %v7360, %v7361
    %v7363 = vsel %vm6731, %v7301, 0.0
    %v7364 = vadd.f32 %v7362, %v7363
    %v7365 = vsel %vm6731, %v7304, 0.0
    %v7366 = vadd.f32 %v7364, %v7365
    %v7367 = vsel %vm6731, %v7307, 0.0
    %v7368 = vadd.f32 %v7366, %v7367
    %v7369 = vsel %vm6731, %v7310, 0.0
    %v7370 = vadd.f32 %v7368, %v7369
    %v7371 = vsel %vm6731, %v7313, 0.0
    %v7372 = vadd.f32 %v7370, %v7371
    %v7373 = vsel %vm6731, %v7316, 0.0
    %v7374 = vadd.f32 %v7372, %v7373
    %v7375 = vsel %vm6731, %v7319, 0.0
    %v7376 = vadd.f32 %v7374, %v7375
    %v7377 = vsel %vm6731, %v7322, 0.0
    %v7378 = vadd.f32 %v7376, %v7377
    %v7379 = vsel %vm6731, %v7325, 0.0
    %v7380 = vadd.f32 %v7378, %v7379
    %v7381 = vsel %vm6731, %v7328, 0.0
    %v7382 = vadd.f32 %v7380, %v7381
    %v7383 = vsel %vm6731, %v7331, 0.0
    %v7384 = vadd.f32 %v7382, %v7383
    %v7385 = vsel %vm6731, %v7334, 0.0
    %v7386 = vadd.f32 %v7384, %v7385
    %v7387 = vsel %vm6731, %v7337, 0.0
    %v7388 = vadd.f32 %v7386, %v7387
    %v7389 = vsel %vm6731, %v7340, 0.0
    %v7390 = vadd.f32 %v7388, %v7389
    %v7391 = vsel %vm6731, %v7343, 0.0
    %v7392 = vadd.f32 %v7390, %v7391
    %v7393 = vsel %vm6731, %v7346, 0.0
    %v7394 = vadd.f32 %v7392, %v7393
    %v7395 = vrot.slane %v7394, 4
    %v7396 = vadd.f32 %v7394, %v7395
    %v7397 = vrot.slane %v7396, 2
    %v7398 = vadd.f32 %v7396, %v7397
    %v7399 = vrot.slane %v7398, 1
    %v7400 = vadd.f32 %v7398, %v7399
    %v7401 = vmul.f32 %v7400, 0.0052083335
    %v7402 = vmul.f32 %v7277, %v7277
    %v7403 = vmul.f32 %v7280, %v7280
    %v7404 = vmul.f32 %v7283, %v7283
    %v7405 = vmul.f32 %v7286, %v7286
    %v7406 = vmul.f32 %v7289, %v7289
    %v7407 = vmul.f32 %v7292, %v7292
    %v7408 = vmul.f32 %v7295, %v7295
    %v7409 = vmul.f32 %v7298, %v7298
    %v7410 = vmul.f32 %v7301, %v7301
    %v7411 = vmul.f32 %v7304, %v7304
    %v7412 = vmul.f32 %v7307, %v7307
    %v7413 = vmul.f32 %v7310, %v7310
    %v7414 = vmul.f32 %v7313, %v7313
    %v7415 = vmul.f32 %v7316, %v7316
    %v7416 = vmul.f32 %v7319, %v7319
    %v7417 = vmul.f32 %v7322, %v7322
    %v7418 = vmul.f32 %v7325, %v7325
    %v7419 = vmul.f32 %v7328, %v7328
    %v7420 = vmul.f32 %v7331, %v7331
    %v7421 = vmul.f32 %v7334, %v7334
    %v7422 = vmul.f32 %v7337, %v7337
    %v7423 = vmul.f32 %v7340, %v7340
    %v7424 = vmul.f32 %v7343, %v7343
    %v7425 = vmul.f32 %v7346, %v7346
    %v7426 = vsel %vm6731, %v7402, 0.0
    %v7427 = vsel %vm6731, %v7403, 0.0
    %v7428 = vadd.f32 %v7426, %v7427
    %v7429 = vsel %vm6731, %v7404, 0.0
    %v7430 = vadd.f32 %v7428, %v7429
    %v7431 = vsel %vm6731, %v7405, 0.0
    %v7432 = vadd.f32 %v7430, %v7431
    %v7433 = vsel %vm6731, %v7406, 0.0
    %v7434 = vadd.f32 %v7432, %v7433
    %v7435 = vsel %vm6731, %v7407, 0.0
    %v7436 = vadd.f32 %v7434, %v7435
    %v7437 = vsel %vm6731, %v7408, 0.0
    %v7438 = vadd.f32 %v7436, %v7437
    %v7439 = vsel %vm6731, %v7409, 0.0
    %v7440 = vadd.f32 %v7438, %v7439
    %v7441 = vsel %vm6731, %v7410, 0.0
    %v7442 = vadd.f32 %v7440, %v7441
    %v7443 = vsel %vm6731, %v7411, 0.0
    %v7444 = vadd.f32 %v7442, %v7443
    %v7445 = vsel %vm6731, %v7412, 0.0
    %v7446 = vadd.f32 %v7444, %v7445
    %v7447 = vsel %vm6731, %v7413, 0.0
    %v7448 = vadd.f32 %v7446, %v7447
    %v7449 = vsel %vm6731, %v7414, 0.0
    %v7450 = vadd.f32 %v7448, %v7449
    %v7451 = vsel %vm6731, %v7415, 0.0
    %v7452 = vadd.f32 %v7450, %v7451
    %v7453 = vsel %vm6731, %v7416, 0.0
    %v7454 = vadd.f32 %v7452, %v7453
    %v7455 = vsel %vm6731, %v7417, 0.0
    %v7456 = vadd.f32 %v7454, %v7455
    %v7457 = vsel %vm6731, %v7418, 0.0
    %v7458 = vadd.f32 %v7456, %v7457
    %v7459 = vsel %vm6731, %v7419, 0.0
    %v7460 = vadd.f32 %v7458, %v7459
    %v7461 = vsel %vm6731, %v7420, 0.0
    %v7462 = vadd.f32 %v7460, %v7461
    %v7463 = vsel %vm6731, %v7421, 0.0
    %v7464 = vadd.f32 %v7462, %v7463
    %v7465 = vsel %vm6731, %v7422, 0.0
    %v7466 = vadd.f32 %v7464, %v7465
    %v7467 = vsel %vm6731, %v7423, 0.0
    %v7468 = vadd.f32 %v7466, %v7467
    %v7469 = vsel %vm6731, %v7424, 0.0
    %v7470 = vadd.f32 %v7468, %v7469
    %v7471 = vsel %vm6731, %v7425, 0.0
    %v7472 = vadd.f32 %v7470, %v7471
    %v7473 = vrot.slane %v7472, 4
    %v7474 = vadd.f32 %v7472, %v7473
    %v7475 = vrot.slane %v7474, 2
    %v7476 = vadd.f32 %v7474, %v7475
    %v7477 = vrot.slane %v7476, 1
    %v7478 = vadd.f32 %v7476, %v7477
    %v7479 = vmul.f32 %v7478, 0.0052083335
    %v7480 = vmul.f32 %v7401, %v7401
    %v7481 = vsub.f32 %v7479, %v7480
    %v7482 = vsub.f32 %v7277, %v7401
    %v7483 = vsub.f32 %v7280, %v7401
    %v7484 = vsub.f32 %v7283, %v7401
    %v7485 = vsub.f32 %v7286, %v7401
    %v7486 = vsub.f32 %v7289, %v7401
    %v7487 = vsub.f32 %v7292, %v7401
    %v7488 = vsub.f32 %v7295, %v7401
    %v7489 = vsub.f32 %v7298, %v7401
    %v7490 = vsub.f32 %v7301, %v7401
    %v7491 = vsub.f32 %v7304, %v7401
    %v7492 = vsub.f32 %v7307, %v7401
    %v7493 = vsub.f32 %v7310, %v7401
    %v7494 = vsub.f32 %v7313, %v7401
    %v7495 = vsub.f32 %v7316, %v7401
    %v7496 = vsub.f32 %v7319, %v7401
    %v7497 = vsub.f32 %v7322, %v7401
    %v7498 = vsub.f32 %v7325, %v7401
    %v7499 = vsub.f32 %v7328, %v7401
    %v7500 = vsub.f32 %v7331, %v7401
    %v7501 = vsub.f32 %v7334, %v7401
    %v7502 = vsub.f32 %v7337, %v7401
    %v7503 = vsub.f32 %v7340, %v7401
    %v7504 = vsub.f32 %v7343, %v7401
    %v7505 = vsub.f32 %v7346, %v7401
    %v7506 = vadd.f32 %v7481, 1e-05
    %v7507 = vrsqrt.pop %v7506
    %v7508 = vmul.f32 %v7507, %v7506
    %v7509 = vmul.f32 %v7508, %v7507
    %v7510 = vmul.f32 0.5, %v7509
    %v7511 = vsub.f32 1.5, %v7510
    %v7512 = vmul.f32 %v7507, %v7511
    %vm7513 = vweird.f32 %v7506
    %vm7514 = vweird.f32 %v7507
    %vm7515 = vmor %vm7513, %vm7514
    %v7516 = vsel %vm7515, %v7507, %v7512
    %v7517 = vmul.f32 %v7482, %v7516
    %v7518 = vmul.f32 %v7483, %v7516
    %v7519 = vmul.f32 %v7484, %v7516
    %v7520 = vmul.f32 %v7485, %v7516
    %v7521 = vmul.f32 %v7486, %v7516
    %v7522 = vmul.f32 %v7487, %v7516
    %v7523 = vmul.f32 %v7488, %v7516
    %v7524 = vmul.f32 %v7489, %v7516
    %v7525 = vmul.f32 %v7490, %v7516
    %v7526 = vmul.f32 %v7491, %v7516
    %v7527 = vmul.f32 %v7492, %v7516
    %v7528 = vmul.f32 %v7493, %v7516
    %v7529 = vmul.f32 %v7494, %v7516
    %v7530 = vmul.f32 %v7495, %v7516
    %v7531 = vmul.f32 %v7496, %v7516
    %v7532 = vmul.f32 %v7497, %v7516
    %v7533 = vmul.f32 %v7498, %v7516
    %v7534 = vmul.f32 %v7499, %v7516
    %v7535 = vmul.f32 %v7500, %v7516
    %v7536 = vmul.f32 %v7501, %v7516
    %v7537 = vmul.f32 %v7502, %v7516
    %v7538 = vmul.f32 %v7503, %v7516
    %v7539 = vmul.f32 %v7504, %v7516
    %v7540 = vmul.f32 %v7505, %v7516
    %v7541 = vld [vmem:[#allocation2 + $0x458] sm:$0x1]
    %v7542 = vperm.slane %v7541, 0
    %v7543 = vmul.f32 %v7517, %v7542
    %v7544 = vmul.f32 %v7518, %v7542
    %v7545 = vmul.f32 %v7519, %v7542
    %v7546 = vmul.f32 %v7520, %v7542
    %v7547 = vmul.f32 %v7521, %v7542
    %v7548 = vmul.f32 %v7522, %v7542
    %v7549 = vmul.f32 %v7523, %v7542
    %v7550 = vmul.f32 %v7524, %v7542
    %v7551 = vmul.f32 %v7525, %v7542
    %v7552 = vmul.f32 %v7526, %v7542
    %v7553 = vmul.f32 %v7527, %v7542
    %v7554 = vmul.f32 %v7528, %v7542
    %v7555 = vmul.f32 %v7529, %v7542
    %v7556 = vmul.f32 %v7530, %v7542
    %v7557 = vmul.f32 %v7531, %v7542
    %v7558 = vmul.f32 %v7532, %v7542
    %v7559 = vmul.f32 %v7533, %v7542
    %v7560 = vmul.f32 %v7534, %v7542
    %v7561 = vmul.f32 %v7535, %v7542
    %v7562 = vmul.f32 %v7536, %v7542
    %v7563 = vmul.f32 %v7537, %v7542
    %v7564 = vmul.f32 %v7538, %v7542
    %v7565 = vmul.f32 %v7539, %v7542
    %v7566 = vmul.f32 %v7540, %v7542
    %v7567 = vld [vmem:[#allocation2 + $0x460] sm:$0x1]
    %v7568 = vperm.slane %v7567, 0
    %v7569 = vadd.f32 %v7543, %v7568
    %v7570 = vadd.f32 %v7544, %v7568
    %v7571 = vadd.f32 %v7545, %v7568
    %v7572 = vadd.f32 %v7546, %v7568
    %v7573 = vadd.f32 %v7547, %v7568
    %v7574 = vadd.f32 %v7548, %v7568
    %v7575 = vadd.f32 %v7549, %v7568
    %v7576 = vadd.f32 %v7550, %v7568
    %v7577 = vadd.f32 %v7551, %v7568
    %v7578 = vadd.f32 %v7552, %v7568
    %v7579 = vadd.f32 %v7553, %v7568
    %v7580 = vadd.f32 %v7554, %v7568
    %v7581 = vadd.f32 %v7555, %v7568
    %v7582 = vadd.f32 %v7556, %v7568
    %v7583 = vadd.f32 %v7557, %v7568
    %v7584 = vadd.f32 %v7558, %v7568
    %v7585 = vadd.f32 %v7559, %v7568
    %v7586 = vadd.f32 %v7560, %v7568
    %v7587 = vadd.f32 %v7561, %v7568
    %v7588 = vadd.f32 %v7562, %v7568
    %v7589 = vadd.f32 %v7563, %v7568
    %v7590 = vadd.f32 %v7564, %v7568
    %v7591 = vadd.f32 %v7565, %v7568
    %v7592 = vadd.f32 %v7566, %v7568
    %v7593 = vmax.f32 %v7569, 0.0
    %v7594 = vmax.f32 %v7570, 0.0
    %v7595 = vmax.f32 %v7571, 0.0
    %v7596 = vmax.f32 %v7572, 0.0
    %v7597 = vmax.f32 %v7573, 0.0
    %v7598 = vmax.f32 %v7574, 0.0
    %v7599 = vmax.f32 %v7575, 0.0
    %v7600 = vmax.f32 %v7576, 0.0
    %v7601 = vmax.f32 %v7577, 0.0
    %v7602 = vmax.f32 %v7578, 0.0
    %v7603 = vmax.f32 %v7579, 0.0
    %v7604 = vmax.f32 %v7580, 0.0
    %v7605 = vmax.f32 %v7581, 0.0
    %v7606 = vmax.f32 %v7582, 0.0
    %v7607 = vmax.f32 %v7583, 0.0
    %v7608 = vmax.f32 %v7584, 0.0
    %v7609 = vmax.f32 %v7585, 0.0
    %v7610 = vmax.f32 %v7586, 0.0
    %v7611 = vmax.f32 %v7587, 0.0
    %v7612 = vmax.f32 %v7588, 0.0
    %v7613 = vmax.f32 %v7589, 0.0
    %v7614 = vmax.f32 %v7590, 0.0
    %v7615 = vmax.f32 %v7591, 0.0
    %v7616 = vmax.f32 %v7592, 0.0
    %7617 = vmatpush.msra.mxu0 %v7608
    %7618 = vmatpush.msra.mxu0 %v7607
    %7619 = vmatpush.msra.mxu0 %v7606
    %7620 = vmatpush.msra.mxu0 %v7605
    %7621 = vmatpush.msra.mxu0 %v7604
    %7622 = vmatpush.msra.mxu0 %v7603
    %7623 = vmatpush.msra.mxu0 %v7602
    %7624 = vmatpush.msra.mxu0 %v7601
    %7625 = vmatpush.msra.mxu0 %v7600
    %7626 = vmatpush.msra.mxu0 %v7599
    %7627 = vmatpush.msra.mxu0 %v7598
    %7628 = vmatpush.msra.mxu0 %v7597
    %7629 = vmatpush.msra.mxu0 %v7596
    %7630 = vmatpush.msra.mxu0 %v7595
    %7631 = vmatpush.msra.mxu0 %v7594
    %7632 = vmatpush.msra.mxu0 %v7593
    %7633 = vmatmul.f32.gmra.mxu0 %v31
    %v7634 = vpop.f32.mrf.mxu0
    %v7635 = vadd.f32 0.0, %v7634
    %7636 = vmatmul.f32.gmra.mxu0 %v33
    %v7637 = vpop.f32.mrf.mxu0
    %v7638 = vadd.f32 0.0, %v7637
    %7639 = vmatmul.f32.gmra.mxu0 %v35
    %v7640 = vpop.f32.mrf.mxu0
    %v7641 = vadd.f32 0.0, %v7640
    %7642 = vmatmul.f32.gmra.mxu0 %v37
    %v7643 = vpop.f32.mrf.mxu0
    %v7644 = vadd.f32 0.0, %v7643
    %7645 = vmatmul.f32.gmra.mxu0 %v39
    %v7646 = vpop.f32.mrf.mxu0
    %v7647 = vadd.f32 0.0, %v7646
    %7648 = vmatmul.f32.gmra.mxu0 %v41
    %v7649 = vpop.f32.mrf.mxu0
    %v7650 = vadd.f32 0.0, %v7649
    %7651 = vmatmul.f32.gmra.mxu0 %v43
    %v7652 = vpop.f32.mrf.mxu0
    %v7653 = vadd.f32 0.0, %v7652
    %7654 = vmatmul.f32.gmra.mxu0 %v45
    %v7655 = vpop.f32.mrf.mxu0
    %v7656 = vadd.f32 0.0, %v7655
    %7657 = vmatmul.f32.gmra.mxu0 %v47
    %v7658 = vpop.f32.mrf.mxu0
    %v7659 = vadd.f32 0.0, %v7658
    %7660 = vmatmul.f32.gmra.mxu0 %v49
    %v7661 = vpop.f32.mrf.mxu0
    %v7662 = vadd.f32 0.0, %v7661
    %7663 = vmatmul.f32.gmra.mxu0 %v51
    %v7664 = vpop.f32.mrf.mxu0
    %v7665 = vadd.f32 0.0, %v7664
    %7666 = vmatmul.f32.gmra.mxu0 %v53
    %v7667 = vpop.f32.mrf.mxu0
    %v7668 = vadd.f32 0.0, %v7667
    %7669 = vmatmul.f32.gmra.mxu0 %v55
    %v7670 = vpop.f32.mrf.mxu0
    %v7671 = vadd.f32 0.0, %v7670
    %7672 = vmatmul.f32.gmra.mxu0 %v57
    %v7673 = vpop.f32.mrf.mxu0
    %v7674 = vadd.f32 0.0, %v7673
    %7675 = vmatmul.f32.gmra.mxu0 %v59
    %v7676 = vpop.f32.mrf.mxu0
    %v7677 = vadd.f32 0.0, %v7676
    %7678 = vmatmul.f32.gmra.mxu0 %v61
    %v7679 = vpop.f32.mrf.mxu0
    %v7680 = vadd.f32 0.0, %v7679
    %7681 = vmatmul.f32.gmra.mxu0 %v63
    %v7682 = vpop.f32.mrf.mxu0
    %v7683 = vadd.f32 0.0, %v7682
    %7684 = vmatmul.f32.gmra.mxu0 %v65
    %v7685 = vpop.f32.mrf.mxu0
    %v7686 = vadd.f32 0.0, %v7685
    %7687 = vmatmul.f32.gmra.mxu0 %v67
    %v7688 = vpop.f32.mrf.mxu0
    %v7689 = vadd.f32 0.0, %v7688
    %7690 = vmatmul.f32.gmra.mxu0 %v69
    %v7691 = vpop.f32.mrf.mxu0
    %v7692 = vadd.f32 0.0, %v7691
    %7693 = vmatmul.f32.gmra.mxu0 %v71
    %v7694 = vpop.f32.mrf.mxu0
    %v7695 = vadd.f32 0.0, %v7694
    %7696 = vmatmul.f32.gmra.mxu0 %v73
    %v7697 = vpop.f32.mrf.mxu0
    %v7698 = vadd.f32 0.0, %v7697
    %7699 = vmatmul.f32.gmra.mxu0 %v75
    %v7700 = vpop.f32.mrf.mxu0
    %v7701 = vadd.f32 0.0, %v7700
    %7702 = vmatmul.f32.gmra.mxu0 %v77
    %v7703 = vpop.f32.mrf.mxu0
    %v7704 = vadd.f32 0.0, %v7703
    %7705 = vdwg.mxu0
    %7706 = vmatpush.msra.mxu0 0.0
    %7707 = vmatpush.msra.mxu0 0.0
    %7708 = vmatpush.msra.mxu0 0.0
    %7709 = vmatpush.msra.mxu0 0.0
    %7710 = vmatpush.msra.mxu0 0.0
    %7711 = vmatpush.msra.mxu0 0.0
    %7712 = vmatpush.msra.mxu0 0.0
    %7713 = vmatpush.msra.mxu0 0.0
    %7714 = vmatpush.msra.mxu0 %v7616
    %7715 = vmatpush.msra.mxu0 %v7615
    %7716 = vmatpush.msra.mxu0 %v7614
    %7717 = vmatpush.msra.mxu0 %v7613
    %7718 = vmatpush.msra.mxu0 %v7612
    %7719 = vmatpush.msra.mxu0 %v7611
    %7720 = vmatpush.msra.mxu0 %v7610
    %7721 = vmatpush.msra.mxu0 %v7609
    %7722 = vmatmul.f32.gmra.mxu0 %v1572
    %v7723 = vpop.f32.mrf.mxu0
    %v7724 = vadd.f32 %v7635, %v7723
    %7725 = vmatmul.f32.gmra.mxu0 %v1575
    %v7726 = vpop.f32.mrf.mxu0
    %v7727 = vadd.f32 %v7638, %v7726
    %7728 = vmatmul.f32.gmra.mxu0 %v1578
    %v7729 = vpop.f32.mrf.mxu0
    %v7730 = vadd.f32 %v7641, %v7729
    %7731 = vmatmul.f32.gmra.mxu0 %v1581
    %v7732 = vpop.f32.mrf.mxu0
    %v7733 = vadd.f32 %v7644, %v7732
    %7734 = vmatmul.f32.gmra.mxu0 %v1584
    %v7735 = vpop.f32.mrf.mxu0
    %v7736 = vadd.f32 %v7647, %v7735
    %7737 = vmatmul.f32.gmra.mxu0 %v1587
    %v7738 = vpop.f32.mrf.mxu0
    %v7739 = vadd.f32 %v7650, %v7738
    %7740 = vmatmul.f32.gmra.mxu0 %v1590
    %v7741 = vpop.f32.mrf.mxu0
    %v7742 = vadd.f32 %v7653, %v7741
    %7743 = vmatmul.f32.gmra.mxu0 %v1593
    %v7744 = vpop.f32.mrf.mxu0
    %v7745 = vadd.f32 %v7656, %v7744
    %7746 = vmatmul.f32.gmra.mxu0 %v1596
    %v7747 = vpop.f32.mrf.mxu0
    %v7748 = vadd.f32 %v7659, %v7747
    %7749 = vmatmul.f32.gmra.mxu0 %v1599
    %v7750 = vpop.f32.mrf.mxu0
    %v7751 = vadd.f32 %v7662, %v7750
    %7752 = vmatmul.f32.gmra.mxu0 %v1602
    %v7753 = vpop.f32.mrf.mxu0
    %v7754 = vadd.f32 %v7665, %v7753
    %7755 = vmatmul.f32.gmra.mxu0 %v1605
    %v7756 = vpop.f32.mrf.mxu0
    %v7757 = vadd.f32 %v7668, %v7756
    %7758 = vmatmul.f32.gmra.mxu0 %v1608
    %v7759 = vpop.f32.mrf.mxu0
    %v7760 = vadd.f32 %v7671, %v7759
    %7761 = vmatmul.f32.gmra.mxu0 %v1611
    %v7762 = vpop.f32.mrf.mxu0
    %v7763 = vadd.f32 %v7674, %v7762
    %7764 = vmatmul.f32.gmra.mxu0 %v1614
    %v7765 = vpop.f32.mrf.mxu0
    %v7766 = vadd.f32 %v7677, %v7765
    %7767 = vmatmul.f32.gmra.mxu0 %v1617
    %v7768 = vpop.f32.mrf.mxu0
    %v7769 = vadd.f32 %v7680, %v7768
    %7770 = vmatmul.f32.gmra.mxu0 %v1620
    %v7771 = vpop.f32.mrf.mxu0
    %v7772 = vadd.f32 %v7683, %v7771
    %7773 = vmatmul.f32.gmra.mxu0 %v1623
    %v7774 = vpop.f32.mrf.mxu0
    %v7775 = vadd.f32 %v7686, %v7774
    %7776 = vmatmul.f32.gmra.mxu0 %v1626
    %v7777 = vpop.f32.mrf.mxu0
    %v7778 = vadd.f32 %v7689, %v7777
    %7779 = vmatmul.f32.gmra.mxu0 %v1629
    %v7780 = vpop.f32.mrf.mxu0
    %v7781 = vadd.f32 %v7692, %v7780
    %7782 = vmatmul.f32.gmra.mxu0 %v1632
    %v7783 = vpop.f32.mrf.mxu0
    %v7784 = vadd.f32 %v7695, %v7783
    %7785 = vmatmul.f32.gmra.mxu0 %v1635
    %v7786 = vpop.f32.mrf.mxu0
    %v7787 = vadd.f32 %v7698, %v7786
    %7788 = vmatmul.f32.gmra.mxu0 %v1638
    %v7789 = vpop.f32.mrf.mxu0
    %v7790 = vadd.f32 %v7701, %v7789
    %7791 = vmatmul.f32.gmra.mxu0 %v1641
    %v7792 = vpop.f32.mrf.mxu0
    %v7793 = vadd.f32 %v7704, %v7792
    %7794 = vdwg.mxu0
    %v7795 = vld [vmem:[#allocation2 + $0x468] sm:$0xff]
    %v7796 = vld [vmem:[#allocation2 + $0x470] sm:$0x3]
    %v7797 = vld [vmem:[#allocation2 + $0x478] sm:$0x1]
    %v7798 = vperm.slane %v7797, 0
    %v7800 = vsel %vm6731, %v7724, 0
    %v7803 = vsel %vm6731, %v7727, 0
    %v7806 = vsel %vm6731, %v7730, 0
    %v7809 = vsel %vm6731, %v7733, 0
    %v7812 = vsel %vm6731, %v7736, 0
    %v7815 = vsel %vm6731, %v7739, 0
    %v7818 = vsel %vm6731, %v7742, 0
    %v7821 = vsel %vm6731, %v7745, 0
    %v7824 = vsel %vm6731, %v7748, 0
    %v7827 = vsel %vm6731, %v7751, 0
    %v7830 = vsel %vm6731, %v7754, 0
    %v7833 = vsel %vm6731, %v7757, 0
    %v7836 = vsel %vm6731, %v7760, 0
    %v7839 = vsel %vm6731, %v7763, 0
    %v7842 = vsel %vm6731, %v7766, 0
    %v7845 = vsel %vm6731, %v7769, 0
    %v7848 = vsel %vm6731, %v7772, 0
    %v7851 = vsel %vm6731, %v7775, 0
    %v7854 = vsel %vm6731, %v7778, 0
    %v7857 = vsel %vm6731, %v7781, 0
    %v7860 = vsel %vm6731, %v7784, 0
    %v7863 = vsel %vm6731, %v7787, 0
    %v7866 = vsel %vm6731, %v7790, 0
    %v7869 = vsel %vm6731, %v7793, 0
    %v7872 = vsel %vm7255, %v7796, 0
    %7874 = vmatpush.msra.mxu0 0.0
    %7875 = vmatpush.msra.mxu0 0.0
    %7876 = vmatpush.msra.mxu0 0.0
    %7877 = vmatpush.msra.mxu0 0.0
    %7878 = vmatpush.msra.mxu0 0.0
    %7879 = vmatpush.msra.mxu0 0.0
    %7880 = vmatpush.msra.mxu0 0.0
    %7881 = vmatpush.msra.mxu0 0.0
    %7882 = vmatpush.msra.mxu0 0.0
    %7883 = vmatpush.msra.mxu0 0.0
    %7884 = vmatpush.msra.mxu0 0.0
    %7885 = vmatpush.msra.mxu0 0.0
    %7886 = vmatpush.msra.mxu0 0.0
    %7887 = vmatpush.msra.mxu0 0.0
    %7888 = vmatpush.msra.mxu0 %v7872
    %7889 = vmatpush.msra.mxu0 %v7795
    %7890 = vmatmul.f32.gmra.mxu0 %v7800
    %v7891 = vpop.f32.mrf.mxu0
    %v7892 = vadd.f32 %v7798, %v7891
    %7893 = vmatmul.f32.gmra.mxu0 %v7803
    %v7894 = vpop.f32.mrf.mxu0
    %v7895 = vadd.f32 %v7798, %v7894
    %7896 = vmatmul.f32.gmra.mxu0 %v7806
    %v7897 = vpop.f32.mrf.mxu0
    %v7898 = vadd.f32 %v7798, %v7897
    %7899 = vmatmul.f32.gmra.mxu0 %v7809
    %v7900 = vpop.f32.mrf.mxu0
    %v7901 = vadd.f32 %v7798, %v7900
    %7902 = vmatmul.f32.gmra.mxu0 %v7812
    %v7903 = vpop.f32.mrf.mxu0
    %v7904 = vadd.f32 %v7798, %v7903
    %7905 = vmatmul.f32.gmra.mxu0 %v7815
    %v7906 = vpop.f32.mrf.mxu0
    %v7907 = vadd.f32 %v7798, %v7906
    %7908 = vmatmul.f32.gmra.mxu0 %v7818
    %v7909 = vpop.f32.mrf.mxu0
    %v7910 = vadd.f32 %v7798, %v7909
    %7911 = vmatmul.f32.gmra.mxu0 %v7821
    %v7912 = vpop.f32.mrf.mxu0
    %v7913 = vadd.f32 %v7798, %v7912
    %7914 = vmatmul.f32.gmra.mxu0 %v7824
    %v7915 = vpop.f32.mrf.mxu0
    %v7916 = vadd.f32 %v7798, %v7915
    %7917 = vmatmul.f32.gmra.mxu0 %v7827
    %v7918 = vpop.f32.mrf.mxu0
    %v7919 = vadd.f32 %v7798, %v7918
    %7920 = vmatmul.f32.gmra.mxu0 %v7830
    %v7921 = vpop.f32.mrf.mxu0
    %v7922 = vadd.f32 %v7798, %v7921
    %7923 = vmatmul.f32.gmra.mxu0 %v7833
    %v7924 = vpop.f32.mrf.mxu0
    %v7925 = vadd.f32 %v7798, %v7924
    %7926 = vmatmul.f32.gmra.mxu0 %v7836
    %v7927 = vpop.f32.mrf.mxu0
    %v7928 = vadd.f32 %v7798, %v7927
    %7929 = vmatmul.f32.gmra.mxu0 %v7839
    %v7930 = vpop.f32.mrf.mxu0
    %v7931 = vadd.f32 %v7798, %v7930
    %7932 = vmatmul.f32.gmra.mxu0 %v7842
    %v7933 = vpop.f32.mrf.mxu0
    %v7934 = vadd.f32 %v7798, %v7933
    %7935 = vmatmul.f32.gmra.mxu0 %v7845
    %v7936 = vpop.f32.mrf.mxu0
    %v7937 = vadd.f32 %v7798, %v7936
    %7938 = vmatmul.f32.gmra.mxu0 %v7848
    %v7939 = vpop.f32.mrf.mxu0
    %v7940 = vadd.f32 %v7798, %v7939
    %7941 = vmatmul.f32.gmra.mxu0 %v7851
    %v7942 = vpop.f32.mrf.mxu0
    %v7943 = vadd.f32 %v7798, %v7942
    %7944 = vmatmul.f32.gmra.mxu0 %v7854
    %v7945 = vpop.f32.mrf.mxu0
    %v7946 = vadd.f32 %v7798, %v7945
    %7947 = vmatmul.f32.gmra.mxu0 %v7857
    %v7948 = vpop.f32.mrf.mxu0
    %v7949 = vadd.f32 %v7798, %v7948
    %7950 = vmatmul.f32.gmra.mxu0 %v7860
    %v7951 = vpop.f32.mrf.mxu0
    %v7952 = vadd.f32 %v7798, %v7951
    %7953 = vmatmul.f32.gmra.mxu0 %v7863
    %v7954 = vpop.f32.mrf.mxu0
    %v7955 = vadd.f32 %v7798, %v7954
    %7956 = vmatmul.f32.gmra.mxu0 %v7866
    %v7957 = vpop.f32.mrf.mxu0
    %v7958 = vadd.f32 %v7798, %v7957
    %7959 = vmatmul.f32.gmra.mxu0 %v7869
    %v7960 = vpop.f32.mrf.mxu0
    %v7961 = vadd.f32 %v7798, %v7960
    %7962 = vdwg.mxu0
    %v7963 = vsel %vm6731, %v7892, 0.0
    %v7964 = vsel %vm6731, %v7895, 0.0
    %v7965 = vadd.f32 %v7963, %v7964
    %v7966 = vsel %vm6731, %v7898, 0.0
    %v7967 = vadd.f32 %v7965, %v7966
    %v7968 = vsel %vm6731, %v7901, 0.0
    %v7969 = vadd.f32 %v7967, %v7968
    %v7970 = vsel %vm6731, %v7904, 0.0
    %v7971 = vadd.f32 %v7969, %v7970
    %v7972 = vsel %vm6731, %v7907, 0.0
    %v7973 = vadd.f32 %v7971, %v7972
    %v7974 = vsel %vm6731, %v7910, 0.0
    %v7975 = vadd.f32 %v7973, %v7974
    %v7976 = vsel %vm6731, %v7913, 0.0
    %v7977 = vadd.f32 %v7975, %v7976
    %v7978 = vsel %vm6731, %v7916, 0.0
    %v7979 = vadd.f32 %v7977, %v7978
    %v7980 = vsel %vm6731, %v7919, 0.0
    %v7981 = vadd.f32 %v7979, %v7980
    %v7982 = vsel %vm6731, %v7922, 0.0
    %v7983 = vadd.f32 %v7981, %v7982
    %v7984 = vsel %vm6731, %v7925, 0.0
    %v7985 = vadd.f32 %v7983, %v7984
    %v7986 = vsel %vm6731, %v7928, 0.0
    %v7987 = vadd.f32 %v7985, %v7986
    %v7988 = vsel %vm6731, %v7931, 0.0
    %v7989 = vadd.f32 %v7987, %v7988
    %v7990 = vsel %vm6731, %v7934, 0.0
    %v7991 = vadd.f32 %v7989, %v7990
    %v7992 = vsel %vm6731, %v7937, 0.0
    %v7993 = vadd.f32 %v7991, %v7992
    %v7994 = vsel %vm6731, %v7940, 0.0
    %v7995 = vadd.f32 %v7993, %v7994
    %v7996 = vsel %vm6731, %v7943, 0.0
    %v7997 = vadd.f32 %v7995, %v7996
    %v7998 = vsel %vm6731, %v7946, 0.0
    %v7999 = vadd.f32 %v7997, %v7998
    %v8000 = vsel %vm6731, %v7949, 0.0
    %v8001 = vadd.f32 %v7999, %v8000
    %v8002 = vsel %vm6731, %v7952, 0.0
    %v8003 = vadd.f32 %v8001, %v8002
    %v8004 = vsel %vm6731, %v7955, 0.0
    %v8005 = vadd.f32 %v8003, %v8004
    %v8006 = vsel %vm6731, %v7958, 0.0
    %v8007 = vadd.f32 %v8005, %v8006
    %v8008 = vsel %vm6731, %v7961, 0.0
    %v8009 = vadd.f32 %v8007, %v8008
    %v8010 = vrot.slane %v8009, 4
    %v8011 = vadd.f32 %v8009, %v8010
    %v8012 = vrot.slane %v8011, 2
    %v8013 = vadd.f32 %v8011, %v8012
    %v8014 = vrot.slane %v8013, 1
    %v8015 = vadd.f32 %v8013, %v8014
    %v8016 = vmul.f32 %v8015, 0.0052083335
    %v8017 = vmul.f32 %v7892, %v7892
    %v8018 = vmul.f32 %v7895, %v7895
    %v8019 = vmul.f32 %v7898, %v7898
    %v8020 = vmul.f32 %v7901, %v7901
    %v8021 = vmul.f32 %v7904, %v7904
    %v8022 = vmul.f32 %v7907, %v7907
    %v8023 = vmul.f32 %v7910, %v7910
    %v8024 = vmul.f32 %v7913, %v7913
    %v8025 = vmul.f32 %v7916, %v7916
    %v8026 = vmul.f32 %v7919, %v7919
    %v8027 = vmul.f32 %v7922, %v7922
    %v8028 = vmul.f32 %v7925, %v7925
    %v8029 = vmul.f32 %v7928, %v7928
    %v8030 = vmul.f32 %v7931, %v7931
    %v8031 = vmul.f32 %v7934, %v7934
    %v8032 = vmul.f32 %v7937, %v7937
    %v8033 = vmul.f32 %v7940, %v7940
    %v8034 = vmul.f32 %v7943, %v7943
    %v8035 = vmul.f32 %v7946, %v7946
    %v8036 = vmul.f32 %v7949, %v7949
    %v8037 = vmul.f32 %v7952, %v7952
    %v8038 = vmul.f32 %v7955, %v7955
    %v8039 = vmul.f32 %v7958, %v7958
    %v8040 = vmul.f32 %v7961, %v7961
    %v8041 = vsel %vm6731, %v8017, 0.0
    %v8042 = vsel %vm6731, %v8018, 0.0
    %v8043 = vadd.f32 %v8041, %v8042
    %v8044 = vsel %vm6731, %v8019, 0.0
    %v8045 = vadd.f32 %v8043, %v8044
    %v8046 = vsel %vm6731, %v8020, 0.0
    %v8047 = vadd.f32 %v8045, %v8046
    %v8048 = vsel %vm6731, %v8021, 0.0
    %v8049 = vadd.f32 %v8047, %v8048
    %v8050 = vsel %vm6731, %v8022, 0.0
    %v8051 = vadd.f32 %v8049, %v8050
    %v8052 = vsel %vm6731, %v8023, 0.0
    %v8053 = vadd.f32 %v8051, %v8052
    %v8054 = vsel %vm6731, %v8024, 0.0
    %v8055 = vadd.f32 %v8053, %v8054
    %v8056 = vsel %vm6731, %v8025, 0.0
    %v8057 = vadd.f32 %v8055, %v8056
    %v8058 = vsel %vm6731, %v8026, 0.0
    %v8059 = vadd.f32 %v8057, %v8058
    %v8060 = vsel %vm6731, %v8027, 0.0
    %v8061 = vadd.f32 %v8059, %v8060
    %v8062 = vsel %vm6731, %v8028, 0.0
    %v8063 = vadd.f32 %v8061, %v8062
    %v8064 = vsel %vm6731, %v8029, 0.0
    %v8065 = vadd.f32 %v8063, %v8064
    %v8066 = vsel %vm6731, %v8030, 0.0
    %v8067 = vadd.f32 %v8065, %v8066
    %v8068 = vsel %vm6731, %v8031, 0.0
    %v8069 = vadd.f32 %v8067, %v8068
    %v8070 = vsel %vm6731, %v8032, 0.0
    %v8071 = vadd.f32 %v8069, %v8070
    %v8072 = vsel %vm6731, %v8033, 0.0
    %v8073 = vadd.f32 %v8071, %v8072
    %v8074 = vsel %vm6731, %v8034, 0.0
    %v8075 = vadd.f32 %v8073, %v8074
    %v8076 = vsel %vm6731, %v8035, 0.0
    %v8077 = vadd.f32 %v8075, %v8076
    %v8078 = vsel %vm6731, %v8036, 0.0
    %v8079 = vadd.f32 %v8077, %v8078
    %v8080 = vsel %vm6731, %v8037, 0.0
    %v8081 = vadd.f32 %v8079, %v8080
    %v8082 = vsel %vm6731, %v8038, 0.0
    %v8083 = vadd.f32 %v8081, %v8082
    %v8084 = vsel %vm6731, %v8039, 0.0
    %v8085 = vadd.f32 %v8083, %v8084
    %v8086 = vsel %vm6731, %v8040, 0.0
    %v8087 = vadd.f32 %v8085, %v8086
    %v8088 = vrot.slane %v8087, 4
    %v8089 = vadd.f32 %v8087, %v8088
    %v8090 = vrot.slane %v8089, 2
    %v8091 = vadd.f32 %v8089, %v8090
    %v8092 = vrot.slane %v8091, 1
    %v8093 = vadd.f32 %v8091, %v8092
    %v8094 = vmul.f32 %v8093, 0.0052083335
    %v8095 = vmul.f32 %v8016, %v8016
    %v8096 = vsub.f32 %v8094, %v8095
    %v8097 = vsub.f32 %v7892, %v8016
    %v8098 = vsub.f32 %v7895, %v8016
    %v8099 = vsub.f32 %v7898, %v8016
    %v8100 = vsub.f32 %v7901, %v8016
    %v8101 = vsub.f32 %v7904, %v8016
    %v8102 = vsub.f32 %v7907, %v8016
    %v8103 = vsub.f32 %v7910, %v8016
    %v8104 = vsub.f32 %v7913, %v8016
    %v8105 = vsub.f32 %v7916, %v8016
    %v8106 = vsub.f32 %v7919, %v8016
    %v8107 = vsub.f32 %v7922, %v8016
    %v8108 = vsub.f32 %v7925, %v8016
    %v8109 = vsub.f32 %v7928, %v8016
    %v8110 = vsub.f32 %v7931, %v8016
    %v8111 = vsub.f32 %v7934, %v8016
    %v8112 = vsub.f32 %v7937, %v8016
    %v8113 = vsub.f32 %v7940, %v8016
    %v8114 = vsub.f32 %v7943, %v8016
    %v8115 = vsub.f32 %v7946, %v8016
    %v8116 = vsub.f32 %v7949, %v8016
    %v8117 = vsub.f32 %v7952, %v8016
    %v8118 = vsub.f32 %v7955, %v8016
    %v8119 = vsub.f32 %v7958, %v8016
    %v8120 = vsub.f32 %v7961, %v8016
    %v8121 = vadd.f32 %v8096, 1e-05
    %v8122 = vrsqrt.pop %v8121
    %v8123 = vmul.f32 %v8122, %v8121
    %v8124 = vmul.f32 %v8123, %v8122
    %v8125 = vmul.f32 0.5, %v8124
    %v8126 = vsub.f32 1.5, %v8125
    %v8127 = vmul.f32 %v8122, %v8126
    %vm8128 = vweird.f32 %v8121
    %vm8129 = vweird.f32 %v8122
    %vm8130 = vmor %vm8128, %vm8129
    %v8131 = vsel %vm8130, %v8122, %v8127
    %v8132 = vmul.f32 %v8097, %v8131
    %v8133 = vmul.f32 %v8098, %v8131
    %v8134 = vmul.f32 %v8099, %v8131
    %v8135 = vmul.f32 %v8100, %v8131
    %v8136 = vmul.f32 %v8101, %v8131
    %v8137 = vmul.f32 %v8102, %v8131
    %v8138 = vmul.f32 %v8103, %v8131
    %v8139 = vmul.f32 %v8104, %v8131
    %v8140 = vmul.f32 %v8105, %v8131
    %v8141 = vmul.f32 %v8106, %v8131
    %v8142 = vmul.f32 %v8107, %v8131
    %v8143 = vmul.f32 %v8108, %v8131
    %v8144 = vmul.f32 %v8109, %v8131
    %v8145 = vmul.f32 %v8110, %v8131
    %v8146 = vmul.f32 %v8111, %v8131
    %v8147 = vmul.f32 %v8112, %v8131
    %v8148 = vmul.f32 %v8113, %v8131
    %v8149 = vmul.f32 %v8114, %v8131
    %v8150 = vmul.f32 %v8115, %v8131
    %v8151 = vmul.f32 %v8116, %v8131
    %v8152 = vmul.f32 %v8117, %v8131
    %v8153 = vmul.f32 %v8118, %v8131
    %v8154 = vmul.f32 %v8119, %v8131
    %v8155 = vmul.f32 %v8120, %v8131
    %v8156 = vld [vmem:[#allocation2 + $0x480] sm:$0x1]
    %v8157 = vperm.slane %v8156, 0
    %v8158 = vmul.f32 %v8132, %v8157
    %v8159 = vmul.f32 %v8133, %v8157
    %v8160 = vmul.f32 %v8134, %v8157
    %v8161 = vmul.f32 %v8135, %v8157
    %v8162 = vmul.f32 %v8136, %v8157
    %v8163 = vmul.f32 %v8137, %v8157
    %v8164 = vmul.f32 %v8138, %v8157
    %v8165 = vmul.f32 %v8139, %v8157
    %v8166 = vmul.f32 %v8140, %v8157
    %v8167 = vmul.f32 %v8141, %v8157
    %v8168 = vmul.f32 %v8142, %v8157
    %v8169 = vmul.f32 %v8143, %v8157
    %v8170 = vmul.f32 %v8144, %v8157
    %v8171 = vmul.f32 %v8145, %v8157
    %v8172 = vmul.f32 %v8146, %v8157
    %v8173 = vmul.f32 %v8147, %v8157
    %v8174 = vmul.f32 %v8148, %v8157
    %v8175 = vmul.f32 %v8149, %v8157
    %v8176 = vmul.f32 %v8150, %v8157
    %v8177 = vmul.f32 %v8151, %v8157
    %v8178 = vmul.f32 %v8152, %v8157
    %v8179 = vmul.f32 %v8153, %v8157
    %v8180 = vmul.f32 %v8154, %v8157
    %v8181 = vmul.f32 %v8155, %v8157
    %v8182 = vld [vmem:[#allocation2 + $0x488] sm:$0x1]
    %v8183 = vperm.slane %v8182, 0
    %v8184 = vadd.f32 %v8158, %v8183
    %v8185 = vadd.f32 %v8159, %v8183
    %v8186 = vadd.f32 %v8160, %v8183
    %v8187 = vadd.f32 %v8161, %v8183
    %v8188 = vadd.f32 %v8162, %v8183
    %v8189 = vadd.f32 %v8163, %v8183
    %v8190 = vadd.f32 %v8164, %v8183
    %v8191 = vadd.f32 %v8165, %v8183
    %v8192 = vadd.f32 %v8166, %v8183
    %v8193 = vadd.f32 %v8167, %v8183
    %v8194 = vadd.f32 %v8168, %v8183
    %v8195 = vadd.f32 %v8169, %v8183
    %v8196 = vadd.f32 %v8170, %v8183
    %v8197 = vadd.f32 %v8171, %v8183
    %v8198 = vadd.f32 %v8172, %v8183
    %v8199 = vadd.f32 %v8173, %v8183
    %v8200 = vadd.f32 %v8174, %v8183
    %v8201 = vadd.f32 %v8175, %v8183
    %v8202 = vadd.f32 %v8176, %v8183
    %v8203 = vadd.f32 %v8177, %v8183
    %v8204 = vadd.f32 %v8178, %v8183
    %v8205 = vadd.f32 %v8179, %v8183
    %v8206 = vadd.f32 %v8180, %v8183
    %v8207 = vadd.f32 %v8181, %v8183
    %v8208 = vmax.f32 %v8184, 0.0
    %v8209 = vmax.f32 %v8185, 0.0
    %v8210 = vmax.f32 %v8186, 0.0
    %v8211 = vmax.f32 %v8187, 0.0
    %v8212 = vmax.f32 %v8188, 0.0
    %v8213 = vmax.f32 %v8189, 0.0
    %v8214 = vmax.f32 %v8190, 0.0
    %v8215 = vmax.f32 %v8191, 0.0
    %v8216 = vmax.f32 %v8192, 0.0
    %v8217 = vmax.f32 %v8193, 0.0
    %v8218 = vmax.f32 %v8194, 0.0
    %v8219 = vmax.f32 %v8195, 0.0
    %v8220 = vmax.f32 %v8196, 0.0
    %v8221 = vmax.f32 %v8197, 0.0
    %v8222 = vmax.f32 %v8198, 0.0
    %v8223 = vmax.f32 %v8199, 0.0
    %v8224 = vmax.f32 %v8200, 0.0
    %v8225 = vmax.f32 %v8201, 0.0
    %v8226 = vmax.f32 %v8202, 0.0
    %v8227 = vmax.f32 %v8203, 0.0
    %v8228 = vmax.f32 %v8204, 0.0
    %v8229 = vmax.f32 %v8205, 0.0
    %v8230 = vmax.f32 %v8206, 0.0
    %v8231 = vmax.f32 %v8207, 0.0
    %v8232 = vld [vmem:[#allocation2 + $0x490] sm:$0xff]
    %v8233 = vld [vmem:[#allocation2 + $0x498] sm:$0x3]
    %v8235 = vsel %vm6731, %v8208, 0
    %v8238 = vsel %vm6731, %v8209, 0
    %v8241 = vsel %vm6731, %v8210, 0
    %v8244 = vsel %vm6731, %v8211, 0
    %v8247 = vsel %vm6731, %v8212, 0
    %v8250 = vsel %vm6731, %v8213, 0
    %v8253 = vsel %vm6731, %v8214, 0
    %v8256 = vsel %vm6731, %v8215, 0
    %v8259 = vsel %vm6731, %v8216, 0
    %v8262 = vsel %vm6731, %v8217, 0
    %v8265 = vsel %vm6731, %v8218, 0
    %v8268 = vsel %vm6731, %v8219, 0
    %v8271 = vsel %vm6731, %v8220, 0
    %v8274 = vsel %vm6731, %v8221, 0
    %v8277 = vsel %vm6731, %v8222, 0
    %v8280 = vsel %vm6731, %v8223, 0
    %v8283 = vsel %vm6731, %v8224, 0
    %v8286 = vsel %vm6731, %v8225, 0
    %v8289 = vsel %vm6731, %v8226, 0
    %v8292 = vsel %vm6731, %v8227, 0
    %v8295 = vsel %vm6731, %v8228, 0
    %v8298 = vsel %vm6731, %v8229, 0
    %v8301 = vsel %vm6731, %v8230, 0
    %v8304 = vsel %vm6731, %v8231, 0
    %v8307 = vsel %vm7255, %v8233, 0
    %8309 = vmatpush.msra.mxu0 0.0
    %8310 = vmatpush.msra.mxu0 0.0
    %8311 = vmatpush.msra.mxu0 0.0
    %8312 = vmatpush.msra.mxu0 0.0
    %8313 = vmatpush.msra.mxu0 0.0
    %8314 = vmatpush.msra.mxu0 0.0
    %8315 = vmatpush.msra.mxu0 0.0
    %8316 = vmatpush.msra.mxu0 0.0
    %8317 = vmatpush.msra.mxu0 0.0
    %8318 = vmatpush.msra.mxu0 0.0
    %8319 = vmatpush.msra.mxu0 0.0
    %8320 = vmatpush.msra.mxu0 0.0
    %8321 = vmatpush.msra.mxu0 0.0
    %8322 = vmatpush.msra.mxu0 0.0
    %8323 = vmatpush.msra.mxu0 %v8307
    %8324 = vmatpush.msra.mxu0 %v8232
    %8325 = vmatmul.f32.gmra.mxu0 %v8235
    %v8326 = vpop.f32.mrf.mxu0
    %v8327 = vadd.f32 0.0, %v8326
    %8328 = vmatmul.f32.gmra.mxu0 %v8238
    %v8329 = vpop.f32.mrf.mxu0
    %v8330 = vadd.f32 0.0, %v8329
    %8331 = vmatmul.f32.gmra.mxu0 %v8241
    %v8332 = vpop.f32.mrf.mxu0
    %v8333 = vadd.f32 0.0, %v8332
    %8334 = vmatmul.f32.gmra.mxu0 %v8244
    %v8335 = vpop.f32.mrf.mxu0
    %v8336 = vadd.f32 0.0, %v8335
    %8337 = vmatmul.f32.gmra.mxu0 %v8247
    %v8338 = vpop.f32.mrf.mxu0
    %v8339 = vadd.f32 0.0, %v8338
    %8340 = vmatmul.f32.gmra.mxu0 %v8250
    %v8341 = vpop.f32.mrf.mxu0
    %v8342 = vadd.f32 0.0, %v8341
    %8343 = vmatmul.f32.gmra.mxu0 %v8253
    %v8344 = vpop.f32.mrf.mxu0
    %v8345 = vadd.f32 0.0, %v8344
    %8346 = vmatmul.f32.gmra.mxu0 %v8256
    %v8347 = vpop.f32.mrf.mxu0
    %v8348 = vadd.f32 0.0, %v8347
    %8349 = vmatmul.f32.gmra.mxu0 %v8259
    %v8350 = vpop.f32.mrf.mxu0
    %v8351 = vadd.f32 0.0, %v8350
    %8352 = vmatmul.f32.gmra.mxu0 %v8262
    %v8353 = vpop.f32.mrf.mxu0
    %v8354 = vadd.f32 0.0, %v8353
    %8355 = vmatmul.f32.gmra.mxu0 %v8265
    %v8356 = vpop.f32.mrf.mxu0
    %v8357 = vadd.f32 0.0, %v8356
    %8358 = vmatmul.f32.gmra.mxu0 %v8268
    %v8359 = vpop.f32.mrf.mxu0
    %v8360 = vadd.f32 0.0, %v8359
    %8361 = vmatmul.f32.gmra.mxu0 %v8271
    %v8362 = vpop.f32.mrf.mxu0
    %v8363 = vadd.f32 0.0, %v8362
    %8364 = vmatmul.f32.gmra.mxu0 %v8274
    %v8365 = vpop.f32.mrf.mxu0
    %v8366 = vadd.f32 0.0, %v8365
    %8367 = vmatmul.f32.gmra.mxu0 %v8277
    %v8368 = vpop.f32.mrf.mxu0
    %v8369 = vadd.f32 0.0, %v8368
    %8370 = vmatmul.f32.gmra.mxu0 %v8280
    %v8371 = vpop.f32.mrf.mxu0
    %v8372 = vadd.f32 0.0, %v8371
    %8373 = vmatmul.f32.gmra.mxu0 %v8283
    %v8374 = vpop.f32.mrf.mxu0
    %v8375 = vadd.f32 0.0, %v8374
    %8376 = vmatmul.f32.gmra.mxu0 %v8286
    %v8377 = vpop.f32.mrf.mxu0
    %v8378 = vadd.f32 0.0, %v8377
    %8379 = vmatmul.f32.gmra.mxu0 %v8289
    %v8380 = vpop.f32.mrf.mxu0
    %v8381 = vadd.f32 0.0, %v8380
    %8382 = vmatmul.f32.gmra.mxu0 %v8292
    %v8383 = vpop.f32.mrf.mxu0
    %v8384 = vadd.f32 0.0, %v8383
    %8385 = vmatmul.f32.gmra.mxu0 %v8295
    %v8386 = vpop.f32.mrf.mxu0
    %v8387 = vadd.f32 0.0, %v8386
    %8388 = vmatmul.f32.gmra.mxu0 %v8298
    %v8389 = vpop.f32.mrf.mxu0
    %v8390 = vadd.f32 0.0, %v8389
    %8391 = vmatmul.f32.gmra.mxu0 %v8301
    %v8392 = vpop.f32.mrf.mxu0
    %v8393 = vadd.f32 0.0, %v8392
    %8394 = vmatmul.f32.gmra.mxu0 %v8304
    %v8395 = vpop.f32.mrf.mxu0
    %v8396 = vadd.f32 0.0, %v8395
    %8397 = vdwg.mxu0
    %8421 = vrot.lane.b32.xlu0 0.0, 10
    %v8422 = vpop.permute.xlu0 %8421
    %8423 = vrot.lane.b32.xlu0 %v8327, 10
    %v8424 = vpop.permute.xlu0 %8423
    %8425 = vrot.lane.b32.xlu0 %v8330, 10
    %v8426 = vpop.permute.xlu0 %8425
    %8427 = vrot.lane.b32.xlu0 %v8333, 10
    %v8428 = vpop.permute.xlu0 %8427
    %8429 = vrot.lane.b32.xlu0 %v8336, 10
    %v8430 = vpop.permute.xlu0 %8429
    %8431 = vrot.lane.b32.xlu0 %v8339, 10
    %v8432 = vpop.permute.xlu0 %8431
    %8433 = vrot.lane.b32.xlu0 %v8342, 10
    %v8434 = vpop.permute.xlu0 %8433
    %8435 = vrot.lane.b32.xlu0 %v8345, 10
    %v8436 = vpop.permute.xlu0 %8435
    %8437 = vrot.lane.b32.xlu0 %v8348, 10
    %v8438 = vpop.permute.xlu0 %8437
    %8439 = vrot.lane.b32.xlu0 %v8351, 10
    %v8440 = vpop.permute.xlu0 %8439
    %8441 = vrot.lane.b32.xlu0 %v8354, 10
    %v8442 = vpop.permute.xlu0 %8441
    %8443 = vrot.lane.b32.xlu0 %v8357, 10
    %v8444 = vpop.permute.xlu0 %8443
    %8445 = vrot.lane.b32.xlu0 %v8360, 10
    %v8446 = vpop.permute.xlu0 %8445
    %8447 = vrot.lane.b32.xlu0 %v8363, 10
    %v8448 = vpop.permute.xlu0 %8447
    %8449 = vrot.lane.b32.xlu0 %v8366, 10
    %v8450 = vpop.permute.xlu0 %8449
    %8451 = vrot.lane.b32.xlu0 %v8369, 10
    %v8452 = vpop.permute.xlu0 %8451
    %8453 = vrot.lane.b32.xlu0 %v8372, 10
    %v8454 = vpop.permute.xlu0 %8453
    %8455 = vrot.lane.b32.xlu0 %v8375, 10
    %v8456 = vpop.permute.xlu0 %8455
    %8457 = vrot.lane.b32.xlu0 %v8378, 10
    %v8458 = vpop.permute.xlu0 %8457
    %8459 = vrot.lane.b32.xlu0 %v8381, 10
    %v8460 = vpop.permute.xlu0 %8459
    %8461 = vrot.lane.b32.xlu0 %v8384, 10
    %v8462 = vpop.permute.xlu0 %8461
    %8463 = vrot.lane.b32.xlu0 %v8387, 10
    %v8464 = vpop.permute.xlu0 %8463
    %8465 = vrot.lane.b32.xlu0 %v8390, 10
    %v8466 = vpop.permute.xlu0 %8465
    %8467 = vrot.lane.b32.xlu0 %v8393, 10
    %v8468 = vpop.permute.xlu0 %8467
    %v8493 = vadd.f32 %v8327, %v8422
    %v8494 = vadd.f32 %v8330, %v8424
    %v8495 = vadd.f32 %v8333, %v8426
    %v8496 = vadd.f32 %v8336, %v8428
    %v8497 = vadd.f32 %v8339, %v8430
    %v8498 = vadd.f32 %v8342, %v8432
    %v8499 = vadd.f32 %v8345, %v8434
    %v8500 = vadd.f32 %v8348, %v8436
    %v8501 = vadd.f32 %v8351, %v8438
    %v8502 = vadd.f32 %v8354, %v8440
    %v8503 = vadd.f32 %v8357, %v8442
    %v8504 = vadd.f32 %v8360, %v8444
    %v8505 = vadd.f32 %v8363, %v8446
    %v8506 = vadd.f32 %v8366, %v8448
    %v8507 = vadd.f32 %v8369, %v8450
    %v8508 = vadd.f32 %v8372, %v8452
    %v8509 = vadd.f32 %v8375, %v8454
    %v8510 = vadd.f32 %v8378, %v8456
    %v8511 = vadd.f32 %v8381, %v8458
    %v8512 = vadd.f32 %v8384, %v8460
    %v8513 = vadd.f32 %v8387, %v8462
    %v8514 = vadd.f32 %v8390, %v8464
    %v8515 = vadd.f32 %v8393, %v8466
    %v8516 = vadd.f32 %v8396, %v8468
    %8518 = vrot.lane.b32.xlu0 %v8330, 118
    %v8519 = vpop.permute.xlu0 %8518
    %8520 = vrot.lane.b32.xlu0 %v8333, 118
    %v8521 = vpop.permute.xlu0 %8520
    %8522 = vrot.lane.b32.xlu0 %v8336, 118
    %v8523 = vpop.permute.xlu0 %8522
    %8524 = vrot.lane.b32.xlu0 %v8339, 118
    %v8525 = vpop.permute.xlu0 %8524
    %8526 = vrot.lane.b32.xlu0 %v8342, 118
    %v8527 = vpop.permute.xlu0 %8526
    %8528 = vrot.lane.b32.xlu0 %v8345, 118
    %v8529 = vpop.permute.xlu0 %8528
    %8530 = vrot.lane.b32.xlu0 %v8348, 118
    %v8531 = vpop.permute.xlu0 %8530
    %8532 = vrot.lane.b32.xlu0 %v8351, 118
    %v8533 = vpop.permute.xlu0 %8532
    %8534 = vrot.lane.b32.xlu0 %v8354, 118
    %v8535 = vpop.permute.xlu0 %8534
    %8536 = vrot.lane.b32.xlu0 %v8357, 118
    %v8537 = vpop.permute.xlu0 %8536
    %8538 = vrot.lane.b32.xlu0 %v8360, 118
    %v8539 = vpop.permute.xlu0 %8538
    %8540 = vrot.lane.b32.xlu0 %v8363, 118
    %v8541 = vpop.permute.xlu0 %8540
    %8542 = vrot.lane.b32.xlu0 %v8366, 118
    %v8543 = vpop.permute.xlu0 %8542
    %8544 = vrot.lane.b32.xlu0 %v8369, 118
    %v8545 = vpop.permute.xlu0 %8544
    %8546 = vrot.lane.b32.xlu0 %v8372, 118
    %v8547 = vpop.permute.xlu0 %8546
    %8548 = vrot.lane.b32.xlu0 %v8375, 118
    %v8549 = vpop.permute.xlu0 %8548
    %8550 = vrot.lane.b32.xlu0 %v8378, 118
    %v8551 = vpop.permute.xlu0 %8550
    %8552 = vrot.lane.b32.xlu0 %v8381, 118
    %v8553 = vpop.permute.xlu0 %8552
    %8554 = vrot.lane.b32.xlu0 %v8384, 118
    %v8555 = vpop.permute.xlu0 %8554
    %8556 = vrot.lane.b32.xlu0 %v8387, 118
    %v8557 = vpop.permute.xlu0 %8556
    %8558 = vrot.lane.b32.xlu0 %v8390, 118
    %v8559 = vpop.permute.xlu0 %8558
    %8560 = vrot.lane.b32.xlu0 %v8393, 118
    %v8561 = vpop.permute.xlu0 %8560
    %8562 = vrot.lane.b32.xlu0 %v8396, 118
    %v8563 = vpop.permute.xlu0 %8562
    %8564 = vrot.lane.b32.xlu0 0.0, 118
    %v8565 = vpop.permute.xlu0 %8564
    %v8590 = vadd.f32 %v8493, %v8519
    %v8591 = vadd.f32 %v8494, %v8521
    %v8592 = vadd.f32 %v8495, %v8523
    %v8593 = vadd.f32 %v8496, %v8525
    %v8594 = vadd.f32 %v8497, %v8527
    %v8595 = vadd.f32 %v8498, %v8529
    %v8596 = vadd.f32 %v8499, %v8531
    %v8597 = vadd.f32 %v8500, %v8533
    %v8598 = vadd.f32 %v8501, %v8535
    %v8599 = vadd.f32 %v8502, %v8537
    %v8600 = vadd.f32 %v8503, %v8539
    %v8601 = vadd.f32 %v8504, %v8541
    %v8602 = vadd.f32 %v8505, %v8543
    %v8603 = vadd.f32 %v8506, %v8545
    %v8604 = vadd.f32 %v8507, %v8547
    %v8605 = vadd.f32 %v8508, %v8549
    %v8606 = vadd.f32 %v8509, %v8551
    %v8607 = vadd.f32 %v8510, %v8553
    %v8608 = vadd.f32 %v8511, %v8555
    %v8609 = vadd.f32 %v8512, %v8557
    %v8610 = vadd.f32 %v8513, %v8559
    %v8611 = vadd.f32 %v8514, %v8561
    %v8612 = vadd.f32 %v8515, %v8563
    %v8613 = vadd.f32 %v8516, %v8565
    %v8614 = vld [vmem:[#allocation2 + $0x4a0] sm:$0x1]
    %v8615 = vperm.slane %v8614, 0
    %8617 = vrot.lane.b32.xlu0 %v8615, 10
    %v8618 = vpop.permute.xlu0 %8617
    %v8620 = vadd.f32 %v8590, %v8618
    %v8621 = vadd.f32 %v8591, %v8618
    %v8622 = vadd.f32 %v8592, %v8618
    %v8623 = vadd.f32 %v8593, %v8618
    %v8624 = vadd.f32 %v8594, %v8618
    %v8625 = vadd.f32 %v8595, %v8618
    %v8626 = vadd.f32 %v8596, %v8618
    %v8627 = vadd.f32 %v8597, %v8618
    %v8628 = vadd.f32 %v8598, %v8618
    %v8629 = vadd.f32 %v8599, %v8618
    %v8630 = vadd.f32 %v8600, %v8618
    %v8631 = vadd.f32 %v8601, %v8618
    %v8632 = vadd.f32 %v8602, %v8618
    %v8633 = vadd.f32 %v8603, %v8618
    %v8634 = vadd.f32 %v8604, %v8618
    %v8635 = vadd.f32 %v8605, %v8618
    %v8636 = vadd.f32 %v8606, %v8618
    %v8637 = vadd.f32 %v8607, %v8618
    %v8638 = vadd.f32 %v8608, %v8618
    %v8639 = vadd.f32 %v8609, %v8618
    %v8640 = vadd.f32 %v8610, %v8618
    %v8641 = vadd.f32 %v8611, %v8618
    %v8642 = vadd.f32 %v8612, %v8618
    %v8643 = vadd.f32 %v8613, %v8618
    %v8644 = vlaneseq
    %v8645 = vshrl.u32 %v8644, 7
    %v8646 = vadd.s32 %v8645, 8
    %v8647 = vadd.s32 %v8645, 16
    %v8648 = vadd.s32 %v8645, 24
    %v8649 = vadd.s32 %v8645, 32
    %v8650 = vadd.s32 %v8645, 40
    %v8651 = vadd.s32 %v8645, 48
    %v8652 = vadd.s32 %v8645, 56
    %v8653 = vadd.s32 %v8645, 64
    %v8654 = vadd.s32 %v8645, 72
    %v8655 = vadd.s32 %v8645, 80
    %v8656 = vadd.s32 %v8645, 88
    %v8657 = vadd.s32 %v8645, 96
    %v8658 = vadd.s32 %v8645, 104
    %v8659 = vadd.s32 %v8645, 112
    %v8660 = vadd.s32 %v8645, 120
    %v8661 = vadd.s32 %v8645, 128
    %v8662 = vadd.s32 %v8645, 136
    %v8663 = vadd.s32 %v8645, 144
    %v8664 = vadd.s32 %v8645, 152
    %v8665 = vadd.s32 %v8645, 160
    %v8666 = vadd.s32 %v8645, 168
    %v8667 = vadd.s32 %v8645, 176
    %v8668 = vadd.s32 %v8645, 184
    %vm8669 = vcmp.lt.s32.totalorder %v8645, 0
    %v8670 = vsub.s32 0, %v8645
    %v8671 = vsel %vm8669, %v8670, %v8645
    %v8672 = vshrl.u32 %v8671, 3
    %v8673 = vand.u32 %v8671, 7
    %v8674 = vsub.s32 0, %v8673
    %v8675 = vsel %vm8669, %v8674, %v8673
    %vm8676 = vcmp.lt.s32.totalorder %v8646, 0
    %v8677 = vsub.s32 0, %v8646
    %v8678 = vsel %vm8676, %v8677, %v8646
    %v8679 = vshrl.u32 %v8678, 3
    %v8680 = vand.u32 %v8678, 7
    %v8681 = vsub.s32 0, %v8680
    %v8682 = vsel %vm8676, %v8681, %v8680
    %vm8683 = vcmp.lt.s32.totalorder %v8647, 0
    %v8684 = vsub.s32 0, %v8647
    %v8685 = vsel %vm8683, %v8684, %v8647
    %v8686 = vshrl.u32 %v8685, 3
    %v8687 = vand.u32 %v8685, 7
    %v8688 = vsub.s32 0, %v8687
    %v8689 = vsel %vm8683, %v8688, %v8687
    %vm8690 = vcmp.lt.s32.totalorder %v8648, 0
    %v8691 = vsub.s32 0, %v8648
    %v8692 = vsel %vm8690, %v8691, %v8648
    %v8693 = vshrl.u32 %v8692, 3
    %v8694 = vand.u32 %v8692, 7
    %v8695 = vsub.s32 0, %v8694
    %v8696 = vsel %vm8690, %v8695, %v8694
    %vm8697 = vcmp.lt.s32.totalorder %v8649, 0
    %v8698 = vsub.s32 0, %v8649
    %v8699 = vsel %vm8697, %v8698, %v8649
    %v8700 = vshrl.u32 %v8699, 3
    %v8701 = vand.u32 %v8699, 7
    %v8702 = vsub.s32 0, %v8701
    %v8703 = vsel %vm8697, %v8702, %v8701
    %vm8704 = vcmp.lt.s32.totalorder %v8650, 0
    %v8705 = vsub.s32 0, %v8650
    %v8706 = vsel %vm8704, %v8705, %v8650
    %v8707 = vshrl.u32 %v8706, 3
    %v8708 = vand.u32 %v8706, 7
    %v8709 = vsub.s32 0, %v8708
    %v8710 = vsel %vm8704, %v8709, %v8708
    %vm8711 = vcmp.lt.s32.totalorder %v8651, 0
    %v8712 = vsub.s32 0, %v8651
    %v8713 = vsel %vm8711, %v8712, %v8651
    %v8714 = vshrl.u32 %v8713, 3
    %v8715 = vand.u32 %v8713, 7
    %v8716 = vsub.s32 0, %v8715
    %v8717 = vsel %vm8711, %v8716, %v8715
    %vm8718 = vcmp.lt.s32.totalorder %v8652, 0
    %v8719 = vsub.s32 0, %v8652
    %v8720 = vsel %vm8718, %v8719, %v8652
    %v8721 = vshrl.u32 %v8720, 3
    %v8722 = vand.u32 %v8720, 7
    %v8723 = vsub.s32 0, %v8722
    %v8724 = vsel %vm8718, %v8723, %v8722
    %vm8725 = vcmp.lt.s32.totalorder %v8653, 0
    %v8726 = vsub.s32 0, %v8653
    %v8727 = vsel %vm8725, %v8726, %v8653
    %v8728 = vshrl.u32 %v8727, 3
    %v8729 = vand.u32 %v8727, 7
    %v8730 = vsub.s32 0, %v8729
    %v8731 = vsel %vm8725, %v8730, %v8729
    %vm8732 = vcmp.lt.s32.totalorder %v8654, 0
    %v8733 = vsub.s32 0, %v8654
    %v8734 = vsel %vm8732, %v8733, %v8654
    %v8735 = vshrl.u32 %v8734, 3
    %v8736 = vand.u32 %v8734, 7
    %v8737 = vsub.s32 0, %v8736
    %v8738 = vsel %vm8732, %v8737, %v8736
    %vm8739 = vcmp.lt.s32.totalorder %v8655, 0
    %v8740 = vsub.s32 0, %v8655
    %v8741 = vsel %vm8739, %v8740, %v8655
    %v8742 = vshrl.u32 %v8741, 3
    %v8743 = vand.u32 %v8741, 7
    %v8744 = vsub.s32 0, %v8743
    %v8745 = vsel %vm8739, %v8744, %v8743
    %vm8746 = vcmp.lt.s32.totalorder %v8656, 0
    %v8747 = vsub.s32 0, %v8656
    %v8748 = vsel %vm8746, %v8747, %v8656
    %v8749 = vshrl.u32 %v8748, 3
    %v8750 = vand.u32 %v8748, 7
    %v8751 = vsub.s32 0, %v8750
    %v8752 = vsel %vm8746, %v8751, %v8750
    %vm8753 = vcmp.lt.s32.totalorder %v8657, 0
    %v8754 = vsub.s32 0, %v8657
    %v8755 = vsel %vm8753, %v8754, %v8657
    %v8756 = vshrl.u32 %v8755, 3
    %v8757 = vand.u32 %v8755, 7
    %v8758 = vsub.s32 0, %v8757
    %v8759 = vsel %vm8753, %v8758, %v8757
    %vm8760 = vcmp.lt.s32.totalorder %v8658, 0
    %v8761 = vsub.s32 0, %v8658
    %v8762 = vsel %vm8760, %v8761, %v8658
    %v8763 = vshrl.u32 %v8762, 3
    %v8764 = vand.u32 %v8762, 7
    %v8765 = vsub.s32 0, %v8764
    %v8766 = vsel %vm8760, %v8765, %v8764
    %vm8767 = vcmp.lt.s32.totalorder %v8659, 0
    %v8768 = vsub.s32 0, %v8659
    %v8769 = vsel %vm8767, %v8768, %v8659
    %v8770 = vshrl.u32 %v8769, 3
    %v8771 = vand.u32 %v8769, 7
    %v8772 = vsub.s32 0, %v8771
    %v8773 = vsel %vm8767, %v8772, %v8771
    %vm8774 = vcmp.lt.s32.totalorder %v8660, 0
    %v8775 = vsub.s32 0, %v8660
    %v8776 = vsel %vm8774, %v8775, %v8660
    %v8777 = vshrl.u32 %v8776, 3
    %v8778 = vand.u32 %v8776, 7
    %v8779 = vsub.s32 0, %v8778
    %v8780 = vsel %vm8774, %v8779, %v8778
    %vm8781 = vcmp.lt.s32.totalorder %v8661, 0
    %v8782 = vsub.s32 0, %v8661
    %v8783 = vsel %vm8781, %v8782, %v8661
    %v8784 = vshrl.u32 %v8783, 3
    %v8785 = vand.u32 %v8783, 7
    %v8786 = vsub.s32 0, %v8785
    %v8787 = vsel %vm8781, %v8786, %v8785
    %vm8788 = vcmp.lt.s32.totalorder %v8662, 0
    %v8789 = vsub.s32 0, %v8662
    %v8790 = vsel %vm8788, %v8789, %v8662
    %v8791 = vshrl.u32 %v8790, 3
    %v8792 = vand.u32 %v8790, 7
    %v8793 = vsub.s32 0, %v8792
    %v8794 = vsel %vm8788, %v8793, %v8792
    %vm8795 = vcmp.lt.s32.totalorder %v8663, 0
    %v8796 = vsub.s32 0, %v8663
    %v8797 = vsel %vm8795, %v8796, %v8663
    %v8798 = vshrl.u32 %v8797, 3
    %v8799 = vand.u32 %v8797, 7
    %v8800 = vsub.s32 0, %v8799
    %v8801 = vsel %vm8795, %v8800, %v8799
    %vm8802 = vcmp.lt.s32.totalorder %v8664, 0
    %v8803 = vsub.s32 0, %v8664
    %v8804 = vsel %vm8802, %v8803, %v8664
    %v8805 = vshrl.u32 %v8804, 3
    %v8806 = vand.u32 %v8804, 7
    %v8807 = vsub.s32 0, %v8806
    %v8808 = vsel %vm8802, %v8807, %v8806
    %vm8809 = vcmp.lt.s32.totalorder %v8665, 0
    %v8810 = vsub.s32 0, %v8665
    %v8811 = vsel %vm8809, %v8810, %v8665
    %v8812 = vshrl.u32 %v8811, 3
    %v8813 = vand.u32 %v8811, 7
    %v8814 = vsub.s32 0, %v8813
    %v8815 = vsel %vm8809, %v8814, %v8813
    %vm8816 = vcmp.lt.s32.totalorder %v8666, 0
    %v8817 = vsub.s32 0, %v8666
    %v8818 = vsel %vm8816, %v8817, %v8666
    %v8819 = vshrl.u32 %v8818, 3
    %v8820 = vand.u32 %v8818, 7
    %v8821 = vsub.s32 0, %v8820
    %v8822 = vsel %vm8816, %v8821, %v8820
    %vm8823 = vcmp.lt.s32.totalorder %v8667, 0
    %v8824 = vsub.s32 0, %v8667
    %v8825 = vsel %vm8823, %v8824, %v8667
    %v8826 = vshrl.u32 %v8825, 3
    %v8827 = vand.u32 %v8825, 7
    %v8828 = vsub.s32 0, %v8827
    %v8829 = vsel %vm8823, %v8828, %v8827
    %vm8830 = vcmp.lt.s32.totalorder %v8668, 0
    %v8831 = vsub.s32 0, %v8668
    %v8832 = vsel %vm8830, %v8831, %v8668
    %v8833 = vshrl.u32 %v8832, 3
    %v8834 = vand.u32 %v8832, 7
    %v8835 = vsub.s32 0, %v8834
    %v8836 = vsel %vm8830, %v8835, %v8834
    %vm8837 = vcmp.ne.s32.totalorder %v8675, 0
    %vm8838 = vcmp.ne.s32.totalorder %v8682, 0
    %vm8839 = vcmp.ne.s32.totalorder %v8689, 0
    %vm8840 = vcmp.ne.s32.totalorder %v8696, 0
    %vm8841 = vcmp.ne.s32.totalorder %v8703, 0
    %vm8842 = vcmp.ne.s32.totalorder %v8710, 0
    %vm8843 = vcmp.ne.s32.totalorder %v8717, 0
    %vm8844 = vcmp.ne.s32.totalorder %v8724, 0
    %vm8845 = vcmp.ne.s32.totalorder %v8731, 0
    %vm8846 = vcmp.ne.s32.totalorder %v8738, 0
    %vm8847 = vcmp.ne.s32.totalorder %v8745, 0
    %vm8848 = vcmp.ne.s32.totalorder %v8752, 0
    %vm8849 = vcmp.ne.s32.totalorder %v8759, 0
    %vm8850 = vcmp.ne.s32.totalorder %v8766, 0
    %vm8851 = vcmp.ne.s32.totalorder %v8773, 0
    %vm8852 = vcmp.ne.s32.totalorder %v8780, 0
    %vm8853 = vcmp.ne.s32.totalorder %v8787, 0
    %vm8854 = vcmp.ne.s32.totalorder %v8794, 0
    %vm8855 = vcmp.ne.s32.totalorder %v8801, 0
    %vm8856 = vcmp.ne.s32.totalorder %v8808, 0
    %vm8857 = vcmp.ne.s32.totalorder %v8815, 0
    %vm8858 = vcmp.ne.s32.totalorder %v8822, 0
    %vm8859 = vcmp.ne.s32.totalorder %v8829, 0
    %vm8860 = vcmp.ne.s32.totalorder %v8836, 0
    %vm8861 = vcmp.lt.s32.totalorder %v8675, 0
    %vm8862 = vcmp.lt.s32.totalorder %v8682, 0
    %vm8863 = vcmp.lt.s32.totalorder %v8689, 0
    %vm8864 = vcmp.lt.s32.totalorder %v8696, 0
    %vm8865 = vcmp.lt.s32.totalorder %v8703, 0
    %vm8866 = vcmp.lt.s32.totalorder %v8710, 0
    %vm8867 = vcmp.lt.s32.totalorder %v8717, 0
    %vm8868 = vcmp.lt.s32.totalorder %v8724, 0
    %vm8869 = vcmp.lt.s32.totalorder %v8731, 0
    %vm8870 = vcmp.lt.s32.totalorder %v8738, 0
    %vm8871 = vcmp.lt.s32.totalorder %v8745, 0
    %vm8872 = vcmp.lt.s32.totalorder %v8752, 0
    %vm8873 = vcmp.lt.s32.totalorder %v8759, 0
    %vm8874 = vcmp.lt.s32.totalorder %v8766, 0
    %vm8875 = vcmp.lt.s32.totalorder %v8773, 0
    %vm8876 = vcmp.lt.s32.totalorder %v8780, 0
    %vm8877 = vcmp.lt.s32.totalorder %v8787, 0
    %vm8878 = vcmp.lt.s32.totalorder %v8794, 0
    %vm8879 = vcmp.lt.s32.totalorder %v8801, 0
    %vm8880 = vcmp.lt.s32.totalorder %v8808, 0
    %vm8881 = vcmp.lt.s32.totalorder %v8815, 0
    %vm8882 = vcmp.lt.s32.totalorder %v8822, 0
    %vm8883 = vcmp.lt.s32.totalorder %v8829, 0
    %vm8884 = vcmp.lt.s32.totalorder %v8836, 0
    %vm8885 = vmand %vm8861, %vm8837
    %vm8886 = vmand %vm8862, %vm8838
    %vm8887 = vmand %vm8863, %vm8839
    %vm8888 = vmand %vm8864, %vm8840
    %vm8889 = vmand %vm8865, %vm8841
    %vm8890 = vmand %vm8866, %vm8842
    %vm8891 = vmand %vm8867, %vm8843
    %vm8892 = vmand %vm8868, %vm8844
    %vm8893 = vmand %vm8869, %vm8845
    %vm8894 = vmand %vm8870, %vm8846
    %vm8895 = vmand %vm8871, %vm8847
    %vm8896 = vmand %vm8872, %vm8848
    %vm8897 = vmand %vm8873, %vm8849
    %vm8898 = vmand %vm8874, %vm8850
    %vm8899 = vmand %vm8875, %vm8851
    %vm8900 = vmand %vm8876, %vm8852
    %vm8901 = vmand %vm8877, %vm8853
    %vm8902 = vmand %vm8878, %vm8854
    %vm8903 = vmand %vm8879, %vm8855
    %vm8904 = vmand %vm8880, %vm8856
    %vm8905 = vmand %vm8881, %vm8857
    %vm8906 = vmand %vm8882, %vm8858
    %vm8907 = vmand %vm8883, %vm8859
    %vm8908 = vmand %vm8884, %vm8860
    %v8909 = vadd.s32 %v8675, 8
    %v8910 = vadd.s32 %v8682, 8
    %v8911 = vadd.s32 %v8689, 8
    %v8912 = vadd.s32 %v8696, 8
    %v8913 = vadd.s32 %v8703, 8
    %v8914 = vadd.s32 %v8710, 8
    %v8915 = vadd.s32 %v8717, 8
    %v8916 = vadd.s32 %v8724, 8
    %v8917 = vadd.s32 %v8731, 8
    %v8918 = vadd.s32 %v8738, 8
    %v8919 = vadd.s32 %v8745, 8
    %v8920 = vadd.s32 %v8752, 8
    %v8921 = vadd.s32 %v8759, 8
    %v8922 = vadd.s32 %v8766, 8
    %v8923 = vadd.s32 %v8773, 8
    %v8924 = vadd.s32 %v8780, 8
    %v8925 = vadd.s32 %v8787, 8
    %v8926 = vadd.s32 %v8794, 8
    %v8927 = vadd.s32 %v8801, 8
    %v8928 = vadd.s32 %v8808, 8
    %v8929 = vadd.s32 %v8815, 8
    %v8930 = vadd.s32 %v8822, 8
    %v8931 = vadd.s32 %v8829, 8
    %v8932 = vadd.s32 %v8836, 8
    %v8933 = vsel %vm8885, %v8909, %v8675
    %v8934 = vsel %vm8886, %v8910, %v8682
    %v8935 = vsel %vm8887, %v8911, %v8689
    %v8936 = vsel %vm8888, %v8912, %v8696
    %v8937 = vsel %vm8889, %v8913, %v8703
    %v8938 = vsel %vm8890, %v8914, %v8710
    %v8939 = vsel %vm8891, %v8915, %v8717
    %v8940 = vsel %vm8892, %v8916, %v8724
    %v8941 = vsel %vm8893, %v8917, %v8731
    %v8942 = vsel %vm8894, %v8918, %v8738
    %v8943 = vsel %vm8895, %v8919, %v8745
    %v8944 = vsel %vm8896, %v8920, %v8752
    %v8945 = vsel %vm8897, %v8921, %v8759
    %v8946 = vsel %vm8898, %v8922, %v8766
    %v8947 = vsel %vm8899, %v8923, %v8773
    %v8948 = vsel %vm8900, %v8924, %v8780
    %v8949 = vsel %vm8901, %v8925, %v8787
    %v8950 = vsel %vm8902, %v8926, %v8794
    %v8951 = vsel %vm8903, %v8927, %v8801
    %v8952 = vsel %vm8904, %v8928, %v8808
    %v8953 = vsel %vm8905, %v8929, %v8815
    %v8954 = vsel %vm8906, %v8930, %v8822
    %v8955 = vsel %vm8907, %v8931, %v8829
    %v8956 = vsel %vm8908, %v8932, %v8836
    %vm8957 = vcmp.eq.s32.totalorder %v8933, 0
    %vm8958 = vcmp.eq.s32.totalorder %v8934, 0
    %vm8959 = vcmp.eq.s32.totalorder %v8935, 0
    %vm8960 = vcmp.eq.s32.totalorder %v8936, 0
    %vm8961 = vcmp.eq.s32.totalorder %v8937, 0
    %vm8962 = vcmp.eq.s32.totalorder %v8938, 0
    %vm8963 = vcmp.eq.s32.totalorder %v8939, 0
    %vm8964 = vcmp.eq.s32.totalorder %v8940, 0
    %vm8965 = vcmp.eq.s32.totalorder %v8941, 0
    %vm8966 = vcmp.eq.s32.totalorder %v8942, 0
    %vm8967 = vcmp.eq.s32.totalorder %v8943, 0
    %vm8968 = vcmp.eq.s32.totalorder %v8944, 0
    %vm8969 = vcmp.eq.s32.totalorder %v8945, 0
    %vm8970 = vcmp.eq.s32.totalorder %v8946, 0
    %vm8971 = vcmp.eq.s32.totalorder %v8947, 0
    %vm8972 = vcmp.eq.s32.totalorder %v8948, 0
    %vm8973 = vcmp.eq.s32.totalorder %v8949, 0
    %vm8974 = vcmp.eq.s32.totalorder %v8950, 0
    %vm8975 = vcmp.eq.s32.totalorder %v8951, 0
    %vm8976 = vcmp.eq.s32.totalorder %v8952, 0
    %vm8977 = vcmp.eq.s32.totalorder %v8953, 0
    %vm8978 = vcmp.eq.s32.totalorder %v8954, 0
    %vm8979 = vcmp.eq.s32.totalorder %v8955, 0
    %vm8980 = vcmp.eq.s32.totalorder %v8956, 0
    %v8981 = vsel %vm8957, 1, 0
    %v8982 = vsel %vm8958, 1, 0
    %v8983 = vsel %vm8959, 1, 0
    %v8984 = vsel %vm8960, 1, 0
    %v8985 = vsel %vm8961, 1, 0
    %v8986 = vsel %vm8962, 1, 0
    %v8987 = vsel %vm8963, 1, 0
    %v8988 = vsel %vm8964, 1, 0
    %v8989 = vsel %vm8965, 1, 0
    %v8990 = vsel %vm8966, 1, 0
    %v8991 = vsel %vm8967, 1, 0
    %v8992 = vsel %vm8968, 1, 0
    %v8993 = vsel %vm8969, 1, 0
    %v8994 = vsel %vm8970, 1, 0
    %v8995 = vsel %vm8971, 1, 0
    %v8996 = vsel %vm8972, 1, 0
    %v8997 = vsel %vm8973, 1, 0
    %v8998 = vsel %vm8974, 1, 0
    %v8999 = vsel %vm8975, 1, 0
    %v9000 = vsel %vm8976, 1, 0
    %v9001 = vsel %vm8977, 1, 0
    %v9002 = vsel %vm8978, 1, 0
    %v9003 = vsel %vm8979, 1, 0
    %v9004 = vsel %vm8980, 1, 0
    %v9005 = vcvt.s32.f32 %v8981
    %v9006 = vcvt.s32.f32 %v8982
    %v9007 = vcvt.s32.f32 %v8983
    %v9008 = vcvt.s32.f32 %v8984
    %v9009 = vcvt.s32.f32 %v8985
    %v9010 = vcvt.s32.f32 %v8986
    %v9011 = vcvt.s32.f32 %v8987
    %v9012 = vcvt.s32.f32 %v8988
    %v9013 = vcvt.s32.f32 %v8989
    %v9014 = vcvt.s32.f32 %v8990
    %v9015 = vcvt.s32.f32 %v8991
    %v9016 = vcvt.s32.f32 %v8992
    %v9017 = vcvt.s32.f32 %v8993
    %v9018 = vcvt.s32.f32 %v8994
    %v9019 = vcvt.s32.f32 %v8995
    %v9020 = vcvt.s32.f32 %v8996
    %v9021 = vcvt.s32.f32 %v8997
    %v9022 = vcvt.s32.f32 %v8998
    %v9023 = vcvt.s32.f32 %v8999
    %v9024 = vcvt.s32.f32 %v9000
    %v9025 = vcvt.s32.f32 %v9001
    %v9026 = vcvt.s32.f32 %v9002
    %v9027 = vcvt.s32.f32 %v9003
    %v9028 = vcvt.s32.f32 %v9004
    %v9029 = vmax.f32 %v1289, 0.0
    %v9030 = vld [vmem:[#allocation2 + $0x520] sm:$0x1]
    %v9031 = vmul.f32 %v9029, %v9030
    %vm9032 = vcmask 253952
    %v9033 = vsel %vm9032, %v9031, 0.0
    %9034 = vadd.xlane.f32.xlu0 %v9033
    %v9035 = vpop.xlane.xlu0 %9034
    %v9036 = vmax.f32 %v1375, 0.0
    %v9037 = vld [vmem:[#allocation2 + $0x548] sm:$0x1]
    %v9038 = vmul.f32 %v9036, %v9037
    %v9039 = vsel %vm9032, %v9038, 0.0
    %9040 = vadd.xlane.f32.xlu0 %v9039
    %v9041 = vpop.xlane.xlu0 %9040
    %v9042 = vadd.f32 %v9035, %v9041
    %v9043 = vmul.f32 %v1377, %v9005
    %v9044 = vmul.f32 %v1378, %v9006
    %v9045 = vmul.f32 %v1379, %v9007
    %v9046 = vmul.f32 %v1380, %v9008
    %v9047 = vmul.f32 %v1381, %v9009
    %v9048 = vmul.f32 %v1382, %v9010
    %v9049 = vmul.f32 %v1383, %v9011
    %v9050 = vmul.f32 %v1384, %v9012
    %v9051 = vmul.f32 %v1385, %v9013
    %v9052 = vmul.f32 %v1386, %v9014
    %v9053 = vmul.f32 %v1387, %v9015
    %v9054 = vmul.f32 %v1388, %v9016
    %v9055 = vmul.f32 %v1389, %v9017
    %v9056 = vmul.f32 %v1390, %v9018
    %v9057 = vmul.f32 %v1391, %v9019
    %v9058 = vmul.f32 %v1392, %v9020
    %v9059 = vmul.f32 %v1393, %v9021
    %v9060 = vmul.f32 %v1394, %v9022
    %v9061 = vmul.f32 %v1395, %v9023
    %v9062 = vmul.f32 %v1396, %v9024
    %v9063 = vmul.f32 %v1397, %v9025
    %v9064 = vmul.f32 %v1398, %v9026
    %v9065 = vmul.f32 %v1399, %v9027
    %v9066 = vmul.f32 %v1400, %v9028
    %v9067 = vsel %vm1402, %v9043, 0.0
    %v9068 = vsel %vm1402, %v9044, 0.0
    %v9069 = vadd.f32 %v9067, %v9068
    %v9070 = vsel %vm1402, %v9045, 0.0
    %v9071 = vadd.f32 %v9069, %v9070
    %v9072 = vsel %vm1402, %v9046, 0.0
    %v9073 = vadd.f32 %v9071, %v9072
    %v9074 = vsel %vm1402, %v9047, 0.0
    %v9075 = vadd.f32 %v9073, %v9074
    %v9076 = vsel %vm1402, %v9048, 0.0
    %v9077 = vadd.f32 %v9075, %v9076
    %v9078 = vsel %vm1402, %v9049, 0.0
    %v9079 = vadd.f32 %v9077, %v9078
    %v9080 = vsel %vm1402, %v9050, 0.0
    %v9081 = vadd.f32 %v9079, %v9080
    %v9082 = vsel %vm1402, %v9051, 0.0
    %v9083 = vadd.f32 %v9081, %v9082
    %v9084 = vsel %vm1402, %v9052, 0.0
    %v9085 = vadd.f32 %v9083, %v9084
    %v9086 = vsel %vm1402, %v9053, 0.0
    %v9087 = vadd.f32 %v9085, %v9086
    %v9088 = vsel %vm1402, %v9054, 0.0
    %v9089 = vadd.f32 %v9087, %v9088
    %v9090 = vsel %vm1402, %v9055, 0.0
    %v9091 = vadd.f32 %v9089, %v9090
    %v9092 = vsel %vm1402, %v9056, 0.0
    %v9093 = vadd.f32 %v9091, %v9092
    %v9094 = vsel %vm1402, %v9057, 0.0
    %v9095 = vadd.f32 %v9093, %v9094
    %v9096 = vsel %vm1402, %v9058, 0.0
    %v9097 = vadd.f32 %v9095, %v9096
    %v9098 = vsel %vm1402, %v9059, 0.0
    %v9099 = vadd.f32 %v9097, %v9098
    %v9100 = vsel %vm1402, %v9060, 0.0
    %v9101 = vadd.f32 %v9099, %v9100
    %v9102 = vsel %vm1402, %v9061, 0.0
    %v9103 = vadd.f32 %v9101, %v9102
    %v9104 = vsel %vm1402, %v9062, 0.0
    %v9105 = vadd.f32 %v9103, %v9104
    %v9106 = vsel %vm1402, %v9063, 0.0
    %v9107 = vadd.f32 %v9105, %v9106
    %v9108 = vsel %vm1402, %v9064, 0.0
    %v9109 = vadd.f32 %v9107, %v9108
    %v9110 = vsel %vm1402, %v9065, 0.0
    %v9111 = vadd.f32 %v9109, %v9110
    %v9112 = vsel %vm1402, %v9066, 0.0
    %v9113 = vadd.f32 %v9111, %v9112
    %v9114 = vrot.slane %v9113, 4
    %v9115 = vadd.f32 %v9113, %v9114
    %v9116 = vrot.slane %v9115, 2
    %v9117 = vadd.f32 %v9115, %v9116
    %v9118 = vrot.slane %v9117, 1
    %v9119 = vadd.f32 %v9117, %v9118
    %v9120 = vmul.f32 %v9119, 0.041666668
    %v9121 = vmax.f32 %v9120, 0.0
    %v9122 = vld [vmem:[#allocation2 + $0x528] sm:$0x1]
    %v9123 = vmul.f32 %v9121, %v9122
    %v9124 = vadd.f32 %v9123, 0.0
    %v9125 = vadd.f32 %v9042, %v9124
    %v9126 = vmul.f32 %v3708, %v9005
    %v9127 = vmul.f32 %v3709, %v9006
    %v9128 = vmul.f32 %v3710, %v9007
    %v9129 = vmul.f32 %v3711, %v9008
    %v9130 = vmul.f32 %v3712, %v9009
    %v9131 = vmul.f32 %v3713, %v9010
    %v9132 = vmul.f32 %v3714, %v9011
    %v9133 = vmul.f32 %v3715, %v9012
    %v9134 = vmul.f32 %v3716, %v9013
    %v9135 = vmul.f32 %v3717, %v9014
    %v9136 = vmul.f32 %v3718, %v9015
    %v9137 = vmul.f32 %v3719, %v9016
    %v9138 = vmul.f32 %v3720, %v9017
    %v9139 = vmul.f32 %v3721, %v9018
    %v9140 = vmul.f32 %v3722, %v9019
    %v9141 = vmul.f32 %v3723, %v9020
    %v9142 = vmul.f32 %v3724, %v9021
    %v9143 = vmul.f32 %v3725, %v9022
    %v9144 = vmul.f32 %v3726, %v9023
    %v9145 = vmul.f32 %v3727, %v9024
    %v9146 = vmul.f32 %v3728, %v9025
    %v9147 = vmul.f32 %v3729, %v9026
    %v9148 = vmul.f32 %v3730, %v9027
    %v9149 = vmul.f32 %v3731, %v9028
    %vm9150 = vcmask 64544
    %v9151 = vsel %vm9150, %v9126, 0.0
    %v9152 = vsel %vm9150, %v9127, 0.0
    %v9153 = vadd.f32 %v9151, %v9152
    %v9154 = vsel %vm9150, %v9128, 0.0
    %v9155 = vadd.f32 %v9153, %v9154
    %v9156 = vsel %vm9150, %v9129, 0.0
    %v9157 = vadd.f32 %v9155, %v9156
    %v9158 = vsel %vm9150, %v9130, 0.0
    %v9159 = vadd.f32 %v9157, %v9158
    %v9160 = vsel %vm9150, %v9131, 0.0
    %v9161 = vadd.f32 %v9159, %v9160
    %v9162 = vsel %vm9150, %v9132, 0.0
    %v9163 = vadd.f32 %v9161, %v9162
    %v9164 = vsel %vm9150, %v9133, 0.0
    %v9165 = vadd.f32 %v9163, %v9164
    %v9166 = vsel %vm9150, %v9134, 0.0
    %v9167 = vadd.f32 %v9165, %v9166
    %v9168 = vsel %vm9150, %v9135, 0.0
    %v9169 = vadd.f32 %v9167, %v9168
    %v9170 = vsel %vm9150, %v9136, 0.0
    %v9171 = vadd.f32 %v9169, %v9170
    %v9172 = vsel %vm9150, %v9137, 0.0
    %v9173 = vadd.f32 %v9171, %v9172
    %v9174 = vsel %vm9150, %v9138, 0.0
    %v9175 = vadd.f32 %v9173, %v9174
    %v9176 = vsel %vm9150, %v9139, 0.0
    %v9177 = vadd.f32 %v9175, %v9176
    %v9178 = vsel %vm9150, %v9140, 0.0
    %v9179 = vadd.f32 %v9177, %v9178
    %v9180 = vsel %vm9150, %v9141, 0.0
    %v9181 = vadd.f32 %v9179, %v9180
    %v9182 = vsel %vm9150, %v9142, 0.0
    %v9183 = vadd.f32 %v9181, %v9182
    %v9184 = vsel %vm9150, %v9143, 0.0
    %v9185 = vadd.f32 %v9183, %v9184
    %v9186 = vsel %vm9150, %v9144, 0.0
    %v9187 = vadd.f32 %v9185, %v9186
    %v9188 = vsel %vm9150, %v9145, 0.0
    %v9189 = vadd.f32 %v9187, %v9188
    %v9190 = vsel %vm9150, %v9146, 0.0
    %v9191 = vadd.f32 %v9189, %v9190
    %v9192 = vsel %vm9150, %v9147, 0.0
    %v9193 = vadd.f32 %v9191, %v9192
    %v9194 = vsel %vm9150, %v9148, 0.0
    %v9195 = vadd.f32 %v9193, %v9194
    %v9196 = vsel %vm9150, %v9149, 0.0
    %v9197 = vadd.f32 %v9195, %v9196
    %v9198 = vrot.slane %v9197, 4
    %v9199 = vadd.f32 %v9197, %v9198
    %v9200 = vrot.slane %v9199, 2
    %v9201 = vadd.f32 %v9199, %v9200
    %v9202 = vrot.slane %v9201, 1
    %v9203 = vadd.f32 %v9201, %v9202
    %v9204 = vmul.f32 %v9203, 0.041666668
    %v9205 = vmax.f32 %v9204, 0.0
    %v9206 = vld [vmem:[#allocation2 + $0x530] sm:$0x1]
    %9208 = vrot.lane.b32.xlu0 %v9206, 4
    %v9209 = vpop.permute.xlu0 %9208
    %v9211 = vmul.f32 %v9205, %v9209
    %9213 = vrot.lane.b32.xlu0 %v9211, 124
    %v9214 = vpop.permute.xlu0 %9213
    %vm9216 = vcmask 24576
    %v9217 = vsel %vm9216, %v9214, 0.0
    %9218 = vadd.xlane.f32.xlu0 %v9217
    %v9219 = vpop.xlane.xlu0 %9218
    %v9220 = vadd.f32 %v9125, %v9219
    %v9221 = vmul.f32 %v6104, %v9005
    %v9222 = vmul.f32 %v6105, %v9006
    %v9223 = vmul.f32 %v6106, %v9007
    %v9224 = vmul.f32 %v6107, %v9008
    %v9225 = vmul.f32 %v6108, %v9009
    %v9226 = vmul.f32 %v6109, %v9010
    %v9227 = vmul.f32 %v6110, %v9011
    %v9228 = vmul.f32 %v6111, %v9012
    %v9229 = vmul.f32 %v6112, %v9013
    %v9230 = vmul.f32 %v6113, %v9014
    %v9231 = vmul.f32 %v6114, %v9015
    %v9232 = vmul.f32 %v6115, %v9016
    %v9233 = vmul.f32 %v6116, %v9017
    %v9234 = vmul.f32 %v6117, %v9018
    %v9235 = vmul.f32 %v6118, %v9019
    %v9236 = vmul.f32 %v6119, %v9020
    %v9237 = vmul.f32 %v6120, %v9021
    %v9238 = vmul.f32 %v6121, %v9022
    %v9239 = vmul.f32 %v6122, %v9023
    %v9240 = vmul.f32 %v6123, %v9024
    %v9241 = vmul.f32 %v6124, %v9025
    %v9242 = vmul.f32 %v6125, %v9026
    %v9243 = vmul.f32 %v6126, %v9027
    %v9244 = vmul.f32 %v6127, %v9028
    %vm9245 = vcmask 80936
    %v9246 = vsel %vm9245, %v9221, 0.0
    %v9247 = vsel %vm9245, %v9222, 0.0
    %v9248 = vadd.f32 %v9246, %v9247
    %v9249 = vsel %vm9245, %v9223, 0.0
    %v9250 = vadd.f32 %v9248, %v9249
    %v9251 = vsel %vm9245, %v9224, 0.0
    %v9252 = vadd.f32 %v9250, %v9251
    %v9253 = vsel %vm9245, %v9225, 0.0
    %v9254 = vadd.f32 %v9252, %v9253
    %v9255 = vsel %vm9245, %v9226, 0.0
    %v9256 = vadd.f32 %v9254, %v9255
    %v9257 = vsel %vm9245, %v9227, 0.0
    %v9258 = vadd.f32 %v9256, %v9257
    %v9259 = vsel %vm9245, %v9228, 0.0
    %v9260 = vadd.f32 %v9258, %v9259
    %v9261 = vsel %vm9245, %v9229, 0.0
    %v9262 = vadd.f32 %v9260, %v9261
    %v9263 = vsel %vm9245, %v9230, 0.0
    %v9264 = vadd.f32 %v9262, %v9263
    %v9265 = vsel %vm9245, %v9231, 0.0
    %v9266 = vadd.f32 %v9264, %v9265
    %v9267 = vsel %vm9245, %v9232, 0.0
    %v9268 = vadd.f32 %v9266, %v9267
    %v9269 = vsel %vm9245, %v9233, 0.0
    %v9270 = vadd.f32 %v9268, %v9269
    %v9271 = vsel %vm9245, %v9234, 0.0
    %v9272 = vadd.f32 %v9270, %v9271
    %v9273 = vsel %vm9245, %v9235, 0.0
    %v9274 = vadd.f32 %v9272, %v9273
    %v9275 = vsel %vm9245, %v9236, 0.0
    %v9276 = vadd.f32 %v9274, %v9275
    %v9277 = vsel %vm9245, %v9237, 0.0
    %v9278 = vadd.f32 %v9276, %v9277
    %v9279 = vsel %vm9245, %v9238, 0.0
    %v9280 = vadd.f32 %v9278, %v9279
    %v9281 = vsel %vm9245, %v9239, 0.0
    %v9282 = vadd.f32 %v9280, %v9281
    %v9283 = vsel %vm9245, %v9240, 0.0
    %v9284 = vadd.f32 %v9282, %v9283
    %v9285 = vsel %vm9245, %v9241, 0.0
    %v9286 = vadd.f32 %v9284, %v9285
    %v9287 = vsel %vm9245, %v9242, 0.0
    %v9288 = vadd.f32 %v9286, %v9287
    %v9289 = vsel %vm9245, %v9243, 0.0
    %v9290 = vadd.f32 %v9288, %v9289
    %v9291 = vsel %vm9245, %v9244, 0.0
    %v9292 = vadd.f32 %v9290, %v9291
    %v9293 = vrot.slane %v9292, 4
    %v9294 = vadd.f32 %v9292, %v9293
    %v9295 = vrot.slane %v9294, 2
    %v9296 = vadd.f32 %v9294, %v9295
    %v9297 = vrot.slane %v9296, 1
    %v9298 = vadd.f32 %v9296, %v9297
    %v9299 = vmul.f32 %v9298, 0.041666668
    %v9300 = vmax.f32 %v9299, 0.0
    %v9301 = vld [vmem:[#allocation2 + $0x538] sm:$0x1]
    %9303 = vrot.lane.b32.xlu0 %v9301, 5
    %v9304 = vpop.permute.xlu0 %9303
    %v9306 = vmul.f32 %v9300, %v9304
    %9308 = vrot.lane.b32.xlu0 %v9306, 123
    %v9309 = vpop.permute.xlu0 %9308
    %vm9311 = vcmask 32768
    %v9312 = vsel %vm9311, %v9309, 0.0
    %9313 = vadd.xlane.f32.xlu0 %v9312
    %v9314 = vpop.xlane.xlu0 %9313
    %v9315 = vadd.f32 %v9220, %v9314
    %v9316 = vmul.f32 %v8620, %v9005
    %v9317 = vmul.f32 %v8621, %v9006
    %v9318 = vmul.f32 %v8622, %v9007
    %v9319 = vmul.f32 %v8623, %v9008
    %v9320 = vmul.f32 %v8624, %v9009
    %v9321 = vmul.f32 %v8625, %v9010
    %v9322 = vmul.f32 %v8626, %v9011
    %v9323 = vmul.f32 %v8627, %v9012
    %v9324 = vmul.f32 %v8628, %v9013
    %v9325 = vmul.f32 %v8629, %v9014
    %v9326 = vmul.f32 %v8630, %v9015
    %v9327 = vmul.f32 %v8631, %v9016
    %v9328 = vmul.f32 %v8632, %v9017
    %v9329 = vmul.f32 %v8633, %v9018
    %v9330 = vmul.f32 %v8634, %v9019
    %v9331 = vmul.f32 %v8635, %v9020
    %v9332 = vmul.f32 %v8636, %v9021
    %v9333 = vmul.f32 %v8637, %v9022
    %v9334 = vmul.f32 %v8638, %v9023
    %v9335 = vmul.f32 %v8639, %v9024
    %v9336 = vmul.f32 %v8640, %v9025
    %v9337 = vmul.f32 %v8641, %v9026
    %v9338 = vmul.f32 %v8642, %v9027
    %v9339 = vmul.f32 %v8643, %v9028
    %vm9340 = vcmask 162896
    %v9341 = vsel %vm9340, %v9316, 0.0
    %v9342 = vsel %vm9340, %v9317, 0.0
    %v9343 = vadd.f32 %v9341, %v9342
    %v9344 = vsel %vm9340, %v9318, 0.0
    %v9345 = vadd.f32 %v9343, %v9344
    %v9346 = vsel %vm9340, %v9319, 0.0
    %v9347 = vadd.f32 %v9345, %v9346
    %v9348 = vsel %vm9340, %v9320, 0.0
    %v9349 = vadd.f32 %v9347, %v9348
    %v9350 = vsel %vm9340, %v9321, 0.0
    %v9351 = vadd.f32 %v9349, %v9350
    %v9352 = vsel %vm9340, %v9322, 0.0
    %v9353 = vadd.f32 %v9351, %v9352
    %v9354 = vsel %vm9340, %v9323, 0.0
    %v9355 = vadd.f32 %v9353, %v9354
    %v9356 = vsel %vm9340, %v9324, 0.0
    %v9357 = vadd.f32 %v9355, %v9356
    %v9358 = vsel %vm9340, %v9325, 0.0
    %v9359 = vadd.f32 %v9357, %v9358
    %v9360 = vsel %vm9340, %v9326, 0.0
    %v9361 = vadd.f32 %v9359, %v9360
    %v9362 = vsel %vm9340, %v9327, 0.0
    %v9363 = vadd.f32 %v9361, %v9362
    %v9364 = vsel %vm9340, %v9328, 0.0
    %v9365 = vadd.f32 %v9363, %v9364
    %v9366 = vsel %vm9340, %v9329, 0.0
    %v9367 = vadd.f32 %v9365, %v9366
    %v9368 = vsel %vm9340, %v9330, 0.0
    %v9369 = vadd.f32 %v9367, %v9368
    %v9370 = vsel %vm9340, %v9331, 0.0
    %v9371 = vadd.f32 %v9369, %v9370
    %v9372 = vsel %vm9340, %v9332, 0.0
    %v9373 = vadd.f32 %v9371, %v9372
    %v9374 = vsel %vm9340, %v9333, 0.0
    %v9375 = vadd.f32 %v9373, %v9374
    %v9376 = vsel %vm9340, %v9334, 0.0
    %v9377 = vadd.f32 %v9375, %v9376
    %v9378 = vsel %vm9340, %v9335, 0.0
    %v9379 = vadd.f32 %v9377, %v9378
    %v9380 = vsel %vm9340, %v9336, 0.0
    %v9381 = vadd.f32 %v9379, %v9380
    %v9382 = vsel %vm9340, %v9337, 0.0
    %v9383 = vadd.f32 %v9381, %v9382
    %v9384 = vsel %vm9340, %v9338, 0.0
    %v9385 = vadd.f32 %v9383, %v9384
    %v9386 = vsel %vm9340, %v9339, 0.0
    %v9387 = vadd.f32 %v9385, %v9386
    %v9388 = vrot.slane %v9387, 4
    %v9389 = vadd.f32 %v9387, %v9388
    %v9390 = vrot.slane %v9389, 2
    %v9391 = vadd.f32 %v9389, %v9390
    %v9392 = vrot.slane %v9391, 1
    %v9393 = vadd.f32 %v9391, %v9392
    %v9394 = vmul.f32 %v9393, 0.041666668
    %v9395 = vmax.f32 %v9394, 0.0
    %v9396 = vld [vmem:[#allocation2 + $0x540] sm:$0x1]
    %9398 = vrot.lane.b32.xlu0 %v9396, 10
    %v9399 = vpop.permute.xlu0 %9398
    %v9401 = vmul.f32 %v9395, %v9399
    %9403 = vrot.lane.b32.xlu0 %v9401, 118
    %v9404 = vpop.permute.xlu0 %9403
    %vm9406 = vcmask 73728
    %v9407 = vsel %vm9406, %v9404, 0.0
    %9408 = vadd.xlane.f32.xlu0 %v9407
    %v9409 = vpop.xlane.xlu0 %9408
    %v9410 = vadd.f32 %v9315, %v9409
    %v9411 = vld [vmem:[#allocation2 + $0x550] sm:$0x1]
    %v9412 = vadd.f32 %v9410, %v9411
    %v9413 = vxor.u32 %v9412, 2147483648
    %v9414 = vmul.f32 %v9413, 1.442695
    %v9415 = vpow.pop %v9414
    %v9416 = vadd.f32 %v9415, 1.0
    %v9417 = vrcp.pop %v9416
    %v9418 = vmul.f32 %v9416, %v9417
    %v9419 = vsub.f32 1.0, %v9418
    %v9420 = vmul.f32 %v9417, %v9419
    %v9421 = vadd.f32 %v9417, %v9420
    %vm9422 = vweird.f32 %v9416
    %vm9423 = vweird.f32 %v9417
    %vm9424 = vmor %vm9422, %vm9423
    %v9425 = vsel %vm9424, %v9417, %v9421
    %v9426 = vand.u32 2147483647, %v9416
    %vm9427 = vcmp.eq.f32.partialorder %v9426, 8.507059e+37
    %v9428 = vand.u32 %v9416, 2147483648
    %v9429 = vor.u32 1.1754944e-38, %v9428
    %v9430 = vsel %vm9427, %v9429, %v9425
    %v9431 = vmul.f32 1.0, %v9430
    %vm9432 = vcmask 0
    %9433 = vst.msk [vmem:[#allocation5] sm:$0x1] %vm9432, %v9431
    // Predicated region
    $region18: #{_lambda_.1} parent=1 // pred_check
      _
    $region19: #{_lambda_.1} parent=1 // pred_check_branch
      %9435 = sbr.rel (0) target = $region21
    $region20: #{_lambda_.1} parent=1 // pred_region
      %9437 = vsyncadd [#allocation4], 0
      %s9439 = sshll.u32 [#allocation5], 4
      %s9440 = int_to_ptr.vmem [resolvable:$true] %s9439
      %s9441 = sshll.u32 %s3, 4
      %s9442 = int_to_ptr.hbm [resolvable:$true] %s9441
      %9444 = dma.vmem_to_hbm [thread:$0]  %s9440, 16, %s9442, [#allocation4]
    $region21: #{_lambda_.1} parent=1 // pred_fallthru
      _
    // Predicated region
    $region22: #{_lambda_.1} parent=1 // pred_check
      _
    $region23: #{_lambda_.1} parent=1 // pred_check_branch
      %9446 = sbr.rel (0) target = $region25
    $region24: #{_lambda_.1} parent=1 // pred_region
      %9448 = dma.done [#allocation4], 16
    $region25: #{_lambda_.1} parent=1 // pred_fallthru
      _
    %9449 = vsyncpa [#allocation3], 1
    %9450 = vsyncpa [#allocation4], 1

</llo_original>
